<compile_context>
chip_gen: v7x
topology: tpu7x:2x2x1
jax: 0.10.0
libtpu: 0.0.40
codegen_flags: <defaults>
</compile_context>

<pallas_src>
import math

import jax
import jax.numpy as jnp
from jax.experimental import pallas as pl
from jax.experimental.pallas import tpu as pltpu

# ------------------------- module constants (scaled) -------------------------
C_FILTER = 8
INPUT_CHANNELS = 4
INPUT_SIZE = 16
KERNEL_SIZE = 3
N_INPUTS = 2
NUM_CONV = 4
STRIDE = 1
AFTER_CONV_SIZE = INPUT_SIZE + NUM_CONV * (1 - KERNEL_SIZE)   # 8
C_LENGTH = C_FILTER * AFTER_CONV_SIZE * AFTER_CONV_SIZE       # 512
S_FLAT = INPUT_SIZE * INPUT_SIZE                              # 256 (lane axis)
BN_EPS = 1e-5

HEAD_DTYPE = jnp.bfloat16   # MXU-input dtype for the big head weights
TK_HEAD = 256               # contraction tile for the head matmuls

assert INPUT_CHANNELS <= C_FILTER, "input channels padded up to c_filter"
assert S_FLAT % 128 == 0, "flat spatial axis must be lane-aligned"
assert C_LENGTH % TK_HEAD == 0 and TK_HEAD % 128 == 0


# ----------------- fused conv stack + max-pool Pallas kernel -----------------
def _conv_stack_kernel(x_ref, w_ref, sc_ref, sh_ref, o_ref):
    # x_ref : (N_INPUTS, C_FILTER, S_FLAT)  channel-major, zero-padded channels
    # w_ref : (NUM_CONV, K*K, C_FILTER, C_FILTER) folded conv taps
    # sc_ref/sh_ref: (NUM_CONV, C_FILTER, 1) folded conv-bias + BatchNorm2d
    # o_ref : (C_FILTER, S_FLAT)   max over the n_inputs images of this pair
    pooled = None
    for t in range(N_INPUTS):                       # static unroll
        a = x_ref[t]                                # (C_FILTER, S_FLAT)
        for l in range(NUM_CONV):                   # static unroll: fused chain
            scale = sc_ref[l]                       # (C_FILTER, 1) hoisted
            shift = sh_ref[l]
            acc = jnp.zeros((C_FILTER, S_FLAT), jnp.float32)
            for dy in range(KERNEL_SIZE):
                for dx in range(KERNEL_SIZE):
                    s = dy * INPUT_SIZE + dx
                    src = a if s == 0 else pltpu.roll(a, shift=S_FLAT - s, axis=1)
                    acc = acc + jnp.dot(w_ref[l, dy * KERNEL_SIZE + dx], src,
                                        preferred_element_type=jnp.float32)
            a = acc * scale + shift                 # folded bias + BN2d
        pooled = a if pooled is None else jnp.maximum(pooled, a)
    o_ref[...] = pooled


def conv_stack(x_pad, w, scale, shift):
    """x_pad: (Bo, N_INPUTS, C_FILTER, S_FLAT) f32; returns (Bo, C_FILTER, S_FLAT)."""
    Bo = x_pad.shape[0]
    return pl.pallas_call(
        _conv_stack_kernel,
        out_shape=jax.ShapeDtypeStruct((Bo, C_FILTER, S_FLAT), jnp.float32),
        grid_spec=pltpu.PrefetchScalarGridSpec(
            num_scalar_prefetch=0,
            grid=(Bo,),     # Bo=2 -> shards across the two v7x TensorCores
            in_specs=[
                pl.BlockSpec((None, N_INPUTS, C_FILTER, S_FLAT),
                             lambda b: (b, 0, 0, 0)),
                pl.BlockSpec((NUM_CONV, KERNEL_SIZE * KERNEL_SIZE,
                              C_FILTER, C_FILTER), lambda b: (0, 0, 0, 0)),
                pl.BlockSpec((NUM_CONV, C_FILTER, 1), lambda b: (0, 0, 0)),
                pl.BlockSpec((NUM_CONV, C_FILTER, 1), lambda b: (0, 0, 0)),
            ],
            out_specs=pl.BlockSpec((None, C_FILTER, S_FLAT), lambda b: (b, 0, 0)),
        ),
        compiler_params=pltpu.CompilerParams(dimension_semantics=("parallel",)),
    )(x_pad, w, scale, shift)


# ------------------ head stage 1: fc (BN1d folded) + residual ----------------
def _fc_kernel(pooled_ref, w_ref, b_ref, out_ref):
    k = pl.program_id(0)

    @pl.when(k == 0)
    def _():
        out_ref[...] = pooled_ref[...] + b_ref[...]       # residual + folded bias

    off = pl.multiple_of(k * TK_HEAD, TK_HEAD)
    h = pooled_ref[:, pl.ds(off, TK_HEAD)].astype(HEAD_DTYPE)
    out_ref[...] += jnp.dot(h, w_ref[...], preferred_element_type=jnp.float32)


def fc_stage(pooled, fc_w, fc_b):
    Bo, L = pooled.shape
    nk = L // TK_HEAD
    return pl.pallas_call(
        _fc_kernel,
        out_shape=jax.ShapeDtypeStruct((Bo, L), jnp.float32),
        grid_spec=pltpu.PrefetchScalarGridSpec(
            num_scalar_prefetch=0,
            grid=(nk,),                                   # contraction tiles
            in_specs=[
                pl.BlockSpec((Bo, L), lambda k: (0, 0)),
                pl.BlockSpec((TK_HEAD, L), lambda k: (k, 0)),   # bf16 weight strip
                pl.BlockSpec((1, L), lambda k: (0, 0)),
            ],
            out_specs=pl.BlockSpec((Bo, L), lambda k: (0, 0)),  # VMEM-resident acc
        ),
        compiler_params=pltpu.CompilerParams(dimension_semantics=("arbitrary",)),
    )(pooled, fc_w, fc_b)


# --------- head stage 2: fused [mu|log_sigma] projection + rsample -----------
def _proj_sample_kernel(pooled_ref, w_ref, b_ref, eps_ref,
                        c_ref, score_ref, acc_ref):
    k = pl.program_id(0)

    @pl.when(k == 0)
    def _():
        acc_ref[...] = jnp.zeros_like(acc_ref)

    off = pl.multiple_of(k * TK_HEAD, TK_HEAD)
    h = pooled_ref[:, pl.ds(off, TK_HEAD)].astype(HEAD_DTYPE)
    acc_ref[...] += jnp.dot(h, w_ref[...], preferred_element_type=jnp.float32)

    @pl.when(k == pl.num_programs(0) - 1)
    def _():
        z = acc_ref[...] + b_ref[...]                 # (Bo, 2L)
        mu = z[:, :C_LENGTH]
        log_sigma = z[:, C_LENGTH:]
        sigma = jnp.exp(log_sigma)
        eps = eps_ref[...]
        c_ref[...] = mu + sigma * eps                 # Normal(mu, sigma).rsample()
        # z-score of the rsample is exactly eps -> no subtract/divide needed.
        log_prob = -0.5 * eps * eps - log_sigma - 0.5 * math.log(2.0 * math.pi)
        score_ref[...] = jnp.sum(log_prob, axis=1, keepdims=True)


def proj_sample_stage(pooled2, musg_w, musg_b, eps):
    Bo, L = pooled2.shape
    nk = L // TK_HEAD
    c, score = pl.pallas_call(
        _proj_sample_kernel,
        out_shape=(jax.ShapeDtypeStruct((Bo, L), jnp.float32),
                   jax.ShapeDtypeStruct((Bo, 1), jnp.float32)),
        grid_spec=pltpu.PrefetchScalarGridSpec(
            num_scalar_prefetch=0,
            grid=(nk,),
            in_specs=[
                pl.BlockSpec((Bo, L), lambda k: (0, 0)),
                pl.BlockSpec((TK_HEAD, 2 * L), lambda k: (k, 0)),  # [mu|sg] strip
                pl.BlockSpec((1, 2 * L), lambda k: (0, 0)),
                pl.BlockSpec((Bo, L), lambda k: (0, 0)),
            ],
            out_specs=(pl.BlockSpec((Bo, L), lambda k: (0, 0)),
                       pl.BlockSpec((Bo, 1), lambda k: (0, 0))),
            scratch_shapes=[pltpu.VMEM((Bo, 2 * L), jnp.float32)],
        ),
        compiler_params=pltpu.CompilerParams(dimension_semantics=("arbitrary",)),
    )(pooled2, musg_w, musg_b, eps)
    return c, score[:, 0]


# --------------------------- parameter initialization ------------------------
def init_params(key):
    # TODO(synk): BatchNorm (2d and 1d) is folded with inference
    # (running-stats) semantics, not training-mode batch statistics.
    p = {}
    w_stack, sc_stack, sh_stack = [], [], []
    cin = INPUT_CHANNELS
    for _ in range(NUM_CONV):
        key, kw, kb, kg, kbe, km, kv = jax.random.split(key, 7)
        fan_in = cin * KERNEL_SIZE * KERNEL_SIZE
        w_pt = jax.random.normal(
            kw, (C_FILTER, cin, KERNEL_SIZE, KERNEL_SIZE), jnp.float32
        ) / math.sqrt(fan_in)                                    # (Cout,Cin,K,K)
        b = 0.05 * jax.random.normal(kb, (C_FILTER,), jnp.float32)
        gamma = 1.0 + 0.05 * jax.random.normal(kg, (C_FILTER,), jnp.float32)
        beta = 0.05 * jax.random.normal(kbe, (C_FILTER,), jnp.float32)
        mean = 0.05 * jax.random.normal(km, (C_FILTER,), jnp.float32)
        var = 1.0 + 0.05 * jnp.abs(jax.random.normal(kv, (C_FILTER,), jnp.float32))
        scale = gamma / jnp.sqrt(var + BN_EPS)
        shift = beta + (b - mean) * scale                        # fold conv bias
        # (Cout,Cin,K,K) -> (K*K, Cout, Cin), zero-pad Cin up to C_FILTER
        w_taps = jnp.transpose(w_pt, (2, 3, 0, 1)).reshape(
            KERNEL_SIZE * KERNEL_SIZE, C_FILTER, cin)
        if cin < C_FILTER:
            w_taps = jnp.pad(w_taps, ((0, 0), (0, 0), (0, C_FILTER - cin)))
        w_stack.append(w_taps)
        sc_stack.append(scale.reshape(C_FILTER, 1))
        sh_stack.append(shift.reshape(C_FILTER, 1))
        cin = C_FILTER
    p["conv_w"] = jnp.stack(w_stack)        # (NUM_CONV, K*K, C_FILTER, C_FILTER)
    p["conv_scale"] = jnp.stack(sc_stack)   # (NUM_CONV, C_FILTER, 1)
    p["conv_shift"] = jnp.stack(sh_stack)

    L = C_LENGTH
    # BatchNorm1d (folded into fc below)
    key, kg, kbe, km, kv = jax.random.split(key, 5)
    gamma = 1.0 + 0.05 * jax.random.normal(kg, (L,), jnp.float32)
    beta = 0.05 * jax.random.normal(kbe, (L,), jnp.float32)
    mean = 0.05 * jax.random.normal(km, (L,), jnp.float32)
    var = 1.0 + 0.05 * jnp.abs(jax.random.normal(kv, (L,), jnp.float32))
    bn_s = gamma / jnp.sqrt(var + BN_EPS)
    bn_t = beta - mean * bn_s

    # fc: Linear(L, L) with BN1d folded in (fc(BN(x)) = x @ W' + b')
    key, kw, kb = jax.random.split(key, 3)
    fc_w_pt = jax.random.normal(kw, (L, L), jnp.float32) / math.sqrt(L)  # (out,in)
    fc_b = 0.05 * jax.random.normal(kb, (L,), jnp.float32)
    w_io = fc_w_pt.T                                   # (in, out)
    p["fc_w"] = (bn_s[:, None] * w_io).astype(HEAD_DTYPE)
    p["fc_b"] = (fc_b + bn_t @ w_io).reshape(1, L).astype(jnp.float32)

    # localization_mu / localization_sigma fused into one (L, 2L) projection
    ws, bs = [], []
    for _ in range(2):
        key, kw, kb = jax.random.split(key, 3)
        w_pt = jax.random.normal(kw, (L, L), jnp.float32) / math.sqrt(L)
        b = 0.05 * jax.random.normal(kb, (L,), jnp.float32)
        ws.append(w_pt.T)                              # (in, out)
        bs.append(b)
    p["musg_w"] = jnp.concatenate(ws, axis=1).astype(HEAD_DTYPE)    # (L, 2L)
    p["musg_b"] = jnp.concatenate(bs).reshape(1, 2 * L).astype(jnp.float32)
    return p


# --------------------------------- forward -----------------------------------
@jax.jit
def qc_forward(inputs, params, eps):
    # inputs: (Bo, n_inputs, Cin, H, W) NCHW per image, like PyTorch.
    Bo = inputs.shape[0]
    x = inputs.reshape(Bo, N_INPUTS, INPUT_CHANNELS, S_FLAT)
    # zero-pad input channels up to C_FILTER so every layer uses one tap shape
    x = jnp.pad(x, ((0, 0), (0, 0), (0, C_FILTER - INPUT_CHANNELS), (0, 0)))

    # fused conv chain + BN + max-pool over n_inputs; output is channel-major
    # with the (shrinking) valid window living in the top-left of each 16x16
    # flat spatial plane.
    maps = conv_stack(x, params["conv_w"], params["conv_scale"],
                      params["conv_shift"])                   # (Bo, C_FILTER, 256)
    pooled = maps.reshape(Bo, C_FILTER, INPUT_SIZE, INPUT_SIZE)[
        :, :, :AFTER_CONV_SIZE, :AFTER_CONV_SIZE].reshape(Bo, C_LENGTH)

    pooled2 = fc_stage(pooled, params["fc_w"], params["fc_b"])
    return proj_sample_stage(pooled2, params["musg_w"], params["musg_b"], eps)


if __name__ == "__main__":
    key = jax.random.PRNGKey(0)
    kparam, kx, keps = jax.random.split(key, 3)
    params = init_params(kparam)

    Bo = 2
    x = jax.random.normal(
        kx, (Bo, N_INPUTS, INPUT_CHANNELS, INPUT_SIZE, INPUT_SIZE), jnp.float32)
    # standard-normal noise for Normal(mu, sigma).rsample()
    eps = jax.random.normal(keps, (Bo, C_LENGTH), jnp.float32)

    c, score = qc_forward(x, params, eps)
    jax.block_until_ready((c, score))

    assert c.shape == (Bo, C_LENGTH), c.shape
    assert score.shape == (Bo,), score.shape
    assert bool(jnp.all(jnp.isfinite(c))) and bool(jnp.all(jnp.isfinite(score)))
    print("KERNEL_OK")
</pallas_src>

<mosaic_0001>
module attributes {stable_mosaic.version = 11 : i64} {
  func.func @_fc_kernel(%arg0: i32, %arg1: memref<2x512xf32, #tpu.memory_space<vmem>>, %arg2: memref<256x512xbf16, #tpu.memory_space<vmem>>, %arg3: memref<1x512xf32, #tpu.memory_space<vmem>>, %arg4: memref<2x512xf32, #tpu.memory_space<vmem>>) attributes {dimension_semantics = [#tpu.dimension_semantics<arbitrary>], iteration_bounds = array<i64: 2>, scalar_prefetch = 0 : i64, scratch_operands = 0 : i64, tpu.core_type = #tpu.core_type<tc>, window_params = [{pipeline_mode = #tpu.pipeline_mode<synchronous>, transform_indices = @transform_0, window_bounds = array<i64: 2, 512>}, {transform_indices = @transform_1, window_bounds = array<i64: 256, 512>}, {pipeline_mode = #tpu.pipeline_mode<synchronous>, transform_indices = @transform_2, window_bounds = array<i64: 1, 512>}, {pipeline_mode = #tpu.pipeline_mode<synchronous>, transform_indices = @transform_3, window_bounds = array<i64: 2, 512>}]} {
    %c0_i32 = arith.constant 0 : i32
    %0 = arith.cmpi eq, %arg0, %c0_i32 : i32
    %1 = arith.extui %0 : i1 to i32
    %c0_i32_0 = arith.constant 0 : i32
    %2 = arith.cmpi ne, %1, %c0_i32_0 : i32
    scf.if %2 {
      %c0_7 = arith.constant 0 : index
      %c0_8 = arith.constant 0 : index
      %13 = vector.load %arg1[%c0_7, %c0_8] : memref<2x512xf32, #tpu.memory_space<vmem>>, vector<2x512xf32>
      %c0_9 = arith.constant 0 : index
      %c0_10 = arith.constant 0 : index
      %14 = vector.load %arg3[%c0_9, %c0_10] : memref<1x512xf32, #tpu.memory_space<vmem>>, vector<1x512xf32>
      %15 = vector.broadcast %14 : vector<1x512xf32> to vector<2x512xf32>
      %16 = arith.addf %13, %15 : vector<2x512xf32>
      %c0_11 = arith.constant 0 : index
      %c0_12 = arith.constant 0 : index
      %17 = vector.load %arg4[%c0_11, %c0_12] : memref<2x512xf32, #tpu.memory_space<vmem>>, vector<2x512xf32>
      tpu.vector_store %arg4[%c0_11, %c0_12], %16 {strides = array<i32>} : memref<2x512xf32, #tpu.memory_space<vmem>>, vector<2x512xf32>,
    } else {
    }
    %c256_i32 = arith.constant 256 : i32
    %3 = arith.muli %arg0, %c256_i32 : i32
    %4 = tpu.assume_multiple %3, 256 : i32
    %c0 = arith.constant 0 : index
    %5 = arith.index_cast %4 : i32 to index
    %6 = vector.load %arg1[%c0, %5] : memref<2x512xf32, #tpu.memory_space<vmem>>, vector<2x256xf32>
    %7 = arith.truncf %6 : vector<2x256xf32> to vector<2x256xbf16>
    %c0_1 = arith.constant 0 : index
    %c0_2 = arith.constant 0 : index
    %8 = vector.load %arg4[%c0_1, %c0_2] : memref<2x512xf32, #tpu.memory_space<vmem>>, vector<2x512xf32>
    %c0_3 = arith.constant 0 : index
    %c0_4 = arith.constant 0 : index
    %9 = vector.load %arg2[%c0_3, %c0_4] : memref<256x512xbf16, #tpu.memory_space<vmem>>, vector<256x512xbf16>
    %cst = arith.constant dense<0.000000e+00> : vector<2x512xf32>
    %10 = tpu.matmul %7, %9, %cst {dimension_numbers = #tpu.dot_dimension_numbers<[1], [0], [0], [1], [0, 0, 1, 1], [], []>} : vector<2x256xbf16>, vector<256x512xbf16>, vector<2x512xf32> -> vector<2x512xf32>
    %11 = arith.addf %8, %10 : vector<2x512xf32>
    %c0_5 = arith.constant 0 : index
    %c0_6 = arith.constant 0 : index
    %12 = vector.load %arg4[%c0_5, %c0_6] : memref<2x512xf32, #tpu.memory_space<vmem>>, vector<2x512xf32>
    tpu.vector_store %arg4[%c0_5, %c0_6], %11 {strides = array<i32>} : memref<2x512xf32, #tpu.memory_space<vmem>>, vector<2x512xf32>,
    return
  }
  func.func @transform_0(%arg0: i32) -> (i32, i32) {
    %c0_i32 = arith.constant 0 : i32
    %c0_i32_0 = arith.constant 0 : i32
    %c0_i32_1 = arith.constant 0 : i32
    return %c0_i32, %c0_i32_0 : i32, i32
  }
  func.func @transform_1(%arg0: i32) -> (i32, i32) {
    %c0_i32 = arith.constant 0 : i32
    %c0_i32_0 = arith.constant 0 : i32
    return %arg0, %c0_i32 : i32, i32
  }
  func.func @transform_2(%arg0: i32) -> (i32, i32) {
    %c0_i32 = arith.constant 0 : i32
    %c0_i32_0 = arith.constant 0 : i32
    %c0_i32_1 = arith.constant 0 : i32
    return %c0_i32, %c0_i32_0 : i32, i32
  }
  func.func @transform_3(%arg0: i32) -> (i32, i32) {
    %c0_i32 = arith.constant 0 : i32
    %c0_i32_0 = arith.constant 0 : i32
    %c0_i32_1 = arith.constant 0 : i32
    return %c0_i32, %c0_i32_0 : i32, i32
  }
}

module attributes {stable_mosaic.version = 11 : i64} {
  func.func @_proj_sample_kernel(%arg0: i32, %arg1: memref<2x512xf32, #tpu.memory_space<vmem>>, %arg2: memref<256x1024xbf16, #tpu.memory_space<vmem>>, %arg3: memref<1x1024xf32, #tpu.memory_space<vmem>>, %arg4: memref<2x512xf32, #tpu.memory_space<vmem>>, %arg5: memref<2x512xf32, #tpu.memory_space<vmem>>, %arg6: memref<2x1xf32, #tpu.memory_space<vmem>>, %arg7: memref<2x1024xf32, #tpu.memory_space<vmem>>) attributes {dimension_semantics = [#tpu.dimension_semantics<arbitrary>], iteration_bounds = array<i64: 2>, scalar_prefetch = 0 : i64, scratch_operands = 1 : i64, tpu.core_type = #tpu.core_type<tc>, window_params = [{pipeline_mode = #tpu.pipeline_mode<synchronous>, transform_indices = @transform_0, window_bounds = array<i64: 2, 512>}, {transform_indices = @transform_1, window_bounds = array<i64: 256, 1024>}, {pipeline_mode = #tpu.pipeline_mode<synchronous>, transform_indices = @transform_2, window_bounds = array<i64: 1, 1024>}, {pipeline_mode = #tpu.pipeline_mode<synchronous>, transform_indices = @transform_3, window_bounds = array<i64: 2, 512>}, {pipeline_mode = #tpu.pipeline_mode<synchronous>, transform_indices = @transform_4, window_bounds = array<i64: 2, 512>}, {pipeline_mode = #tpu.pipeline_mode<synchronous>, transform_indices = @transform_5, window_bounds = array<i64: 2, 1>}]} {
    %c0_i32 = arith.constant 0 : i32
    %0 = arith.cmpi eq, %arg0, %c0_i32 : i32
    %1 = arith.extui %0 : i1 to i32
    %c0_i32_0 = arith.constant 0 : i32
    %2 = arith.cmpi ne, %1, %c0_i32_0 : i32
    scf.if %2 {
      %cst_8 = arith.constant 0.000000e+00 : f32
      %16 = vector.broadcast %cst_8 : f32 to vector<2x1024xf32>
      %c0_9 = arith.constant 0 : index
      %c0_10 = arith.constant 0 : index
      %17 = vector.load %arg7[%c0_9, %c0_10] : memref<2x1024xf32, #tpu.memory_space<vmem>>, vector<2x1024xf32>
      tpu.vector_store %arg7[%c0_9, %c0_10], %16 {strides = array<i32>} : memref<2x1024xf32, #tpu.memory_space<vmem>>, vector<2x1024xf32>,
    } else {
    }
    %c256_i32 = arith.constant 256 : i32
    %3 = arith.muli %arg0, %c256_i32 : i32
    %4 = tpu.assume_multiple %3, 256 : i32
    %c0 = arith.constant 0 : index
    %5 = arith.index_cast %4 : i32 to index
    %6 = vector.load %arg1[%c0, %5] : memref<2x512xf32, #tpu.memory_space<vmem>>, vector<2x256xf32>
    %7 = arith.truncf %6 : vector<2x256xf32> to vector<2x256xbf16>
    %c0_1 = arith.constant 0 : index
    %c0_2 = arith.constant 0 : index
    %8 = vector.load %arg7[%c0_1, %c0_2] : memref<2x1024xf32, #tpu.memory_space<vmem>>, vector<2x1024xf32>
    %c0_3 = arith.constant 0 : index
    %c0_4 = arith.constant 0 : index
    %9 = vector.load %arg2[%c0_3, %c0_4] : memref<256x1024xbf16, #tpu.memory_space<vmem>>, vector<256x1024xbf16>
    %cst = arith.constant dense<0.000000e+00> : vector<2x1024xf32>
    %10 = tpu.matmul %7, %9, %cst {dimension_numbers = #tpu.dot_dimension_numbers<[1], [0], [0], [1], [0, 0, 1, 1], [], []>} : vector<2x256xbf16>, vector<256x1024xbf16>, vector<2x1024xf32> -> vector<2x1024xf32>
    %11 = arith.addf %8, %10 : vector<2x1024xf32>
    %c0_5 = arith.constant 0 : index
    %c0_6 = arith.constant 0 : index
    %12 = vector.load %arg7[%c0_5, %c0_6] : memref<2x1024xf32, #tpu.memory_space<vmem>>, vector<2x1024xf32>
    tpu.vector_store %arg7[%c0_5, %c0_6], %11 {strides = array<i32>} : memref<2x1024xf32, #tpu.memory_space<vmem>>, vector<2x1024xf32>,
    %c1_i32 = arith.constant 1 : i32
    %13 = arith.cmpi eq, %arg0, %c1_i32 : i32
    %14 = arith.extui %13 : i1 to i32
    %c0_i32_7 = arith.constant 0 : i32
    %15 = arith.cmpi ne, %14, %c0_i32_7 : i32
    scf.if %15 {
      %c0_8 = arith.constant 0 : index
      %c0_9 = arith.constant 0 : index
      %16 = vector.load %arg7[%c0_8, %c0_9] : memref<2x1024xf32, #tpu.memory_space<vmem>>, vector<2x1024xf32>
      %c0_10 = arith.constant 0 : index
      %c0_11 = arith.constant 0 : index
      %17 = vector.load %arg3[%c0_10, %c0_11] : memref<1x1024xf32, #tpu.memory_space<vmem>>, vector<1x1024xf32>
      %18 = vector.broadcast %17 : vector<1x1024xf32> to vector<2x1024xf32>
      %19 = arith.addf %16, %18 : vector<2x1024xf32>
      %20 = vector.extract_strided_slice %19 {offsets = [0, 0], sizes = [2, 512], strides = [1, 1]} : vector<2x1024xf32> to vector<2x512xf32>
      %21 = vector.extract_strided_slice %19 {offsets = [0, 512], sizes = [2, 512], strides = [1, 1]} : vector<2x1024xf32> to vector<2x512xf32>
      %22 = math.exp %21 : vector<2x512xf32>
      %c0_12 = arith.constant 0 : index
      %c0_13 = arith.constant 0 : index
      %23 = vector.load %arg4[%c0_12, %c0_13] : memref<2x512xf32, #tpu.memory_space<vmem>>, vector<2x512xf32>
      %24 = arith.mulf %22, %23 : vector<2x512xf32>
      %25 = arith.addf %20, %24 : vector<2x512xf32>
      %c0_14 = arith.constant 0 : index
      %c0_15 = arith.constant 0 : index
      %26 = vector.load %arg5[%c0_14, %c0_15] : memref<2x512xf32, #tpu.memory_space<vmem>>, vector<2x512xf32>
      tpu.vector_store %arg5[%c0_14, %c0_15], %25 {strides = array<i32>} : memref<2x512xf32, #tpu.memory_space<vmem>>, vector<2x512xf32>,
      %cst_16 = arith.constant -5.000000e-01 : f32
      %27 = vector.broadcast %cst_16 : f32 to vector<2x512xf32>
      %28 = arith.mulf %27, %23 : vector<2x512xf32>
      %29 = arith.mulf %28, %23 : vector<2x512xf32>
      %30 = arith.subf %29, %21 : vector<2x512xf32>
      %cst_17 = arith.constant 0.918938517 : f32
      %31 = vector.broadcast %cst_17 : f32 to vector<2x512xf32>
      %32 = arith.subf %30, %31 : vector<2x512xf32>
      %cst_18 = arith.constant dense<0.000000e+00> : vector<2xf32>
      %33 = vector.multi_reduction <add>, %32, %cst_18 [1] : vector<2x512xf32> to vector<2xf32>
      %34 = vector.shape_cast %33 : vector<2xf32> to vector<2x1xf32>
      %c0_19 = arith.constant 0 : index
      %c0_20 = arith.constant 0 : index
      %35 = vector.load %arg6[%c0_19, %c0_20] : memref<2x1xf32, #tpu.memory_space<vmem>>, vector<2x1xf32>
      tpu.vector_store %arg6[%c0_19, %c0_20], %34 {strides = array<i32>} : memref<2x1xf32, #tpu.memory_space<vmem>>, vector<2x1xf32>,
    } else {
    }
    return
  }
  func.func @transform_0(%arg0: i32) -> (i32, i32) {
    %c0_i32 = arith.constant 0 : i32
    %c0_i32_0 = arith.constant 0 : i32
    %c0_i32_1 = arith.constant 0 : i32
    return %c0_i32, %c0_i32_0 : i32, i32
  }
  func.func @transform_1(%arg0: i32) -> (i32, i32) {
    %c0_i32 = arith.constant 0 : i32
    %c0_i32_0 = arith.constant 0 : i32
    return %arg0, %c0_i32 : i32, i32
  }
  func.func @transform_2(%arg0: i32) -> (i32, i32) {
    %c0_i32 = arith.constant 0 : i32
    %c0_i32_0 = arith.constant 0 : i32
    %c0_i32_1 = arith.constant 0 : i32
    return %c0_i32, %c0_i32_0 : i32, i32
  }
  func.func @transform_3(%arg0: i32) -> (i32, i32) {
    %c0_i32 = arith.constant 0 : i32
    %c0_i32_0 = arith.constant 0 : i32
    %c0_i32_1 = arith.constant 0 : i32
    return %c0_i32, %c0_i32_0 : i32, i32
  }
  func.func @transform_4(%arg0: i32) -> (i32, i32) {
    %c0_i32 = arith.constant 0 : i32
    %c0_i32_0 = arith.constant 0 : i32
    %c0_i32_1 = arith.constant 0 : i32
    return %c0_i32, %c0_i32_0 : i32, i32
  }
  func.func @transform_5(%arg0: i32) -> (i32, i32) {
    %c0_i32 = arith.constant 0 : i32
    %c0_i32_0 = arith.constant 0 : i32
    %c0_i32_1 = arith.constant 0 : i32
    return %c0_i32, %c0_i32_0 : i32, i32
  }
}

module attributes {stable_mosaic.version = 11 : i64} {
  func.func @_conv_stack_kernel(%arg0: i32, %arg1: memref<1x2x8x256xf32, #tpu.memory_space<vmem>>, %arg2: memref<4x9x8x8xf32, #tpu.memory_space<vmem>>, %arg3: memref<4x8x1xf32, #tpu.memory_space<vmem>>, %arg4: memref<4x8x1xf32, #tpu.memory_space<vmem>>, %arg5: memref<1x8x256xf32, #tpu.memory_space<vmem>>) attributes {dimension_semantics = [#tpu.dimension_semantics<parallel>], iteration_bounds = array<i64: 2>, scalar_prefetch = 0 : i64, scratch_operands = 0 : i64, tpu.core_type = #tpu.core_type<tc>, window_params = [{transform_indices = @transform_0, window_bounds = array<i64: 1, 2, 8, 256>}, {pipeline_mode = #tpu.pipeline_mode<synchronous>, transform_indices = @transform_1, window_bounds = array<i64: 4, 9, 8, 8>}, {pipeline_mode = #tpu.pipeline_mode<synchronous>, transform_indices = @transform_2, window_bounds = array<i64: 4, 8, 1>}, {pipeline_mode = #tpu.pipeline_mode<synchronous>, transform_indices = @transform_3, window_bounds = array<i64: 4, 8, 1>}, {transform_indices = @transform_4, window_bounds = array<i64: 1, 8, 256>}]} {
    %c0 = arith.constant 0 : index
    %c0_0 = arith.constant 0 : index
    %c0_1 = arith.constant 0 : index
    %c0_2 = arith.constant 0 : index
    %0 = vector.load %arg1[%c0, %c0_0, %c0_1, %c0_2] : memref<1x2x8x256xf32, #tpu.memory_space<vmem>>, vector<1x1x8x256xf32>
    %1 = vector.shape_cast %0 : vector<1x1x8x256xf32> to vector<8x256xf32>
    %c0_3 = arith.constant 0 : index
    %c0_4 = arith.constant 0 : index
    %c0_5 = arith.constant 0 : index
    %2 = vector.load %arg3[%c0_3, %c0_4, %c0_5] : memref<4x8x1xf32, #tpu.memory_space<vmem>>, vector<1x8x1xf32>
    %3 = vector.shape_cast %2 : vector<1x8x1xf32> to vector<8x1xf32>
    %c0_6 = arith.constant 0 : index
    %c0_7 = arith.constant 0 : index
    %c0_8 = arith.constant 0 : index
    %4 = vector.load %arg4[%c0_6, %c0_7, %c0_8] : memref<4x8x1xf32, #tpu.memory_space<vmem>>, vector<1x8x1xf32>
    %5 = vector.shape_cast %4 : vector<1x8x1xf32> to vector<8x1xf32>
    %cst = arith.constant 0.000000e+00 : f32
    %6 = vector.broadcast %cst : f32 to vector<8x256xf32>
    %c0_9 = arith.constant 0 : index
    %c0_10 = arith.constant 0 : index
    %c0_11 = arith.constant 0 : index
    %c0_12 = arith.constant 0 : index
    %7 = vector.load %arg2[%c0_9, %c0_10, %c0_11, %c0_12] : memref<4x9x8x8xf32, #tpu.memory_space<vmem>>, vector<1x1x8x8xf32>
    %8 = vector.shape_cast %7 : vector<1x1x8x8xf32> to vector<8x8xf32>
    %cst_13 = arith.constant dense<0.000000e+00> : vector<8x256xf32>
    %9 = tpu.matmul %8, %1, %cst_13 {dimension_numbers = #tpu.dot_dimension_numbers<[1], [0], [0], [1], [0, 0, 1, 1], [], []>} : vector<8x8xf32>, vector<8x256xf32>, vector<8x256xf32> -> vector<8x256xf32>
    %10 = arith.addf %6, %9 : vector<8x256xf32>
    %c255_i32 = arith.constant 255 : i32
    %11 = tpu.dynamic_rotate %1 by %c255_i32 dim 1 : vector<8x256xf32>, i32 -> vector<8x256xf32>
    %c0_14 = arith.constant 0 : index
    %c1 = arith.constant 1 : index
    %c0_15 = arith.constant 0 : index
    %c0_16 = arith.constant 0 : index
    %12 = vector.load %arg2[%c0_14, %c1, %c0_15, %c0_16] : memref<4x9x8x8xf32, #tpu.memory_space<vmem>>, vector<1x1x8x8xf32>
    %13 = vector.shape_cast %12 : vector<1x1x8x8xf32> to vector<8x8xf32>
    %cst_17 = arith.constant dense<0.000000e+00> : vector<8x256xf32>
    %14 = tpu.matmul %13, %11, %cst_17 {dimension_numbers = #tpu.dot_dimension_numbers<[1], [0], [0], [1], [0, 0, 1, 1], [], []>} : vector<8x8xf32>, vector<8x256xf32>, vector<8x256xf32> -> vector<8x256xf32>
    %15 = arith.addf %10, %14 : vector<8x256xf32>
    %c254_i32 = arith.constant 254 : i32
    %16 = tpu.dynamic_rotate %1 by %c254_i32 dim 1 : vector<8x256xf32>, i32 -> vector<8x256xf32>
    %c0_18 = arith.constant 0 : index
    %c2 = arith.constant 2 : index
    %c0_19 = arith.constant 0 : index
    %c0_20 = arith.constant 0 : index
    %17 = vector.load %arg2[%c0_18, %c2, %c0_19, %c0_20] : memref<4x9x8x8xf32, #tpu.memory_space<vmem>>, vector<1x1x8x8xf32>
    %18 = vector.shape_cast %17 : vector<1x1x8x8xf32> to vector<8x8xf32>
    %cst_21 = arith.constant dense<0.000000e+00> : vector<8x256xf32>
    %19 = tpu.matmul %18, %16, %cst_21 {dimension_numbers = #tpu.dot_dimension_numbers<[1], [0], [0], [1], [0, 0, 1, 1], [], []>} : vector<8x8xf32>, vector<8x256xf32>, vector<8x256xf32> -> vector<8x256xf32>
    %20 = arith.addf %15, %19 : vector<8x256xf32>
    %c240_i32 = arith.constant 240 : i32
    %21 = tpu.dynamic_rotate %1 by %c240_i32 dim 1 : vector<8x256xf32>, i32 -> vector<8x256xf32>
    %c0_22 = arith.constant 0 : index
    %c3 = arith.constant 3 : index
    %c0_23 = arith.constant 0 : index
    %c0_24 = arith.constant 0 : index
    %22 = vector.load %arg2[%c0_22, %c3, %c0_23, %c0_24] : memref<4x9x8x8xf32, #tpu.memory_space<vmem>>, vector<1x1x8x8xf32>
    %23 = vector.shape_cast %22 : vector<1x1x8x8xf32> to vector<8x8xf32>
    %cst_25 = arith.constant dense<0.000000e+00> : vector<8x256xf32>
    %24 = tpu.matmul %23, %21, %cst_25 {dimension_numbers = #tpu.dot_dimension_numbers<[1], [0], [0], [1], [0, 0, 1, 1], [], []>} : vector<8x8xf32>, vector<8x256xf32>, vector<8x256xf32> -> vector<8x256xf32>
    %25 = arith.addf %20, %24 : vector<8x256xf32>
    %c239_i32 = arith.constant 239 : i32
    %26 = tpu.dynamic_rotate %1 by %c239_i32 dim 1 : vector<8x256xf32>, i32 -> vector<8x256xf32>
    %c0_26 = arith.constant 0 : index
    %c4 = arith.constant 4 : index
    %c0_27 = arith.constant 0 : index
    %c0_28 = arith.constant 0 : index
    %27 = vector.load %arg2[%c0_26, %c4, %c0_27, %c0_28] : memref<4x9x8x8xf32, #tpu.memory_space<vmem>>, vector<1x1x8x8xf32>
    %28 = vector.shape_cast %27 : vector<1x1x8x8xf32> to vector<8x8xf32>
    %cst_29 = arith.constant dense<0.000000e+00> : vector<8x256xf32>
    %29 = tpu.matmul %28, %26, %cst_29 {dimension_numbers = #tpu.dot_dimension_numbers<[1], [0], [0], [1], [0, 0, 1, 1], [], []>} : vector<8x8xf32>, vector<8x256xf32>, vector<8x256xf32> -> vector<8x256xf32>
    %30 = arith.addf %25, %29 : vector<8x256xf32>
    %c238_i32 = arith.constant 238 : i32
    %31 = tpu.dynamic_rotate %1 by %c238_i32 dim 1 : vector<8x256xf32>, i32 -> vector<8x256xf32>
    %c0_30 = arith.constant 0 : index
    %c5 = arith.constant 5 : index
    %c0_31 = arith.constant 0 : index
    %c0_32 = arith.constant 0 : index
    %32 = vector.load %arg2[%c0_30, %c5, %c0_31, %c0_32] : memref<4x9x8x8xf32, #tpu.memory_space<vmem>>, vector<1x1x8x8xf32>
    %33 = vector.shape_cast %32 : vector<1x1x8x8xf32> to vector<8x8xf32>
    %cst_33 = arith.constant dense<0.000000e+00> : vector<8x256xf32>
    %34 = tpu.matmul %33, %31, %cst_33 {dimension_numbers = #tpu.dot_dimension_numbers<[1], [0], [0], [1], [0, 0, 1, 1], [], []>} : vector<8x8xf32>, vector<8x256xf32>, vector<8x256xf32> -> vector<8x256xf32>
    %35 = arith.addf %30, %34 : vector<8x256xf32>
    %c224_i32 = arith.constant 224 : i32
    %36 = tpu.dynamic_rotate %1 by %c224_i32 dim 1 : vector<8x256xf32>, i32 -> vector<8x256xf32>
    %c0_34 = arith.constant 0 : index
    %c6 = arith.constant 6 : index
    %c0_35 = arith.constant 0 : index
    %c0_36 = arith.constant 0 : index
    %37 = vector.load %arg2[%c0_34, %c6, %c0_35, %c0_36] : memref<4x9x8x8xf32, #tpu.memory_space<vmem>>, vector<1x1x8x8xf32>
    %38 = vector.shape_cast %37 : vector<1x1x8x8xf32> to vector<8x8xf32>
    %cst_37 = arith.constant dense<0.000000e+00> : vector<8x256xf32>
    %39 = tpu.matmul %38, %36, %cst_37 {dimension_numbers = #tpu.dot_dimension_numbers<[1], [0], [0], [1], [0, 0, 1, 1], [], []>} : vector<8x8xf32>, vector<8x256xf32>, vector<8x256xf32> -> vector<8x256xf32>
    %40 = arith.addf %35, %39 : vector<8x256xf32>
    %c223_i32 = arith.constant 223 : i32
    %41 = tpu.dynamic_rotate %1 by %c223_i32 dim 1 : vector<8x256xf32>, i32 -> vector<8x256xf32>
    %c0_38 = arith.constant 0 : index
    %c7 = arith.constant 7 : index
    %c0_39 = arith.constant 0 : index
    %c0_40 = arith.constant 0 : index
    %42 = vector.load %arg2[%c0_38, %c7, %c0_39, %c0_40] : memref<4x9x8x8xf32, #tpu.memory_space<vmem>>, vector<1x1x8x8xf32>
    %43 = vector.shape_cast %42 : vector<1x1x8x8xf32> to vector<8x8xf32>
    %cst_41 = arith.constant dense<0.000000e+00> : vector<8x256xf32>
    %44 = tpu.matmul %43, %41, %cst_41 {dimension_numbers = #tpu.dot_dimension_numbers<[1], [0], [0], [1], [0, 0, 1, 1], [], []>} : vector<8x8xf32>, vector<8x256xf32>, vector<8x256xf32> -> vector<8x256xf32>
    %45 = arith.addf %40, %44 : vector<8x256xf32>
    %c222_i32 = arith.constant 222 : i32
    %46 = tpu.dynamic_rotate %1 by %c222_i32 dim 1 : vector<8x256xf32>, i32 -> vector<8x256xf32>
    %c0_42 = arith.constant 0 : index
    %c8 = arith.constant 8 : index
    %c0_43 = arith.constant 0 : index
    %c0_44 = arith.constant 0 : index
    %47 = vector.load %arg2[%c0_42, %c8, %c0_43, %c0_44] : memref<4x9x8x8xf32, #tpu.memory_space<vmem>>, vector<1x1x8x8xf32>
    %48 = vector.shape_cast %47 : vector<1x1x8x8xf32> to vector<8x8xf32>
    %cst_45 = arith.constant dense<0.000000e+00> : vector<8x256xf32>
    %49 = tpu.matmul %48, %46, %cst_45 {dimension_numbers = #tpu.dot_dimension_numbers<[1], [0], [0], [1], [0, 0, 1, 1], [], []>} : vector<8x8xf32>, vector<8x256xf32>, vector<8x256xf32> -> vector<8x256xf32>
    %50 = arith.addf %45, %49 : vector<8x256xf32>
    %51 = vector.broadcast %3 : vector<8x1xf32> to vector<8x256xf32>
    %52 = arith.mulf %50, %51 : vector<8x256xf32>
    %53 = vector.broadcast %5 : vector<8x1xf32> to vector<8x256xf32>
    %54 = arith.addf %52, %53 : vector<8x256xf32>
    %c1_46 = arith.constant 1 : index
    %c0_47 = arith.constant 0 : index
    %c0_48 = arith.constant 0 : index
    %55 = vector.load %arg3[%c1_46, %c0_47, %c0_48] : memref<4x8x1xf32, #tpu.memory_space<vmem>>, vector<1x8x1xf32>
    %56 = vector.shape_cast %55 : vector<1x8x1xf32> to vector<8x1xf32>
    %c1_49 = arith.constant 1 : index
    %c0_50 = arith.constant 0 : index
    %c0_51 = arith.constant 0 : index
    %57 = vector.load %arg4[%c1_49, %c0_50, %c0_51] : memref<4x8x1xf32, #tpu.memory_space<vmem>>, vector<1x8x1xf32>
    %58 = vector.shape_cast %57 : vector<1x8x1xf32> to vector<8x1xf32>
    %cst_52 = arith.constant 0.000000e+00 : f32
    %59 = vector.broadcast %cst_52 : f32 to vector<8x256xf32>
    %c1_53 = arith.constant 1 : index
    %c0_54 = arith.constant 0 : index
    %c0_55 = arith.constant 0 : index
    %c0_56 = arith.constant 0 : index
    %60 = vector.load %arg2[%c1_53, %c0_54, %c0_55, %c0_56] : memref<4x9x8x8xf32, #tpu.memory_space<vmem>>, vector<1x1x8x8xf32>
    %61 = vector.shape_cast %60 : vector<1x1x8x8xf32> to vector<8x8xf32>
    %cst_57 = arith.constant dense<0.000000e+00> : vector<8x256xf32>
    %62 = tpu.matmul %61, %54, %cst_57 {dimension_numbers = #tpu.dot_dimension_numbers<[1], [0], [0], [1], [0, 0, 1, 1], [], []>} : vector<8x8xf32>, vector<8x256xf32>, vector<8x256xf32> -> vector<8x256xf32>
    %63 = arith.addf %59, %62 : vector<8x256xf32>
    %c255_i32_58 = arith.constant 255 : i32
    %64 = tpu.dynamic_rotate %54 by %c255_i32_58 dim 1 : vector<8x256xf32>, i32 -> vector<8x256xf32>
    %c1_59 = arith.constant 1 : index
    %c1_60 = arith.constant 1 : index
    %c0_61 = arith.constant 0 : index
    %c0_62 = arith.constant 0 : index
    %65 = vector.load %arg2[%c1_59, %c1_60, %c0_61, %c0_62] : memref<4x9x8x8xf32, #tpu.memory_space<vmem>>, vector<1x1x8x8xf32>
    %66 = vector.shape_cast %65 : vector<1x1x8x8xf32> to vector<8x8xf32>
    %cst_63 = arith.constant dense<0.000000e+00> : vector<8x256xf32>
    %67 = tpu.matmul %66, %64, %cst_63 {dimension_numbers = #tpu.dot_dimension_numbers<[1], [0], [0], [1], [0, 0, 1, 1], [], []>} : vector<8x8xf32>, vector<8x256xf32>, vector<8x256xf32> -> vector<8x256xf32>
    %68 = arith.addf %63, %67 : vector<8x256xf32>
    %c254_i32_64 = arith.constant 254 : i32
    %69 = tpu.dynamic_rotate %54 by %c254_i32_64 dim 1 : vector<8x256xf32>, i32 -> vector<8x256xf32>
    %c1_65 = arith.constant 1 : index
    %c2_66 = arith.constant 2 : index
    %c0_67 = arith.constant 0 : index
    %c0_68 = arith.constant 0 : index
    %70 = vector.load %arg2[%c1_65, %c2_66, %c0_67, %c0_68] : memref<4x9x8x8xf32, #tpu.memory_space<vmem>>, vector<1x1x8x8xf32>
    %71 = vector.shape_cast %70 : vector<1x1x8x8xf32> to vector<8x8xf32>
    %cst_69 = arith.constant dense<0.000000e+00> : vector<8x256xf32>
    %72 = tpu.matmul %71, %69, %cst_69 {dimension_numbers = #tpu.dot_dimension_numbers<[1], [0], [0], [1], [0, 0, 1, 1], [], []>} : vector<8x8xf32>, vector<8x256xf32>, vector<8x256xf32> -> vector<8x256xf32>
    %73 = arith.addf %68, %72 : vector<8x256xf32>
    %c240_i32_70 = arith.constant 240 : i32
    %74 = tpu.dynamic_rotate %54 by %c240_i32_70 dim 1 : vector<8x256xf32>, i32 -> vector<8x256xf32>
    %c1_71 = arith.constant 1 : index
    %c3_72 = arith.constant 3 : index
    %c0_73 = arith.constant 0 : index
    %c0_74 = arith.constant 0 : index
    %75 = vector.load %arg2[%c1_71, %c3_72, %c0_73, %c0_74] : memref<4x9x8x8xf32, #tpu.memory_space<vmem>>, vector<1x1x8x8xf32>
    %76 = vector.shape_cast %75 : vector<1x1x8x8xf32> to vector<8x8xf32>
    %cst_75 = arith.constant dense<0.000000e+00> : vector<8x256xf32>
    %77 = tpu.matmul %76, %74, %cst_75 {dimension_numbers = #tpu.dot_dimension_numbers<[1], [0], [0], [1], [0, 0, 1, 1], [], []>} : vector<8x8xf32>, vector<8x256xf32>, vector<8x256xf32> -> vector<8x256xf32>
    %78 = arith.addf %73, %77 : vector<8x256xf32>
    %c239_i32_76 = arith.constant 239 : i32
    %79 = tpu.dynamic_rotate %54 by %c239_i32_76 dim 1 : vector<8x256xf32>, i32 -> vector<8x256xf32>
    %c1_77 = arith.constant 1 : index
    %c4_78 = arith.constant 4 : index
    %c0_79 = arith.constant 0 : index
    %c0_80 = arith.constant 0 : index
    %80 = vector.load %arg2[%c1_77, %c4_78, %c0_79, %c0_80] : memref<4x9x8x8xf32, #tpu.memory_space<vmem>>, vector<1x1x8x8xf32>
    %81 = vector.shape_cast %80 : vector<1x1x8x8xf32> to vector<8x8xf32>
    %cst_81 = arith.constant dense<0.000000e+00> : vector<8x256xf32>
    %82 = tpu.matmul %81, %79, %cst_81 {dimension_numbers = #tpu.dot_dimension_numbers<[1], [0], [0], [1], [0, 0, 1, 1], [], []>} : vector<8x8xf32>, vector<8x256xf32>, vector<8x256xf32> -> vector<8x256xf32>
    %83 = arith.addf %78, %82 : vector<8x256xf32>
    %c238_i32_82 = arith.constant 238 : i32
    %84 = tpu.dynamic_rotate %54 by %c238_i32_82 dim 1 : vector<8x256xf32>, i32 -> vector<8x256xf32>
    %c1_83 = arith.constant 1 : index
    %c5_84 = arith.constant 5 : index
    %c0_85 = arith.constant 0 : index
    %c0_86 = arith.constant 0 : index
    %85 = vector.load %arg2[%c1_83, %c5_84, %c0_85, %c0_86] : memref<4x9x8x8xf32, #tpu.memory_space<vmem>>, vector<1x1x8x8xf32>
    %86 = vector.shape_cast %85 : vector<1x1x8x8xf32> to vector<8x8xf32>
    %cst_87 = arith.constant dense<0.000000e+00> : vector<8x256xf32>
    %87 = tpu.matmul %86, %84, %cst_87 {dimension_numbers = #tpu.dot_dimension_numbers<[1], [0], [0], [1], [0, 0, 1, 1], [], []>} : vector<8x8xf32>, vector<8x256xf32>, vector<8x256xf32> -> vector<8x256xf32>
    %88 = arith.addf %83, %87 : vector<8x256xf32>
    %c224_i32_88 = arith.constant 224 : i32
    %89 = tpu.dynamic_rotate %54 by %c224_i32_88 dim 1 : vector<8x256xf32>, i32 -> vector<8x256xf32>
    %c1_89 = arith.constant 1 : index
    %c6_90 = arith.constant 6 : index
    %c0_91 = arith.constant 0 : index
    %c0_92 = arith.constant 0 : index
    %90 = vector.load %arg2[%c1_89, %c6_90, %c0_91, %c0_92] : memref<4x9x8x8xf32, #tpu.memory_space<vmem>>, vector<1x1x8x8xf32>
    %91 = vector.shape_cast %90 : vector<1x1x8x8xf32> to vector<8x8xf32>
    %cst_93 = arith.constant dense<0.000000e+00> : vector<8x256xf32>
    %92 = tpu.matmul %91, %89, %cst_93 {dimension_numbers = #tpu.dot_dimension_numbers<[1], [0], [0], [1], [0, 0, 1, 1], [], []>} : vector<8x8xf32>, vector<8x256xf32>, vector<8x256xf32> -> vector<8x256xf32>
    %93 = arith.addf %88, %92 : vector<8x256xf32>
    %c223_i32_94 = arith.constant 223 : i32
    %94 = tpu.dynamic_rotate %54 by %c223_i32_94 dim 1 : vector<8x256xf32>, i32 -> vector<8x256xf32>
    %c1_95 = arith.constant 1 : index
    %c7_96 = arith.constant 7 : index
    %c0_97 = arith.constant 0 : index
    %c0_98 = arith.constant 0 : index
    %95 = vector.load %arg2[%c1_95, %c7_96, %c0_97, %c0_98] : memref<4x9x8x8xf32, #tpu.memory_space<vmem>>, vector<1x1x8x8xf32>
    %96 = vector.shape_cast %95 : vector<1x1x8x8xf32> to vector<8x8xf32>
    %cst_99 = arith.constant dense<0.000000e+00> : vector<8x256xf32>
    %97 = tpu.matmul %96, %94, %cst_99 {dimension_numbers = #tpu.dot_dimension_numbers<[1], [0], [0], [1], [0, 0, 1, 1], [], []>} : vector<8x8xf32>, vector<8x256xf32>, vector<8x256xf32> -> vector<8x256xf32>
    %98 = arith.addf %93, %97 : vector<8x256xf32>
    %c222_i32_100 = arith.constant 222 : i32
    %99 = tpu.dynamic_rotate %54 by %c222_i32_100 dim 1 : vector<8x256xf32>, i32 -> vector<8x256xf32>
    %c1_101 = arith.constant 1 : index
    %c8_102 = arith.constant 8 : index
    %c0_103 = arith.constant 0 : index
    %c0_104 = arith.constant 0 : index
    %100 = vector.load %arg2[%c1_101, %c8_102, %c0_103, %c0_104] : memref<4x9x8x8xf32, #tpu.memory_space<vmem>>, vector<1x1x8x8xf32>
    %101 = vector.shape_cast %100 : vector<1x1x8x8xf32> to vector<8x8xf32>
    %cst_105 = arith.constant dense<0.000000e+00> : vector<8x256xf32>
    %102 = tpu.matmul %101, %99, %cst_105 {dimension_numbers = #tpu.dot_dimension_numbers<[1], [0], [0], [1], [0, 0, 1, 1], [], []>} : vector<8x8xf32>, vector<8x256xf32>, vector<8x256xf32> -> vector<8x256xf32>
    %103 = arith.addf %98, %102 : vector<8x256xf32>
    %104 = vector.broadcast %56 : vector<8x1xf32> to vector<8x256xf32>
    %105 = arith.mulf %103, %104 : vector<8x256xf32>
    %106 = vector.broadcast %58 : vector<8x1xf32> to vector<8x256xf32>
    %107 = arith.addf %105, %106 : vector<8x256xf32>
    %c2_106 = arith.constant 2 : index
    %c0_107 = arith.constant 0 : index
    %c0_108 = arith.constant 0 : index
    %108 = vector.load %arg3[%c2_106, %c0_107, %c0_108] : memref<4x8x1xf32, #tpu.memory_space<vmem>>, vector<1x8x1xf32>
    %109 = vector.shape_cast %108 : vector<1x8x1xf32> to vector<8x1xf32>
    %c2_109 = arith.constant 2 : index
    %c0_110 = arith.constant 0 : index
    %c0_111 = arith.constant 0 : index
    %110 = vector.load %arg4[%c2_109, %c0_110, %c0_111] : memref<4x8x1xf32, #tpu.memory_space<vmem>>, vector<1x8x1xf32>
    %111 = vector.shape_cast %110 : vector<1x8x1xf32> to vector<8x1xf32>
    %cst_112 = arith.constant 0.000000e+00 : f32
    %112 = vector.broadcast %cst_112 : f32 to vector<8x256xf32>
    %c2_113 = arith.constant 2 : index
    %c0_114 = arith.constant 0 : index
    %c0_115 = arith.constant 0 : index
    %c0_116 = arith.constant 0 : index
    %113 = vector.load %arg2[%c2_113, %c0_114, %c0_115, %c0_116] : memref<4x9x8x8xf32, #tpu.memory_space<vmem>>, vector<1x1x8x8xf32>
    %114 = vector.shape_cast %113 : vector<1x1x8x8xf32> to vector<8x8xf32>
    %cst_117 = arith.constant dense<0.000000e+00> : vector<8x256xf32>
    %115 = tpu.matmul %114, %107, %cst_117 {dimension_numbers = #tpu.dot_dimension_numbers<[1], [0], [0], [1], [0, 0, 1, 1], [], []>} : vector<8x8xf32>, vector<8x256xf32>, vector<8x256xf32> -> vector<8x256xf32>
    %116 = arith.addf %112, %115 : vector<8x256xf32>
    %c255_i32_118 = arith.constant 255 : i32
    %117 = tpu.dynamic_rotate %107 by %c255_i32_118 dim 1 : vector<8x256xf32>, i32 -> vector<8x256xf32>
    %c2_119 = arith.constant 2 : index
    %c1_120 = arith.constant 1 : index
    %c0_121 = arith.constant 0 : index
    %c0_122 = arith.constant 0 : index
    %118 = vector.load %arg2[%c2_119, %c1_120, %c0_121, %c0_122] : memref<4x9x8x8xf32, #tpu.memory_space<vmem>>, vector<1x1x8x8xf32>
    %119 = vector.shape_cast %118 : vector<1x1x8x8xf32> to vector<8x8xf32>
    %cst_123 = arith.constant dense<0.000000e+00> : vector<8x256xf32>
    %120 = tpu.matmul %119, %117, %cst_123 {dimension_numbers = #tpu.dot_dimension_numbers<[1], [0], [0], [1], [0, 0, 1, 1], [], []>} : vector<8x8xf32>, vector<8x256xf32>, vector<8x256xf32> -> vector<8x256xf32>
    %121 = arith.addf %116, %120 : vector<8x256xf32>
    %c254_i32_124 = arith.constant 254 : i32
    %122 = tpu.dynamic_rotate %107 by %c254_i32_124 dim 1 : vector<8x256xf32>, i32 -> vector<8x256xf32>
    %c2_125 = arith.constant 2 : index
    %c2_126 = arith.constant 2 : index
    %c0_127 = arith.constant 0 : index
    %c0_128 = arith.constant 0 : index
    %123 = vector.load %arg2[%c2_125, %c2_126, %c0_127, %c0_128] : memref<4x9x8x8xf32, #tpu.memory_space<vmem>>, vector<1x1x8x8xf32>
    %124 = vector.shape_cast %123 : vector<1x1x8x8xf32> to vector<8x8xf32>
    %cst_129 = arith.constant dense<0.000000e+00> : vector<8x256xf32>
    %125 = tpu.matmul %124, %122, %cst_129 {dimension_numbers = #tpu.dot_dimension_numbers<[1], [0], [0], [1], [0, 0, 1, 1], [], []>} : vector<8x8xf32>, vector<8x256xf32>, vector<8x256xf32> -> vector<8x256xf32>
    %126 = arith.addf %121, %125 : vector<8x256xf32>
    %c240_i32_130 = arith.constant 240 : i32
    %127 = tpu.dynamic_rotate %107 by %c240_i32_130 dim 1 : vector<8x256xf32>, i32 -> vector<8x256xf32>
    %c2_131 = arith.constant 2 : index
    %c3_132 = arith.constant 3 : index
    %c0_133 = arith.constant 0 : index
    %c0_134 = arith.constant 0 : index
    %128 = vector.load %arg2[%c2_131, %c3_132, %c0_133, %c0_134] : memref<4x9x8x8xf32, #tpu.memory_space<vmem>>, vector<1x1x8x8xf32>
    %129 = vector.shape_cast %128 : vector<1x1x8x8xf32> to vector<8x8xf32>
    %cst_135 = arith.constant dense<0.000000e+00> : vector<8x256xf32>
    %130 = tpu.matmul %129, %127, %cst_135 {dimension_numbers = #tpu.dot_dimension_numbers<[1], [0], [0], [1], [0, 0, 1, 1], [], []>} : vector<8x8xf32>, vector<8x256xf32>, vector<8x256xf32> -> vector<8x256xf32>
    %131 = arith.addf %126, %130 : vector<8x256xf32>
    %c239_i32_136 = arith.constant 239 : i32
    %132 = tpu.dynamic_rotate %107 by %c239_i32_136 dim 1 : vector<8x256xf32>, i32 -> vector<8x256xf32>
    %c2_137 = arith.constant 2 : index
    %c4_138 = arith.constant 4 : index
    %c0_139 = arith.constant 0 : index
    %c0_140 = arith.constant 0 : index
    %133 = vector.load %arg2[%c2_137, %c4_138, %c0_139, %c0_140] : memref<4x9x8x8xf32, #tpu.memory_space<vmem>>, vector<1x1x8x8xf32>
    %134 = vector.shape_cast %133 : vector<1x1x8x8xf32> to vector<8x8xf32>
    %cst_141 = arith.constant dense<0.000000e+00> : vector<8x256xf32>
    %135 = tpu.matmul %134, %132, %cst_141 {dimension_numbers = #tpu.dot_dimension_numbers<[1], [0], [0], [1], [0, 0, 1, 1], [], []>} : vector<8x8xf32>, vector<8x256xf32>, vector<8x256xf32> -> vector<8x256xf32>
    %136 = arith.addf %131, %135 : vector<8x256xf32>
    %c238_i32_142 = arith.constant 238 : i32
    %137 = tpu.dynamic_rotate %107 by %c238_i32_142 dim 1 : vector<8x256xf32>, i32 -> vector<8x256xf32>
    %c2_143 = arith.constant 2 : index
    %c5_144 = arith.constant 5 : index
    %c0_145 = arith.constant 0 : index
    %c0_146 = arith.constant 0 : index
    %138 = vector.load %arg2[%c2_143, %c5_144, %c0_145, %c0_146] : memref<4x9x8x8xf32, #tpu.memory_space<vmem>>, vector<1x1x8x8xf32>
    %139 = vector.shape_cast %138 : vector<1x1x8x8xf32> to vector<8x8xf32>
    %cst_147 = arith.constant dense<0.000000e+00> : vector<8x256xf32>
    %140 = tpu.matmul %139, %137, %cst_147 {dimension_numbers = #tpu.dot_dimension_numbers<[1], [0], [0], [1], [0, 0, 1, 1], [], []>} : vector<8x8xf32>, vector<8x256xf32>, vector<8x256xf32> -> vector<8x256xf32>
    %141 = arith.addf %136, %140 : vector<8x256xf32>
    %c224_i32_148 = arith.constant 224 : i32
    %142 = tpu.dynamic_rotate %107 by %c224_i32_148 dim 1 : vector<8x256xf32>, i32 -> vector<8x256xf32>
    %c2_149 = arith.constant 2 : index
    %c6_150 = arith.constant 6 : index
    %c0_151 = arith.constant 0 : index
    %c0_152 = arith.constant 0 : index
    %143 = vector.load %arg2[%c2_149, %c6_150, %c0_151, %c0_152] : memref<4x9x8x8xf32, #tpu.memory_space<vmem>>, vector<1x1x8x8xf32>
    %144 = vector.shape_cast %143 : vector<1x1x8x8xf32> to vector<8x8xf32>
    %cst_153 = arith.constant dense<0.000000e+00> : vector<8x256xf32>
    %145 = tpu.matmul %144, %142, %cst_153 {dimension_numbers = #tpu.dot_dimension_numbers<[1], [0], [0], [1], [0, 0, 1, 1], [], []>} : vector<8x8xf32>, vector<8x256xf32>, vector<8x256xf32> -> vector<8x256xf32>
    %146 = arith.addf %141, %145 : vector<8x256xf32>
    %c223_i32_154 = arith.constant 223 : i32
    %147 = tpu.dynamic_rotate %107 by %c223_i32_154 dim 1 : vector<8x256xf32>, i32 -> vector<8x256xf32>
    %c2_155 = arith.constant 2 : index
    %c7_156 = arith.constant 7 : index
    %c0_157 = arith.constant 0 : index
    %c0_158 = arith.constant 0 : index
    %148 = vector.load %arg2[%c2_155, %c7_156, %c0_157, %c0_158] : memref<4x9x8x8xf32, #tpu.memory_space<vmem>>, vector<1x1x8x8xf32>
    %149 = vector.shape_cast %148 : vector<1x1x8x8xf32> to vector<8x8xf32>
    %cst_159 = arith.constant dense<0.000000e+00> : vector<8x256xf32>
    %150 = tpu.matmul %149, %147, %cst_159 {dimension_numbers = #tpu.dot_dimension_numbers<[1], [0], [0], [1], [0, 0, 1, 1], [], []>} : vector<8x8xf32>, vector<8x256xf32>, vector<8x256xf32> -> vector<8x256xf32>
    %151 = arith.addf %146, %150 : vector<8x256xf32>
    %c222_i32_160 = arith.constant 222 : i32
    %152 = tpu.dynamic_rotate %107 by %c222_i32_160 dim 1 : vector<8x256xf32>, i32 -> vector<8x256xf32>
    %c2_161 = arith.constant 2 : index
    %c8_162 = arith.constant 8 : index
    %c0_163 = arith.constant 0 : index
    %c0_164 = arith.constant 0 : index
    %153 = vector.load %arg2[%c2_161, %c8_162, %c0_163, %c0_164] : memref<4x9x8x8xf32, #tpu.memory_space<vmem>>, vector<1x1x8x8xf32>
    %154 = vector.shape_cast %153 : vector<1x1x8x8xf32> to vector<8x8xf32>
    %cst_165 = arith.constant dense<0.000000e+00> : vector<8x256xf32>
    %155 = tpu.matmul %154, %152, %cst_165 {dimension_numbers = #tpu.dot_dimension_numbers<[1], [0], [0], [1], [0, 0, 1, 1], [], []>} : vector<8x8xf32>, vector<8x256xf32>, vector<8x256xf32> -> vector<8x256xf32>
    %156 = arith.addf %151, %155 : vector<8x256xf32>
    %157 = vector.broadcast %109 : vector<8x1xf32> to vector<8x256xf32>
    %158 = arith.mulf %156, %157 : vector<8x256xf32>
    %159 = vector.broadcast %111 : vector<8x1xf32> to vector<8x256xf32>
    %160 = arith.addf %158, %159 : vector<8x256xf32>
    %c3_166 = arith.constant 3 : index
    %c0_167 = arith.constant 0 : index
    %c0_168 = arith.constant 0 : index
    %161 = vector.load %arg3[%c3_166, %c0_167, %c0_168] : memref<4x8x1xf32, #tpu.memory_space<vmem>>, vector<1x8x1xf32>
    %162 = vector.shape_cast %161 : vector<1x8x1xf32> to vector<8x1xf32>
    %c3_169 = arith.constant 3 : index
    %c0_170 = arith.constant 0 : index
    %c0_171 = arith.constant 0 : index
    %163 = vector.load %arg4[%c3_169, %c0_170, %c0_171] : memref<4x8x1xf32, #tpu.memory_space<vmem>>, vector<1x8x1xf32>
    %164 = vector.shape_cast %163 : vector<1x8x1xf32> to vector<8x1xf32>
    %cst_172 = arith.constant 0.000000e+00 : f32
    %165 = vector.broadcast %cst_172 : f32 to vector<8x256xf32>
    %c3_173 = arith.constant 3 : index
    %c0_174 = arith.constant 0 : index
    %c0_175 = arith.constant 0 : index
    %c0_176 = arith.constant 0 : index
    %166 = vector.load %arg2[%c3_173, %c0_174, %c0_175, %c0_176] : memref<4x9x8x8xf32, #tpu.memory_space<vmem>>, vector<1x1x8x8xf32>
    %167 = vector.shape_cast %166 : vector<1x1x8x8xf32> to vector<8x8xf32>
    %cst_177 = arith.constant dense<0.000000e+00> : vector<8x256xf32>
    %168 = tpu.matmul %167, %160, %cst_177 {dimension_numbers = #tpu.dot_dimension_numbers<[1], [0], [0], [1], [0, 0, 1, 1], [], []>} : vector<8x8xf32>, vector<8x256xf32>, vector<8x256xf32> -> vector<8x256xf32>
    %169 = arith.addf %165, %168 : vector<8x256xf32>
    %c255_i32_178 = arith.constant 255 : i32
    %170 = tpu.dynamic_rotate %160 by %c255_i32_178 dim 1 : vector<8x256xf32>, i32 -> vector<8x256xf32>
    %c3_179 = arith.constant 3 : index
    %c1_180 = arith.constant 1 : index
    %c0_181 = arith.constant 0 : index
    %c0_182 = arith.constant 0 : index
    %171 = vector.load %arg2[%c3_179, %c1_180, %c0_181, %c0_182] : memref<4x9x8x8xf32, #tpu.memory_space<vmem>>, vector<1x1x8x8xf32>
    %172 = vector.shape_cast %171 : vector<1x1x8x8xf32> to vector<8x8xf32>
    %cst_183 = arith.constant dense<0.000000e+00> : vector<8x256xf32>
    %173 = tpu.matmul %172, %170, %cst_183 {dimension_numbers = #tpu.dot_dimension_numbers<[1], [0], [0], [1], [0, 0, 1, 1], [], []>} : vector<8x8xf32>, vector<8x256xf32>, vector<8x256xf32> -> vector<8x256xf32>
    %174 = arith.addf %169, %173 : vector<8x256xf32>
    %c254_i32_184 = arith.constant 254 : i32
    %175 = tpu.dynamic_rotate %160 by %c254_i32_184 dim 1 : vector<8x256xf32>, i32 -> vector<8x256xf32>
    %c3_185 = arith.constant 3 : index
    %c2_186 = arith.constant 2 : index
    %c0_187 = arith.constant 0 : index
    %c0_188 = arith.constant 0 : index
    %176 = vector.load %arg2[%c3_185, %c2_186, %c0_187, %c0_188] : memref<4x9x8x8xf32, #tpu.memory_space<vmem>>, vector<1x1x8x8xf32>
    %177 = vector.shape_cast %176 : vector<1x1x8x8xf32> to vector<8x8xf32>
    %cst_189 = arith.constant dense<0.000000e+00> : vector<8x256xf32>
    %178 = tpu.matmul %177, %175, %cst_189 {dimension_numbers = #tpu.dot_dimension_numbers<[1], [0], [0], [1], [0, 0, 1, 1], [], []>} : vector<8x8xf32>, vector<8x256xf32>, vector<8x256xf32> -> vector<8x256xf32>
    %179 = arith.addf %174, %178 : vector<8x256xf32>
    %c240_i32_190 = arith.constant 240 : i32
    %180 = tpu.dynamic_rotate %160 by %c240_i32_190 dim 1 : vector<8x256xf32>, i32 -> vector<8x256xf32>
    %c3_191 = arith.constant 3 : index
    %c3_192 = arith.constant 3 : index
    %c0_193 = arith.constant 0 : index
    %c0_194 = arith.constant 0 : index
    %181 = vector.load %arg2[%c3_191, %c3_192, %c0_193, %c0_194] : memref<4x9x8x8xf32, #tpu.memory_space<vmem>>, vector<1x1x8x8xf32>
    %182 = vector.shape_cast %181 : vector<1x1x8x8xf32> to vector<8x8xf32>
    %cst_195 = arith.constant dense<0.000000e+00> : vector<8x256xf32>
    %183 = tpu.matmul %182, %180, %cst_195 {dimension_numbers = #tpu.dot_dimension_numbers<[1], [0], [0], [1], [0, 0, 1, 1], [], []>} : vector<8x8xf32>, vector<8x256xf32>, vector<8x256xf32> -> vector<8x256xf32>
    %184 = arith.addf %179, %183 : vector<8x256xf32>
    %c239_i32_196 = arith.constant 239 : i32
    %185 = tpu.dynamic_rotate %160 by %c239_i32_196 dim 1 : vector<8x256xf32>, i32 -> vector<8x256xf32>
    %c3_197 = arith.constant 3 : index
    %c4_198 = arith.constant 4 : index
    %c0_199 = arith.constant 0 : index
    %c0_200 = arith.constant 0 : index
    %186 = vector.load %arg2[%c3_197, %c4_198, %c0_199, %c0_200] : memref<4x9x8x8xf32, #tpu.memory_space<vmem>>, vector<1x1x8x8xf32>
    %187 = vector.shape_cast %186 : vector<1x1x8x8xf32> to vector<8x8xf32>
    %cst_201 = arith.constant dense<0.000000e+00> : vector<8x256xf32>
    %188 = tpu.matmul %187, %185, %cst_201 {dimension_numbers = #tpu.dot_dimension_numbers<[1], [0], [0], [1], [0, 0, 1, 1], [], []>} : vector<8x8xf32>, vector<8x256xf32>, vector<8x256xf32> -> vector<8x256xf32>
    %189 = arith.addf %184, %188 : vector<8x256xf32>
    %c238_i32_202 = arith.constant 238 : i32
    %190 = tpu.dynamic_rotate %160 by %c238_i32_202 dim 1 : vector<8x256xf32>, i32 -> vector<8x256xf32>
    %c3_203 = arith.constant 3 : index
    %c5_204 = arith.constant 5 : index
    %c0_205 = arith.constant 0 : index
    %c0_206 = arith.constant 0 : index
    %191 = vector.load %arg2[%c3_203, %c5_204, %c0_205, %c0_206] : memref<4x9x8x8xf32, #tpu.memory_space<vmem>>, vector<1x1x8x8xf32>
    %192 = vector.shape_cast %191 : vector<1x1x8x8xf32> to vector<8x8xf32>
    %cst_207 = arith.constant dense<0.000000e+00> : vector<8x256xf32>
    %193 = tpu.matmul %192, %190, %cst_207 {dimension_numbers = #tpu.dot_dimension_numbers<[1], [0], [0], [1], [0, 0, 1, 1], [], []>} : vector<8x8xf32>, vector<8x256xf32>, vector<8x256xf32> -> vector<8x256xf32>
    %194 = arith.addf %189, %193 : vector<8x256xf32>
    %c224_i32_208 = arith.constant 224 : i32
    %195 = tpu.dynamic_rotate %160 by %c224_i32_208 dim 1 : vector<8x256xf32>, i32 -> vector<8x256xf32>
    %c3_209 = arith.constant 3 : index
    %c6_210 = arith.constant 6 : index
    %c0_211 = arith.constant 0 : index
    %c0_212 = arith.constant 0 : index
    %196 = vector.load %arg2[%c3_209, %c6_210, %c0_211, %c0_212] : memref<4x9x8x8xf32, #tpu.memory_space<vmem>>, vector<1x1x8x8xf32>
    %197 = vector.shape_cast %196 : vector<1x1x8x8xf32> to vector<8x8xf32>
    %cst_213 = arith.constant dense<0.000000e+00> : vector<8x256xf32>
    %198 = tpu.matmul %197, %195, %cst_213 {dimension_numbers = #tpu.dot_dimension_numbers<[1], [0], [0], [1], [0, 0, 1, 1], [], []>} : vector<8x8xf32>, vector<8x256xf32>, vector<8x256xf32> -> vector<8x256xf32>
    %199 = arith.addf %194, %198 : vector<8x256xf32>
    %c223_i32_214 = arith.constant 223 : i32
    %200 = tpu.dynamic_rotate %160 by %c223_i32_214 dim 1 : vector<8x256xf32>, i32 -> vector<8x256xf32>
    %c3_215 = arith.constant 3 : index
    %c7_216 = arith.constant 7 : index
    %c0_217 = arith.constant 0 : index
    %c0_218 = arith.constant 0 : index
    %201 = vector.load %arg2[%c3_215, %c7_216, %c0_217, %c0_218] : memref<4x9x8x8xf32, #tpu.memory_space<vmem>>, vector<1x1x8x8xf32>
    %202 = vector.shape_cast %201 : vector<1x1x8x8xf32> to vector<8x8xf32>
    %cst_219 = arith.constant dense<0.000000e+00> : vector<8x256xf32>
    %203 = tpu.matmul %202, %200, %cst_219 {dimension_numbers = #tpu.dot_dimension_numbers<[1], [0], [0], [1], [0, 0, 1, 1], [], []>} : vector<8x8xf32>, vector<8x256xf32>, vector<8x256xf32> -> vector<8x256xf32>
    %204 = arith.addf %199, %203 : vector<8x256xf32>
    %c222_i32_220 = arith.constant 222 : i32
    %205 = tpu.dynamic_rotate %160 by %c222_i32_220 dim 1 : vector<8x256xf32>, i32 -> vector<8x256xf32>
    %c3_221 = arith.constant 3 : index
    %c8_222 = arith.constant 8 : index
    %c0_223 = arith.constant 0 : index
    %c0_224 = arith.constant 0 : index
    %206 = vector.load %arg2[%c3_221, %c8_222, %c0_223, %c0_224] : memref<4x9x8x8xf32, #tpu.memory_space<vmem>>, vector<1x1x8x8xf32>
    %207 = vector.shape_cast %206 : vector<1x1x8x8xf32> to vector<8x8xf32>
    %cst_225 = arith.constant dense<0.000000e+00> : vector<8x256xf32>
    %208 = tpu.matmul %207, %205, %cst_225 {dimension_numbers = #tpu.dot_dimension_numbers<[1], [0], [0], [1], [0, 0, 1, 1], [], []>} : vector<8x8xf32>, vector<8x256xf32>, vector<8x256xf32> -> vector<8x256xf32>
    %209 = arith.addf %204, %208 : vector<8x256xf32>
    %210 = vector.broadcast %162 : vector<8x1xf32> to vector<8x256xf32>
    %211 = arith.mulf %209, %210 : vector<8x256xf32>
    %212 = vector.broadcast %164 : vector<8x1xf32> to vector<8x256xf32>
    %213 = arith.addf %211, %212 : vector<8x256xf32>
    %c0_226 = arith.constant 0 : index
    %c1_227 = arith.constant 1 : index
    %c0_228 = arith.constant 0 : index
    %c0_229 = arith.constant 0 : index
    %214 = vector.load %arg1[%c0_226, %c1_227, %c0_228, %c0_229] : memref<1x2x8x256xf32, #tpu.memory_space<vmem>>, vector<1x1x8x256xf32>
    %215 = vector.shape_cast %214 : vector<1x1x8x256xf32> to vector<8x256xf32>
    %c0_230 = arith.constant 0 : index
    %c0_231 = arith.constant 0 : index
    %c0_232 = arith.constant 0 : index
    %216 = vector.load %arg3[%c0_230, %c0_231, %c0_232] : memref<4x8x1xf32, #tpu.memory_space<vmem>>, vector<1x8x1xf32>
    %217 = vector.shape_cast %216 : vector<1x8x1xf32> to vector<8x1xf32>
    %c0_233 = arith.constant 0 : index
    %c0_234 = arith.constant 0 : index
    %c0_235 = arith.constant 0 : index
    %218 = vector.load %arg4[%c0_233, %c0_234, %c0_235] : memref<4x8x1xf32, #tpu.memory_space<vmem>>, vector<1x8x1xf32>
    %219 = vector.shape_cast %218 : vector<1x8x1xf32> to vector<8x1xf32>
    %cst_236 = arith.constant 0.000000e+00 : f32
    %220 = vector.broadcast %cst_236 : f32 to vector<8x256xf32>
    %c0_237 = arith.constant 0 : index
    %c0_238 = arith.constant 0 : index
    %c0_239 = arith.constant 0 : index
    %c0_240 = arith.constant 0 : index
    %221 = vector.load %arg2[%c0_237, %c0_238, %c0_239, %c0_240] : memref<4x9x8x8xf32, #tpu.memory_space<vmem>>, vector<1x1x8x8xf32>
    %222 = vector.shape_cast %221 : vector<1x1x8x8xf32> to vector<8x8xf32>
    %cst_241 = arith.constant dense<0.000000e+00> : vector<8x256xf32>
    %223 = tpu.matmul %222, %215, %cst_241 {dimension_numbers = #tpu.dot_dimension_numbers<[1], [0], [0], [1], [0, 0, 1, 1], [], []>} : vector<8x8xf32>, vector<8x256xf32>, vector<8x256xf32> -> vector<8x256xf32>
    %224 = arith.addf %220, %223 : vector<8x256xf32>
    %c255_i32_242 = arith.constant 255 : i32
    %225 = tpu.dynamic_rotate %215 by %c255_i32_242 dim 1 : vector<8x256xf32>, i32 -> vector<8x256xf32>
    %c0_243 = arith.constant 0 : index
    %c1_244 = arith.constant 1 : index
    %c0_245 = arith.constant 0 : index
    %c0_246 = arith.constant 0 : index
    %226 = vector.load %arg2[%c0_243, %c1_244, %c0_245, %c0_246] : memref<4x9x8x8xf32, #tpu.memory_space<vmem>>, vector<1x1x8x8xf32>
    %227 = vector.shape_cast %226 : vector<1x1x8x8xf32> to vector<8x8xf32>
    %cst_247 = arith.constant dense<0.000000e+00> : vector<8x256xf32>
    %228 = tpu.matmul %227, %225, %cst_247 {dimension_numbers = #tpu.dot_dimension_numbers<[1], [0], [0], [1], [0, 0, 1, 1], [], []>} : vector<8x8xf32>, vector<8x256xf32>, vector<8x256xf32> -> vector<8x256xf32>
    %229 = arith.addf %224, %228 : vector<8x256xf32>
    %c254_i32_248 = arith.constant 254 : i32
    %230 = tpu.dynamic_rotate %215 by %c254_i32_248 dim 1 : vector<8x256xf32>, i32 -> vector<8x256xf32>
    %c0_249 = arith.constant 0 : index
    %c2_250 = arith.constant 2 : index
    %c0_251 = arith.constant 0 : index
    %c0_252 = arith.constant 0 : index
    %231 = vector.load %arg2[%c0_249, %c2_250, %c0_251, %c0_252] : memref<4x9x8x8xf32, #tpu.memory_space<vmem>>, vector<1x1x8x8xf32>
    %232 = vector.shape_cast %231 : vector<1x1x8x8xf32> to vector<8x8xf32>
    %cst_253 = arith.constant dense<0.000000e+00> : vector<8x256xf32>
    %233 = tpu.matmul %232, %230, %cst_253 {dimension_numbers = #tpu.dot_dimension_numbers<[1], [0], [0], [1], [0, 0, 1, 1], [], []>} : vector<8x8xf32>, vector<8x256xf32>, vector<8x256xf32> -> vector<8x256xf32>
    %234 = arith.addf %229, %233 : vector<8x256xf32>
    %c240_i32_254 = arith.constant 240 : i32
    %235 = tpu.dynamic_rotate %215 by %c240_i32_254 dim 1 : vector<8x256xf32>, i32 -> vector<8x256xf32>
    %c0_255 = arith.constant 0 : index
    %c3_256 = arith.constant 3 : index
    %c0_257 = arith.constant 0 : index
    %c0_258 = arith.constant 0 : index
    %236 = vector.load %arg2[%c0_255, %c3_256, %c0_257, %c0_258] : memref<4x9x8x8xf32, #tpu.memory_space<vmem>>, vector<1x1x8x8xf32>
    %237 = vector.shape_cast %236 : vector<1x1x8x8xf32> to vector<8x8xf32>
    %cst_259 = arith.constant dense<0.000000e+00> : vector<8x256xf32>
    %238 = tpu.matmul %237, %235, %cst_259 {dimension_numbers = #tpu.dot_dimension_numbers<[1], [0], [0], [1], [0, 0, 1, 1], [], []>} : vector<8x8xf32>, vector<8x256xf32>, vector<8x256xf32> -> vector<8x256xf32>
    %239 = arith.addf %234, %238 : vector<8x256xf32>
    %c239_i32_260 = arith.constant 239 : i32
    %240 = tpu.dynamic_rotate %215 by %c239_i32_260 dim 1 : vector<8x256xf32>, i32 -> vector<8x256xf32>
    %c0_261 = arith.constant 0 : index
    %c4_262 = arith.constant 4 : index
    %c0_263 = arith.constant 0 : index
    %c0_264 = arith.constant 0 : index
    %241 = vector.load %arg2[%c0_261, %c4_262, %c0_263, %c0_264] : memref<4x9x8x8xf32, #tpu.memory_space<vmem>>, vector<1x1x8x8xf32>
    %242 = vector.shape_cast %241 : vector<1x1x8x8xf32> to vector<8x8xf32>
    %cst_265 = arith.constant dense<0.000000e+00> : vector<8x256xf32>
    %243 = tpu.matmul %242, %240, %cst_265 {dimension_numbers = #tpu.dot_dimension_numbers<[1], [0], [0], [1], [0, 0, 1, 1], [], []>} : vector<8x8xf32>, vector<8x256xf32>, vector<8x256xf32> -> vector<8x256xf32>
    %244 = arith.addf %239, %243 : vector<8x256xf32>
    %c238_i32_266 = arith.constant 238 : i32
    %245 = tpu.dynamic_rotate %215 by %c238_i32_266 dim 1 : vector<8x256xf32>, i32 -> vector<8x256xf32>
    %c0_267 = arith.constant 0 : index
    %c5_268 = arith.constant 5 : index
    %c0_269 = arith.constant 0 : index
    %c0_270 = arith.constant 0 : index
    %246 = vector.load %arg2[%c0_267, %c5_268, %c0_269, %c0_270] : memref<4x9x8x8xf32, #tpu.memory_space<vmem>>, vector<1x1x8x8xf32>
    %247 = vector.shape_cast %246 : vector<1x1x8x8xf32> to vector<8x8xf32>
    %cst_271 = arith.constant dense<0.000000e+00> : vector<8x256xf32>
    %248 = tpu.matmul %247, %245, %cst_271 {dimension_numbers = #tpu.dot_dimension_numbers<[1], [0], [0], [1], [0, 0, 1, 1], [], []>} : vector<8x8xf32>, vector<8x256xf32>, vector<8x256xf32> -> vector<8x256xf32>
    %249 = arith.addf %244, %248 : vector<8x256xf32>
    %c224_i32_272 = arith.constant 224 : i32
    %250 = tpu.dynamic_rotate %215 by %c224_i32_272 dim 1 : vector<8x256xf32>, i32 -> vector<8x256xf32>
    %c0_273 = arith.constant 0 : index
    %c6_274 = arith.constant 6 : index
    %c0_275 = arith.constant 0 : index
    %c0_276 = arith.constant 0 : index
    %251 = vector.load %arg2[%c0_273, %c6_274, %c0_275, %c0_276] : memref<4x9x8x8xf32, #tpu.memory_space<vmem>>, vector<1x1x8x8xf32>
    %252 = vector.shape_cast %251 : vector<1x1x8x8xf32> to vector<8x8xf32>
    %cst_277 = arith.constant dense<0.000000e+00> : vector<8x256xf32>
    %253 = tpu.matmul %252, %250, %cst_277 {dimension_numbers = #tpu.dot_dimension_numbers<[1], [0], [0], [1], [0, 0, 1, 1], [], []>} : vector<8x8xf32>, vector<8x256xf32>, vector<8x256xf32> -> vector<8x256xf32>
    %254 = arith.addf %249, %253 : vector<8x256xf32>
    %c223_i32_278 = arith.constant 223 : i32
    %255 = tpu.dynamic_rotate %215 by %c223_i32_278 dim 1 : vector<8x256xf32>, i32 -> vector<8x256xf32>
    %c0_279 = arith.constant 0 : index
    %c7_280 = arith.constant 7 : index
    %c0_281 = arith.constant 0 : index
    %c0_282 = arith.constant 0 : index
    %256 = vector.load %arg2[%c0_279, %c7_280, %c0_281, %c0_282] : memref<4x9x8x8xf32, #tpu.memory_space<vmem>>, vector<1x1x8x8xf32>
    %257 = vector.shape_cast %256 : vector<1x1x8x8xf32> to vector<8x8xf32>
    %cst_283 = arith.constant dense<0.000000e+00> : vector<8x256xf32>
    %258 = tpu.matmul %257, %255, %cst_283 {dimension_numbers = #tpu.dot_dimension_numbers<[1], [0], [0], [1], [0, 0, 1, 1], [], []>} : vector<8x8xf32>, vector<8x256xf32>, vector<8x256xf32> -> vector<8x256xf32>
    %259 = arith.addf %254, %258 : vector<8x256xf32>
    %c222_i32_284 = arith.constant 222 : i32
    %260 = tpu.dynamic_rotate %215 by %c222_i32_284 dim 1 : vector<8x256xf32>, i32 -> vector<8x256xf32>
    %c0_285 = arith.constant 0 : index
    %c8_286 = arith.constant 8 : index
    %c0_287 = arith.constant 0 : index
    %c0_288 = arith.constant 0 : index
    %261 = vector.load %arg2[%c0_285, %c8_286, %c0_287, %c0_288] : memref<4x9x8x8xf32, #tpu.memory_space<vmem>>, vector<1x1x8x8xf32>
    %262 = vector.shape_cast %261 : vector<1x1x8x8xf32> to vector<8x8xf32>
    %cst_289 = arith.constant dense<0.000000e+00> : vector<8x256xf32>
    %263 = tpu.matmul %262, %260, %cst_289 {dimension_numbers = #tpu.dot_dimension_numbers<[1], [0], [0], [1], [0, 0, 1, 1], [], []>} : vector<8x8xf32>, vector<8x256xf32>, vector<8x256xf32> -> vector<8x256xf32>
    %264 = arith.addf %259, %263 : vector<8x256xf32>
    %265 = vector.broadcast %217 : vector<8x1xf32> to vector<8x256xf32>
    %266 = arith.mulf %264, %265 : vector<8x256xf32>
    %267 = vector.broadcast %219 : vector<8x1xf32> to vector<8x256xf32>
    %268 = arith.addf %266, %267 : vector<8x256xf32>
    %c1_290 = arith.constant 1 : index
    %c0_291 = arith.constant 0 : index
    %c0_292 = arith.constant 0 : index
    %269 = vector.load %arg3[%c1_290, %c0_291, %c0_292] : memref<4x8x1xf32, #tpu.memory_space<vmem>>, vector<1x8x1xf32>
    %270 = vector.shape_cast %269 : vector<1x8x1xf32> to vector<8x1xf32>
    %c1_293 = arith.constant 1 : index
    %c0_294 = arith.constant 0 : index
    %c0_295 = arith.constant 0 : index
    %271 = vector.load %arg4[%c1_293, %c0_294, %c0_295] : memref<4x8x1xf32, #tpu.memory_space<vmem>>, vector<1x8x1xf32>
    %272 = vector.shape_cast %271 : vector<1x8x1xf32> to vector<8x1xf32>
    %cst_296 = arith.constant 0.000000e+00 : f32
    %273 = vector.broadcast %cst_296 : f32 to vector<8x256xf32>
    %c1_297 = arith.constant 1 : index
    %c0_298 = arith.constant 0 : index
    %c0_299 = arith.constant 0 : index
    %c0_300 = arith.constant 0 : index
    %274 = vector.load %arg2[%c1_297, %c0_298, %c0_299, %c0_300] : memref<4x9x8x8xf32, #tpu.memory_space<vmem>>, vector<1x1x8x8xf32>
    %275 = vector.shape_cast %274 : vector<1x1x8x8xf32> to vector<8x8xf32>
    %cst_301 = arith.constant dense<0.000000e+00> : vector<8x256xf32>
    %276 = tpu.matmul %275, %268, %cst_301 {dimension_numbers = #tpu.dot_dimension_numbers<[1], [0], [0], [1], [0, 0, 1, 1], [], []>} : vector<8x8xf32>, vector<8x256xf32>, vector<8x256xf32> -> vector<8x256xf32>
    %277 = arith.addf %273, %276 : vector<8x256xf32>
    %c255_i32_302 = arith.constant 255 : i32
    %278 = tpu.dynamic_rotate %268 by %c255_i32_302 dim 1 : vector<8x256xf32>, i32 -> vector<8x256xf32>
    %c1_303 = arith.constant 1 : index
    %c1_304 = arith.constant 1 : index
    %c0_305 = arith.constant 0 : index
    %c0_306 = arith.constant 0 : index
    %279 = vector.load %arg2[%c1_303, %c1_304, %c0_305, %c0_306] : memref<4x9x8x8xf32, #tpu.memory_space<vmem>>, vector<1x1x8x8xf32>
    %280 = vector.shape_cast %279 : vector<1x1x8x8xf32> to vector<8x8xf32>
    %cst_307 = arith.constant dense<0.000000e+00> : vector<8x256xf32>
    %281 = tpu.matmul %280, %278, %cst_307 {dimension_numbers = #tpu.dot_dimension_numbers<[1], [0], [0], [1], [0, 0, 1, 1], [], []>} : vector<8x8xf32>, vector<8x256xf32>, vector<8x256xf32> -> vector<8x256xf32>
    %282 = arith.addf %277, %281 : vector<8x256xf32>
    %c254_i32_308 = arith.constant 254 : i32
    %283 = tpu.dynamic_rotate %268 by %c254_i32_308 dim 1 : vector<8x256xf32>, i32 -> vector<8x256xf32>
    %c1_309 = arith.constant 1 : index
    %c2_310 = arith.constant 2 : index
    %c0_311 = arith.constant 0 : index
    %c0_312 = arith.constant 0 : index
    %284 = vector.load %arg2[%c1_309, %c2_310, %c0_311, %c0_312] : memref<4x9x8x8xf32, #tpu.memory_space<vmem>>, vector<1x1x8x8xf32>
    %285 = vector.shape_cast %284 : vector<1x1x8x8xf32> to vector<8x8xf32>
    %cst_313 = arith.constant dense<0.000000e+00> : vector<8x256xf32>
    %286 = tpu.matmul %285, %283, %cst_313 {dimension_numbers = #tpu.dot_dimension_numbers<[1], [0], [0], [1], [0, 0, 1, 1], [], []>} : vector<8x8xf32>, vector<8x256xf32>, vector<8x256xf32> -> vector<8x256xf32>
    %287 = arith.addf %282, %286 : vector<8x256xf32>
    %c240_i32_314 = arith.constant 240 : i32
    %288 = tpu.dynamic_rotate %268 by %c240_i32_314 dim 1 : vector<8x256xf32>, i32 -> vector<8x256xf32>
    %c1_315 = arith.constant 1 : index
    %c3_316 = arith.constant 3 : index
    %c0_317 = arith.constant 0 : index
    %c0_318 = arith.constant 0 : index
    %289 = vector.load %arg2[%c1_315, %c3_316, %c0_317, %c0_318] : memref<4x9x8x8xf32, #tpu.memory_space<vmem>>, vector<1x1x8x8xf32>
    %290 = vector.shape_cast %289 : vector<1x1x8x8xf32> to vector<8x8xf32>
    %cst_319 = arith.constant dense<0.000000e+00> : vector<8x256xf32>
    %291 = tpu.matmul %290, %288, %cst_319 {dimension_numbers = #tpu.dot_dimension_numbers<[1], [0], [0], [1], [0, 0, 1, 1], [], []>} : vector<8x8xf32>, vector<8x256xf32>, vector<8x256xf32> -> vector<8x256xf32>
    %292 = arith.addf %287, %291 : vector<8x256xf32>
    %c239_i32_320 = arith.constant 239 : i32
    %293 = tpu.dynamic_rotate %268 by %c239_i32_320 dim 1 : vector<8x256xf32>, i32 -> vector<8x256xf32>
    %c1_321 = arith.constant 1 : index
    %c4_322 = arith.constant 4 : index
    %c0_323 = arith.constant 0 : index
    %c0_324 = arith.constant 0 : index
    %294 = vector.load %arg2[%c1_321, %c4_322, %c0_323, %c0_324] : memref<4x9x8x8xf32, #tpu.memory_space<vmem>>, vector<1x1x8x8xf32>
    %295 = vector.shape_cast %294 : vector<1x1x8x8xf32> to vector<8x8xf32>
    %cst_325 = arith.constant dense<0.000000e+00> : vector<8x256xf32>
    %296 = tpu.matmul %295, %293, %cst_325 {dimension_numbers = #tpu.dot_dimension_numbers<[1], [0], [0], [1], [0, 0, 1, 1], [], []>} : vector<8x8xf32>, vector<8x256xf32>, vector<8x256xf32> -> vector<8x256xf32>
    %297 = arith.addf %292, %296 : vector<8x256xf32>
    %c238_i32_326 = arith.constant 238 : i32
    %298 = tpu.dynamic_rotate %268 by %c238_i32_326 dim 1 : vector<8x256xf32>, i32 -> vector<8x256xf32>
    %c1_327 = arith.constant 1 : index
    %c5_328 = arith.constant 5 : index
    %c0_329 = arith.constant 0 : index
    %c0_330 = arith.constant 0 : index
    %299 = vector.load %arg2[%c1_327, %c5_328, %c0_329, %c0_330] : memref<4x9x8x8xf32, #tpu.memory_space<vmem>>, vector<1x1x8x8xf32>
    %300 = vector.shape_cast %299 : vector<1x1x8x8xf32> to vector<8x8xf32>
    %cst_331 = arith.constant dense<0.000000e+00> : vector<8x256xf32>
    %301 = tpu.matmul %300, %298, %cst_331 {dimension_numbers = #tpu.dot_dimension_numbers<[1], [0], [0], [1], [0, 0, 1, 1], [], []>} : vector<8x8xf32>, vector<8x256xf32>, vector<8x256xf32> -> vector<8x256xf32>
    %302 = arith.addf %297, %301 : vector<8x256xf32>
    %c224_i32_332 = arith.constant 224 : i32
    %303 = tpu.dynamic_rotate %268 by %c224_i32_332 dim 1 : vector<8x256xf32>, i32 -> vector<8x256xf32>
    %c1_333 = arith.constant 1 : index
    %c6_334 = arith.constant 6 : index
    %c0_335 = arith.constant 0 : index
    %c0_336 = arith.constant 0 : index
    %304 = vector.load %arg2[%c1_333, %c6_334, %c0_335, %c0_336] : memref<4x9x8x8xf32, #tpu.memory_space<vmem>>, vector<1x1x8x8xf32>
    %305 = vector.shape_cast %304 : vector<1x1x8x8xf32> to vector<8x8xf32>
    %cst_337 = arith.constant dense<0.000000e+00> : vector<8x256xf32>
    %306 = tpu.matmul %305, %303, %cst_337 {dimension_numbers = #tpu.dot_dimension_numbers<[1], [0], [0], [1], [0, 0, 1, 1], [], []>} : vector<8x8xf32>, vector<8x256xf32>, vector<8x256xf32> -> vector<8x256xf32>
    %307 = arith.addf %302, %306 : vector<8x256xf32>
    %c223_i32_338 = arith.constant 223 : i32
    %308 = tpu.dynamic_rotate %268 by %c223_i32_338 dim 1 : vector<8x256xf32>, i32 -> vector<8x256xf32>
    %c1_339 = arith.constant 1 : index
    %c7_340 = arith.constant 7 : index
    %c0_341 = arith.constant 0 : index
    %c0_342 = arith.constant 0 : index
    %309 = vector.load %arg2[%c1_339, %c7_340, %c0_341, %c0_342] : memref<4x9x8x8xf32, #tpu.memory_space<vmem>>, vector<1x1x8x8xf32>
    %310 = vector.shape_cast %309 : vector<1x1x8x8xf32> to vector<8x8xf32>
    %cst_343 = arith.constant dense<0.000000e+00> : vector<8x256xf32>
    %311 = tpu.matmul %310, %308, %cst_343 {dimension_numbers = #tpu.dot_dimension_numbers<[1], [0], [0], [1], [0, 0, 1, 1], [], []>} : vector<8x8xf32>, vector<8x256xf32>, vector<8x256xf32> -> vector<8x256xf32>
    %312 = arith.addf %307, %311 : vector<8x256xf32>
    %c222_i32_344 = arith.constant 222 : i32
    %313 = tpu.dynamic_rotate %268 by %c222_i32_344 dim 1 : vector<8x256xf32>, i32 -> vector<8x256xf32>
    %c1_345 = arith.constant 1 : index
    %c8_346 = arith.constant 8 : index
    %c0_347 = arith.constant 0 : index
    %c0_348 = arith.constant 0 : index
    %314 = vector.load %arg2[%c1_345, %c8_346, %c0_347, %c0_348] : memref<4x9x8x8xf32, #tpu.memory_space<vmem>>, vector<1x1x8x8xf32>
    %315 = vector.shape_cast %314 : vector<1x1x8x8xf32> to vector<8x8xf32>
    %cst_349 = arith.constant dense<0.000000e+00> : vector<8x256xf32>
    %316 = tpu.matmul %315, %313, %cst_349 {dimension_numbers = #tpu.dot_dimension_numbers<[1], [0], [0], [1], [0, 0, 1, 1], [], []>} : vector<8x8xf32>, vector<8x256xf32>, vector<8x256xf32> -> vector<8x256xf32>
    %317 = arith.addf %312, %316 : vector<8x256xf32>
    %318 = vector.broadcast %270 : vector<8x1xf32> to vector<8x256xf32>
    %319 = arith.mulf %317, %318 : vector<8x256xf32>
    %320 = vector.broadcast %272 : vector<8x1xf32> to vector<8x256xf32>
    %321 = arith.addf %319, %320 : vector<8x256xf32>
    %c2_350 = arith.constant 2 : index
    %c0_351 = arith.constant 0 : index
    %c0_352 = arith.constant 0 : index
    %322 = vector.load %arg3[%c2_350, %c0_351, %c0_352] : memref<4x8x1xf32, #tpu.memory_space<vmem>>, vector<1x8x1xf32>
    %323 = vector.shape_cast %322 : vector<1x8x1xf32> to vector<8x1xf32>
    %c2_353 = arith.constant 2 : index
    %c0_354 = arith.constant 0 : index
    %c0_355 = arith.constant 0 : index
    %324 = vector.load %arg4[%c2_353, %c0_354, %c0_355] : memref<4x8x1xf32, #tpu.memory_space<vmem>>, vector<1x8x1xf32>
    %325 = vector.shape_cast %324 : vector<1x8x1xf32> to vector<8x1xf32>
    %cst_356 = arith.constant 0.000000e+00 : f32
    %326 = vector.broadcast %cst_356 : f32 to vector<8x256xf32>
    %c2_357 = arith.constant 2 : index
    %c0_358 = arith.constant 0 : index
    %c0_359 = arith.constant 0 : index
    %c0_360 = arith.constant 0 : index
    %327 = vector.load %arg2[%c2_357, %c0_358, %c0_359, %c0_360] : memref<4x9x8x8xf32, #tpu.memory_space<vmem>>, vector<1x1x8x8xf32>
    %328 = vector.shape_cast %327 : vector<1x1x8x8xf32> to vector<8x8xf32>
    %cst_361 = arith.constant dense<0.000000e+00> : vector<8x256xf32>
    %329 = tpu.matmul %328, %321, %cst_361 {dimension_numbers = #tpu.dot_dimension_numbers<[1], [0], [0], [1], [0, 0, 1, 1], [], []>} : vector<8x8xf32>, vector<8x256xf32>, vector<8x256xf32> -> vector<8x256xf32>
    %330 = arith.addf %326, %329 : vector<8x256xf32>
    %c255_i32_362 = arith.constant 255 : i32
    %331 = tpu.dynamic_rotate %321 by %c255_i32_362 dim 1 : vector<8x256xf32>, i32 -> vector<8x256xf32>
    %c2_363 = arith.constant 2 : index
    %c1_364 = arith.constant 1 : index
    %c0_365 = arith.constant 0 : index
    %c0_366 = arith.constant 0 : index
    %332 = vector.load %arg2[%c2_363, %c1_364, %c0_365, %c0_366] : memref<4x9x8x8xf32, #tpu.memory_space<vmem>>, vector<1x1x8x8xf32>
    %333 = vector.shape_cast %332 : vector<1x1x8x8xf32> to vector<8x8xf32>
    %cst_367 = arith.constant dense<0.000000e+00> : vector<8x256xf32>
    %334 = tpu.matmul %333, %331, %cst_367 {dimension_numbers = #tpu.dot_dimension_numbers<[1], [0], [0], [1], [0, 0, 1, 1], [], []>} : vector<8x8xf32>, vector<8x256xf32>, vector<8x256xf32> -> vector<8x256xf32>
    %335 = arith.addf %330, %334 : vector<8x256xf32>
    %c254_i32_368 = arith.constant 254 : i32
    %336 = tpu.dynamic_rotate %321 by %c254_i32_368 dim 1 : vector<8x256xf32>, i32 -> vector<8x256xf32>
    %c2_369 = arith.constant 2 : index
    %c2_370 = arith.constant 2 : index
    %c0_371 = arith.constant 0 : index
    %c0_372 = arith.constant 0 : index
    %337 = vector.load %arg2[%c2_369, %c2_370, %c0_371, %c0_372] : memref<4x9x8x8xf32, #tpu.memory_space<vmem>>, vector<1x1x8x8xf32>
    %338 = vector.shape_cast %337 : vector<1x1x8x8xf32> to vector<8x8xf32>
    %cst_373 = arith.constant dense<0.000000e+00> : vector<8x256xf32>
    %339 = tpu.matmul %338, %336, %cst_373 {dimension_numbers = #tpu.dot_dimension_numbers<[1], [0], [0], [1], [0, 0, 1, 1], [], []>} : vector<8x8xf32>, vector<8x256xf32>, vector<8x256xf32> -> vector<8x256xf32>
    %340 = arith.addf %335, %339 : vector<8x256xf32>
    %c240_i32_374 = arith.constant 240 : i32
    %341 = tpu.dynamic_rotate %321 by %c240_i32_374 dim 1 : vector<8x256xf32>, i32 -> vector<8x256xf32>
    %c2_375 = arith.constant 2 : index
    %c3_376 = arith.constant 3 : index
    %c0_377 = arith.constant 0 : index
    %c0_378 = arith.constant 0 : index
    %342 = vector.load %arg2[%c2_375, %c3_376, %c0_377, %c0_378] : memref<4x9x8x8xf32, #tpu.memory_space<vmem>>, vector<1x1x8x8xf32>
    %343 = vector.shape_cast %342 : vector<1x1x8x8xf32> to vector<8x8xf32>
    %cst_379 = arith.constant dense<0.000000e+00> : vector<8x256xf32>
    %344 = tpu.matmul %343, %341, %cst_379 {dimension_numbers = #tpu.dot_dimension_numbers<[1], [0], [0], [1], [0, 0, 1, 1], [], []>} : vector<8x8xf32>, vector<8x256xf32>, vector<8x256xf32> -> vector<8x256xf32>
    %345 = arith.addf %340, %344 : vector<8x256xf32>
    %c239_i32_380 = arith.constant 239 : i32
    %346 = tpu.dynamic_rotate %321 by %c239_i32_380 dim 1 : vector<8x256xf32>, i32 -> vector<8x256xf32>
    %c2_381 = arith.constant 2 : index
    %c4_382 = arith.constant 4 : index
    %c0_383 = arith.constant 0 : index
    %c0_384 = arith.constant 0 : index
    %347 = vector.load %arg2[%c2_381, %c4_382, %c0_383, %c0_384] : memref<4x9x8x8xf32, #tpu.memory_space<vmem>>, vector<1x1x8x8xf32>
    %348 = vector.shape_cast %347 : vector<1x1x8x8xf32> to vector<8x8xf32>
    %cst_385 = arith.constant dense<0.000000e+00> : vector<8x256xf32>
    %349 = tpu.matmul %348, %346, %cst_385 {dimension_numbers = #tpu.dot_dimension_numbers<[1], [0], [0], [1], [0, 0, 1, 1], [], []>} : vector<8x8xf32>, vector<8x256xf32>, vector<8x256xf32> -> vector<8x256xf32>
    %350 = arith.addf %345, %349 : vector<8x256xf32>
    %c238_i32_386 = arith.constant 238 : i32
    %351 = tpu.dynamic_rotate %321 by %c238_i32_386 dim 1 : vector<8x256xf32>, i32 -> vector<8x256xf32>
    %c2_387 = arith.constant 2 : index
    %c5_388 = arith.constant 5 : index
    %c0_389 = arith.constant 0 : index
    %c0_390 = arith.constant 0 : index
    %352 = vector.load %arg2[%c2_387, %c5_388, %c0_389, %c0_390] : memref<4x9x8x8xf32, #tpu.memory_space<vmem>>, vector<1x1x8x8xf32>
    %353 = vector.shape_cast %352 : vector<1x1x8x8xf32> to vector<8x8xf32>
    %cst_391 = arith.constant dense<0.000000e+00> : vector<8x256xf32>
    %354 = tpu.matmul %353, %351, %cst_391 {dimension_numbers = #tpu.dot_dimension_numbers<[1], [0], [0], [1], [0, 0, 1, 1], [], []>} : vector<8x8xf32>, vector<8x256xf32>, vector<8x256xf32> -> vector<8x256xf32>
    %355 = arith.addf %350, %354 : vector<8x256xf32>
    %c224_i32_392 = arith.constant 224 : i32
    %356 = tpu.dynamic_rotate %321 by %c224_i32_392 dim 1 : vector<8x256xf32>, i32 -> vector<8x256xf32>
    %c2_393 = arith.constant 2 : index
    %c6_394 = arith.constant 6 : index
    %c0_395 = arith.constant 0 : index
    %c0_396 = arith.constant 0 : index
    %357 = vector.load %arg2[%c2_393, %c6_394, %c0_395, %c0_396] : memref<4x9x8x8xf32, #tpu.memory_space<vmem>>, vector<1x1x8x8xf32>
    %358 = vector.shape_cast %357 : vector<1x1x8x8xf32> to vector<8x8xf32>
    %cst_397 = arith.constant dense<0.000000e+00> : vector<8x256xf32>
    %359 = tpu.matmul %358, %356, %cst_397 {dimension_numbers = #tpu.dot_dimension_numbers<[1], [0], [0], [1], [0, 0, 1, 1], [], []>} : vector<8x8xf32>, vector<8x256xf32>, vector<8x256xf32> -> vector<8x256xf32>
    %360 = arith.addf %355, %359 : vector<8x256xf32>
    %c223_i32_398 = arith.constant 223 : i32
    %361 = tpu.dynamic_rotate %321 by %c223_i32_398 dim 1 : vector<8x256xf32>, i32 -> vector<8x256xf32>
    %c2_399 = arith.constant 2 : index
    %c7_400 = arith.constant 7 : index
    %c0_401 = arith.constant 0 : index
    %c0_402 = arith.constant 0 : index
    %362 = vector.load %arg2[%c2_399, %c7_400, %c0_401, %c0_402] : memref<4x9x8x8xf32, #tpu.memory_space<vmem>>, vector<1x1x8x8xf32>
    %363 = vector.shape_cast %362 : vector<1x1x8x8xf32> to vector<8x8xf32>
    %cst_403 = arith.constant dense<0.000000e+00> : vector<8x256xf32>
    %364 = tpu.matmul %363, %361, %cst_403 {dimension_numbers = #tpu.dot_dimension_numbers<[1], [0], [0], [1], [0, 0, 1, 1], [], []>} : vector<8x8xf32>, vector<8x256xf32>, vector<8x256xf32> -> vector<8x256xf32>
    %365 = arith.addf %360, %364 : vector<8x256xf32>
    %c222_i32_404 = arith.constant 222 : i32
    %366 = tpu.dynamic_rotate %321 by %c222_i32_404 dim 1 : vector<8x256xf32>, i32 -> vector<8x256xf32>
    %c2_405 = arith.constant 2 : index
    %c8_406 = arith.constant 8 : index
    %c0_407 = arith.constant 0 : index
    %c0_408 = arith.constant 0 : index
    %367 = vector.load %arg2[%c2_405, %c8_406, %c0_407, %c0_408] : memref<4x9x8x8xf32, #tpu.memory_space<vmem>>, vector<1x1x8x8xf32>
    %368 = vector.shape_cast %367 : vector<1x1x8x8xf32> to vector<8x8xf32>
    %cst_409 = arith.constant dense<0.000000e+00> : vector<8x256xf32>
    %369 = tpu.matmul %368, %366, %cst_409 {dimension_numbers = #tpu.dot_dimension_numbers<[1], [0], [0], [1], [0, 0, 1, 1], [], []>} : vector<8x8xf32>, vector<8x256xf32>, vector<8x256xf32> -> vector<8x256xf32>
    %370 = arith.addf %365, %369 : vector<8x256xf32>
    %371 = vector.broadcast %323 : vector<8x1xf32> to vector<8x256xf32>
    %372 = arith.mulf %370, %371 : vector<8x256xf32>
    %373 = vector.broadcast %325 : vector<8x1xf32> to vector<8x256xf32>
    %374 = arith.addf %372, %373 : vector<8x256xf32>
    %c3_410 = arith.constant 3 : index
    %c0_411 = arith.constant 0 : index
    %c0_412 = arith.constant 0 : index
    %375 = vector.load %arg3[%c3_410, %c0_411, %c0_412] : memref<4x8x1xf32, #tpu.memory_space<vmem>>, vector<1x8x1xf32>
    %376 = vector.shape_cast %375 : vector<1x8x1xf32> to vector<8x1xf32>
    %c3_413 = arith.constant 3 : index
    %c0_414 = arith.constant 0 : index
    %c0_415 = arith.constant 0 : index
    %377 = vector.load %arg4[%c3_413, %c0_414, %c0_415] : memref<4x8x1xf32, #tpu.memory_space<vmem>>, vector<1x8x1xf32>
    %378 = vector.shape_cast %377 : vector<1x8x1xf32> to vector<8x1xf32>
    %cst_416 = arith.constant 0.000000e+00 : f32
    %379 = vector.broadcast %cst_416 : f32 to vector<8x256xf32>
    %c3_417 = arith.constant 3 : index
    %c0_418 = arith.constant 0 : index
    %c0_419 = arith.constant 0 : index
    %c0_420 = arith.constant 0 : index
    %380 = vector.load %arg2[%c3_417, %c0_418, %c0_419, %c0_420] : memref<4x9x8x8xf32, #tpu.memory_space<vmem>>, vector<1x1x8x8xf32>
    %381 = vector.shape_cast %380 : vector<1x1x8x8xf32> to vector<8x8xf32>
    %cst_421 = arith.constant dense<0.000000e+00> : vector<8x256xf32>
    %382 = tpu.matmul %381, %374, %cst_421 {dimension_numbers = #tpu.dot_dimension_numbers<[1], [0], [0], [1], [0, 0, 1, 1], [], []>} : vector<8x8xf32>, vector<8x256xf32>, vector<8x256xf32> -> vector<8x256xf32>
    %383 = arith.addf %379, %382 : vector<8x256xf32>
    %c255_i32_422 = arith.constant 255 : i32
    %384 = tpu.dynamic_rotate %374 by %c255_i32_422 dim 1 : vector<8x256xf32>, i32 -> vector<8x256xf32>
    %c3_423 = arith.constant 3 : index
    %c1_424 = arith.constant 1 : index
    %c0_425 = arith.constant 0 : index
    %c0_426 = arith.constant 0 : index
    %385 = vector.load %arg2[%c3_423, %c1_424, %c0_425, %c0_426] : memref<4x9x8x8xf32, #tpu.memory_space<vmem>>, vector<1x1x8x8xf32>
    %386 = vector.shape_cast %385 : vector<1x1x8x8xf32> to vector<8x8xf32>
    %cst_427 = arith.constant dense<0.000000e+00> : vector<8x256xf32>
    %387 = tpu.matmul %386, %384, %cst_427 {dimension_numbers = #tpu.dot_dimension_numbers<[1], [0], [0], [1], [0, 0, 1, 1], [], []>} : vector<8x8xf32>, vector<8x256xf32>, vector<8x256xf32> -> vector<8x256xf32>
    %388 = arith.addf %383, %387 : vector<8x256xf32>
    %c254_i32_428 = arith.constant 254 : i32
    %389 = tpu.dynamic_rotate %374 by %c254_i32_428 dim 1 : vector<8x256xf32>, i32 -> vector<8x256xf32>
    %c3_429 = arith.constant 3 : index
    %c2_430 = arith.constant 2 : index
    %c0_431 = arith.constant 0 : index
    %c0_432 = arith.constant 0 : index
    %390 = vector.load %arg2[%c3_429, %c2_430, %c0_431, %c0_432] : memref<4x9x8x8xf32, #tpu.memory_space<vmem>>, vector<1x1x8x8xf32>
    %391 = vector.shape_cast %390 : vector<1x1x8x8xf32> to vector<8x8xf32>
    %cst_433 = arith.constant dense<0.000000e+00> : vector<8x256xf32>
    %392 = tpu.matmul %391, %389, %cst_433 {dimension_numbers = #tpu.dot_dimension_numbers<[1], [0], [0], [1], [0, 0, 1, 1], [], []>} : vector<8x8xf32>, vector<8x256xf32>, vector<8x256xf32> -> vector<8x256xf32>
    %393 = arith.addf %388, %392 : vector<8x256xf32>
    %c240_i32_434 = arith.constant 240 : i32
    %394 = tpu.dynamic_rotate %374 by %c240_i32_434 dim 1 : vector<8x256xf32>, i32 -> vector<8x256xf32>
    %c3_435 = arith.constant 3 : index
    %c3_436 = arith.constant 3 : index
    %c0_437 = arith.constant 0 : index
    %c0_438 = arith.constant 0 : index
    %395 = vector.load %arg2[%c3_435, %c3_436, %c0_437, %c0_438] : memref<4x9x8x8xf32, #tpu.memory_space<vmem>>, vector<1x1x8x8xf32>
    %396 = vector.shape_cast %395 : vector<1x1x8x8xf32> to vector<8x8xf32>
    %cst_439 = arith.constant dense<0.000000e+00> : vector<8x256xf32>
    %397 = tpu.matmul %396, %394, %cst_439 {dimension_numbers = #tpu.dot_dimension_numbers<[1], [0], [0], [1], [0, 0, 1, 1], [], []>} : vector<8x8xf32>, vector<8x256xf32>, vector<8x256xf32> -> vector<8x256xf32>
    %398 = arith.addf %393, %397 : vector<8x256xf32>
    %c239_i32_440 = arith.constant 239 : i32
    %399 = tpu.dynamic_rotate %374 by %c239_i32_440 dim 1 : vector<8x256xf32>, i32 -> vector<8x256xf32>
    %c3_441 = arith.constant 3 : index
    %c4_442 = arith.constant 4 : index
    %c0_443 = arith.constant 0 : index
    %c0_444 = arith.constant 0 : index
    %400 = vector.load %arg2[%c3_441, %c4_442, %c0_443, %c0_444] : memref<4x9x8x8xf32, #tpu.memory_space<vmem>>, vector<1x1x8x8xf32>
    %401 = vector.shape_cast %400 : vector<1x1x8x8xf32> to vector<8x8xf32>
    %cst_445 = arith.constant dense<0.000000e+00> : vector<8x256xf32>
    %402 = tpu.matmul %401, %399, %cst_445 {dimension_numbers = #tpu.dot_dimension_numbers<[1], [0], [0], [1], [0, 0, 1, 1], [], []>} : vector<8x8xf32>, vector<8x256xf32>, vector<8x256xf32> -> vector<8x256xf32>
    %403 = arith.addf %398, %402 : vector<8x256xf32>
    %c238_i32_446 = arith.constant 238 : i32
    %404 = tpu.dynamic_rotate %374 by %c238_i32_446 dim 1 : vector<8x256xf32>, i32 -> vector<8x256xf32>
    %c3_447 = arith.constant 3 : index
    %c5_448 = arith.constant 5 : index
    %c0_449 = arith.constant 0 : index
    %c0_450 = arith.constant 0 : index
    %405 = vector.load %arg2[%c3_447, %c5_448, %c0_449, %c0_450] : memref<4x9x8x8xf32, #tpu.memory_space<vmem>>, vector<1x1x8x8xf32>
    %406 = vector.shape_cast %405 : vector<1x1x8x8xf32> to vector<8x8xf32>
    %cst_451 = arith.constant dense<0.000000e+00> : vector<8x256xf32>
    %407 = tpu.matmul %406, %404, %cst_451 {dimension_numbers = #tpu.dot_dimension_numbers<[1], [0], [0], [1], [0, 0, 1, 1], [], []>} : vector<8x8xf32>, vector<8x256xf32>, vector<8x256xf32> -> vector<8x256xf32>
    %408 = arith.addf %403, %407 : vector<8x256xf32>
    %c224_i32_452 = arith.constant 224 : i32
    %409 = tpu.dynamic_rotate %374 by %c224_i32_452 dim 1 : vector<8x256xf32>, i32 -> vector<8x256xf32>
    %c3_453 = arith.constant 3 : index
    %c6_454 = arith.constant 6 : index
    %c0_455 = arith.constant 0 : index
    %c0_456 = arith.constant 0 : index
    %410 = vector.load %arg2[%c3_453, %c6_454, %c0_455, %c0_456] : memref<4x9x8x8xf32, #tpu.memory_space<vmem>>, vector<1x1x8x8xf32>
    %411 = vector.shape_cast %410 : vector<1x1x8x8xf32> to vector<8x8xf32>
    %cst_457 = arith.constant dense<0.000000e+00> : vector<8x256xf32>
    %412 = tpu.matmul %411, %409, %cst_457 {dimension_numbers = #tpu.dot_dimension_numbers<[1], [0], [0], [1], [0, 0, 1, 1], [], []>} : vector<8x8xf32>, vector<8x256xf32>, vector<8x256xf32> -> vector<8x256xf32>
    %413 = arith.addf %408, %412 : vector<8x256xf32>
    %c223_i32_458 = arith.constant 223 : i32
    %414 = tpu.dynamic_rotate %374 by %c223_i32_458 dim 1 : vector<8x256xf32>, i32 -> vector<8x256xf32>
    %c3_459 = arith.constant 3 : index
    %c7_460 = arith.constant 7 : index
    %c0_461 = arith.constant 0 : index
    %c0_462 = arith.constant 0 : index
    %415 = vector.load %arg2[%c3_459, %c7_460, %c0_461, %c0_462] : memref<4x9x8x8xf32, #tpu.memory_space<vmem>>, vector<1x1x8x8xf32>
    %416 = vector.shape_cast %415 : vector<1x1x8x8xf32> to vector<8x8xf32>
    %cst_463 = arith.constant dense<0.000000e+00> : vector<8x256xf32>
    %417 = tpu.matmul %416, %414, %cst_463 {dimension_numbers = #tpu.dot_dimension_numbers<[1], [0], [0], [1], [0, 0, 1, 1], [], []>} : vector<8x8xf32>, vector<8x256xf32>, vector<8x256xf32> -> vector<8x256xf32>
    %418 = arith.addf %413, %417 : vector<8x256xf32>
    %c222_i32_464 = arith.constant 222 : i32
    %419 = tpu.dynamic_rotate %374 by %c222_i32_464 dim 1 : vector<8x256xf32>, i32 -> vector<8x256xf32>
    %c3_465 = arith.constant 3 : index
    %c8_466 = arith.constant 8 : index
    %c0_467 = arith.constant 0 : index
    %c0_468 = arith.constant 0 : index
    %420 = vector.load %arg2[%c3_465, %c8_466, %c0_467, %c0_468] : memref<4x9x8x8xf32, #tpu.memory_space<vmem>>, vector<1x1x8x8xf32>
    %421 = vector.shape_cast %420 : vector<1x1x8x8xf32> to vector<8x8xf32>
    %cst_469 = arith.constant dense<0.000000e+00> : vector<8x256xf32>
    %422 = tpu.matmul %421, %419, %cst_469 {dimension_numbers = #tpu.dot_dimension_numbers<[1], [0], [0], [1], [0, 0, 1, 1], [], []>} : vector<8x8xf32>, vector<8x256xf32>, vector<8x256xf32> -> vector<8x256xf32>
    %423 = arith.addf %418, %422 : vector<8x256xf32>
    %424 = vector.broadcast %376 : vector<8x1xf32> to vector<8x256xf32>
    %425 = arith.mulf %423, %424 : vector<8x256xf32>
    %426 = vector.broadcast %378 : vector<8x1xf32> to vector<8x256xf32>
    %427 = arith.addf %425, %426 : vector<8x256xf32>
    %428 = arith.maximumf %213, %427 : vector<8x256xf32>
    %c0_470 = arith.constant 0 : index
    %c0_471 = arith.constant 0 : index
    %c0_472 = arith.constant 0 : index
    %429 = vector.load %arg5[%c0_470, %c0_471, %c0_472] : memref<1x8x256xf32, #tpu.memory_space<vmem>>, vector<1x8x256xf32>
    %430 = vector.shape_cast %429 : vector<1x8x256xf32> to vector<8x256xf32>
    %431 = vector.shape_cast %428 : vector<8x256xf32> to vector<1x8x256xf32>
    tpu.vector_store %arg5[%c0_470, %c0_471, %c0_472], %431 {strides = array<i32>} : memref<1x8x256xf32, #tpu.memory_space<vmem>>, vector<1x8x256xf32>,
    return
  }
  func.func @transform_0(%arg0: i32) -> (i32, i32, i32, i32) {
    %c0_i32 = arith.constant 0 : i32
    %c0_i32_0 = arith.constant 0 : i32
    %c0_i32_1 = arith.constant 0 : i32
    %c0_i32_2 = arith.constant 0 : i32
    return %arg0, %c0_i32, %c0_i32_0, %c0_i32_1 : i32, i32, i32, i32
  }
  func.func @transform_1(%arg0: i32) -> (i32, i32, i32, i32) {
    %c0_i32 = arith.constant 0 : i32
    %c0_i32_0 = arith.constant 0 : i32
    %c0_i32_1 = arith.constant 0 : i32
    %c0_i32_2 = arith.constant 0 : i32
    %c0_i32_3 = arith.constant 0 : i32
    return %c0_i32, %c0_i32_0, %c0_i32_1, %c0_i32_2 : i32, i32, i32, i32
  }
  func.func @transform_2(%arg0: i32) -> (i32, i32, i32) {
    %c0_i32 = arith.constant 0 : i32
    %c0_i32_0 = arith.constant 0 : i32
    %c0_i32_1 = arith.constant 0 : i32
    %c0_i32_2 = arith.constant 0 : i32
    return %c0_i32, %c0_i32_0, %c0_i32_1 : i32, i32, i32
  }
  func.func @transform_3(%arg0: i32) -> (i32, i32, i32) {
    %c0_i32 = arith.constant 0 : i32
    %c0_i32_0 = arith.constant 0 : i32
    %c0_i32_1 = arith.constant 0 : i32
    %c0_i32_2 = arith.constant 0 : i32
    return %c0_i32, %c0_i32_0, %c0_i32_1 : i32, i32, i32
  }
  func.func @transform_4(%arg0: i32) -> (i32, i32, i32) {
    %c0_i32 = arith.constant 0 : i32
    %c0_i32_0 = arith.constant 0 : i32
    %c0_i32_1 = arith.constant 0 : i32
    return %arg0, %c0_i32, %c0_i32_0 : i32, i32, i32
  }
}

</mosaic_0001>

<llo_original>
// kernel: qc_forward.4
$region0: #{qc_forward.4}
  #allocation0 [shape = 'u32[]', space=smem, size = 0x4, offset = 0x4, fixed_abs, tag = 'smem constant byte address 0x4 - core index']
  #allocation1 [shape = 'u32[144,128]{1,0:T(1,128)}', space=vmem, size = 0x12000, scoped, tag = 'internal scratch']
  %s0 = inlined_call_operand.vmem [shape: f32[2,512], index: 0, kind: input, shape index: {}]
  %s1 = inlined_call_operand.hbm [shape: bf16[512,512], index: 1, kind: input, shape index: {}]
  %s2 = inlined_call_operand.vmem [shape: f32[1,512], index: 2, kind: input, shape index: {}]
  %s3 = inlined_call_operand.vmem [shape: f32[2,512], index: 3, kind: output, shape index: {}]
  %s4 = sld [smem:[#allocation0]]
  $region53: #{qc_forward.4} parent=0
    _
  %s6 = ssub.s32 1, %s4
  %s7 = scalar_select 0, %s6, %s4
  $region1: #{qc_forward.4} parent=0
    #allocation2 [shape = 'u8[524288]{0}', space=vmem, size = 0x80000, scoped, tag = 'input window, operand 1']
    #allocation3 [shape = 's32[2]{0}', space=sflag, size = 0x8, scoped, tag = 'scoped memory for qc_forward.4']
    %8 = vsyncpa [#allocation3], 0
    %s9 = scalar_lea.sflag [#allocation3], 1
    %10 = vsyncpa %s9, 0
    loop: start=0, step=1, limit=4
    $region2: #{qc_forward.4} parent=1 // loop_pre_header
      _
    $region3: #{qc_forward.4} parent=1 // loop_header
      %s12 = sphi 0, %s16
      %p13 = scmp.ge.s32.totalorder %s12, 4
      %s20 = sphi 0, %s20
      %s22 = sphi 0, %s20
      %s23 = sphi 0, %s22
      %s37 = sphi 0, %s23
      %s43 = sphi 0, %s45
      %s46 = sphi 0, %s43
      %s47 = sphi 0, %s46
      %s63 = sphi 0, %s47
      %s67 = sphi 0, %s67
      %s69 = sphi 0, %s67
      %s70 = sphi 0, %s69
      %s84 = sphi 0, %s70
      %s88 = sphi 0, %s88
      %s90 = sphi 0, %s88
      %s91 = sphi 0, %s90
      %s105 = sphi 0, %s91
    $region4: #{qc_forward.4} parent=1 // loop_header_branch
      %15 = sbr.rel (%p13) target = $region8
    $region5: #{qc_forward.4} parent=1 // loop_body
      %s17 = ssub.s32 %s12, 1
      %s18 = ssub.s32 %s12, 2
      %s19 = sadd.s32 %s12, 1
      %s21 = sadd.s32 %s20, 1
      %p24 = scmp.eq.s32.totalorder %s12, 1
      %p25 = scmp.ne.s32.totalorder %s20, %s22
      %p26 = scmp.eq.s32.totalorder %s12, 0
      %p27 = por %p25, %p26
      %p28 = scmp.ne.s32.totalorder %s20, %s22
      %p29 = scmp.eq.s32.totalorder %s17, 1
      %p30 = por %p28, %p29
      %p31 = scmp.ne.s32.totalorder %s22, %s23
      %p32 = scmp.eq.s32.totalorder %s17, 0
      %p33 = por %p31, %p32
      %p34 = scmp.ne.s32.totalorder %s22, %s23
      %p35 = scmp.eq.s32.totalorder %s18, 1
      %p36 = por %p34, %p35
      %p38 = scmp.ne.s32.totalorder %s23, %s37
      %p39 = scmp.eq.s32.totalorder %s18, 0
      %p40 = por %p38, %p39
      %s41 = ssub.s32 %s12, %s19
      %p42 = scmp.eq.s32.totalorder %s41, 0
      %s44 = sadd.s32 %s43, 1
      %s45 = scalar_select %p42, %s43, %s44
      %p48 = pneg %p42
      %p49 = scmp.eq.s32.totalorder %s12, 1
      %p50 = por %p48, %p49
      %p51 = scmp.ne.s32.totalorder %s43, %s46
      %p52 = scmp.eq.s32.totalorder %s12, 0
      %p53 = por %p51, %p52
      %p54 = scmp.ne.s32.totalorder %s43, %s46
      %p55 = scmp.eq.s32.totalorder %s17, 1
      %p56 = por %p54, %p55
      %p57 = scmp.ne.s32.totalorder %s46, %s47
      %p58 = scmp.eq.s32.totalorder %s17, 0
      %p59 = por %p57, %p58
      %p60 = scmp.ne.s32.totalorder %s46, %s47
      %p61 = scmp.eq.s32.totalorder %s18, 1
      %p62 = por %p60, %p61
      %p64 = scmp.ne.s32.totalorder %s47, %s63
      %p65 = scmp.eq.s32.totalorder %s18, 0
      %p66 = por %p64, %p65
      %s68 = sadd.s32 %s67, 1
      %p71 = scmp.eq.s32.totalorder %s12, 1
      %p72 = scmp.ne.s32.totalorder %s67, %s69
      %p73 = scmp.eq.s32.totalorder %s12, 0
      %p74 = por %p72, %p73
      %p75 = scmp.ne.s32.totalorder %s67, %s69
      %p76 = scmp.eq.s32.totalorder %s17, 1
      %p77 = por %p75, %p76
      %p78 = scmp.ne.s32.totalorder %s69, %s70
      %p79 = scmp.eq.s32.totalorder %s17, 0
      %p80 = por %p78, %p79
      %p81 = scmp.ne.s32.totalorder %s69, %s70
      %p82 = scmp.eq.s32.totalorder %s18, 1
      %p83 = por %p81, %p82
      %p85 = scmp.ne.s32.totalorder %s70, %s84
      %p86 = scmp.eq.s32.totalorder %s18, 0
      %p87 = por %p85, %p86
      %s89 = sadd.s32 %s88, 1
      %p92 = scmp.eq.s32.totalorder %s12, 1
      %p93 = scmp.ne.s32.totalorder %s88, %s90
      %p94 = scmp.eq.s32.totalorder %s12, 0
      %p95 = por %p93, %p94
      %p96 = scmp.ne.s32.totalorder %s88, %s90
      %p97 = scmp.eq.s32.totalorder %s17, 1
      %p98 = por %p96, %p97
      %p99 = scmp.ne.s32.totalorder %s90, %s91
      %p100 = scmp.eq.s32.totalorder %s17, 0
      %p101 = por %p99, %p100
      %p102 = scmp.ne.s32.totalorder %s90, %s91
      %p103 = scmp.eq.s32.totalorder %s18, 1
      %p104 = por %p102, %p103
      %p106 = scmp.ne.s32.totalorder %s91, %s105
      %p107 = scmp.eq.s32.totalorder %s18, 0
      %p108 = por %p106, %p107
      %p109 = scmp.le.s32.totalorder 1, %s12
      %p110 = scmp.lt.s32.totalorder %s12, 3
      %p111 = pnand %p109, %p110
      %p112 = pneg %p111
      // Predicated region
      $region9: #{qc_forward.4} parent=5 // pred_check
        _
      $region10: #{qc_forward.4} parent=5 // pred_check_branch
        %114 = sbr.rel (%p111) target = $region12
      $region11: #{qc_forward.4} parent=5 // pred_region
        %s115 = ssub.s32 %s12, 1
        // Predicated region
        $region13: #{qc_forward.4} parent=11 // pred_check
          %p116 = pneg %p33
        $region14: #{qc_forward.4} parent=11 // pred_check_branch
          %118 = sbr.rel (%p116) target = $region16
        $region15: #{qc_forward.4} parent=11 // pred_region
          _
        $region16: #{qc_forward.4} parent=11 // pred_fallthru
          _
        // Predicated region
        $region17: #{qc_forward.4} parent=11 // pred_check
          %p119 = pneg %p80
        $region18: #{qc_forward.4} parent=11 // pred_check_branch
          %121 = sbr.rel (%p119) target = $region20
        $region19: #{qc_forward.4} parent=11 // pred_region
          _
        $region20: #{qc_forward.4} parent=11 // pred_fallthru
          _
      $region12: #{qc_forward.4} parent=5 // pred_fallthru
        _
      %p122 = scmp.lt.s32.totalorder %s12, 2
      // Predicated region
      $region21: #{qc_forward.4} parent=5 // pred_check
        %p123 = pneg %p122
      $region22: #{qc_forward.4} parent=5 // pred_check_branch
        %125 = sbr.rel (%p123) target = $region24
      $region23: #{qc_forward.4} parent=5 // pred_region
        // Predicated region
        $region25: #{qc_forward.4} parent=23 // pred_check
          %p126 = pneg %p53
        $region26: #{qc_forward.4} parent=23 // pred_check_branch
          %128 = sbr.rel (%p126) target = $region28
        $region27: #{qc_forward.4} parent=23 // pred_region
          %s129 = sand.u32 %s43, 1
          %s130 = scalar_lea.sflag [#allocation3], %s129
          %s131 = sand.u32 %s43, 1
          %s132 = smul.addr %s131, 512
          %s133 = scalar_lea.vmem [#allocation2], %s132
          %s134 = smul.u32 32, %s12
          %s136 = ssub.s32 8192, 8192
          %137 = vsyncadd %s130, %s136
          %s138 = smul.addr %s134, 4
          %s139 = smul.addr %s138, 64
          %s140 = scalar_lea.hbm %s1, %s139
          %s141 = sshll.u32 %s133, 4
          %s142 = int_to_ptr.vmem [resolvable:$true] %s141
          %147 = dma.hbm_to_vmem [thread:$0]  %s140, 8192, %s142, %s130, 256, 256, 16
        $region28: #{qc_forward.4} parent=23 // pred_fallthru
          _
      $region24: #{qc_forward.4} parent=5 // pred_fallthru
        _
      %p148 = scmp.le.s32.totalorder 1, %s12
      %p149 = scmp.lt.s32.totalorder %s12, 3
      %p150 = pnand %p148, %p149
      %p151 = pneg %p150
      // Predicated region
      $region29: #{qc_forward.4} parent=5 // pred_check
        _
      $region30: #{qc_forward.4} parent=5 // pred_check_branch
        %153 = sbr.rel (%p150) target = $region32
      $region31: #{qc_forward.4} parent=5 // pred_region
        %s154 = ssub.s32 %s12, 1
        %s155 = sand.u32 %s46, 1
        %s156 = scalar_lea.sflag [#allocation3], %s155
        %s157 = sand.u32 %s46, 1
        %s158 = smul.addr %s157, 512
        %s159 = scalar_lea.vmem [#allocation2], %s158
        // Predicated region
        $region33: #{qc_forward.4} parent=31 // pred_check
          %p160 = pneg %p59
        $region34: #{qc_forward.4} parent=31 // pred_check_branch
          %162 = sbr.rel (%p160) target = $region36
        $region35: #{qc_forward.4} parent=31 // pred_region
          %163 = dma.done %s156, 8192
        $region36: #{qc_forward.4} parent=31 // pred_fallthru
          _
        %p164 = pneg %p33
        %p165 = pneg %p30
        %s166 = sand.u32 %s46, 1
        %s167 = scalar_lea.sflag [#allocation3], %s166
        %s168 = sand.u32 %s46, 1
        %s169 = smul.addr %s168, 512
        %s170 = scalar_lea.vmem [#allocation2], %s169
        %p171 = pneg %p59
        %p172 = pneg %p56
        %p173 = pneg %p80
        %p174 = pneg %p77
        %p175 = pneg %p101
        %p176 = pneg %p98
        %s177 = smul.u32 32, %s17
        %p178 = scmp.eq.s32.totalorder %s17, 0
        // Predicated region
        $region37: #{qc_forward.4} parent=31 // pred_check
          %p179 = pneg %p178
        $region38: #{qc_forward.4} parent=31 // pred_check_branch
          %181 = sbr.rel (%p179) target = $region40
        $region39: #{qc_forward.4} parent=31 // pred_region
          %v182 = vld [vmem:[%s0] sm:$0xff]
          %v183 = vld [vmem:[%s2] sm:$0xf]
          %v185 = vlaneseq
          %v186 = vshrl.u32 %v185, 7
          %v187 = vsub.s32 0, %v186
          %v188 = vrot.slane %v183, %v187
          %v189 = vlaneseq
          %v190 = vshrl.u32 %v189, 7
          %v191 = vsub.s32 1, %v190
          %v192 = vrot.slane %v183, %v191
          %v193 = vlaneseq
          %v194 = vshrl.u32 %v193, 7
          %v195 = vsub.s32 2, %v194
          %v196 = vrot.slane %v183, %v195
          %v197 = vlaneseq
          %v198 = vshrl.u32 %v197, 7
          %v199 = vsub.s32 3, %v198
          %v200 = vrot.slane %v183, %v199
          %v201 = vcombine.low %v188, %v192
          %v202 = vcombine.low %v196, %v200
          %v204 = vunpack.c.l.s4 1983009808
          %v205 = vunpack.c.0.s8 %v204
          %v206 = vlaneseq
          %v207 = vshrl.u32 %v206, 7
          %v208 = vsub.s32 %v205, %v207
          %v209 = vrot.slane %v201, %v208
          %v211 = vunpack.c.l.s4 1983009808
          %v212 = vunpack.c.0.s8 %v211
          %v213 = vlaneseq
          %v214 = vshrl.u32 %v213, 7
          %v215 = vsub.s32 %v212, %v214
          %v216 = vrot.slane %v202, %v215
          %v217 = vcombine.low %v209, %v216
          %v219 = vadd.f32 %v182, %v217
          %220 = vst [vmem:[%s3] sm:$0xff] %v219
        $region40: #{qc_forward.4} parent=31 // pred_fallthru
          _
        %s221 = smul.u32 %s17, 256
        %s222 = sshra.s32 %s221, 7
        %s223 = sand.u32 %s221, 127
        %s224 = smul.addr %s222, 2
        %s225 = scalar_lea.vmem %s0, %s224
        %v226 = vld [vmem:[%s225] sm:$0xf]
        %v229 = vunpack.c.l.s4 1983009808
        %v230 = vunpack.c.0.s8 %v229
        %v231 = vlaneseq
        %v232 = vshrl.u32 %v231, 7
        %v233 = vsub.s32 %v230, %v232
        %v234 = vrot.slane %v226, %v233
        %v235 = vcombine.high %v234, %v234
        %v238 = vpack.c.bf16 %v234, %v234
        %v239 = vpack.c.bf16 %v235, %v235
        %v240 = vld [vmem:[%s3] sm:$0xff]
        %v241 = vld [vmem:[%s159] sm:$0xff]
        %v242 = vld [vmem:[%s159 + $0x8] sm:$0xff]
        %v243 = vld [vmem:[%s159 + $0x10] sm:$0xff]
        %v244 = vld [vmem:[%s159 + $0x18] sm:$0xff]
        %v245 = vld [vmem:[%s159 + $0x20] sm:$0xff]
        %v246 = vld [vmem:[%s159 + $0x28] sm:$0xff]
        %v247 = vld [vmem:[%s159 + $0x30] sm:$0xff]
        %v248 = vld [vmem:[%s159 + $0x38] sm:$0xff]
        %v249 = vld [vmem:[%s159 + $0x40] sm:$0xff]
        %v250 = vld [vmem:[%s159 + $0x48] sm:$0xff]
        %v251 = vld [vmem:[%s159 + $0x50] sm:$0xff]
        %v252 = vld [vmem:[%s159 + $0x58] sm:$0xff]
        %v253 = vld [vmem:[%s159 + $0x60] sm:$0xff]
        %v254 = vld [vmem:[%s159 + $0x68] sm:$0xff]
        %v255 = vld [vmem:[%s159 + $0x70] sm:$0xff]
        %v256 = vld [vmem:[%s159 + $0x78] sm:$0xff]
        %v257 = vld [vmem:[%s159 + $0x80] sm:$0xff]
        %v258 = vld [vmem:[%s159 + $0x88] sm:$0xff]
        %v259 = vld [vmem:[%s159 + $0x90] sm:$0xff]
        %v260 = vld [vmem:[%s159 + $0x98] sm:$0xff]
        %v261 = vld [vmem:[%s159 + $0xa0] sm:$0xff]
        %v262 = vld [vmem:[%s159 + $0xa8] sm:$0xff]
        %v263 = vld [vmem:[%s159 + $0xb0] sm:$0xff]
        %v264 = vld [vmem:[%s159 + $0xb8] sm:$0xff]
        %v265 = vld [vmem:[%s159 + $0xc0] sm:$0xff]
        %v266 = vld [vmem:[%s159 + $0xc8] sm:$0xff]
        %v267 = vld [vmem:[%s159 + $0xd0] sm:$0xff]
        %v268 = vld [vmem:[%s159 + $0xd8] sm:$0xff]
        %v269 = vld [vmem:[%s159 + $0xe0] sm:$0xff]
        %v270 = vld [vmem:[%s159 + $0xe8] sm:$0xff]
        %v271 = vld [vmem:[%s159 + $0xf0] sm:$0xff]
        %v272 = vld [vmem:[%s159 + $0xf8] sm:$0xff]
        %v273 = vld [vmem:[%s159 + $0x100] sm:$0xff]
        %v274 = vld [vmem:[%s159 + $0x108] sm:$0xff]
        %v275 = vld [vmem:[%s159 + $0x110] sm:$0xff]
        %v276 = vld [vmem:[%s159 + $0x118] sm:$0xff]
        %v277 = vld [vmem:[%s159 + $0x120] sm:$0xff]
        %v278 = vld [vmem:[%s159 + $0x128] sm:$0xff]
        %v279 = vld [vmem:[%s159 + $0x130] sm:$0xff]
        %v280 = vld [vmem:[%s159 + $0x138] sm:$0xff]
        %v281 = vld [vmem:[%s159 + $0x140] sm:$0xff]
        %v282 = vld [vmem:[%s159 + $0x148] sm:$0xff]
        %v283 = vld [vmem:[%s159 + $0x150] sm:$0xff]
        %v284 = vld [vmem:[%s159 + $0x158] sm:$0xff]
        %v285 = vld [vmem:[%s159 + $0x160] sm:$0xff]
        %v286 = vld [vmem:[%s159 + $0x168] sm:$0xff]
        %v287 = vld [vmem:[%s159 + $0x170] sm:$0xff]
        %v288 = vld [vmem:[%s159 + $0x178] sm:$0xff]
        %v289 = vld [vmem:[%s159 + $0x180] sm:$0xff]
        %v290 = vld [vmem:[%s159 + $0x188] sm:$0xff]
        %v291 = vld [vmem:[%s159 + $0x190] sm:$0xff]
        %v292 = vld [vmem:[%s159 + $0x198] sm:$0xff]
        %v293 = vld [vmem:[%s159 + $0x1a0] sm:$0xff]
        %v294 = vld [vmem:[%s159 + $0x1a8] sm:$0xff]
        %v295 = vld [vmem:[%s159 + $0x1b0] sm:$0xff]
        %v296 = vld [vmem:[%s159 + $0x1b8] sm:$0xff]
        %v297 = vld [vmem:[%s159 + $0x1c0] sm:$0xff]
        %v298 = vld [vmem:[%s159 + $0x1c8] sm:$0xff]
        %v299 = vld [vmem:[%s159 + $0x1d0] sm:$0xff]
        %v300 = vld [vmem:[%s159 + $0x1d8] sm:$0xff]
        %v301 = vld [vmem:[%s159 + $0x1e0] sm:$0xff]
        %v302 = vld [vmem:[%s159 + $0x1e8] sm:$0xff]
        %v303 = vld [vmem:[%s159 + $0x1f0] sm:$0xff]
        %v304 = vld [vmem:[%s159 + $0x1f8] sm:$0xff]
        %v369 = vunpack.c.l.b16 %v241
        %v370 = vunpack.c.h.b16 %v241
        %v371 = vunpack.c.l.b16 %v242
        %v372 = vunpack.c.h.b16 %v242
        %v373 = vunpack.c.l.b16 %v243
        %v374 = vunpack.c.h.b16 %v243
        %v375 = vunpack.c.l.b16 %v244
        %v376 = vunpack.c.h.b16 %v244
        %v377 = vunpack.c.l.b16 %v245
        %v378 = vunpack.c.h.b16 %v245
        %v379 = vunpack.c.l.b16 %v246
        %v380 = vunpack.c.h.b16 %v246
        %v381 = vunpack.c.l.b16 %v247
        %v382 = vunpack.c.h.b16 %v247
        %v383 = vunpack.c.l.b16 %v248
        %v384 = vunpack.c.h.b16 %v248
        %v385 = vunpack.c.l.b16 %v249
        %v386 = vunpack.c.h.b16 %v249
        %v387 = vunpack.c.l.b16 %v250
        %v388 = vunpack.c.h.b16 %v250
        %v389 = vunpack.c.l.b16 %v251
        %v390 = vunpack.c.h.b16 %v251
        %v391 = vunpack.c.l.b16 %v252
        %v392 = vunpack.c.h.b16 %v252
        %v393 = vunpack.c.l.b16 %v253
        %v394 = vunpack.c.h.b16 %v253
        %v395 = vunpack.c.l.b16 %v254
        %v396 = vunpack.c.h.b16 %v254
        %v397 = vunpack.c.l.b16 %v255
        %v398 = vunpack.c.h.b16 %v255
        %v399 = vunpack.c.l.b16 %v256
        %v400 = vunpack.c.h.b16 %v256
        %v401 = vunpack.c.l.b16 %v257
        %v402 = vunpack.c.h.b16 %v257
        %v403 = vunpack.c.l.b16 %v258
        %v404 = vunpack.c.h.b16 %v258
        %v405 = vunpack.c.l.b16 %v259
        %v406 = vunpack.c.h.b16 %v259
        %v407 = vunpack.c.l.b16 %v260
        %v408 = vunpack.c.h.b16 %v260
        %v409 = vunpack.c.l.b16 %v261
        %v410 = vunpack.c.h.b16 %v261
        %v411 = vunpack.c.l.b16 %v262
        %v412 = vunpack.c.h.b16 %v262
        %v413 = vunpack.c.l.b16 %v263
        %v414 = vunpack.c.h.b16 %v263
        %v415 = vunpack.c.l.b16 %v264
        %v416 = vunpack.c.h.b16 %v264
        %v417 = vunpack.c.l.b16 %v265
        %v418 = vunpack.c.h.b16 %v265
        %v419 = vunpack.c.l.b16 %v266
        %v420 = vunpack.c.h.b16 %v266
        %v421 = vunpack.c.l.b16 %v267
        %v422 = vunpack.c.h.b16 %v267
        %v423 = vunpack.c.l.b16 %v268
        %v424 = vunpack.c.h.b16 %v268
        %v425 = vunpack.c.l.b16 %v269
        %v426 = vunpack.c.h.b16 %v269
        %v427 = vunpack.c.l.b16 %v270
        %v428 = vunpack.c.h.b16 %v270
        %v429 = vunpack.c.l.b16 %v271
        %v430 = vunpack.c.h.b16 %v271
        %v431 = vunpack.c.l.b16 %v272
        %v432 = vunpack.c.h.b16 %v272
        %v433 = vunpack.c.l.b16 %v273
        %v434 = vunpack.c.h.b16 %v273
        %v435 = vunpack.c.l.b16 %v274
        %v436 = vunpack.c.h.b16 %v274
        %v437 = vunpack.c.l.b16 %v275
        %v438 = vunpack.c.h.b16 %v275
        %v439 = vunpack.c.l.b16 %v276
        %v440 = vunpack.c.h.b16 %v276
        %v441 = vunpack.c.l.b16 %v277
        %v442 = vunpack.c.h.b16 %v277
        %v443 = vunpack.c.l.b16 %v278
        %v444 = vunpack.c.h.b16 %v278
        %v445 = vunpack.c.l.b16 %v279
        %v446 = vunpack.c.h.b16 %v279
        %v447 = vunpack.c.l.b16 %v280
        %v448 = vunpack.c.h.b16 %v280
        %v449 = vunpack.c.l.b16 %v281
        %v450 = vunpack.c.h.b16 %v281
        %v451 = vunpack.c.l.b16 %v282
        %v452 = vunpack.c.h.b16 %v282
        %v453 = vunpack.c.l.b16 %v283
        %v454 = vunpack.c.h.b16 %v283
        %v455 = vunpack.c.l.b16 %v284
        %v456 = vunpack.c.h.b16 %v284
        %v457 = vunpack.c.l.b16 %v285
        %v458 = vunpack.c.h.b16 %v285
        %v459 = vunpack.c.l.b16 %v286
        %v460 = vunpack.c.h.b16 %v286
        %v461 = vunpack.c.l.b16 %v287
        %v462 = vunpack.c.h.b16 %v287
        %v463 = vunpack.c.l.b16 %v288
        %v464 = vunpack.c.h.b16 %v288
        %v465 = vunpack.c.l.b16 %v289
        %v466 = vunpack.c.h.b16 %v289
        %v467 = vunpack.c.l.b16 %v290
        %v468 = vunpack.c.h.b16 %v290
        %v469 = vunpack.c.l.b16 %v291
        %v470 = vunpack.c.h.b16 %v291
        %v471 = vunpack.c.l.b16 %v292
        %v472 = vunpack.c.h.b16 %v292
        %v473 = vunpack.c.l.b16 %v293
        %v474 = vunpack.c.h.b16 %v293
        %v475 = vunpack.c.l.b16 %v294
        %v476 = vunpack.c.h.b16 %v294
        %v477 = vunpack.c.l.b16 %v295
        %v478 = vunpack.c.h.b16 %v295
        %v479 = vunpack.c.l.b16 %v296
        %v480 = vunpack.c.h.b16 %v296
        %v481 = vunpack.c.l.b16 %v297
        %v482 = vunpack.c.h.b16 %v297
        %v483 = vunpack.c.l.b16 %v298
        %v484 = vunpack.c.h.b16 %v298
        %v485 = vunpack.c.l.b16 %v299
        %v486 = vunpack.c.h.b16 %v299
        %v487 = vunpack.c.l.b16 %v300
        %v488 = vunpack.c.h.b16 %v300
        %v489 = vunpack.c.l.b16 %v301
        %v490 = vunpack.c.h.b16 %v301
        %v491 = vunpack.c.l.b16 %v302
        %v492 = vunpack.c.h.b16 %v302
        %v493 = vunpack.c.l.b16 %v303
        %v494 = vunpack.c.h.b16 %v303
        %v495 = vunpack.c.l.b16 %v304
        %v496 = vunpack.c.h.b16 %v304
        %v497 = vpack.c.b16 %v373, %v369
        %v498 = vpack.c.b16 %v374, %v370
        %v499 = vpack.c.b16 %v375, %v371
        %v500 = vpack.c.b16 %v376, %v372
        %v501 = vpack.c.b16 %v381, %v377
        %v502 = vpack.c.b16 %v382, %v378
        %v503 = vpack.c.b16 %v383, %v379
        %v504 = vpack.c.b16 %v384, %v380
        %v505 = vpack.c.b16 %v389, %v385
        %v506 = vpack.c.b16 %v390, %v386
        %v507 = vpack.c.b16 %v391, %v387
        %v508 = vpack.c.b16 %v392, %v388
        %v509 = vpack.c.b16 %v397, %v393
        %v510 = vpack.c.b16 %v398, %v394
        %v511 = vpack.c.b16 %v399, %v395
        %v512 = vpack.c.b16 %v400, %v396
        %v513 = vpack.c.b16 %v405, %v401
        %v514 = vpack.c.b16 %v406, %v402
        %v515 = vpack.c.b16 %v407, %v403
        %v516 = vpack.c.b16 %v408, %v404
        %v517 = vpack.c.b16 %v413, %v409
        %v518 = vpack.c.b16 %v414, %v410
        %v519 = vpack.c.b16 %v415, %v411
        %v520 = vpack.c.b16 %v416, %v412
        %v521 = vpack.c.b16 %v421, %v417
        %v522 = vpack.c.b16 %v422, %v418
        %v523 = vpack.c.b16 %v423, %v419
        %v524 = vpack.c.b16 %v424, %v420
        %v525 = vpack.c.b16 %v429, %v425
        %v526 = vpack.c.b16 %v430, %v426
        %v527 = vpack.c.b16 %v431, %v427
        %v528 = vpack.c.b16 %v432, %v428
        %v529 = vpack.c.b16 %v437, %v433
        %v530 = vpack.c.b16 %v438, %v434
        %v531 = vpack.c.b16 %v439, %v435
        %v532 = vpack.c.b16 %v440, %v436
        %v533 = vpack.c.b16 %v445, %v441
        %v534 = vpack.c.b16 %v446, %v442
        %v535 = vpack.c.b16 %v447, %v443
        %v536 = vpack.c.b16 %v448, %v444
        %v537 = vpack.c.b16 %v453, %v449
        %v538 = vpack.c.b16 %v454, %v450
        %v539 = vpack.c.b16 %v455, %v451
        %v540 = vpack.c.b16 %v456, %v452
        %v541 = vpack.c.b16 %v461, %v457
        %v542 = vpack.c.b16 %v462, %v458
        %v543 = vpack.c.b16 %v463, %v459
        %v544 = vpack.c.b16 %v464, %v460
        %v545 = vpack.c.b16 %v469, %v465
        %v546 = vpack.c.b16 %v470, %v466
        %v547 = vpack.c.b16 %v471, %v467
        %v548 = vpack.c.b16 %v472, %v468
        %v549 = vpack.c.b16 %v477, %v473
        %v550 = vpack.c.b16 %v478, %v474
        %v551 = vpack.c.b16 %v479, %v475
        %v552 = vpack.c.b16 %v480, %v476
        %v553 = vpack.c.b16 %v485, %v481
        %v554 = vpack.c.b16 %v486, %v482
        %v555 = vpack.c.b16 %v487, %v483
        %v556 = vpack.c.b16 %v488, %v484
        %v557 = vpack.c.b16 %v493, %v489
        %v558 = vpack.c.b16 %v494, %v490
        %v559 = vpack.c.b16 %v495, %v491
        %v560 = vpack.c.b16 %v496, %v492
        %625 = vmatprep.subr.bf16.mxu0 %v498
        %626 = vmatpush1.bf16.msra.mxu0 %v497
        %627 = vmatprep.subr.bf16.mxu0 %v502
        %628 = vmatpush1.bf16.msra.mxu0 %v501
        %629 = vmatprep.subr.bf16.mxu0 %v506
        %630 = vmatpush1.bf16.msra.mxu0 %v505
        %631 = vmatprep.subr.bf16.mxu0 %v510
        %632 = vmatpush1.bf16.msra.mxu0 %v509
        %633 = vmatprep.subr.bf16.mxu0 %v514
        %634 = vmatpush1.bf16.msra.mxu0 %v513
        %635 = vmatprep.subr.bf16.mxu0 %v518
        %636 = vmatpush1.bf16.msra.mxu0 %v517
        %637 = vmatprep.subr.bf16.mxu0 %v522
        %638 = vmatpush1.bf16.msra.mxu0 %v521
        %639 = vmatprep.subr.bf16.mxu0 %v526
        %640 = vmatpush1.bf16.msra.mxu0 %v525
        %641 = vmatprep.subr.bf16.mxu0 %v530
        %642 = vmatpush1.bf16.msra.mxu0 %v529
        %643 = vmatprep.subr.bf16.mxu0 %v534
        %644 = vmatpush1.bf16.msra.mxu0 %v533
        %645 = vmatprep.subr.bf16.mxu0 %v538
        %646 = vmatpush1.bf16.msra.mxu0 %v537
        %647 = vmatprep.subr.bf16.mxu0 %v542
        %648 = vmatpush1.bf16.msra.mxu0 %v541
        %649 = vmatprep.subr.bf16.mxu0 %v546
        %650 = vmatpush1.bf16.msra.mxu0 %v545
        %651 = vmatprep.subr.bf16.mxu0 %v550
        %652 = vmatpush1.bf16.msra.mxu0 %v549
        %653 = vmatprep.subr.bf16.mxu0 %v554
        %654 = vmatpush1.bf16.msra.mxu0 %v553
        %655 = vmatprep.subr.bf16.mxu0 %v558
        %656 = vmatpush1.bf16.msra.mxu0 %v557
        %657 = vmatprep.mubr.bf16.mxu0 %v239
        %658 = vmatmul.mubr.bf16.gmra.mrb[0].mxu0 %v238
        %v659 = vpop.f32.mrb[0].mxu0
        %v660 = vadd.f32 0.0, %v659
        %v661 = vpop.f32.mrb[0].mxu0
        %v662 = vadd.f32 0.0, %v661
        %v663 = vpop.f32.mrb[0].mxu0
        %v664 = vpop.f32.mrb[0].mxu0
        %665 = vdwg.mxu0
        %666 = vmatprep.subr.bf16.mxu0 %v500
        %667 = vmatpush1.bf16.msra.mxu0 %v499
        %668 = vmatprep.subr.bf16.mxu0 %v504
        %669 = vmatpush1.bf16.msra.mxu0 %v503
        %670 = vmatprep.subr.bf16.mxu0 %v508
        %671 = vmatpush1.bf16.msra.mxu0 %v507
        %672 = vmatprep.subr.bf16.mxu0 %v512
        %673 = vmatpush1.bf16.msra.mxu0 %v511
        %674 = vmatprep.subr.bf16.mxu0 %v516
        %675 = vmatpush1.bf16.msra.mxu0 %v515
        %676 = vmatprep.subr.bf16.mxu0 %v520
        %677 = vmatpush1.bf16.msra.mxu0 %v519
        %678 = vmatprep.subr.bf16.mxu0 %v524
        %679 = vmatpush1.bf16.msra.mxu0 %v523
        %680 = vmatprep.subr.bf16.mxu0 %v528
        %681 = vmatpush1.bf16.msra.mxu0 %v527
        %682 = vmatprep.subr.bf16.mxu0 %v532
        %683 = vmatpush1.bf16.msra.mxu0 %v531
        %684 = vmatprep.subr.bf16.mxu0 %v536
        %685 = vmatpush1.bf16.msra.mxu0 %v535
        %686 = vmatprep.subr.bf16.mxu0 %v540
        %687 = vmatpush1.bf16.msra.mxu0 %v539
        %688 = vmatprep.subr.bf16.mxu0 %v544
        %689 = vmatpush1.bf16.msra.mxu0 %v543
        %690 = vmatprep.subr.bf16.mxu0 %v548
        %691 = vmatpush1.bf16.msra.mxu0 %v547
        %692 = vmatprep.subr.bf16.mxu0 %v552
        %693 = vmatpush1.bf16.msra.mxu0 %v551
        %694 = vmatprep.subr.bf16.mxu0 %v556
        %695 = vmatpush1.bf16.msra.mxu0 %v555
        %696 = vmatprep.subr.bf16.mxu0 %v560
        %697 = vmatpush1.bf16.msra.mxu0 %v559
        %698 = vmatprep.mubr.bf16.mxu0 %v239
        %699 = vmatmul.mubr.bf16.gmra.mrb[0].mxu0 %v238
        %v700 = vpop.f32.mrb[0].mxu0
        %v701 = vadd.f32 0.0, %v700
        %v702 = vpop.f32.mrb[0].mxu0
        %v703 = vadd.f32 0.0, %v702
        %v704 = vpop.f32.mrb[0].mxu0
        %v705 = vpop.f32.mrb[0].mxu0
        %706 = vdwg.mxu0
        %v711 = vcombine.low %v660, %v662
        %v712 = vcombine.low %v701, %v703
        %v714 = vunpack.c.l.s4 1983009808
        %v715 = vunpack.c.0.s8 %v714
        %v716 = vlaneseq
        %v717 = vshrl.u32 %v716, 7
        %v718 = vsub.s32 %v715, %v717
        %v719 = vrot.slane %v711, %v718
        %v721 = vunpack.c.l.s4 1983009808
        %v722 = vunpack.c.0.s8 %v721
        %v723 = vlaneseq
        %v724 = vshrl.u32 %v723, 7
        %v725 = vsub.s32 %v722, %v724
        %v726 = vrot.slane %v712, %v725
        %v727 = vcombine.low %v719, %v726
        %v729 = vadd.f32 %v240, %v727
        %730 = vst [vmem:[%s3] sm:$0xff] %v729
        // Predicated region
        $region41: #{qc_forward.4} parent=31 // pred_check
          %p731 = pneg %p98
        $region42: #{qc_forward.4} parent=31 // pred_check_branch
          %733 = sbr.rel (%p731) target = $region44
        $region43: #{qc_forward.4} parent=31 // pred_region
          _
        $region44: #{qc_forward.4} parent=31 // pred_fallthru
          _
        // Predicated region
        $region45: #{qc_forward.4} parent=31 // pred_check
          %p734 = pneg %p98
        $region46: #{qc_forward.4} parent=31 // pred_check_branch
          %736 = sbr.rel (%p734) target = $region48
        $region47: #{qc_forward.4} parent=31 // pred_region
          _
        $region48: #{qc_forward.4} parent=31 // pred_fallthru
          _
      $region32: #{qc_forward.4} parent=5 // pred_fallthru
        _
      %p737 = scmp.le.s32.totalorder 2, %s12
      // Predicated region
      $region49: #{qc_forward.4} parent=5 // pred_check
        %p738 = pneg %p737
      $region50: #{qc_forward.4} parent=5 // pred_check_branch
        %740 = sbr.rel (%p738) target = $region52
      $region51: #{qc_forward.4} parent=5 // pred_region
        %s741 = ssub.s32 %s12, 2
      $region52: #{qc_forward.4} parent=5 // pred_fallthru
        _
    $region6: #{qc_forward.4} parent=1 // loop_footer
      %s16 = sadd.s32 1, %s12
    $region7: #{qc_forward.4} parent=1 // loop_footer_branch
      %11 = sbr.rel target = $region3
    $region8: #{qc_forward.4} parent=1 // loop_exit
      _
    %742 = vsyncpa [#allocation3], 1
    %s743 = scalar_lea.sflag [#allocation3], 1
    %744 = vsyncpa %s743, 1

// kernel: qc_forward.5
$region0: #{qc_forward.5}
  #allocation0 [shape = 'u32[]', space=smem, size = 0x4, offset = 0x4, fixed_abs, tag = 'smem constant byte address 0x4 - core index']
  #allocation1 [shape = 'u32[144,128]{1,0:T(1,128)}', space=vmem, size = 0x12000, scoped, tag = 'internal scratch']
  #allocation2 [shape = 'f32[2,1024]{1,0:T(2,128)}', space=vmem, size = 0x2000, scoped, tag = 'scratch operand']
  %s0 = inlined_call_operand.vmem [shape: f32[2,512], index: 0, kind: input, shape index: {}]
  %s1 = inlined_call_operand.vmem [shape: bf16[512,1024], index: 1, kind: input, shape index: {}]
  %s2 = inlined_call_operand.vmem [shape: f32[1,1024], index: 2, kind: input, shape index: {}]
  %s3 = inlined_call_operand.vmem [shape: f32[2,512], index: 3, kind: input, shape index: {}]
  %s4 = inlined_call_operand.hbm [shape: f32[2,512], index: 4, kind: output, shape index: {0}]
  %s5 = inlined_call_operand.vmem [shape: f32[2,1], index: 5, kind: output, shape index: {1}]
  %6 = xla_tuple %s4, %s5
  %s7 = sld [smem:[#allocation0]]
  $region65: #{qc_forward.5} parent=0
    _
  %s9 = ssub.s32 1, %s7
  %s10 = scalar_select 0, %s9, %s7
  $region1: #{qc_forward.5} parent=0
    #allocation3 [shape = 'u8[4096]{0}', space=vmem, size = 0x1000, scoped, tag = 'output window, operand 0, single buffered']
    #allocation4 [shape = 's32[2]{0}', space=sflag, size = 0x8, scoped, tag = 'scoped memory for qc_forward.5']
    %11 = vsyncpa [#allocation4], 0
    loop: start=0, step=1, limit=4
    $region2: #{qc_forward.5} parent=1 // loop_pre_header
      _
    $region3: #{qc_forward.5} parent=1 // loop_header
      %s13 = sphi 0, %s17
      %p14 = scmp.ge.s32.totalorder %s13, 4
      %s21 = sphi 0, %s21
      %s23 = sphi 0, %s21
      %s24 = sphi 0, %s23
      %s38 = sphi 0, %s24
      %s44 = sphi 0, %s46
      %s47 = sphi 0, %s44
      %s48 = sphi 0, %s47
      %s64 = sphi 0, %s48
      %s68 = sphi 0, %s68
      %s70 = sphi 0, %s68
      %s71 = sphi 0, %s70
      %s85 = sphi 0, %s71
      %s89 = sphi 0, %s89
      %s91 = sphi 0, %s89
      %s92 = sphi 0, %s91
      %s106 = sphi 0, %s92
      %s110 = sphi 0, %s110
      %s112 = sphi 0, %s110
      %s113 = sphi 0, %s112
      %s127 = sphi 0, %s113
      %s131 = sphi 0, %s131
      %s133 = sphi 0, %s131
      %s134 = sphi 0, %s133
      %s148 = sphi 0, %s134
    $region4: #{qc_forward.5} parent=1 // loop_header_branch
      %16 = sbr.rel (%p14) target = $region8
    $region5: #{qc_forward.5} parent=1 // loop_body
      %s18 = ssub.s32 %s13, 1
      %s19 = ssub.s32 %s13, 2
      %s20 = sadd.s32 %s13, 1
      %s22 = sadd.s32 %s21, 1
      %p25 = scmp.eq.s32.totalorder %s13, 1
      %p26 = scmp.ne.s32.totalorder %s21, %s23
      %p27 = scmp.eq.s32.totalorder %s13, 0
      %p28 = por %p26, %p27
      %p29 = scmp.ne.s32.totalorder %s21, %s23
      %p30 = scmp.eq.s32.totalorder %s18, 1
      %p31 = por %p29, %p30
      %p32 = scmp.ne.s32.totalorder %s23, %s24
      %p33 = scmp.eq.s32.totalorder %s18, 0
      %p34 = por %p32, %p33
      %p35 = scmp.ne.s32.totalorder %s23, %s24
      %p36 = scmp.eq.s32.totalorder %s19, 1
      %p37 = por %p35, %p36
      %p39 = scmp.ne.s32.totalorder %s24, %s38
      %p40 = scmp.eq.s32.totalorder %s19, 0
      %p41 = por %p39, %p40
      %s42 = ssub.s32 %s13, %s20
      %p43 = scmp.eq.s32.totalorder %s42, 0
      %s45 = sadd.s32 %s44, 1
      %s46 = scalar_select %p43, %s44, %s45
      %p49 = pneg %p43
      %p50 = scmp.eq.s32.totalorder %s13, 1
      %p51 = por %p49, %p50
      %p52 = scmp.ne.s32.totalorder %s44, %s47
      %p53 = scmp.eq.s32.totalorder %s13, 0
      %p54 = por %p52, %p53
      %p55 = scmp.ne.s32.totalorder %s44, %s47
      %p56 = scmp.eq.s32.totalorder %s18, 1
      %p57 = por %p55, %p56
      %p58 = scmp.ne.s32.totalorder %s47, %s48
      %p59 = scmp.eq.s32.totalorder %s18, 0
      %p60 = por %p58, %p59
      %p61 = scmp.ne.s32.totalorder %s47, %s48
      %p62 = scmp.eq.s32.totalorder %s19, 1
      %p63 = por %p61, %p62
      %p65 = scmp.ne.s32.totalorder %s48, %s64
      %p66 = scmp.eq.s32.totalorder %s19, 0
      %p67 = por %p65, %p66
      %s69 = sadd.s32 %s68, 1
      %p72 = scmp.eq.s32.totalorder %s13, 1
      %p73 = scmp.ne.s32.totalorder %s68, %s70
      %p74 = scmp.eq.s32.totalorder %s13, 0
      %p75 = por %p73, %p74
      %p76 = scmp.ne.s32.totalorder %s68, %s70
      %p77 = scmp.eq.s32.totalorder %s18, 1
      %p78 = por %p76, %p77
      %p79 = scmp.ne.s32.totalorder %s70, %s71
      %p80 = scmp.eq.s32.totalorder %s18, 0
      %p81 = por %p79, %p80
      %p82 = scmp.ne.s32.totalorder %s70, %s71
      %p83 = scmp.eq.s32.totalorder %s19, 1
      %p84 = por %p82, %p83
      %p86 = scmp.ne.s32.totalorder %s71, %s85
      %p87 = scmp.eq.s32.totalorder %s19, 0
      %p88 = por %p86, %p87
      %s90 = sadd.s32 %s89, 1
      %p93 = scmp.eq.s32.totalorder %s13, 1
      %p94 = scmp.ne.s32.totalorder %s89, %s91
      %p95 = scmp.eq.s32.totalorder %s13, 0
      %p96 = por %p94, %p95
      %p97 = scmp.ne.s32.totalorder %s89, %s91
      %p98 = scmp.eq.s32.totalorder %s18, 1
      %p99 = por %p97, %p98
      %p100 = scmp.ne.s32.totalorder %s91, %s92
      %p101 = scmp.eq.s32.totalorder %s18, 0
      %p102 = por %p100, %p101
      %p103 = scmp.ne.s32.totalorder %s91, %s92
      %p104 = scmp.eq.s32.totalorder %s19, 1
      %p105 = por %p103, %p104
      %p107 = scmp.ne.s32.totalorder %s92, %s106
      %p108 = scmp.eq.s32.totalorder %s19, 0
      %p109 = por %p107, %p108
      %s111 = sadd.s32 %s110, 1
      %p114 = scmp.eq.s32.totalorder %s13, 1
      %p115 = scmp.ne.s32.totalorder %s110, %s112
      %p116 = scmp.eq.s32.totalorder %s13, 0
      %p117 = por %p115, %p116
      %p118 = scmp.ne.s32.totalorder %s110, %s112
      %p119 = scmp.eq.s32.totalorder %s18, 1
      %p120 = por %p118, %p119
      %p121 = scmp.ne.s32.totalorder %s112, %s113
      %p122 = scmp.eq.s32.totalorder %s18, 0
      %p123 = por %p121, %p122
      %p124 = scmp.ne.s32.totalorder %s112, %s113
      %p125 = scmp.eq.s32.totalorder %s19, 1
      %p126 = por %p124, %p125
      %p128 = scmp.ne.s32.totalorder %s113, %s127
      %p129 = scmp.eq.s32.totalorder %s19, 0
      %p130 = por %p128, %p129
      %s132 = sadd.s32 %s131, 1
      %p135 = scmp.eq.s32.totalorder %s13, 1
      %p136 = scmp.ne.s32.totalorder %s131, %s133
      %p137 = scmp.eq.s32.totalorder %s13, 0
      %p138 = por %p136, %p137
      %p139 = scmp.ne.s32.totalorder %s131, %s133
      %p140 = scmp.eq.s32.totalorder %s18, 1
      %p141 = por %p139, %p140
      %p142 = scmp.ne.s32.totalorder %s133, %s134
      %p143 = scmp.eq.s32.totalorder %s18, 0
      %p144 = por %p142, %p143
      %p145 = scmp.ne.s32.totalorder %s133, %s134
      %p146 = scmp.eq.s32.totalorder %s19, 1
      %p147 = por %p145, %p146
      %p149 = scmp.ne.s32.totalorder %s134, %s148
      %p150 = scmp.eq.s32.totalorder %s19, 0
      %p151 = por %p149, %p150
      %p152 = scmp.le.s32.totalorder 1, %s13
      %p153 = scmp.lt.s32.totalorder %s13, 3
      %p154 = pnand %p152, %p153
      %p155 = pneg %p154
      // Predicated region
      $region9: #{qc_forward.5} parent=5 // pred_check
        _
      $region10: #{qc_forward.5} parent=5 // pred_check_branch
        %157 = sbr.rel (%p154) target = $region12
      $region11: #{qc_forward.5} parent=5 // pred_region
        %s158 = ssub.s32 %s13, 1
        // Predicated region
        $region13: #{qc_forward.5} parent=11 // pred_check
          %p159 = pneg %p34
        $region14: #{qc_forward.5} parent=11 // pred_check_branch
          %161 = sbr.rel (%p159) target = $region16
        $region15: #{qc_forward.5} parent=11 // pred_region
          _
        $region16: #{qc_forward.5} parent=11 // pred_fallthru
          _
        // Predicated region
        $region17: #{qc_forward.5} parent=11 // pred_check
          %p162 = pneg %p81
        $region18: #{qc_forward.5} parent=11 // pred_check_branch
          %164 = sbr.rel (%p162) target = $region20
        $region19: #{qc_forward.5} parent=11 // pred_region
          _
        $region20: #{qc_forward.5} parent=11 // pred_fallthru
          _
        // Predicated region
        $region21: #{qc_forward.5} parent=11 // pred_check
          %p165 = pneg %p102
        $region22: #{qc_forward.5} parent=11 // pred_check_branch
          %167 = sbr.rel (%p165) target = $region24
        $region23: #{qc_forward.5} parent=11 // pred_region
          _
        $region24: #{qc_forward.5} parent=11 // pred_fallthru
          _
      $region12: #{qc_forward.5} parent=5 // pred_fallthru
        _
      %p168 = scmp.lt.s32.totalorder %s13, 2
      // Predicated region
      $region25: #{qc_forward.5} parent=5 // pred_check
        %p169 = pneg %p168
      $region26: #{qc_forward.5} parent=5 // pred_check_branch
        %171 = sbr.rel (%p169) target = $region28
      $region27: #{qc_forward.5} parent=5 // pred_region
        // Predicated region
        $region29: #{qc_forward.5} parent=27 // pred_check
          %p172 = pneg %p54
        $region30: #{qc_forward.5} parent=27 // pred_check_branch
          %174 = sbr.rel (%p172) target = $region32
        $region31: #{qc_forward.5} parent=27 // pred_region
          %s175 = smul.u32 32, %s13
          %p176 = scmp.lt.s32.totalorder %s175, 63
          %s177 = scalar_select %p176, %s175, 63
          %s178 = smul.addr %s177, 8
          %s179 = smul.addr %s178, 4
          %s180 = scalar_lea.vmem %s1, %s179
          %s181 = smul.u32 32, %s13
        $region32: #{qc_forward.5} parent=27 // pred_fallthru
          _
      $region28: #{qc_forward.5} parent=5 // pred_fallthru
        _
      %p182 = scmp.le.s32.totalorder 1, %s13
      %p183 = scmp.lt.s32.totalorder %s13, 3
      %p184 = pnand %p182, %p183
      %p185 = pneg %p184
      // Predicated region
      $region33: #{qc_forward.5} parent=5 // pred_check
        _
      $region34: #{qc_forward.5} parent=5 // pred_check_branch
        %187 = sbr.rel (%p184) target = $region36
      $region35: #{qc_forward.5} parent=5 // pred_region
        %s188 = ssub.s32 %s13, 1
        %p189 = pneg %p34
        %p190 = pneg %p31
        %s191 = smul.u32 32, %s18
        %p192 = scmp.lt.s32.totalorder %s191, 63
        %s193 = scalar_select %p192, %s191, 63
        %s194 = smul.addr %s193, 8
        %s195 = smul.addr %s194, 4
        %s196 = scalar_lea.vmem %s1, %s195
        %p197 = pneg %p60
        %p198 = pneg %p57
        %p199 = pneg %p81
        %p200 = pneg %p78
        %p201 = pneg %p102
        %p202 = pneg %p99
        %p203 = pneg %p123
        %p204 = pneg %p120
        %p205 = pneg %p144
        %p206 = pneg %p141
        %s207 = smul.u32 32, %s18
        %p208 = scmp.lt.s32.totalorder %s207, 63
        %s209 = scalar_select %p208, %s207, 63
        %s210 = smul.addr %s209, 8
        %s211 = smul.addr %s210, 4
        %s212 = scalar_lea.vmem %s1, %s211
        %s213 = smul.u32 32, %s18
        %p214 = scmp.eq.s32.totalorder %s18, 0
        // Predicated region
        $region37: #{qc_forward.5} parent=35 // pred_check
          %p215 = pneg %p214
        $region38: #{qc_forward.5} parent=35 // pred_check_branch
          %217 = sbr.rel (%p215) target = $region40
        $region39: #{qc_forward.5} parent=35 // pred_region
          %218 = vst [vmem:[#allocation2] sm:$0xff] 0.0
          %219 = vst [vmem:[#allocation2 + $0x8] sm:$0xff] 0.0
        $region40: #{qc_forward.5} parent=35 // pred_fallthru
          _
        %s220 = smul.u32 %s18, 256
        %s221 = sshra.s32 %s220, 7
        %s222 = sand.u32 %s220, 127
        %s223 = smul.addr %s221, 2
        %s224 = scalar_lea.vmem %s0, %s223
        %v225 = vld [vmem:[%s224] sm:$0xf]
        %v228 = vunpack.c.l.s4 1983009808
        %v229 = vunpack.c.0.s8 %v228
        %v230 = vlaneseq
        %v231 = vshrl.u32 %v230, 7
        %v232 = vsub.s32 %v229, %v231
        %v233 = vrot.slane %v225, %v232
        %v234 = vcombine.high %v233, %v233
        %v237 = vpack.c.bf16 %v233, %v233
        %v238 = vpack.c.bf16 %v234, %v234
        %v239 = vld [vmem:[#allocation2] sm:$0xff]
        %v240 = vld [vmem:[#allocation2 + $0x8] sm:$0xff]
        %v241 = vld [vmem:[%s212] sm:$0xff]
        %v242 = vld [vmem:[%s212 + $0x8] sm:$0xff]
        %v243 = vld [vmem:[%s212 + $0x10] sm:$0xff]
        %v244 = vld [vmem:[%s212 + $0x18] sm:$0xff]
        %v245 = vld [vmem:[%s212 + $0x20] sm:$0xff]
        %v246 = vld [vmem:[%s212 + $0x28] sm:$0xff]
        %v247 = vld [vmem:[%s212 + $0x30] sm:$0xff]
        %v248 = vld [vmem:[%s212 + $0x38] sm:$0xff]
        %v249 = vld [vmem:[%s212 + $0x40] sm:$0xff]
        %v250 = vld [vmem:[%s212 + $0x48] sm:$0xff]
        %v251 = vld [vmem:[%s212 + $0x50] sm:$0xff]
        %v252 = vld [vmem:[%s212 + $0x58] sm:$0xff]
        %v253 = vld [vmem:[%s212 + $0x60] sm:$0xff]
        %v254 = vld [vmem:[%s212 + $0x68] sm:$0xff]
        %v255 = vld [vmem:[%s212 + $0x70] sm:$0xff]
        %v256 = vld [vmem:[%s212 + $0x78] sm:$0xff]
        %v257 = vld [vmem:[%s212 + $0x80] sm:$0xff]
        %v258 = vld [vmem:[%s212 + $0x88] sm:$0xff]
        %v259 = vld [vmem:[%s212 + $0x90] sm:$0xff]
        %v260 = vld [vmem:[%s212 + $0x98] sm:$0xff]
        %v261 = vld [vmem:[%s212 + $0xa0] sm:$0xff]
        %v262 = vld [vmem:[%s212 + $0xa8] sm:$0xff]
        %v263 = vld [vmem:[%s212 + $0xb0] sm:$0xff]
        %v264 = vld [vmem:[%s212 + $0xb8] sm:$0xff]
        %v265 = vld [vmem:[%s212 + $0xc0] sm:$0xff]
        %v266 = vld [vmem:[%s212 + $0xc8] sm:$0xff]
        %v267 = vld [vmem:[%s212 + $0xd0] sm:$0xff]
        %v268 = vld [vmem:[%s212 + $0xd8] sm:$0xff]
        %v269 = vld [vmem:[%s212 + $0xe0] sm:$0xff]
        %v270 = vld [vmem:[%s212 + $0xe8] sm:$0xff]
        %v271 = vld [vmem:[%s212 + $0xf0] sm:$0xff]
        %v272 = vld [vmem:[%s212 + $0xf8] sm:$0xff]
        %v273 = vld [vmem:[%s212 + $0x100] sm:$0xff]
        %v274 = vld [vmem:[%s212 + $0x108] sm:$0xff]
        %v275 = vld [vmem:[%s212 + $0x110] sm:$0xff]
        %v276 = vld [vmem:[%s212 + $0x118] sm:$0xff]
        %v277 = vld [vmem:[%s212 + $0x120] sm:$0xff]
        %v278 = vld [vmem:[%s212 + $0x128] sm:$0xff]
        %v279 = vld [vmem:[%s212 + $0x130] sm:$0xff]
        %v280 = vld [vmem:[%s212 + $0x138] sm:$0xff]
        %v281 = vld [vmem:[%s212 + $0x140] sm:$0xff]
        %v282 = vld [vmem:[%s212 + $0x148] sm:$0xff]
        %v283 = vld [vmem:[%s212 + $0x150] sm:$0xff]
        %v284 = vld [vmem:[%s212 + $0x158] sm:$0xff]
        %v285 = vld [vmem:[%s212 + $0x160] sm:$0xff]
        %v286 = vld [vmem:[%s212 + $0x168] sm:$0xff]
        %v287 = vld [vmem:[%s212 + $0x170] sm:$0xff]
        %v288 = vld [vmem:[%s212 + $0x178] sm:$0xff]
        %v289 = vld [vmem:[%s212 + $0x180] sm:$0xff]
        %v290 = vld [vmem:[%s212 + $0x188] sm:$0xff]
        %v291 = vld [vmem:[%s212 + $0x190] sm:$0xff]
        %v292 = vld [vmem:[%s212 + $0x198] sm:$0xff]
        %v293 = vld [vmem:[%s212 + $0x1a0] sm:$0xff]
        %v294 = vld [vmem:[%s212 + $0x1a8] sm:$0xff]
        %v295 = vld [vmem:[%s212 + $0x1b0] sm:$0xff]
        %v296 = vld [vmem:[%s212 + $0x1b8] sm:$0xff]
        %v297 = vld [vmem:[%s212 + $0x1c0] sm:$0xff]
        %v298 = vld [vmem:[%s212 + $0x1c8] sm:$0xff]
        %v299 = vld [vmem:[%s212 + $0x1d0] sm:$0xff]
        %v300 = vld [vmem:[%s212 + $0x1d8] sm:$0xff]
        %v301 = vld [vmem:[%s212 + $0x1e0] sm:$0xff]
        %v302 = vld [vmem:[%s212 + $0x1e8] sm:$0xff]
        %v303 = vld [vmem:[%s212 + $0x1f0] sm:$0xff]
        %v304 = vld [vmem:[%s212 + $0x1f8] sm:$0xff]
        %v305 = vld [vmem:[%s212 + $0x200] sm:$0xff]
        %v306 = vld [vmem:[%s212 + $0x208] sm:$0xff]
        %v307 = vld [vmem:[%s212 + $0x210] sm:$0xff]
        %v308 = vld [vmem:[%s212 + $0x218] sm:$0xff]
        %v309 = vld [vmem:[%s212 + $0x220] sm:$0xff]
        %v310 = vld [vmem:[%s212 + $0x228] sm:$0xff]
        %v311 = vld [vmem:[%s212 + $0x230] sm:$0xff]
        %v312 = vld [vmem:[%s212 + $0x238] sm:$0xff]
        %v313 = vld [vmem:[%s212 + $0x240] sm:$0xff]
        %v314 = vld [vmem:[%s212 + $0x248] sm:$0xff]
        %v315 = vld [vmem:[%s212 + $0x250] sm:$0xff]
        %v316 = vld [vmem:[%s212 + $0x258] sm:$0xff]
        %v317 = vld [vmem:[%s212 + $0x260] sm:$0xff]
        %v318 = vld [vmem:[%s212 + $0x268] sm:$0xff]
        %v319 = vld [vmem:[%s212 + $0x270] sm:$0xff]
        %v320 = vld [vmem:[%s212 + $0x278] sm:$0xff]
        %v321 = vld [vmem:[%s212 + $0x280] sm:$0xff]
        %v322 = vld [vmem:[%s212 + $0x288] sm:$0xff]
        %v323 = vld [vmem:[%s212 + $0x290] sm:$0xff]
        %v324 = vld [vmem:[%s212 + $0x298] sm:$0xff]
        %v325 = vld [vmem:[%s212 + $0x2a0] sm:$0xff]
        %v326 = vld [vmem:[%s212 + $0x2a8] sm:$0xff]
        %v327 = vld [vmem:[%s212 + $0x2b0] sm:$0xff]
        %v328 = vld [vmem:[%s212 + $0x2b8] sm:$0xff]
        %v329 = vld [vmem:[%s212 + $0x2c0] sm:$0xff]
        %v330 = vld [vmem:[%s212 + $0x2c8] sm:$0xff]
        %v331 = vld [vmem:[%s212 + $0x2d0] sm:$0xff]
        %v332 = vld [vmem:[%s212 + $0x2d8] sm:$0xff]
        %v333 = vld [vmem:[%s212 + $0x2e0] sm:$0xff]
        %v334 = vld [vmem:[%s212 + $0x2e8] sm:$0xff]
        %v335 = vld [vmem:[%s212 + $0x2f0] sm:$0xff]
        %v336 = vld [vmem:[%s212 + $0x2f8] sm:$0xff]
        %v337 = vld [vmem:[%s212 + $0x300] sm:$0xff]
        %v338 = vld [vmem:[%s212 + $0x308] sm:$0xff]
        %v339 = vld [vmem:[%s212 + $0x310] sm:$0xff]
        %v340 = vld [vmem:[%s212 + $0x318] sm:$0xff]
        %v341 = vld [vmem:[%s212 + $0x320] sm:$0xff]
        %v342 = vld [vmem:[%s212 + $0x328] sm:$0xff]
        %v343 = vld [vmem:[%s212 + $0x330] sm:$0xff]
        %v344 = vld [vmem:[%s212 + $0x338] sm:$0xff]
        %v345 = vld [vmem:[%s212 + $0x340] sm:$0xff]
        %v346 = vld [vmem:[%s212 + $0x348] sm:$0xff]
        %v347 = vld [vmem:[%s212 + $0x350] sm:$0xff]
        %v348 = vld [vmem:[%s212 + $0x358] sm:$0xff]
        %v349 = vld [vmem:[%s212 + $0x360] sm:$0xff]
        %v350 = vld [vmem:[%s212 + $0x368] sm:$0xff]
        %v351 = vld [vmem:[%s212 + $0x370] sm:$0xff]
        %v352 = vld [vmem:[%s212 + $0x378] sm:$0xff]
        %v353 = vld [vmem:[%s212 + $0x380] sm:$0xff]
        %v354 = vld [vmem:[%s212 + $0x388] sm:$0xff]
        %v355 = vld [vmem:[%s212 + $0x390] sm:$0xff]
        %v356 = vld [vmem:[%s212 + $0x398] sm:$0xff]
        %v357 = vld [vmem:[%s212 + $0x3a0] sm:$0xff]
        %v358 = vld [vmem:[%s212 + $0x3a8] sm:$0xff]
        %v359 = vld [vmem:[%s212 + $0x3b0] sm:$0xff]
        %v360 = vld [vmem:[%s212 + $0x3b8] sm:$0xff]
        %v361 = vld [vmem:[%s212 + $0x3c0] sm:$0xff]
        %v362 = vld [vmem:[%s212 + $0x3c8] sm:$0xff]
        %v363 = vld [vmem:[%s212 + $0x3d0] sm:$0xff]
        %v364 = vld [vmem:[%s212 + $0x3d8] sm:$0xff]
        %v365 = vld [vmem:[%s212 + $0x3e0] sm:$0xff]
        %v366 = vld [vmem:[%s212 + $0x3e8] sm:$0xff]
        %v367 = vld [vmem:[%s212 + $0x3f0] sm:$0xff]
        %v368 = vld [vmem:[%s212 + $0x3f8] sm:$0xff]
        %v497 = vunpack.c.l.b16 %v241
        %v498 = vunpack.c.h.b16 %v241
        %v499 = vunpack.c.l.b16 %v242
        %v500 = vunpack.c.h.b16 %v242
        %v501 = vunpack.c.l.b16 %v243
        %v502 = vunpack.c.h.b16 %v243
        %v503 = vunpack.c.l.b16 %v244
        %v504 = vunpack.c.h.b16 %v244
        %v505 = vunpack.c.l.b16 %v245
        %v506 = vunpack.c.h.b16 %v245
        %v507 = vunpack.c.l.b16 %v246
        %v508 = vunpack.c.h.b16 %v246
        %v509 = vunpack.c.l.b16 %v247
        %v510 = vunpack.c.h.b16 %v247
        %v511 = vunpack.c.l.b16 %v248
        %v512 = vunpack.c.h.b16 %v248
        %v513 = vunpack.c.l.b16 %v249
        %v514 = vunpack.c.h.b16 %v249
        %v515 = vunpack.c.l.b16 %v250
        %v516 = vunpack.c.h.b16 %v250
        %v517 = vunpack.c.l.b16 %v251
        %v518 = vunpack.c.h.b16 %v251
        %v519 = vunpack.c.l.b16 %v252
        %v520 = vunpack.c.h.b16 %v252
        %v521 = vunpack.c.l.b16 %v253
        %v522 = vunpack.c.h.b16 %v253
        %v523 = vunpack.c.l.b16 %v254
        %v524 = vunpack.c.h.b16 %v254
        %v525 = vunpack.c.l.b16 %v255
        %v526 = vunpack.c.h.b16 %v255
        %v527 = vunpack.c.l.b16 %v256
        %v528 = vunpack.c.h.b16 %v256
        %v529 = vunpack.c.l.b16 %v257
        %v530 = vunpack.c.h.b16 %v257
        %v531 = vunpack.c.l.b16 %v258
        %v532 = vunpack.c.h.b16 %v258
        %v533 = vunpack.c.l.b16 %v259
        %v534 = vunpack.c.h.b16 %v259
        %v535 = vunpack.c.l.b16 %v260
        %v536 = vunpack.c.h.b16 %v260
        %v537 = vunpack.c.l.b16 %v261
        %v538 = vunpack.c.h.b16 %v261
        %v539 = vunpack.c.l.b16 %v262
        %v540 = vunpack.c.h.b16 %v262
        %v541 = vunpack.c.l.b16 %v263
        %v542 = vunpack.c.h.b16 %v263
        %v543 = vunpack.c.l.b16 %v264
        %v544 = vunpack.c.h.b16 %v264
        %v545 = vunpack.c.l.b16 %v265
        %v546 = vunpack.c.h.b16 %v265
        %v547 = vunpack.c.l.b16 %v266
        %v548 = vunpack.c.h.b16 %v266
        %v549 = vunpack.c.l.b16 %v267
        %v550 = vunpack.c.h.b16 %v267
        %v551 = vunpack.c.l.b16 %v268
        %v552 = vunpack.c.h.b16 %v268
        %v553 = vunpack.c.l.b16 %v269
        %v554 = vunpack.c.h.b16 %v269
        %v555 = vunpack.c.l.b16 %v270
        %v556 = vunpack.c.h.b16 %v270
        %v557 = vunpack.c.l.b16 %v271
        %v558 = vunpack.c.h.b16 %v271
        %v559 = vunpack.c.l.b16 %v272
        %v560 = vunpack.c.h.b16 %v272
        %v561 = vunpack.c.l.b16 %v273
        %v562 = vunpack.c.h.b16 %v273
        %v563 = vunpack.c.l.b16 %v274
        %v564 = vunpack.c.h.b16 %v274
        %v565 = vunpack.c.l.b16 %v275
        %v566 = vunpack.c.h.b16 %v275
        %v567 = vunpack.c.l.b16 %v276
        %v568 = vunpack.c.h.b16 %v276
        %v569 = vunpack.c.l.b16 %v277
        %v570 = vunpack.c.h.b16 %v277
        %v571 = vunpack.c.l.b16 %v278
        %v572 = vunpack.c.h.b16 %v278
        %v573 = vunpack.c.l.b16 %v279
        %v574 = vunpack.c.h.b16 %v279
        %v575 = vunpack.c.l.b16 %v280
        %v576 = vunpack.c.h.b16 %v280
        %v577 = vunpack.c.l.b16 %v281
        %v578 = vunpack.c.h.b16 %v281
        %v579 = vunpack.c.l.b16 %v282
        %v580 = vunpack.c.h.b16 %v282
        %v581 = vunpack.c.l.b16 %v283
        %v582 = vunpack.c.h.b16 %v283
        %v583 = vunpack.c.l.b16 %v284
        %v584 = vunpack.c.h.b16 %v284
        %v585 = vunpack.c.l.b16 %v285
        %v586 = vunpack.c.h.b16 %v285
        %v587 = vunpack.c.l.b16 %v286
        %v588 = vunpack.c.h.b16 %v286
        %v589 = vunpack.c.l.b16 %v287
        %v590 = vunpack.c.h.b16 %v287
        %v591 = vunpack.c.l.b16 %v288
        %v592 = vunpack.c.h.b16 %v288
        %v593 = vunpack.c.l.b16 %v289
        %v594 = vunpack.c.h.b16 %v289
        %v595 = vunpack.c.l.b16 %v290
        %v596 = vunpack.c.h.b16 %v290
        %v597 = vunpack.c.l.b16 %v291
        %v598 = vunpack.c.h.b16 %v291
        %v599 = vunpack.c.l.b16 %v292
        %v600 = vunpack.c.h.b16 %v292
        %v601 = vunpack.c.l.b16 %v293
        %v602 = vunpack.c.h.b16 %v293
        %v603 = vunpack.c.l.b16 %v294
        %v604 = vunpack.c.h.b16 %v294
        %v605 = vunpack.c.l.b16 %v295
        %v606 = vunpack.c.h.b16 %v295
        %v607 = vunpack.c.l.b16 %v296
        %v608 = vunpack.c.h.b16 %v296
        %v609 = vunpack.c.l.b16 %v297
        %v610 = vunpack.c.h.b16 %v297
        %v611 = vunpack.c.l.b16 %v298
        %v612 = vunpack.c.h.b16 %v298
        %v613 = vunpack.c.l.b16 %v299
        %v614 = vunpack.c.h.b16 %v299
        %v615 = vunpack.c.l.b16 %v300
        %v616 = vunpack.c.h.b16 %v300
        %v617 = vunpack.c.l.b16 %v301
        %v618 = vunpack.c.h.b16 %v301
        %v619 = vunpack.c.l.b16 %v302
        %v620 = vunpack.c.h.b16 %v302
        %v621 = vunpack.c.l.b16 %v303
        %v622 = vunpack.c.h.b16 %v303
        %v623 = vunpack.c.l.b16 %v304
        %v624 = vunpack.c.h.b16 %v304
        %v625 = vunpack.c.l.b16 %v305
        %v626 = vunpack.c.h.b16 %v305
        %v627 = vunpack.c.l.b16 %v306
        %v628 = vunpack.c.h.b16 %v306
        %v629 = vunpack.c.l.b16 %v307
        %v630 = vunpack.c.h.b16 %v307
        %v631 = vunpack.c.l.b16 %v308
        %v632 = vunpack.c.h.b16 %v308
        %v633 = vunpack.c.l.b16 %v309
        %v634 = vunpack.c.h.b16 %v309
        %v635 = vunpack.c.l.b16 %v310
        %v636 = vunpack.c.h.b16 %v310
        %v637 = vunpack.c.l.b16 %v311
        %v638 = vunpack.c.h.b16 %v311
        %v639 = vunpack.c.l.b16 %v312
        %v640 = vunpack.c.h.b16 %v312
        %v641 = vunpack.c.l.b16 %v313
        %v642 = vunpack.c.h.b16 %v313
        %v643 = vunpack.c.l.b16 %v314
        %v644 = vunpack.c.h.b16 %v314
        %v645 = vunpack.c.l.b16 %v315
        %v646 = vunpack.c.h.b16 %v315
        %v647 = vunpack.c.l.b16 %v316
        %v648 = vunpack.c.h.b16 %v316
        %v649 = vunpack.c.l.b16 %v317
        %v650 = vunpack.c.h.b16 %v317
        %v651 = vunpack.c.l.b16 %v318
        %v652 = vunpack.c.h.b16 %v318
        %v653 = vunpack.c.l.b16 %v319
        %v654 = vunpack.c.h.b16 %v319
        %v655 = vunpack.c.l.b16 %v320
        %v656 = vunpack.c.h.b16 %v320
        %v657 = vunpack.c.l.b16 %v321
        %v658 = vunpack.c.h.b16 %v321
        %v659 = vunpack.c.l.b16 %v322
        %v660 = vunpack.c.h.b16 %v322
        %v661 = vunpack.c.l.b16 %v323
        %v662 = vunpack.c.h.b16 %v323
        %v663 = vunpack.c.l.b16 %v324
        %v664 = vunpack.c.h.b16 %v324
        %v665 = vunpack.c.l.b16 %v325
        %v666 = vunpack.c.h.b16 %v325
        %v667 = vunpack.c.l.b16 %v326
        %v668 = vunpack.c.h.b16 %v326
        %v669 = vunpack.c.l.b16 %v327
        %v670 = vunpack.c.h.b16 %v327
        %v671 = vunpack.c.l.b16 %v328
        %v672 = vunpack.c.h.b16 %v328
        %v673 = vunpack.c.l.b16 %v329
        %v674 = vunpack.c.h.b16 %v329
        %v675 = vunpack.c.l.b16 %v330
        %v676 = vunpack.c.h.b16 %v330
        %v677 = vunpack.c.l.b16 %v331
        %v678 = vunpack.c.h.b16 %v331
        %v679 = vunpack.c.l.b16 %v332
        %v680 = vunpack.c.h.b16 %v332
        %v681 = vunpack.c.l.b16 %v333
        %v682 = vunpack.c.h.b16 %v333
        %v683 = vunpack.c.l.b16 %v334
        %v684 = vunpack.c.h.b16 %v334
        %v685 = vunpack.c.l.b16 %v335
        %v686 = vunpack.c.h.b16 %v335
        %v687 = vunpack.c.l.b16 %v336
        %v688 = vunpack.c.h.b16 %v336
        %v689 = vunpack.c.l.b16 %v337
        %v690 = vunpack.c.h.b16 %v337
        %v691 = vunpack.c.l.b16 %v338
        %v692 = vunpack.c.h.b16 %v338
        %v693 = vunpack.c.l.b16 %v339
        %v694 = vunpack.c.h.b16 %v339
        %v695 = vunpack.c.l.b16 %v340
        %v696 = vunpack.c.h.b16 %v340
        %v697 = vunpack.c.l.b16 %v341
        %v698 = vunpack.c.h.b16 %v341
        %v699 = vunpack.c.l.b16 %v342
        %v700 = vunpack.c.h.b16 %v342
        %v701 = vunpack.c.l.b16 %v343
        %v702 = vunpack.c.h.b16 %v343
        %v703 = vunpack.c.l.b16 %v344
        %v704 = vunpack.c.h.b16 %v344
        %v705 = vunpack.c.l.b16 %v345
        %v706 = vunpack.c.h.b16 %v345
        %v707 = vunpack.c.l.b16 %v346
        %v708 = vunpack.c.h.b16 %v346
        %v709 = vunpack.c.l.b16 %v347
        %v710 = vunpack.c.h.b16 %v347
        %v711 = vunpack.c.l.b16 %v348
        %v712 = vunpack.c.h.b16 %v348
        %v713 = vunpack.c.l.b16 %v349
        %v714 = vunpack.c.h.b16 %v349
        %v715 = vunpack.c.l.b16 %v350
        %v716 = vunpack.c.h.b16 %v350
        %v717 = vunpack.c.l.b16 %v351
        %v718 = vunpack.c.h.b16 %v351
        %v719 = vunpack.c.l.b16 %v352
        %v720 = vunpack.c.h.b16 %v352
        %v721 = vunpack.c.l.b16 %v353
        %v722 = vunpack.c.h.b16 %v353
        %v723 = vunpack.c.l.b16 %v354
        %v724 = vunpack.c.h.b16 %v354
        %v725 = vunpack.c.l.b16 %v355
        %v726 = vunpack.c.h.b16 %v355
        %v727 = vunpack.c.l.b16 %v356
        %v728 = vunpack.c.h.b16 %v356
        %v729 = vunpack.c.l.b16 %v357
        %v730 = vunpack.c.h.b16 %v357
        %v731 = vunpack.c.l.b16 %v358
        %v732 = vunpack.c.h.b16 %v358
        %v733 = vunpack.c.l.b16 %v359
        %v734 = vunpack.c.h.b16 %v359
        %v735 = vunpack.c.l.b16 %v360
        %v736 = vunpack.c.h.b16 %v360
        %v737 = vunpack.c.l.b16 %v361
        %v738 = vunpack.c.h.b16 %v361
        %v739 = vunpack.c.l.b16 %v362
        %v740 = vunpack.c.h.b16 %v362
        %v741 = vunpack.c.l.b16 %v363
        %v742 = vunpack.c.h.b16 %v363
        %v743 = vunpack.c.l.b16 %v364
        %v744 = vunpack.c.h.b16 %v364
        %v745 = vunpack.c.l.b16 %v365
        %v746 = vunpack.c.h.b16 %v365
        %v747 = vunpack.c.l.b16 %v366
        %v748 = vunpack.c.h.b16 %v366
        %v749 = vunpack.c.l.b16 %v367
        %v750 = vunpack.c.h.b16 %v367
        %v751 = vunpack.c.l.b16 %v368
        %v752 = vunpack.c.h.b16 %v368
        %v753 = vpack.c.b16 %v505, %v497
        %v754 = vpack.c.b16 %v506, %v498
        %v755 = vpack.c.b16 %v507, %v499
        %v756 = vpack.c.b16 %v508, %v500
        %v757 = vpack.c.b16 %v509, %v501
        %v758 = vpack.c.b16 %v510, %v502
        %v759 = vpack.c.b16 %v511, %v503
        %v760 = vpack.c.b16 %v512, %v504
        %v761 = vpack.c.b16 %v521, %v513
        %v762 = vpack.c.b16 %v522, %v514
        %v763 = vpack.c.b16 %v523, %v515
        %v764 = vpack.c.b16 %v524, %v516
        %v765 = vpack.c.b16 %v525, %v517
        %v766 = vpack.c.b16 %v526, %v518
        %v767 = vpack.c.b16 %v527, %v519
        %v768 = vpack.c.b16 %v528, %v520
        %v769 = vpack.c.b16 %v537, %v529
        %v770 = vpack.c.b16 %v538, %v530
        %v771 = vpack.c.b16 %v539, %v531
        %v772 = vpack.c.b16 %v540, %v532
        %v773 = vpack.c.b16 %v541, %v533
        %v774 = vpack.c.b16 %v542, %v534
        %v775 = vpack.c.b16 %v543, %v535
        %v776 = vpack.c.b16 %v544, %v536
        %v777 = vpack.c.b16 %v553, %v545
        %v778 = vpack.c.b16 %v554, %v546
        %v779 = vpack.c.b16 %v555, %v547
        %v780 = vpack.c.b16 %v556, %v548
        %v781 = vpack.c.b16 %v557, %v549
        %v782 = vpack.c.b16 %v558, %v550
        %v783 = vpack.c.b16 %v559, %v551
        %v784 = vpack.c.b16 %v560, %v552
        %v785 = vpack.c.b16 %v569, %v561
        %v786 = vpack.c.b16 %v570, %v562
        %v787 = vpack.c.b16 %v571, %v563
        %v788 = vpack.c.b16 %v572, %v564
        %v789 = vpack.c.b16 %v573, %v565
        %v790 = vpack.c.b16 %v574, %v566
        %v791 = vpack.c.b16 %v575, %v567
        %v792 = vpack.c.b16 %v576, %v568
        %v793 = vpack.c.b16 %v585, %v577
        %v794 = vpack.c.b16 %v586, %v578
        %v795 = vpack.c.b16 %v587, %v579
        %v796 = vpack.c.b16 %v588, %v580
        %v797 = vpack.c.b16 %v589, %v581
        %v798 = vpack.c.b16 %v590, %v582
        %v799 = vpack.c.b16 %v591, %v583
        %v800 = vpack.c.b16 %v592, %v584
        %v801 = vpack.c.b16 %v601, %v593
        %v802 = vpack.c.b16 %v602, %v594
        %v803 = vpack.c.b16 %v603, %v595
        %v804 = vpack.c.b16 %v604, %v596
        %v805 = vpack.c.b16 %v605, %v597
        %v806 = vpack.c.b16 %v606, %v598
        %v807 = vpack.c.b16 %v607, %v599
        %v808 = vpack.c.b16 %v608, %v600
        %v809 = vpack.c.b16 %v617, %v609
        %v810 = vpack.c.b16 %v618, %v610
        %v811 = vpack.c.b16 %v619, %v611
        %v812 = vpack.c.b16 %v620, %v612
        %v813 = vpack.c.b16 %v621, %v613
        %v814 = vpack.c.b16 %v622, %v614
        %v815 = vpack.c.b16 %v623, %v615
        %v816 = vpack.c.b16 %v624, %v616
        %v817 = vpack.c.b16 %v633, %v625
        %v818 = vpack.c.b16 %v634, %v626
        %v819 = vpack.c.b16 %v635, %v627
        %v820 = vpack.c.b16 %v636, %v628
        %v821 = vpack.c.b16 %v637, %v629
        %v822 = vpack.c.b16 %v638, %v630
        %v823 = vpack.c.b16 %v639, %v631
        %v824 = vpack.c.b16 %v640, %v632
        %v825 = vpack.c.b16 %v649, %v641
        %v826 = vpack.c.b16 %v650, %v642
        %v827 = vpack.c.b16 %v651, %v643
        %v828 = vpack.c.b16 %v652, %v644
        %v829 = vpack.c.b16 %v653, %v645
        %v830 = vpack.c.b16 %v654, %v646
        %v831 = vpack.c.b16 %v655, %v647
        %v832 = vpack.c.b16 %v656, %v648
        %v833 = vpack.c.b16 %v665, %v657
        %v834 = vpack.c.b16 %v666, %v658
        %v835 = vpack.c.b16 %v667, %v659
        %v836 = vpack.c.b16 %v668, %v660
        %v837 = vpack.c.b16 %v669, %v661
        %v838 = vpack.c.b16 %v670, %v662
        %v839 = vpack.c.b16 %v671, %v663
        %v840 = vpack.c.b16 %v672, %v664
        %v841 = vpack.c.b16 %v681, %v673
        %v842 = vpack.c.b16 %v682, %v674
        %v843 = vpack.c.b16 %v683, %v675
        %v844 = vpack.c.b16 %v684, %v676
        %v845 = vpack.c.b16 %v685, %v677
        %v846 = vpack.c.b16 %v686, %v678
        %v847 = vpack.c.b16 %v687, %v679
        %v848 = vpack.c.b16 %v688, %v680
        %v849 = vpack.c.b16 %v697, %v689
        %v850 = vpack.c.b16 %v698, %v690
        %v851 = vpack.c.b16 %v699, %v691
        %v852 = vpack.c.b16 %v700, %v692
        %v853 = vpack.c.b16 %v701, %v693
        %v854 = vpack.c.b16 %v702, %v694
        %v855 = vpack.c.b16 %v703, %v695
        %v856 = vpack.c.b16 %v704, %v696
        %v857 = vpack.c.b16 %v713, %v705
        %v858 = vpack.c.b16 %v714, %v706
        %v859 = vpack.c.b16 %v715, %v707
        %v860 = vpack.c.b16 %v716, %v708
        %v861 = vpack.c.b16 %v717, %v709
        %v862 = vpack.c.b16 %v718, %v710
        %v863 = vpack.c.b16 %v719, %v711
        %v864 = vpack.c.b16 %v720, %v712
        %v865 = vpack.c.b16 %v729, %v721
        %v866 = vpack.c.b16 %v730, %v722
        %v867 = vpack.c.b16 %v731, %v723
        %v868 = vpack.c.b16 %v732, %v724
        %v869 = vpack.c.b16 %v733, %v725
        %v870 = vpack.c.b16 %v734, %v726
        %v871 = vpack.c.b16 %v735, %v727
        %v872 = vpack.c.b16 %v736, %v728
        %v873 = vpack.c.b16 %v745, %v737
        %v874 = vpack.c.b16 %v746, %v738
        %v875 = vpack.c.b16 %v747, %v739
        %v876 = vpack.c.b16 %v748, %v740
        %v877 = vpack.c.b16 %v749, %v741
        %v878 = vpack.c.b16 %v750, %v742
        %v879 = vpack.c.b16 %v751, %v743
        %v880 = vpack.c.b16 %v752, %v744
        %1009 = vmatprep.subr.bf16.mxu0 %v754
        %1010 = vmatpush1.bf16.msra.mxu0 %v753
        %1011 = vmatprep.subr.bf16.mxu0 %v762
        %1012 = vmatpush1.bf16.msra.mxu0 %v761
        %1013 = vmatprep.subr.bf16.mxu0 %v770
        %1014 = vmatpush1.bf16.msra.mxu0 %v769
        %1015 = vmatprep.subr.bf16.mxu0 %v778
        %1016 = vmatpush1.bf16.msra.mxu0 %v777
        %1017 = vmatprep.subr.bf16.mxu0 %v786
        %1018 = vmatpush1.bf16.msra.mxu0 %v785
        %1019 = vmatprep.subr.bf16.mxu0 %v794
        %1020 = vmatpush1.bf16.msra.mxu0 %v793
        %1021 = vmatprep.subr.bf16.mxu0 %v802
        %1022 = vmatpush1.bf16.msra.mxu0 %v801
        %1023 = vmatprep.subr.bf16.mxu0 %v810
        %1024 = vmatpush1.bf16.msra.mxu0 %v809
        %1025 = vmatprep.subr.bf16.mxu0 %v818
        %1026 = vmatpush1.bf16.msra.mxu0 %v817
        %1027 = vmatprep.subr.bf16.mxu0 %v826
        %1028 = vmatpush1.bf16.msra.mxu0 %v825
        %1029 = vmatprep.subr.bf16.mxu0 %v834
        %1030 = vmatpush1.bf16.msra.mxu0 %v833
        %1031 = vmatprep.subr.bf16.mxu0 %v842
        %1032 = vmatpush1.bf16.msra.mxu0 %v841
        %1033 = vmatprep.subr.bf16.mxu0 %v850
        %1034 = vmatpush1.bf16.msra.mxu0 %v849
        %1035 = vmatprep.subr.bf16.mxu0 %v858
        %1036 = vmatpush1.bf16.msra.mxu0 %v857
        %1037 = vmatprep.subr.bf16.mxu0 %v866
        %1038 = vmatpush1.bf16.msra.mxu0 %v865
        %1039 = vmatprep.subr.bf16.mxu0 %v874
        %1040 = vmatpush1.bf16.msra.mxu0 %v873
        %1041 = vmatprep.mubr.bf16.mxu0 %v238
        %1042 = vmatmul.mubr.bf16.gmra.mrb[0].mxu0 %v237
        %v1043 = vpop.f32.mrb[0].mxu0
        %v1044 = vadd.f32 0.0, %v1043
        %v1045 = vpop.f32.mrb[0].mxu0
        %v1046 = vadd.f32 0.0, %v1045
        %v1047 = vpop.f32.mrb[0].mxu0
        %v1048 = vpop.f32.mrb[0].mxu0
        %1049 = vdwg.mxu0
        %1050 = vmatprep.subr.bf16.mxu0 %v756
        %1051 = vmatpush1.bf16.msra.mxu0 %v755
        %1052 = vmatprep.subr.bf16.mxu0 %v764
        %1053 = vmatpush1.bf16.msra.mxu0 %v763
        %1054 = vmatprep.subr.bf16.mxu0 %v772
        %1055 = vmatpush1.bf16.msra.mxu0 %v771
        %1056 = vmatprep.subr.bf16.mxu0 %v780
        %1057 = vmatpush1.bf16.msra.mxu0 %v779
        %1058 = vmatprep.subr.bf16.mxu0 %v788
        %1059 = vmatpush1.bf16.msra.mxu0 %v787
        %1060 = vmatprep.subr.bf16.mxu0 %v796
        %1061 = vmatpush1.bf16.msra.mxu0 %v795
        %1062 = vmatprep.subr.bf16.mxu0 %v804
        %1063 = vmatpush1.bf16.msra.mxu0 %v803
        %1064 = vmatprep.subr.bf16.mxu0 %v812
        %1065 = vmatpush1.bf16.msra.mxu0 %v811
        %1066 = vmatprep.subr.bf16.mxu0 %v820
        %1067 = vmatpush1.bf16.msra.mxu0 %v819
        %1068 = vmatprep.subr.bf16.mxu0 %v828
        %1069 = vmatpush1.bf16.msra.mxu0 %v827
        %1070 = vmatprep.subr.bf16.mxu0 %v836
        %1071 = vmatpush1.bf16.msra.mxu0 %v835
        %1072 = vmatprep.subr.bf16.mxu0 %v844
        %1073 = vmatpush1.bf16.msra.mxu0 %v843
        %1074 = vmatprep.subr.bf16.mxu0 %v852
        %1075 = vmatpush1.bf16.msra.mxu0 %v851
        %1076 = vmatprep.subr.bf16.mxu0 %v860
        %1077 = vmatpush1.bf16.msra.mxu0 %v859
        %1078 = vmatprep.subr.bf16.mxu0 %v868
        %1079 = vmatpush1.bf16.msra.mxu0 %v867
        %1080 = vmatprep.subr.bf16.mxu0 %v876
        %1081 = vmatpush1.bf16.msra.mxu0 %v875
        %1082 = vmatprep.mubr.bf16.mxu0 %v238
        %1083 = vmatmul.mubr.bf16.gmra.mrb[0].mxu0 %v237
        %v1084 = vpop.f32.mrb[0].mxu0
        %v1085 = vadd.f32 0.0, %v1084
        %v1086 = vpop.f32.mrb[0].mxu0
        %v1087 = vadd.f32 0.0, %v1086
        %v1088 = vpop.f32.mrb[0].mxu0
        %v1089 = vpop.f32.mrb[0].mxu0
        %1090 = vdwg.mxu0
        %1091 = vmatprep.subr.bf16.mxu0 %v758
        %1092 = vmatpush1.bf16.msra.mxu0 %v757
        %1093 = vmatprep.subr.bf16.mxu0 %v766
        %1094 = vmatpush1.bf16.msra.mxu0 %v765
        %1095 = vmatprep.subr.bf16.mxu0 %v774
        %1096 = vmatpush1.bf16.msra.mxu0 %v773
        %1097 = vmatprep.subr.bf16.mxu0 %v782
        %1098 = vmatpush1.bf16.msra.mxu0 %v781
        %1099 = vmatprep.subr.bf16.mxu0 %v790
        %1100 = vmatpush1.bf16.msra.mxu0 %v789
        %1101 = vmatprep.subr.bf16.mxu0 %v798
        %1102 = vmatpush1.bf16.msra.mxu0 %v797
        %1103 = vmatprep.subr.bf16.mxu0 %v806
        %1104 = vmatpush1.bf16.msra.mxu0 %v805
        %1105 = vmatprep.subr.bf16.mxu0 %v814
        %1106 = vmatpush1.bf16.msra.mxu0 %v813
        %1107 = vmatprep.subr.bf16.mxu0 %v822
        %1108 = vmatpush1.bf16.msra.mxu0 %v821
        %1109 = vmatprep.subr.bf16.mxu0 %v830
        %1110 = vmatpush1.bf16.msra.mxu0 %v829
        %1111 = vmatprep.subr.bf16.mxu0 %v838
        %1112 = vmatpush1.bf16.msra.mxu0 %v837
        %1113 = vmatprep.subr.bf16.mxu0 %v846
        %1114 = vmatpush1.bf16.msra.mxu0 %v845
        %1115 = vmatprep.subr.bf16.mxu0 %v854
        %1116 = vmatpush1.bf16.msra.mxu0 %v853
        %1117 = vmatprep.subr.bf16.mxu0 %v862
        %1118 = vmatpush1.bf16.msra.mxu0 %v861
        %1119 = vmatprep.subr.bf16.mxu0 %v870
        %1120 = vmatpush1.bf16.msra.mxu0 %v869
        %1121 = vmatprep.subr.bf16.mxu0 %v878
        %1122 = vmatpush1.bf16.msra.mxu0 %v877
        %1123 = vmatprep.mubr.bf16.mxu0 %v238
        %1124 = vmatmul.mubr.bf16.gmra.mrb[0].mxu0 %v237
        %v1125 = vpop.f32.mrb[0].mxu0
        %v1126 = vadd.f32 0.0, %v1125
        %v1127 = vpop.f32.mrb[0].mxu0
        %v1128 = vadd.f32 0.0, %v1127
        %v1129 = vpop.f32.mrb[0].mxu0
        %v1130 = vpop.f32.mrb[0].mxu0
        %1131 = vdwg.mxu0
        %1132 = vmatprep.subr.bf16.mxu0 %v760
        %1133 = vmatpush1.bf16.msra.mxu0 %v759
        %1134 = vmatprep.subr.bf16.mxu0 %v768
        %1135 = vmatpush1.bf16.msra.mxu0 %v767
        %1136 = vmatprep.subr.bf16.mxu0 %v776
        %1137 = vmatpush1.bf16.msra.mxu0 %v775
        %1138 = vmatprep.subr.bf16.mxu0 %v784
        %1139 = vmatpush1.bf16.msra.mxu0 %v783
        %1140 = vmatprep.subr.bf16.mxu0 %v792
        %1141 = vmatpush1.bf16.msra.mxu0 %v791
        %1142 = vmatprep.subr.bf16.mxu0 %v800
        %1143 = vmatpush1.bf16.msra.mxu0 %v799
        %1144 = vmatprep.subr.bf16.mxu0 %v808
        %1145 = vmatpush1.bf16.msra.mxu0 %v807
        %1146 = vmatprep.subr.bf16.mxu0 %v816
        %1147 = vmatpush1.bf16.msra.mxu0 %v815
        %1148 = vmatprep.subr.bf16.mxu0 %v824
        %1149 = vmatpush1.bf16.msra.mxu0 %v823
        %1150 = vmatprep.subr.bf16.mxu0 %v832
        %1151 = vmatpush1.bf16.msra.mxu0 %v831
        %1152 = vmatprep.subr.bf16.mxu0 %v840
        %1153 = vmatpush1.bf16.msra.mxu0 %v839
        %1154 = vmatprep.subr.bf16.mxu0 %v848
        %1155 = vmatpush1.bf16.msra.mxu0 %v847
        %1156 = vmatprep.subr.bf16.mxu0 %v856
        %1157 = vmatpush1.bf16.msra.mxu0 %v855
        %1158 = vmatprep.subr.bf16.mxu0 %v864
        %1159 = vmatpush1.bf16.msra.mxu0 %v863
        %1160 = vmatprep.subr.bf16.mxu0 %v872
        %1161 = vmatpush1.bf16.msra.mxu0 %v871
        %1162 = vmatprep.subr.bf16.mxu0 %v880
        %1163 = vmatpush1.bf16.msra.mxu0 %v879
        %1164 = vmatprep.mubr.bf16.mxu0 %v238
        %1165 = vmatmul.mubr.bf16.gmra.mrb[0].mxu0 %v237
        %v1166 = vpop.f32.mrb[0].mxu0
        %v1167 = vadd.f32 0.0, %v1166
        %v1168 = vpop.f32.mrb[0].mxu0
        %v1169 = vadd.f32 0.0, %v1168
        %v1170 = vpop.f32.mrb[0].mxu0
        %v1171 = vpop.f32.mrb[0].mxu0
        %1172 = vdwg.mxu0
        %v1181 = vcombine.low %v1044, %v1046
        %v1182 = vcombine.low %v1085, %v1087
        %v1184 = vunpack.c.l.s4 1983009808
        %v1185 = vunpack.c.0.s8 %v1184
        %v1186 = vlaneseq
        %v1187 = vshrl.u32 %v1186, 7
        %v1188 = vsub.s32 %v1185, %v1187
        %v1189 = vrot.slane %v1181, %v1188
        %v1191 = vunpack.c.l.s4 1983009808
        %v1192 = vunpack.c.0.s8 %v1191
        %v1193 = vlaneseq
        %v1194 = vshrl.u32 %v1193, 7
        %v1195 = vsub.s32 %v1192, %v1194
        %v1196 = vrot.slane %v1182, %v1195
        %v1197 = vcombine.low %v1189, %v1196
        %v1198 = vcombine.low %v1126, %v1128
        %v1199 = vcombine.low %v1167, %v1169
        %v1201 = vunpack.c.l.s4 1983009808
        %v1202 = vunpack.c.0.s8 %v1201
        %v1203 = vlaneseq
        %v1204 = vshrl.u32 %v1203, 7
        %v1205 = vsub.s32 %v1202, %v1204
        %v1206 = vrot.slane %v1198, %v1205
        %v1208 = vunpack.c.l.s4 1983009808
        %v1209 = vunpack.c.0.s8 %v1208
        %v1210 = vlaneseq
        %v1211 = vshrl.u32 %v1210, 7
        %v1212 = vsub.s32 %v1209, %v1211
        %v1213 = vrot.slane %v1199, %v1212
        %v1214 = vcombine.low %v1206, %v1213
        %v1217 = vadd.f32 %v239, %v1197
        %v1218 = vadd.f32 %v240, %v1214
        %1219 = vst [vmem:[#allocation2] sm:$0xff] %v1217
        %1220 = vst [vmem:[#allocation2 + $0x8] sm:$0xff] %v1218
        %p1221 = scmp.eq.s32.totalorder %s18, 1
        // Predicated region
        $region41: #{qc_forward.5} parent=35 // pred_check
          %p1222 = pneg %p1221
        $region42: #{qc_forward.5} parent=35 // pred_check_branch
          %1224 = sbr.rel (%p1222) target = $region44
        $region43: #{qc_forward.5} parent=35 // pred_region
          %v1225 = vld [vmem:[#allocation2] sm:$0xff]
          %v1226 = vld [vmem:[#allocation2 + $0x8] sm:$0xff]
          %v1227 = vld [vmem:[%s2] sm:$0xff]
          %v1229 = vlaneseq
          %v1230 = vshrl.u32 %v1229, 7
          %v1231 = vsub.s32 0, %v1230
          %v1232 = vrot.slane %v1227, %v1231
          %v1233 = vlaneseq
          %v1234 = vshrl.u32 %v1233, 7
          %v1235 = vsub.s32 1, %v1234
          %v1236 = vrot.slane %v1227, %v1235
          %v1237 = vlaneseq
          %v1238 = vshrl.u32 %v1237, 7
          %v1239 = vsub.s32 2, %v1238
          %v1240 = vrot.slane %v1227, %v1239
          %v1241 = vlaneseq
          %v1242 = vshrl.u32 %v1241, 7
          %v1243 = vsub.s32 3, %v1242
          %v1244 = vrot.slane %v1227, %v1243
          %v1245 = vlaneseq
          %v1246 = vshrl.u32 %v1245, 7
          %v1247 = vsub.s32 4, %v1246
          %v1248 = vrot.slane %v1227, %v1247
          %v1249 = vlaneseq
          %v1250 = vshrl.u32 %v1249, 7
          %v1251 = vsub.s32 5, %v1250
          %v1252 = vrot.slane %v1227, %v1251
          %v1253 = vlaneseq
          %v1254 = vshrl.u32 %v1253, 7
          %v1255 = vsub.s32 6, %v1254
          %v1256 = vrot.slane %v1227, %v1255
          %v1257 = vlaneseq
          %v1258 = vshrl.u32 %v1257, 7
          %v1259 = vsub.s32 7, %v1258
          %v1260 = vrot.slane %v1227, %v1259
          %v1261 = vcombine.low %v1232, %v1236
          %v1262 = vcombine.low %v1240, %v1244
          %v1264 = vunpack.c.l.s4 1983009808
          %v1265 = vunpack.c.0.s8 %v1264
          %v1266 = vlaneseq
          %v1267 = vshrl.u32 %v1266, 7
          %v1268 = vsub.s32 %v1265, %v1267
          %v1269 = vrot.slane %v1261, %v1268
          %v1271 = vunpack.c.l.s4 1983009808
          %v1272 = vunpack.c.0.s8 %v1271
          %v1273 = vlaneseq
          %v1274 = vshrl.u32 %v1273, 7
          %v1275 = vsub.s32 %v1272, %v1274
          %v1276 = vrot.slane %v1262, %v1275
          %v1277 = vcombine.low %v1269, %v1276
          %v1278 = vcombine.low %v1248, %v1252
          %v1279 = vcombine.low %v1256, %v1260
          %v1281 = vunpack.c.l.s4 1983009808
          %v1282 = vunpack.c.0.s8 %v1281
          %v1283 = vlaneseq
          %v1284 = vshrl.u32 %v1283, 7
          %v1285 = vsub.s32 %v1282, %v1284
          %v1286 = vrot.slane %v1278, %v1285
          %v1288 = vunpack.c.l.s4 1983009808
          %v1289 = vunpack.c.0.s8 %v1288
          %v1290 = vlaneseq
          %v1291 = vshrl.u32 %v1290, 7
          %v1292 = vsub.s32 %v1289, %v1291
          %v1293 = vrot.slane %v1279, %v1292
          %v1294 = vcombine.low %v1286, %v1293
          %v1297 = vadd.f32 %v1225, %v1277
          %v1298 = vadd.f32 %v1226, %v1294
          %v1299 = vmul.f32 %v1298, 1.442695
          %v1300 = vpow.pop %v1299
          %v1301 = vld [vmem:[%s3] sm:$0xff]
          %v1302 = vmul.f32 %v1300, %v1301
          %v1303 = vadd.f32 %v1297, %v1302
          %1304 = vst [vmem:[#allocation3] sm:$0xff] %v1303
          %v1305 = vmul.f32 %v1301, -0.5
          %v1306 = vmul.f32 %v1305, %v1301
          %v1307 = vsub.f32 %v1306, %v1298
          %v1308 = vsub.f32 %v1307, 0.9189385
          %v1310 = vcombine.high %v1308, %v1308
          %v1312 = vunpack.c.l.s4 1983009808
          %v1313 = vunpack.c.0.s8 %v1312
          %v1314 = vlaneseq
          %v1315 = vshrl.u32 %v1314, 7
          %v1316 = vsub.s32 %v1313, %v1315
          %v1317 = vrot.slane %v1308, %v1316
          %v1319 = vunpack.c.l.s4 1983009808
          %v1320 = vunpack.c.0.s8 %v1319
          %v1321 = vlaneseq
          %v1322 = vshrl.u32 %v1321, 7
          %v1323 = vsub.s32 %v1320, %v1322
          %v1324 = vrot.slane %v1310, %v1323
          %v1325 = vcombine.high %v1317, %v1317
          %v1326 = vcombine.high %v1324, %v1324
          %vm1331 = vcmask 1041408
          %v1332 = vsel %vm1331, %v1317, 0.0
          %v1333 = vsel %vm1331, %v1325, 0.0
          %v1334 = vadd.f32 %v1332, %v1333
          %v1335 = vsel %vm1331, %v1324, 0.0
          %v1336 = vadd.f32 %v1334, %v1335
          %v1337 = vsel %vm1331, %v1326, 0.0
          %v1338 = vadd.f32 %v1336, %v1337
          %1339 = vadd.xlane.f32.xlu0 %v1338
          %v1340 = vpop.xlane.xlu0 %1339
          %vm1341 = vcmask 1024
          %1342 = vst.msk [vmem:[%s5] sm:$0x3] %vm1341, %v1340
        $region44: #{qc_forward.5} parent=35 // pred_fallthru
          _
        // Predicated region
        $region45: #{qc_forward.5} parent=35 // pred_check
          %p1343 = pneg %p120
        $region46: #{qc_forward.5} parent=35 // pred_check_branch
          %1345 = sbr.rel (%p1343) target = $region48
        $region47: #{qc_forward.5} parent=35 // pred_region
          %s1347 = ssub.s32 128, 128
          %1348 = vsyncadd [#allocation4], %s1347
          %s1350 = sshll.u32 [#allocation3], 4
          %s1351 = int_to_ptr.vmem [resolvable:$true] %s1350
          %1353 = dma.vmem_to_hbm [thread:$0]  %s1351, 128, %s4, [#allocation4]
        $region48: #{qc_forward.5} parent=35 // pred_fallthru
          _
        // Predicated region
        $region49: #{qc_forward.5} parent=35 // pred_check
          %p1354 = pneg %p141
        $region50: #{qc_forward.5} parent=35 // pred_check_branch
          %1356 = sbr.rel (%p1354) target = $region52
        $region51: #{qc_forward.5} parent=35 // pred_region
          _
        $region52: #{qc_forward.5} parent=35 // pred_fallthru
          _
        // Predicated region
        $region53: #{qc_forward.5} parent=35 // pred_check
          %p1357 = pneg %p120
        $region54: #{qc_forward.5} parent=35 // pred_check_branch
          %1359 = sbr.rel (%p1357) target = $region56
        $region55: #{qc_forward.5} parent=35 // pred_region
          %1360 = dma.done [#allocation4], 128
        $region56: #{qc_forward.5} parent=35 // pred_fallthru
          _
        // Predicated region
        $region57: #{qc_forward.5} parent=35 // pred_check
          %p1361 = pneg %p141
        $region58: #{qc_forward.5} parent=35 // pred_check_branch
          %1363 = sbr.rel (%p1361) target = $region60
        $region59: #{qc_forward.5} parent=35 // pred_region
          _
        $region60: #{qc_forward.5} parent=35 // pred_fallthru
          _
      $region36: #{qc_forward.5} parent=5 // pred_fallthru
        _
      %p1364 = scmp.le.s32.totalorder 2, %s13
      // Predicated region
      $region61: #{qc_forward.5} parent=5 // pred_check
        %p1365 = pneg %p1364
      $region62: #{qc_forward.5} parent=5 // pred_check_branch
        %1367 = sbr.rel (%p1365) target = $region64
      $region63: #{qc_forward.5} parent=5 // pred_region
        %s1368 = ssub.s32 %s13, 2
      $region64: #{qc_forward.5} parent=5 // pred_fallthru
        _
    $region6: #{qc_forward.5} parent=1 // loop_footer
      %s17 = sadd.s32 1, %s13
    $region7: #{qc_forward.5} parent=1 // loop_footer_branch
      %12 = sbr.rel target = $region3
    $region8: #{qc_forward.5} parent=1 // loop_exit
      _
    %1369 = vsyncpa [#allocation4], 1
    %s1370 = scalar_lea.sflag [#allocation4], 1
    %1371 = vsyncpa %s1370, 1

// kernel: qc_forward.3
$region0: #{qc_forward.3}
  #allocation0 [shape = 'u32[]', space=smem, size = 0x4, offset = 0x4, fixed_abs, tag = 'smem constant byte address 0x4 - core index']
  #allocation1 [shape = 'u32[144,128]{1,0:T(1,128)}', space=vmem, size = 0x12000, scoped, tag = 'internal scratch']
  %s0 = inlined_call_operand.vmem [shape: f32[2,2,8,256], index: 0, kind: input, shape index: {}]
  %s1 = inlined_call_operand.vmem [shape: f32[4,9,8,8], index: 1, kind: input, shape index: {}]
  %s2 = inlined_call_operand.vmem [shape: f32[4,8,1], index: 2, kind: input, shape index: {}]
  %s3 = inlined_call_operand.vmem [shape: f32[4,8,1], index: 3, kind: input, shape index: {}]
  %s4 = inlined_call_operand.vmem [shape: f32[2,8,256], index: 4, kind: output, shape index: {}]
  %s5 = sld [smem:[#allocation0]]
  $region49: #{qc_forward.3} parent=0
    _
  %s7 = ssub.s32 1, %s5
  %s8 = scalar_select 0, %s7, %s5
  loop: start=0, step=1, limit=4
  $region2: #{qc_forward.3} parent=0 // loop_pre_header
    _
  $region3: #{qc_forward.3} parent=0 // loop_header
    %s10 = sphi 0, %s14
    %p11 = scmp.ge.s32.totalorder %s10, 4
    %s20 = sphi 0, %s22
    %s23 = sphi 0, %s20
    %s24 = sphi 0, %s23
    %s40 = sphi 0, %s24
    %s44 = sphi 0, %s44
    %s46 = sphi 0, %s44
    %s47 = sphi 0, %s46
    %s61 = sphi 0, %s47
    %s65 = sphi 0, %s65
    %s67 = sphi 0, %s65
    %s68 = sphi 0, %s67
    %s82 = sphi 0, %s68
    %s86 = sphi 0, %s86
    %s88 = sphi 0, %s86
    %s89 = sphi 0, %s88
    %s103 = sphi 0, %s89
    %s109 = sphi 0, %s111
    %s112 = sphi 0, %s109
    %s113 = sphi 0, %s112
    %s129 = sphi 0, %s113
  $region4: #{qc_forward.3} parent=0 // loop_header_branch
    %13 = sbr.rel (%p11) target = $region8
  $region5: #{qc_forward.3} parent=0 // loop_body
    %s15 = ssub.s32 %s10, 1
    %s16 = ssub.s32 %s10, 2
    %s17 = sadd.s32 %s10, 1
    %s18 = ssub.s32 %s10, %s17
    %p19 = scmp.eq.s32.totalorder %s18, 0
    %s21 = sadd.s32 %s20, 1
    %s22 = scalar_select %p19, %s20, %s21
    %p25 = pneg %p19
    %p26 = scmp.eq.s32.totalorder %s10, 1
    %p27 = por %p25, %p26
    %p28 = scmp.ne.s32.totalorder %s20, %s23
    %p29 = scmp.eq.s32.totalorder %s10, 0
    %p30 = por %p28, %p29
    %p31 = scmp.ne.s32.totalorder %s20, %s23
    %p32 = scmp.eq.s32.totalorder %s15, 1
    %p33 = por %p31, %p32
    %p34 = scmp.ne.s32.totalorder %s23, %s24
    %p35 = scmp.eq.s32.totalorder %s15, 0
    %p36 = por %p34, %p35
    %p37 = scmp.ne.s32.totalorder %s23, %s24
    %p38 = scmp.eq.s32.totalorder %s16, 1
    %p39 = por %p37, %p38
    %p41 = scmp.ne.s32.totalorder %s24, %s40
    %p42 = scmp.eq.s32.totalorder %s16, 0
    %p43 = por %p41, %p42
    %s45 = sadd.s32 %s44, 1
    %p48 = scmp.eq.s32.totalorder %s10, 1
    %p49 = scmp.ne.s32.totalorder %s44, %s46
    %p50 = scmp.eq.s32.totalorder %s10, 0
    %p51 = por %p49, %p50
    %p52 = scmp.ne.s32.totalorder %s44, %s46
    %p53 = scmp.eq.s32.totalorder %s15, 1
    %p54 = por %p52, %p53
    %p55 = scmp.ne.s32.totalorder %s46, %s47
    %p56 = scmp.eq.s32.totalorder %s15, 0
    %p57 = por %p55, %p56
    %p58 = scmp.ne.s32.totalorder %s46, %s47
    %p59 = scmp.eq.s32.totalorder %s16, 1
    %p60 = por %p58, %p59
    %p62 = scmp.ne.s32.totalorder %s47, %s61
    %p63 = scmp.eq.s32.totalorder %s16, 0
    %p64 = por %p62, %p63
    %s66 = sadd.s32 %s65, 1
    %p69 = scmp.eq.s32.totalorder %s10, 1
    %p70 = scmp.ne.s32.totalorder %s65, %s67
    %p71 = scmp.eq.s32.totalorder %s10, 0
    %p72 = por %p70, %p71
    %p73 = scmp.ne.s32.totalorder %s65, %s67
    %p74 = scmp.eq.s32.totalorder %s15, 1
    %p75 = por %p73, %p74
    %p76 = scmp.ne.s32.totalorder %s67, %s68
    %p77 = scmp.eq.s32.totalorder %s15, 0
    %p78 = por %p76, %p77
    %p79 = scmp.ne.s32.totalorder %s67, %s68
    %p80 = scmp.eq.s32.totalorder %s16, 1
    %p81 = por %p79, %p80
    %p83 = scmp.ne.s32.totalorder %s68, %s82
    %p84 = scmp.eq.s32.totalorder %s16, 0
    %p85 = por %p83, %p84
    %s87 = sadd.s32 %s86, 1
    %p90 = scmp.eq.s32.totalorder %s10, 1
    %p91 = scmp.ne.s32.totalorder %s86, %s88
    %p92 = scmp.eq.s32.totalorder %s10, 0
    %p93 = por %p91, %p92
    %p94 = scmp.ne.s32.totalorder %s86, %s88
    %p95 = scmp.eq.s32.totalorder %s15, 1
    %p96 = por %p94, %p95
    %p97 = scmp.ne.s32.totalorder %s88, %s89
    %p98 = scmp.eq.s32.totalorder %s15, 0
    %p99 = por %p97, %p98
    %p100 = scmp.ne.s32.totalorder %s88, %s89
    %p101 = scmp.eq.s32.totalorder %s16, 1
    %p102 = por %p100, %p101
    %p104 = scmp.ne.s32.totalorder %s89, %s103
    %p105 = scmp.eq.s32.totalorder %s16, 0
    %p106 = por %p104, %p105
    %s107 = ssub.s32 %s10, %s17
    %p108 = scmp.eq.s32.totalorder %s107, 0
    %s110 = sadd.s32 %s109, 1
    %s111 = scalar_select %p108, %s109, %s110
    %p114 = pneg %p108
    %p115 = scmp.eq.s32.totalorder %s10, 1
    %p116 = por %p114, %p115
    %p117 = scmp.ne.s32.totalorder %s109, %s112
    %p118 = scmp.eq.s32.totalorder %s10, 0
    %p119 = por %p117, %p118
    %p120 = scmp.ne.s32.totalorder %s109, %s112
    %p121 = scmp.eq.s32.totalorder %s15, 1
    %p122 = por %p120, %p121
    %p123 = scmp.ne.s32.totalorder %s112, %s113
    %p124 = scmp.eq.s32.totalorder %s15, 0
    %p125 = por %p123, %p124
    %p126 = scmp.ne.s32.totalorder %s112, %s113
    %p127 = scmp.eq.s32.totalorder %s16, 1
    %p128 = por %p126, %p127
    %p130 = scmp.ne.s32.totalorder %s113, %s129
    %p131 = scmp.eq.s32.totalorder %s16, 0
    %p132 = por %p130, %p131
    %p133 = scmp.le.s32.totalorder 1, %s10
    %p134 = scmp.lt.s32.totalorder %s10, 3
    %p135 = pnand %p133, %p134
    %p136 = pneg %p135
    // Predicated region
    $region9: #{qc_forward.3} parent=5 // pred_check
      _
    $region10: #{qc_forward.3} parent=5 // pred_check_branch
      %138 = sbr.rel (%p135) target = $region12
    $region11: #{qc_forward.3} parent=5 // pred_region
      %s139 = ssub.s32 %s10, 1
      // Predicated region
      $region13: #{qc_forward.3} parent=11 // pred_check
        %p140 = pneg %p57
      $region14: #{qc_forward.3} parent=11 // pred_check_branch
        %142 = sbr.rel (%p140) target = $region16
      $region15: #{qc_forward.3} parent=11 // pred_region
        _
      $region16: #{qc_forward.3} parent=11 // pred_fallthru
        _
      // Predicated region
      $region17: #{qc_forward.3} parent=11 // pred_check
        %p143 = pneg %p78
      $region18: #{qc_forward.3} parent=11 // pred_check_branch
        %145 = sbr.rel (%p143) target = $region20
      $region19: #{qc_forward.3} parent=11 // pred_region
        _
      $region20: #{qc_forward.3} parent=11 // pred_fallthru
        _
      // Predicated region
      $region21: #{qc_forward.3} parent=11 // pred_check
        %p146 = pneg %p99
      $region22: #{qc_forward.3} parent=11 // pred_check_branch
        %148 = sbr.rel (%p146) target = $region24
      $region23: #{qc_forward.3} parent=11 // pred_region
        _
      $region24: #{qc_forward.3} parent=11 // pred_fallthru
        _
    $region12: #{qc_forward.3} parent=5 // pred_fallthru
      _
    %p149 = scmp.lt.s32.totalorder %s10, 2
    // Predicated region
    $region25: #{qc_forward.3} parent=5 // pred_check
      %p150 = pneg %p149
    $region26: #{qc_forward.3} parent=5 // pred_check_branch
      %152 = sbr.rel (%p150) target = $region28
    $region27: #{qc_forward.3} parent=5 // pred_region
      // Predicated region
      $region29: #{qc_forward.3} parent=27 // pred_check
        %p153 = pneg %p30
      $region30: #{qc_forward.3} parent=27 // pred_check_branch
        %155 = sbr.rel (%p153) target = $region32
      $region31: #{qc_forward.3} parent=27 // pred_region
        %p156 = scmp.lt.s32.totalorder %s10, 1
        %s157 = scalar_select %p156, %s10, 1
        %s158 = smul.addr %s157, 4
        %s159 = smul.addr %s158, 8
        %s160 = scalar_lea.vmem %s0, %s159
      $region32: #{qc_forward.3} parent=27 // pred_fallthru
        _
    $region28: #{qc_forward.3} parent=5 // pred_fallthru
      _
    %p161 = scmp.le.s32.totalorder 1, %s10
    %p162 = scmp.lt.s32.totalorder %s10, 3
    %p163 = pnand %p161, %p162
    %p164 = pneg %p163
    // Predicated region
    $region33: #{qc_forward.3} parent=5 // pred_check
      _
    $region34: #{qc_forward.3} parent=5 // pred_check_branch
      %166 = sbr.rel (%p163) target = $region36
    $region35: #{qc_forward.3} parent=5 // pred_region
      %s167 = ssub.s32 %s10, 1
      %p168 = scmp.lt.s32.totalorder %s15, 1
      %s169 = scalar_select %p168, %s15, 1
      %s170 = smul.addr %s169, 4
      %s171 = smul.addr %s170, 8
      %s172 = scalar_lea.vmem %s0, %s171
      %p173 = pneg %p36
      %p174 = pneg %p33
      %p175 = pneg %p57
      %p176 = pneg %p54
      %p177 = pneg %p78
      %p178 = pneg %p75
      %p179 = pneg %p99
      %p180 = pneg %p96
      %p181 = pneg %p125
      %p182 = pneg %p122
      %p183 = scmp.lt.s32.totalorder %s15, 1
      %s184 = scalar_select %p183, %s15, 1
      %s185 = smul.addr %s184, 2
      %s186 = smul.addr %s185, 8
      %s187 = scalar_lea.vmem %s4, %s186
      %p188 = scmp.lt.s32.totalorder %s15, 1
      %s189 = scalar_select %p188, %s15, 1
      %s190 = smul.addr %s189, 4
      %s191 = smul.addr %s190, 8
      %s192 = scalar_lea.vmem %s0, %s191
      %p193 = scmp.lt.s32.totalorder %s15, 1
      %s194 = scalar_select %p193, %s15, 1
      %s195 = smul.addr %s194, 2
      %s196 = smul.addr %s195, 8
      %s197 = scalar_lea.vmem %s4, %s196
      %v198 = vld [vmem:[%s192] sm:$0xff]
      %v199 = vld [vmem:[%s192 + $0x8] sm:$0xff]
      %v200 = vld [vmem:[%s2] sm:$0xff]
      %v201 = vld [vmem:[%s3] sm:$0xff]
      %v202 = vld [vmem:[%s1] sm:$0xff]
      %203 = vrot.lane.b32.xlu0 %v198, 127
      %v204 = vpop.permute.xlu0 %203
      %205 = vrot.lane.b32.xlu0 %v199, 127
      %v206 = vpop.permute.xlu0 %205
      %v207 = vlaneseq
      %v208 = vand.u32 %v207, 127
      %vm209 = vcmp.lt.s32.totalorder %v208, 127
      %v210 = vsel %vm209, %v204, %v206
      %v211 = vsel %vm209, %v206, %v204
      %s212 = scalar_lea.vmem %s1, 8
      %v213 = vld [vmem:[%s212] sm:$0xff]
      %vm214 = vcmask 64512
      %v216 = vsel %vm214, %v213, 0
      %218 = vmatprep.subr.mxu0 %v211
      %219 = vmatpush1.msra.mxu0 %v210
      %220 = vmatprep.subr.mxu0 0.0
      %221 = vmatpush1.msra.mxu0 0.0
      %222 = vmatprep.subr.mxu0 0.0
      %223 = vmatpush1.msra.mxu0 0.0
      %224 = vmatprep.subr.mxu0 0.0
      %225 = vmatpush1.msra.mxu0 0.0
      %226 = vmatprep.subr.mxu0 0.0
      %227 = vmatpush1.msra.mxu0 0.0
      %228 = vmatprep.subr.mxu0 0.0
      %229 = vmatpush1.msra.mxu0 0.0
      %230 = vmatprep.subr.mxu0 0.0
      %231 = vmatpush1.msra.mxu0 0.0
      %232 = vmatprep.subr.mxu0 0.0
      %233 = vmatpush1.msra.mxu0 0.0
      %234 = vmatprep.subr.mxu0 0.0
      %235 = vmatpush1.msra.mxu0 0.0
      %236 = vmatprep.subr.mxu0 0.0
      %237 = vmatpush1.msra.mxu0 0.0
      %238 = vmatprep.subr.mxu0 0.0
      %239 = vmatpush1.msra.mxu0 0.0
      %240 = vmatprep.subr.mxu0 0.0
      %241 = vmatpush1.msra.mxu0 0.0
      %242 = vmatprep.subr.mxu0 0.0
      %243 = vmatpush1.msra.mxu0 0.0
      %244 = vmatprep.subr.mxu0 0.0
      %245 = vmatpush1.msra.mxu0 0.0
      %246 = vmatprep.subr.mxu0 0.0
      %247 = vmatpush1.msra.mxu0 0.0
      %248 = vmatprep.subr.mxu0 0.0
      %249 = vmatpush1.msra.mxu0 0.0
      %250 = vmatprep.subr.mxu0 0.0
      %251 = vmatpush1.msra.mxu0 0.0
      %252 = vmatprep.subr.mxu0 0.0
      %253 = vmatpush1.msra.mxu0 0.0
      %254 = vmatprep.subr.mxu0 0.0
      %255 = vmatpush1.msra.mxu0 0.0
      %256 = vmatprep.subr.mxu0 0.0
      %257 = vmatpush1.msra.mxu0 0.0
      %258 = vmatprep.subr.mxu0 0.0
      %259 = vmatpush1.msra.mxu0 0.0
      %260 = vmatprep.subr.mxu0 0.0
      %261 = vmatpush1.msra.mxu0 0.0
      %262 = vmatprep.subr.mxu0 0.0
      %263 = vmatpush1.msra.mxu0 0.0
      %264 = vmatprep.subr.mxu0 0.0
      %265 = vmatpush1.msra.mxu0 0.0
      %266 = vmatprep.subr.mxu0 0.0
      %267 = vmatpush1.msra.mxu0 0.0
      %268 = vmatprep.subr.mxu0 0.0
      %269 = vmatpush1.msra.mxu0 0.0
      %270 = vmatprep.subr.mxu0 0.0
      %271 = vmatpush1.msra.mxu0 0.0
      %272 = vmatprep.subr.mxu0 0.0
      %273 = vmatpush1.msra.mxu0 0.0
      %274 = vmatprep.subr.mxu0 0.0
      %275 = vmatpush1.msra.mxu0 0.0
      %276 = vmatprep.subr.mxu0 0.0
      %277 = vmatpush1.msra.mxu0 0.0
      %278 = vmatprep.subr.mxu0 0.0
      %279 = vmatpush1.msra.mxu0 0.0
      %280 = vmatprep.subr.mxu0 0.0
      %281 = vmatpush1.msra.mxu0 0.0
      %282 = vmatprep.mubr.f32.mxu0 0.0
      %283 = vmatmul.mubr.f32.gmra.mrb[0].mxu0 %v216
      %v284 = vpop.f32.mrb[0].mxu0
      %v285 = vadd.f32 0.0, %v284
      %v286 = vpop.f32.mrb[0].mxu0
      %v287 = vadd.f32 0.0, %v286
      %288 = vdwg.mxu0
      %v290 = vsel %vm214, %v202, 0
      %292 = vmatprep.subr.mxu0 %v199
      %293 = vmatpush1.msra.mxu0 %v198
      %294 = vmatprep.subr.mxu0 0.0
      %295 = vmatpush1.msra.mxu0 0.0
      %296 = vmatprep.subr.mxu0 0.0
      %297 = vmatpush1.msra.mxu0 0.0
      %298 = vmatprep.subr.mxu0 0.0
      %299 = vmatpush1.msra.mxu0 0.0
      %300 = vmatprep.subr.mxu0 0.0
      %301 = vmatpush1.msra.mxu0 0.0
      %302 = vmatprep.subr.mxu0 0.0
      %303 = vmatpush1.msra.mxu0 0.0
      %304 = vmatprep.subr.mxu0 0.0
      %305 = vmatpush1.msra.mxu0 0.0
      %306 = vmatprep.subr.mxu0 0.0
      %307 = vmatpush1.msra.mxu0 0.0
      %308 = vmatprep.subr.mxu0 0.0
      %309 = vmatpush1.msra.mxu0 0.0
      %310 = vmatprep.subr.mxu0 0.0
      %311 = vmatpush1.msra.mxu0 0.0
      %312 = vmatprep.subr.mxu0 0.0
      %313 = vmatpush1.msra.mxu0 0.0
      %314 = vmatprep.subr.mxu0 0.0
      %315 = vmatpush1.msra.mxu0 0.0
      %316 = vmatprep.subr.mxu0 0.0
      %317 = vmatpush1.msra.mxu0 0.0
      %318 = vmatprep.subr.mxu0 0.0
      %319 = vmatpush1.msra.mxu0 0.0
      %320 = vmatprep.subr.mxu0 0.0
      %321 = vmatpush1.msra.mxu0 0.0
      %322 = vmatprep.subr.mxu0 0.0
      %323 = vmatpush1.msra.mxu0 0.0
      %324 = vmatprep.subr.mxu0 0.0
      %325 = vmatpush1.msra.mxu0 0.0
      %326 = vmatprep.subr.mxu0 0.0
      %327 = vmatpush1.msra.mxu0 0.0
      %328 = vmatprep.subr.mxu0 0.0
      %329 = vmatpush1.msra.mxu0 0.0
      %330 = vmatprep.subr.mxu0 0.0
      %331 = vmatpush1.msra.mxu0 0.0
      %332 = vmatprep.subr.mxu0 0.0
      %333 = vmatpush1.msra.mxu0 0.0
      %334 = vmatprep.subr.mxu0 0.0
      %335 = vmatpush1.msra.mxu0 0.0
      %336 = vmatprep.subr.mxu0 0.0
      %337 = vmatpush1.msra.mxu0 0.0
      %338 = vmatprep.subr.mxu0 0.0
      %339 = vmatpush1.msra.mxu0 0.0
      %340 = vmatprep.subr.mxu0 0.0
      %341 = vmatpush1.msra.mxu0 0.0
      %342 = vmatprep.subr.mxu0 0.0
      %343 = vmatpush1.msra.mxu0 0.0
      %344 = vmatprep.subr.mxu0 0.0
      %345 = vmatpush1.msra.mxu0 0.0
      %346 = vmatprep.subr.mxu0 0.0
      %347 = vmatpush1.msra.mxu0 0.0
      %348 = vmatprep.subr.mxu0 0.0
      %349 = vmatpush1.msra.mxu0 0.0
      %350 = vmatprep.subr.mxu0 0.0
      %351 = vmatpush1.msra.mxu0 0.0
      %352 = vmatprep.subr.mxu0 0.0
      %353 = vmatpush1.msra.mxu0 0.0
      %354 = vmatprep.subr.mxu0 0.0
      %355 = vmatpush1.msra.mxu0 0.0
      %356 = vmatprep.mubr.f32.mxu0 0.0
      %357 = vmatmul.mubr.f32.gmra.mrb[0].mxu0 %v290
      %v358 = vpop.f32.mrb[0].mxu0
      %v359 = vadd.f32 %v285, %v358
      %v360 = vpop.f32.mrb[0].mxu0
      %v361 = vadd.f32 %v287, %v360
      %362 = vdwg.mxu0
      %363 = vrot.lane.b32.xlu0 %v198, 126
      %v364 = vpop.permute.xlu0 %363
      %365 = vrot.lane.b32.xlu0 %v199, 126
      %v366 = vpop.permute.xlu0 %365
      %vm367 = vcmp.lt.s32.totalorder %v208, 126
      %v368 = vsel %vm367, %v364, %v366
      %v369 = vsel %vm367, %v366, %v364
      %s370 = scalar_lea.vmem %s1, 16
      %v371 = vld [vmem:[%s370] sm:$0xff]
      %v373 = vsel %vm214, %v371, 0
      %375 = vmatprep.subr.mxu0 %v369
      %376 = vmatpush1.msra.mxu0 %v368
      %377 = vmatprep.subr.mxu0 0.0
      %378 = vmatpush1.msra.mxu0 0.0
      %379 = vmatprep.subr.mxu0 0.0
      %380 = vmatpush1.msra.mxu0 0.0
      %381 = vmatprep.subr.mxu0 0.0
      %382 = vmatpush1.msra.mxu0 0.0
      %383 = vmatprep.subr.mxu0 0.0
      %384 = vmatpush1.msra.mxu0 0.0
      %385 = vmatprep.subr.mxu0 0.0
      %386 = vmatpush1.msra.mxu0 0.0
      %387 = vmatprep.subr.mxu0 0.0
      %388 = vmatpush1.msra.mxu0 0.0
      %389 = vmatprep.subr.mxu0 0.0
      %390 = vmatpush1.msra.mxu0 0.0
      %391 = vmatprep.subr.mxu0 0.0
      %392 = vmatpush1.msra.mxu0 0.0
      %393 = vmatprep.subr.mxu0 0.0
      %394 = vmatpush1.msra.mxu0 0.0
      %395 = vmatprep.subr.mxu0 0.0
      %396 = vmatpush1.msra.mxu0 0.0
      %397 = vmatprep.subr.mxu0 0.0
      %398 = vmatpush1.msra.mxu0 0.0
      %399 = vmatprep.subr.mxu0 0.0
      %400 = vmatpush1.msra.mxu0 0.0
      %401 = vmatprep.subr.mxu0 0.0
      %402 = vmatpush1.msra.mxu0 0.0
      %403 = vmatprep.subr.mxu0 0.0
      %404 = vmatpush1.msra.mxu0 0.0
      %405 = vmatprep.subr.mxu0 0.0
      %406 = vmatpush1.msra.mxu0 0.0
      %407 = vmatprep.subr.mxu0 0.0
      %408 = vmatpush1.msra.mxu0 0.0
      %409 = vmatprep.subr.mxu0 0.0
      %410 = vmatpush1.msra.mxu0 0.0
      %411 = vmatprep.subr.mxu0 0.0
      %412 = vmatpush1.msra.mxu0 0.0
      %413 = vmatprep.subr.mxu0 0.0
      %414 = vmatpush1.msra.mxu0 0.0
      %415 = vmatprep.subr.mxu0 0.0
      %416 = vmatpush1.msra.mxu0 0.0
      %417 = vmatprep.subr.mxu0 0.0
      %418 = vmatpush1.msra.mxu0 0.0
      %419 = vmatprep.subr.mxu0 0.0
      %420 = vmatpush1.msra.mxu0 0.0
      %421 = vmatprep.subr.mxu0 0.0
      %422 = vmatpush1.msra.mxu0 0.0
      %423 = vmatprep.subr.mxu0 0.0
      %424 = vmatpush1.msra.mxu0 0.0
      %425 = vmatprep.subr.mxu0 0.0
      %426 = vmatpush1.msra.mxu0 0.0
      %427 = vmatprep.subr.mxu0 0.0
      %428 = vmatpush1.msra.mxu0 0.0
      %429 = vmatprep.subr.mxu0 0.0
      %430 = vmatpush1.msra.mxu0 0.0
      %431 = vmatprep.subr.mxu0 0.0
      %432 = vmatpush1.msra.mxu0 0.0
      %433 = vmatprep.subr.mxu0 0.0
      %434 = vmatpush1.msra.mxu0 0.0
      %435 = vmatprep.subr.mxu0 0.0
      %436 = vmatpush1.msra.mxu0 0.0
      %437 = vmatprep.subr.mxu0 0.0
      %438 = vmatpush1.msra.mxu0 0.0
      %439 = vmatprep.mubr.f32.mxu0 0.0
      %440 = vmatmul.mubr.f32.gmra.mrb[0].mxu0 %v373
      %v441 = vpop.f32.mrb[0].mxu0
      %v442 = vadd.f32 0.0, %v441
      %v443 = vpop.f32.mrb[0].mxu0
      %v444 = vadd.f32 0.0, %v443
      %445 = vdwg.mxu0
      %v446 = vadd.f32 %v359, %v442
      %v447 = vadd.f32 %v361, %v444
      %448 = vrot.lane.b32.xlu0 %v198, 112
      %v449 = vpop.permute.xlu0 %448
      %450 = vrot.lane.b32.xlu0 %v199, 112
      %v451 = vpop.permute.xlu0 %450
      %vm452 = vcmp.lt.s32.totalorder %v208, 112
      %v453 = vsel %vm452, %v449, %v451
      %v454 = vsel %vm452, %v451, %v449
      %s455 = scalar_lea.vmem %s1, 24
      %v456 = vld [vmem:[%s455] sm:$0xff]
      %v458 = vsel %vm214, %v456, 0
      %460 = vmatprep.subr.mxu0 %v454
      %461 = vmatpush1.msra.mxu0 %v453
      %462 = vmatprep.subr.mxu0 0.0
      %463 = vmatpush1.msra.mxu0 0.0
      %464 = vmatprep.subr.mxu0 0.0
      %465 = vmatpush1.msra.mxu0 0.0
      %466 = vmatprep.subr.mxu0 0.0
      %467 = vmatpush1.msra.mxu0 0.0
      %468 = vmatprep.subr.mxu0 0.0
      %469 = vmatpush1.msra.mxu0 0.0
      %470 = vmatprep.subr.mxu0 0.0
      %471 = vmatpush1.msra.mxu0 0.0
      %472 = vmatprep.subr.mxu0 0.0
      %473 = vmatpush1.msra.mxu0 0.0
      %474 = vmatprep.subr.mxu0 0.0
      %475 = vmatpush1.msra.mxu0 0.0
      %476 = vmatprep.subr.mxu0 0.0
      %477 = vmatpush1.msra.mxu0 0.0
      %478 = vmatprep.subr.mxu0 0.0
      %479 = vmatpush1.msra.mxu0 0.0
      %480 = vmatprep.subr.mxu0 0.0
      %481 = vmatpush1.msra.mxu0 0.0
      %482 = vmatprep.subr.mxu0 0.0
      %483 = vmatpush1.msra.mxu0 0.0
      %484 = vmatprep.subr.mxu0 0.0
      %485 = vmatpush1.msra.mxu0 0.0
      %486 = vmatprep.subr.mxu0 0.0
      %487 = vmatpush1.msra.mxu0 0.0
      %488 = vmatprep.subr.mxu0 0.0
      %489 = vmatpush1.msra.mxu0 0.0
      %490 = vmatprep.subr.mxu0 0.0
      %491 = vmatpush1.msra.mxu0 0.0
      %492 = vmatprep.subr.mxu0 0.0
      %493 = vmatpush1.msra.mxu0 0.0
      %494 = vmatprep.subr.mxu0 0.0
      %495 = vmatpush1.msra.mxu0 0.0
      %496 = vmatprep.subr.mxu0 0.0
      %497 = vmatpush1.msra.mxu0 0.0
      %498 = vmatprep.subr.mxu0 0.0
      %499 = vmatpush1.msra.mxu0 0.0
      %500 = vmatprep.subr.mxu0 0.0
      %501 = vmatpush1.msra.mxu0 0.0
      %502 = vmatprep.subr.mxu0 0.0
      %503 = vmatpush1.msra.mxu0 0.0
      %504 = vmatprep.subr.mxu0 0.0
      %505 = vmatpush1.msra.mxu0 0.0
      %506 = vmatprep.subr.mxu0 0.0
      %507 = vmatpush1.msra.mxu0 0.0
      %508 = vmatprep.subr.mxu0 0.0
      %509 = vmatpush1.msra.mxu0 0.0
      %510 = vmatprep.subr.mxu0 0.0
      %511 = vmatpush1.msra.mxu0 0.0
      %512 = vmatprep.subr.mxu0 0.0
      %513 = vmatpush1.msra.mxu0 0.0
      %514 = vmatprep.subr.mxu0 0.0
      %515 = vmatpush1.msra.mxu0 0.0
      %516 = vmatprep.subr.mxu0 0.0
      %517 = vmatpush1.msra.mxu0 0.0
      %518 = vmatprep.subr.mxu0 0.0
      %519 = vmatpush1.msra.mxu0 0.0
      %520 = vmatprep.subr.mxu0 0.0
      %521 = vmatpush1.msra.mxu0 0.0
      %522 = vmatprep.subr.mxu0 0.0
      %523 = vmatpush1.msra.mxu0 0.0
      %524 = vmatprep.mubr.f32.mxu0 0.0
      %525 = vmatmul.mubr.f32.gmra.mrb[0].mxu0 %v458
      %v526 = vpop.f32.mrb[0].mxu0
      %v527 = vadd.f32 0.0, %v526
      %v528 = vpop.f32.mrb[0].mxu0
      %v529 = vadd.f32 0.0, %v528
      %530 = vdwg.mxu0
      %v531 = vadd.f32 %v446, %v527
      %v532 = vadd.f32 %v447, %v529
      %533 = vrot.lane.b32.xlu0 %v198, 111
      %v534 = vpop.permute.xlu0 %533
      %535 = vrot.lane.b32.xlu0 %v199, 111
      %v536 = vpop.permute.xlu0 %535
      %vm537 = vcmp.lt.s32.totalorder %v208, 111
      %v538 = vsel %vm537, %v534, %v536
      %v539 = vsel %vm537, %v536, %v534
      %s540 = scalar_lea.vmem %s1, 32
      %v541 = vld [vmem:[%s540] sm:$0xff]
      %v543 = vsel %vm214, %v541, 0
      %545 = vmatprep.subr.mxu0 %v539
      %546 = vmatpush1.msra.mxu0 %v538
      %547 = vmatprep.subr.mxu0 0.0
      %548 = vmatpush1.msra.mxu0 0.0
      %549 = vmatprep.subr.mxu0 0.0
      %550 = vmatpush1.msra.mxu0 0.0
      %551 = vmatprep.subr.mxu0 0.0
      %552 = vmatpush1.msra.mxu0 0.0
      %553 = vmatprep.subr.mxu0 0.0
      %554 = vmatpush1.msra.mxu0 0.0
      %555 = vmatprep.subr.mxu0 0.0
      %556 = vmatpush1.msra.mxu0 0.0
      %557 = vmatprep.subr.mxu0 0.0
      %558 = vmatpush1.msra.mxu0 0.0
      %559 = vmatprep.subr.mxu0 0.0
      %560 = vmatpush1.msra.mxu0 0.0
      %561 = vmatprep.subr.mxu0 0.0
      %562 = vmatpush1.msra.mxu0 0.0
      %563 = vmatprep.subr.mxu0 0.0
      %564 = vmatpush1.msra.mxu0 0.0
      %565 = vmatprep.subr.mxu0 0.0
      %566 = vmatpush1.msra.mxu0 0.0
      %567 = vmatprep.subr.mxu0 0.0
      %568 = vmatpush1.msra.mxu0 0.0
      %569 = vmatprep.subr.mxu0 0.0
      %570 = vmatpush1.msra.mxu0 0.0
      %571 = vmatprep.subr.mxu0 0.0
      %572 = vmatpush1.msra.mxu0 0.0
      %573 = vmatprep.subr.mxu0 0.0
      %574 = vmatpush1.msra.mxu0 0.0
      %575 = vmatprep.subr.mxu0 0.0
      %576 = vmatpush1.msra.mxu0 0.0
      %577 = vmatprep.subr.mxu0 0.0
      %578 = vmatpush1.msra.mxu0 0.0
      %579 = vmatprep.subr.mxu0 0.0
      %580 = vmatpush1.msra.mxu0 0.0
      %581 = vmatprep.subr.mxu0 0.0
      %582 = vmatpush1.msra.mxu0 0.0
      %583 = vmatprep.subr.mxu0 0.0
      %584 = vmatpush1.msra.mxu0 0.0
      %585 = vmatprep.subr.mxu0 0.0
      %586 = vmatpush1.msra.mxu0 0.0
      %587 = vmatprep.subr.mxu0 0.0
      %588 = vmatpush1.msra.mxu0 0.0
      %589 = vmatprep.subr.mxu0 0.0
      %590 = vmatpush1.msra.mxu0 0.0
      %591 = vmatprep.subr.mxu0 0.0
      %592 = vmatpush1.msra.mxu0 0.0
      %593 = vmatprep.subr.mxu0 0.0
      %594 = vmatpush1.msra.mxu0 0.0
      %595 = vmatprep.subr.mxu0 0.0
      %596 = vmatpush1.msra.mxu0 0.0
      %597 = vmatprep.subr.mxu0 0.0
      %598 = vmatpush1.msra.mxu0 0.0
      %599 = vmatprep.subr.mxu0 0.0
      %600 = vmatpush1.msra.mxu0 0.0
      %601 = vmatprep.subr.mxu0 0.0
      %602 = vmatpush1.msra.mxu0 0.0
      %603 = vmatprep.subr.mxu0 0.0
      %604 = vmatpush1.msra.mxu0 0.0
      %605 = vmatprep.subr.mxu0 0.0
      %606 = vmatpush1.msra.mxu0 0.0
      %607 = vmatprep.subr.mxu0 0.0
      %608 = vmatpush1.msra.mxu0 0.0
      %609 = vmatprep.mubr.f32.mxu0 0.0
      %610 = vmatmul.mubr.f32.gmra.mrb[0].mxu0 %v543
      %v611 = vpop.f32.mrb[0].mxu0
      %v612 = vadd.f32 0.0, %v611
      %v613 = vpop.f32.mrb[0].mxu0
      %v614 = vadd.f32 0.0, %v613
      %615 = vdwg.mxu0
      %v616 = vadd.f32 %v531, %v612
      %v617 = vadd.f32 %v532, %v614
      %618 = vrot.lane.b32.xlu0 %v198, 110
      %v619 = vpop.permute.xlu0 %618
      %620 = vrot.lane.b32.xlu0 %v199, 110
      %v621 = vpop.permute.xlu0 %620
      %vm622 = vcmp.lt.s32.totalorder %v208, 110
      %v623 = vsel %vm622, %v619, %v621
      %v624 = vsel %vm622, %v621, %v619
      %s625 = scalar_lea.vmem %s1, 40
      %v626 = vld [vmem:[%s625] sm:$0xff]
      %v628 = vsel %vm214, %v626, 0
      %630 = vmatprep.subr.mxu0 %v624
      %631 = vmatpush1.msra.mxu0 %v623
      %632 = vmatprep.subr.mxu0 0.0
      %633 = vmatpush1.msra.mxu0 0.0
      %634 = vmatprep.subr.mxu0 0.0
      %635 = vmatpush1.msra.mxu0 0.0
      %636 = vmatprep.subr.mxu0 0.0
      %637 = vmatpush1.msra.mxu0 0.0
      %638 = vmatprep.subr.mxu0 0.0
      %639 = vmatpush1.msra.mxu0 0.0
      %640 = vmatprep.subr.mxu0 0.0
      %641 = vmatpush1.msra.mxu0 0.0
      %642 = vmatprep.subr.mxu0 0.0
      %643 = vmatpush1.msra.mxu0 0.0
      %644 = vmatprep.subr.mxu0 0.0
      %645 = vmatpush1.msra.mxu0 0.0
      %646 = vmatprep.subr.mxu0 0.0
      %647 = vmatpush1.msra.mxu0 0.0
      %648 = vmatprep.subr.mxu0 0.0
      %649 = vmatpush1.msra.mxu0 0.0
      %650 = vmatprep.subr.mxu0 0.0
      %651 = vmatpush1.msra.mxu0 0.0
      %652 = vmatprep.subr.mxu0 0.0
      %653 = vmatpush1.msra.mxu0 0.0
      %654 = vmatprep.subr.mxu0 0.0
      %655 = vmatpush1.msra.mxu0 0.0
      %656 = vmatprep.subr.mxu0 0.0
      %657 = vmatpush1.msra.mxu0 0.0
      %658 = vmatprep.subr.mxu0 0.0
      %659 = vmatpush1.msra.mxu0 0.0
      %660 = vmatprep.subr.mxu0 0.0
      %661 = vmatpush1.msra.mxu0 0.0
      %662 = vmatprep.subr.mxu0 0.0
      %663 = vmatpush1.msra.mxu0 0.0
      %664 = vmatprep.subr.mxu0 0.0
      %665 = vmatpush1.msra.mxu0 0.0
      %666 = vmatprep.subr.mxu0 0.0
      %667 = vmatpush1.msra.mxu0 0.0
      %668 = vmatprep.subr.mxu0 0.0
      %669 = vmatpush1.msra.mxu0 0.0
      %670 = vmatprep.subr.mxu0 0.0
      %671 = vmatpush1.msra.mxu0 0.0
      %672 = vmatprep.subr.mxu0 0.0
      %673 = vmatpush1.msra.mxu0 0.0
      %674 = vmatprep.subr.mxu0 0.0
      %675 = vmatpush1.msra.mxu0 0.0
      %676 = vmatprep.subr.mxu0 0.0
      %677 = vmatpush1.msra.mxu0 0.0
      %678 = vmatprep.subr.mxu0 0.0
      %679 = vmatpush1.msra.mxu0 0.0
      %680 = vmatprep.subr.mxu0 0.0
      %681 = vmatpush1.msra.mxu0 0.0
      %682 = vmatprep.subr.mxu0 0.0
      %683 = vmatpush1.msra.mxu0 0.0
      %684 = vmatprep.subr.mxu0 0.0
      %685 = vmatpush1.msra.mxu0 0.0
      %686 = vmatprep.subr.mxu0 0.0
      %687 = vmatpush1.msra.mxu0 0.0
      %688 = vmatprep.subr.mxu0 0.0
      %689 = vmatpush1.msra.mxu0 0.0
      %690 = vmatprep.subr.mxu0 0.0
      %691 = vmatpush1.msra.mxu0 0.0
      %692 = vmatprep.subr.mxu0 0.0
      %693 = vmatpush1.msra.mxu0 0.0
      %694 = vmatprep.mubr.f32.mxu0 0.0
      %695 = vmatmul.mubr.f32.gmra.mrb[0].mxu0 %v628
      %v696 = vpop.f32.mrb[0].mxu0
      %v697 = vadd.f32 0.0, %v696
      %v698 = vpop.f32.mrb[0].mxu0
      %v699 = vadd.f32 0.0, %v698
      %700 = vdwg.mxu0
      %v701 = vadd.f32 %v616, %v697
      %v702 = vadd.f32 %v617, %v699
      %703 = vrot.lane.b32.xlu0 %v198, 96
      %v704 = vpop.permute.xlu0 %703
      %705 = vrot.lane.b32.xlu0 %v199, 96
      %v706 = vpop.permute.xlu0 %705
      %vm707 = vcmp.lt.s32.totalorder %v208, 96
      %v708 = vsel %vm707, %v704, %v706
      %v709 = vsel %vm707, %v706, %v704
      %s710 = scalar_lea.vmem %s1, 48
      %v711 = vld [vmem:[%s710] sm:$0xff]
      %v713 = vsel %vm214, %v711, 0
      %715 = vmatprep.subr.mxu0 %v709
      %716 = vmatpush1.msra.mxu0 %v708
      %717 = vmatprep.subr.mxu0 0.0
      %718 = vmatpush1.msra.mxu0 0.0
      %719 = vmatprep.subr.mxu0 0.0
      %720 = vmatpush1.msra.mxu0 0.0
      %721 = vmatprep.subr.mxu0 0.0
      %722 = vmatpush1.msra.mxu0 0.0
      %723 = vmatprep.subr.mxu0 0.0
      %724 = vmatpush1.msra.mxu0 0.0
      %725 = vmatprep.subr.mxu0 0.0
      %726 = vmatpush1.msra.mxu0 0.0
      %727 = vmatprep.subr.mxu0 0.0
      %728 = vmatpush1.msra.mxu0 0.0
      %729 = vmatprep.subr.mxu0 0.0
      %730 = vmatpush1.msra.mxu0 0.0
      %731 = vmatprep.subr.mxu0 0.0
      %732 = vmatpush1.msra.mxu0 0.0
      %733 = vmatprep.subr.mxu0 0.0
      %734 = vmatpush1.msra.mxu0 0.0
      %735 = vmatprep.subr.mxu0 0.0
      %736 = vmatpush1.msra.mxu0 0.0
      %737 = vmatprep.subr.mxu0 0.0
      %738 = vmatpush1.msra.mxu0 0.0
      %739 = vmatprep.subr.mxu0 0.0
      %740 = vmatpush1.msra.mxu0 0.0
      %741 = vmatprep.subr.mxu0 0.0
      %742 = vmatpush1.msra.mxu0 0.0
      %743 = vmatprep.subr.mxu0 0.0
      %744 = vmatpush1.msra.mxu0 0.0
      %745 = vmatprep.subr.mxu0 0.0
      %746 = vmatpush1.msra.mxu0 0.0
      %747 = vmatprep.subr.mxu0 0.0
      %748 = vmatpush1.msra.mxu0 0.0
      %749 = vmatprep.subr.mxu0 0.0
      %750 = vmatpush1.msra.mxu0 0.0
      %751 = vmatprep.subr.mxu0 0.0
      %752 = vmatpush1.msra.mxu0 0.0
      %753 = vmatprep.subr.mxu0 0.0
      %754 = vmatpush1.msra.mxu0 0.0
      %755 = vmatprep.subr.mxu0 0.0
      %756 = vmatpush1.msra.mxu0 0.0
      %757 = vmatprep.subr.mxu0 0.0
      %758 = vmatpush1.msra.mxu0 0.0
      %759 = vmatprep.subr.mxu0 0.0
      %760 = vmatpush1.msra.mxu0 0.0
      %761 = vmatprep.subr.mxu0 0.0
      %762 = vmatpush1.msra.mxu0 0.0
      %763 = vmatprep.subr.mxu0 0.0
      %764 = vmatpush1.msra.mxu0 0.0
      %765 = vmatprep.subr.mxu0 0.0
      %766 = vmatpush1.msra.mxu0 0.0
      %767 = vmatprep.subr.mxu0 0.0
      %768 = vmatpush1.msra.mxu0 0.0
      %769 = vmatprep.subr.mxu0 0.0
      %770 = vmatpush1.msra.mxu0 0.0
      %771 = vmatprep.subr.mxu0 0.0
      %772 = vmatpush1.msra.mxu0 0.0
      %773 = vmatprep.subr.mxu0 0.0
      %774 = vmatpush1.msra.mxu0 0.0
      %775 = vmatprep.subr.mxu0 0.0
      %776 = vmatpush1.msra.mxu0 0.0
      %777 = vmatprep.subr.mxu0 0.0
      %778 = vmatpush1.msra.mxu0 0.0
      %779 = vmatprep.mubr.f32.mxu0 0.0
      %780 = vmatmul.mubr.f32.gmra.mrb[0].mxu0 %v713
      %v781 = vpop.f32.mrb[0].mxu0
      %v782 = vadd.f32 0.0, %v781
      %v783 = vpop.f32.mrb[0].mxu0
      %v784 = vadd.f32 0.0, %v783
      %785 = vdwg.mxu0
      %v786 = vadd.f32 %v701, %v782
      %v787 = vadd.f32 %v702, %v784
      %788 = vrot.lane.b32.xlu0 %v198, 95
      %v789 = vpop.permute.xlu0 %788
      %790 = vrot.lane.b32.xlu0 %v199, 95
      %v791 = vpop.permute.xlu0 %790
      %vm792 = vcmp.lt.s32.totalorder %v208, 95
      %v793 = vsel %vm792, %v789, %v791
      %v794 = vsel %vm792, %v791, %v789
      %s795 = scalar_lea.vmem %s1, 56
      %v796 = vld [vmem:[%s795] sm:$0xff]
      %v798 = vsel %vm214, %v796, 0
      %800 = vmatprep.subr.mxu0 %v794
      %801 = vmatpush1.msra.mxu0 %v793
      %802 = vmatprep.subr.mxu0 0.0
      %803 = vmatpush1.msra.mxu0 0.0
      %804 = vmatprep.subr.mxu0 0.0
      %805 = vmatpush1.msra.mxu0 0.0
      %806 = vmatprep.subr.mxu0 0.0
      %807 = vmatpush1.msra.mxu0 0.0
      %808 = vmatprep.subr.mxu0 0.0
      %809 = vmatpush1.msra.mxu0 0.0
      %810 = vmatprep.subr.mxu0 0.0
      %811 = vmatpush1.msra.mxu0 0.0
      %812 = vmatprep.subr.mxu0 0.0
      %813 = vmatpush1.msra.mxu0 0.0
      %814 = vmatprep.subr.mxu0 0.0
      %815 = vmatpush1.msra.mxu0 0.0
      %816 = vmatprep.subr.mxu0 0.0
      %817 = vmatpush1.msra.mxu0 0.0
      %818 = vmatprep.subr.mxu0 0.0
      %819 = vmatpush1.msra.mxu0 0.0
      %820 = vmatprep.subr.mxu0 0.0
      %821 = vmatpush1.msra.mxu0 0.0
      %822 = vmatprep.subr.mxu0 0.0
      %823 = vmatpush1.msra.mxu0 0.0
      %824 = vmatprep.subr.mxu0 0.0
      %825 = vmatpush1.msra.mxu0 0.0
      %826 = vmatprep.subr.mxu0 0.0
      %827 = vmatpush1.msra.mxu0 0.0
      %828 = vmatprep.subr.mxu0 0.0
      %829 = vmatpush1.msra.mxu0 0.0
      %830 = vmatprep.subr.mxu0 0.0
      %831 = vmatpush1.msra.mxu0 0.0
      %832 = vmatprep.subr.mxu0 0.0
      %833 = vmatpush1.msra.mxu0 0.0
      %834 = vmatprep.subr.mxu0 0.0
      %835 = vmatpush1.msra.mxu0 0.0
      %836 = vmatprep.subr.mxu0 0.0
      %837 = vmatpush1.msra.mxu0 0.0
      %838 = vmatprep.subr.mxu0 0.0
      %839 = vmatpush1.msra.mxu0 0.0
      %840 = vmatprep.subr.mxu0 0.0
      %841 = vmatpush1.msra.mxu0 0.0
      %842 = vmatprep.subr.mxu0 0.0
      %843 = vmatpush1.msra.mxu0 0.0
      %844 = vmatprep.subr.mxu0 0.0
      %845 = vmatpush1.msra.mxu0 0.0
      %846 = vmatprep.subr.mxu0 0.0
      %847 = vmatpush1.msra.mxu0 0.0
      %848 = vmatprep.subr.mxu0 0.0
      %849 = vmatpush1.msra.mxu0 0.0
      %850 = vmatprep.subr.mxu0 0.0
      %851 = vmatpush1.msra.mxu0 0.0
      %852 = vmatprep.subr.mxu0 0.0
      %853 = vmatpush1.msra.mxu0 0.0
      %854 = vmatprep.subr.mxu0 0.0
      %855 = vmatpush1.msra.mxu0 0.0
      %856 = vmatprep.subr.mxu0 0.0
      %857 = vmatpush1.msra.mxu0 0.0
      %858 = vmatprep.subr.mxu0 0.0
      %859 = vmatpush1.msra.mxu0 0.0
      %860 = vmatprep.subr.mxu0 0.0
      %861 = vmatpush1.msra.mxu0 0.0
      %862 = vmatprep.subr.mxu0 0.0
      %863 = vmatpush1.msra.mxu0 0.0
      %864 = vmatprep.mubr.f32.mxu0 0.0
      %865 = vmatmul.mubr.f32.gmra.mrb[0].mxu0 %v798
      %v866 = vpop.f32.mrb[0].mxu0
      %v867 = vadd.f32 0.0, %v866
      %v868 = vpop.f32.mrb[0].mxu0
      %v869 = vadd.f32 0.0, %v868
      %870 = vdwg.mxu0
      %v871 = vadd.f32 %v786, %v867
      %v872 = vadd.f32 %v787, %v869
      %873 = vrot.lane.b32.xlu0 %v198, 94
      %v874 = vpop.permute.xlu0 %873
      %875 = vrot.lane.b32.xlu0 %v199, 94
      %v876 = vpop.permute.xlu0 %875
      %vm877 = vcmp.lt.s32.totalorder %v208, 94
      %v878 = vsel %vm877, %v874, %v876
      %v879 = vsel %vm877, %v876, %v874
      %s880 = scalar_lea.vmem %s1, 64
      %v881 = vld [vmem:[%s880] sm:$0xff]
      %v883 = vsel %vm214, %v881, 0
      %885 = vmatprep.subr.mxu0 %v879
      %886 = vmatpush1.msra.mxu0 %v878
      %887 = vmatprep.subr.mxu0 0.0
      %888 = vmatpush1.msra.mxu0 0.0
      %889 = vmatprep.subr.mxu0 0.0
      %890 = vmatpush1.msra.mxu0 0.0
      %891 = vmatprep.subr.mxu0 0.0
      %892 = vmatpush1.msra.mxu0 0.0
      %893 = vmatprep.subr.mxu0 0.0
      %894 = vmatpush1.msra.mxu0 0.0
      %895 = vmatprep.subr.mxu0 0.0
      %896 = vmatpush1.msra.mxu0 0.0
      %897 = vmatprep.subr.mxu0 0.0
      %898 = vmatpush1.msra.mxu0 0.0
      %899 = vmatprep.subr.mxu0 0.0
      %900 = vmatpush1.msra.mxu0 0.0
      %901 = vmatprep.subr.mxu0 0.0
      %902 = vmatpush1.msra.mxu0 0.0
      %903 = vmatprep.subr.mxu0 0.0
      %904 = vmatpush1.msra.mxu0 0.0
      %905 = vmatprep.subr.mxu0 0.0
      %906 = vmatpush1.msra.mxu0 0.0
      %907 = vmatprep.subr.mxu0 0.0
      %908 = vmatpush1.msra.mxu0 0.0
      %909 = vmatprep.subr.mxu0 0.0
      %910 = vmatpush1.msra.mxu0 0.0
      %911 = vmatprep.subr.mxu0 0.0
      %912 = vmatpush1.msra.mxu0 0.0
      %913 = vmatprep.subr.mxu0 0.0
      %914 = vmatpush1.msra.mxu0 0.0
      %915 = vmatprep.subr.mxu0 0.0
      %916 = vmatpush1.msra.mxu0 0.0
      %917 = vmatprep.subr.mxu0 0.0
      %918 = vmatpush1.msra.mxu0 0.0
      %919 = vmatprep.subr.mxu0 0.0
      %920 = vmatpush1.msra.mxu0 0.0
      %921 = vmatprep.subr.mxu0 0.0
      %922 = vmatpush1.msra.mxu0 0.0
      %923 = vmatprep.subr.mxu0 0.0
      %924 = vmatpush1.msra.mxu0 0.0
      %925 = vmatprep.subr.mxu0 0.0
      %926 = vmatpush1.msra.mxu0 0.0
      %927 = vmatprep.subr.mxu0 0.0
      %928 = vmatpush1.msra.mxu0 0.0
      %929 = vmatprep.subr.mxu0 0.0
      %930 = vmatpush1.msra.mxu0 0.0
      %931 = vmatprep.subr.mxu0 0.0
      %932 = vmatpush1.msra.mxu0 0.0
      %933 = vmatprep.subr.mxu0 0.0
      %934 = vmatpush1.msra.mxu0 0.0
      %935 = vmatprep.subr.mxu0 0.0
      %936 = vmatpush1.msra.mxu0 0.0
      %937 = vmatprep.subr.mxu0 0.0
      %938 = vmatpush1.msra.mxu0 0.0
      %939 = vmatprep.subr.mxu0 0.0
      %940 = vmatpush1.msra.mxu0 0.0
      %941 = vmatprep.subr.mxu0 0.0
      %942 = vmatpush1.msra.mxu0 0.0
      %943 = vmatprep.subr.mxu0 0.0
      %944 = vmatpush1.msra.mxu0 0.0
      %945 = vmatprep.subr.mxu0 0.0
      %946 = vmatpush1.msra.mxu0 0.0
      %947 = vmatprep.subr.mxu0 0.0
      %948 = vmatpush1.msra.mxu0 0.0
      %949 = vmatprep.mubr.f32.mxu0 0.0
      %950 = vmatmul.mubr.f32.gmra.mrb[0].mxu0 %v883
      %v951 = vpop.f32.mrb[0].mxu0
      %v952 = vadd.f32 0.0, %v951
      %v953 = vpop.f32.mrb[0].mxu0
      %v954 = vadd.f32 0.0, %v953
      %955 = vdwg.mxu0
      %v956 = vadd.f32 %v871, %v952
      %v957 = vadd.f32 %v872, %v954
      %959 = vset.pattern.permute.xlu0 0
      %960 = vperm.xlu0 %959, %v200
      %v961 = vpop.permute.xlu0 %960
      %v963 = vmul.f32 %v956, %v961
      %v964 = vmul.f32 %v957, %v961
      %966 = vset.pattern.permute.xlu0 0
      %967 = vperm.xlu0 %966, %v201
      %v968 = vpop.permute.xlu0 %967
      %v970 = vadd.f32 %v963, %v968
      %v971 = vadd.f32 %v964, %v968
      %s972 = scalar_lea.vmem %s2, 8
      %v973 = vld [vmem:[%s972] sm:$0xff]
      %s974 = scalar_lea.vmem %s3, 8
      %v975 = vld [vmem:[%s974] sm:$0xff]
      %s976 = scalar_lea.vmem %s1, 72
      %v977 = vld [vmem:[%s976] sm:$0xff]
      %978 = vrot.lane.b32.xlu0 %v970, 127
      %v979 = vpop.permute.xlu0 %978
      %980 = vrot.lane.b32.xlu0 %v971, 127
      %v981 = vpop.permute.xlu0 %980
      %v982 = vsel %vm209, %v979, %v981
      %v983 = vsel %vm209, %v981, %v979
      %s984 = scalar_lea.vmem %s1, 80
      %v985 = vld [vmem:[%s984] sm:$0xff]
      %v987 = vsel %vm214, %v985, 0
      %989 = vmatprep.subr.mxu0 %v983
      %990 = vmatpush1.msra.mxu0 %v982
      %991 = vmatprep.subr.mxu0 0.0
      %992 = vmatpush1.msra.mxu0 0.0
      %993 = vmatprep.subr.mxu0 0.0
      %994 = vmatpush1.msra.mxu0 0.0
      %995 = vmatprep.subr.mxu0 0.0
      %996 = vmatpush1.msra.mxu0 0.0
      %997 = vmatprep.subr.mxu0 0.0
      %998 = vmatpush1.msra.mxu0 0.0
      %999 = vmatprep.subr.mxu0 0.0
      %1000 = vmatpush1.msra.mxu0 0.0
      %1001 = vmatprep.subr.mxu0 0.0
      %1002 = vmatpush1.msra.mxu0 0.0
      %1003 = vmatprep.subr.mxu0 0.0
      %1004 = vmatpush1.msra.mxu0 0.0
      %1005 = vmatprep.subr.mxu0 0.0
      %1006 = vmatpush1.msra.mxu0 0.0
      %1007 = vmatprep.subr.mxu0 0.0
      %1008 = vmatpush1.msra.mxu0 0.0
      %1009 = vmatprep.subr.mxu0 0.0
      %1010 = vmatpush1.msra.mxu0 0.0
      %1011 = vmatprep.subr.mxu0 0.0
      %1012 = vmatpush1.msra.mxu0 0.0
      %1013 = vmatprep.subr.mxu0 0.0
      %1014 = vmatpush1.msra.mxu0 0.0
      %1015 = vmatprep.subr.mxu0 0.0
      %1016 = vmatpush1.msra.mxu0 0.0
      %1017 = vmatprep.subr.mxu0 0.0
      %1018 = vmatpush1.msra.mxu0 0.0
      %1019 = vmatprep.subr.mxu0 0.0
      %1020 = vmatpush1.msra.mxu0 0.0
      %1021 = vmatprep.subr.mxu0 0.0
      %1022 = vmatpush1.msra.mxu0 0.0
      %1023 = vmatprep.subr.mxu0 0.0
      %1024 = vmatpush1.msra.mxu0 0.0
      %1025 = vmatprep.subr.mxu0 0.0
      %1026 = vmatpush1.msra.mxu0 0.0
      %1027 = vmatprep.subr.mxu0 0.0
      %1028 = vmatpush1.msra.mxu0 0.0
      %1029 = vmatprep.subr.mxu0 0.0
      %1030 = vmatpush1.msra.mxu0 0.0
      %1031 = vmatprep.subr.mxu0 0.0
      %1032 = vmatpush1.msra.mxu0 0.0
      %1033 = vmatprep.subr.mxu0 0.0
      %1034 = vmatpush1.msra.mxu0 0.0
      %1035 = vmatprep.subr.mxu0 0.0
      %1036 = vmatpush1.msra.mxu0 0.0
      %1037 = vmatprep.subr.mxu0 0.0
      %1038 = vmatpush1.msra.mxu0 0.0
      %1039 = vmatprep.subr.mxu0 0.0
      %1040 = vmatpush1.msra.mxu0 0.0
      %1041 = vmatprep.subr.mxu0 0.0
      %1042 = vmatpush1.msra.mxu0 0.0
      %1043 = vmatprep.subr.mxu0 0.0
      %1044 = vmatpush1.msra.mxu0 0.0
      %1045 = vmatprep.subr.mxu0 0.0
      %1046 = vmatpush1.msra.mxu0 0.0
      %1047 = vmatprep.subr.mxu0 0.0
      %1048 = vmatpush1.msra.mxu0 0.0
      %1049 = vmatprep.subr.mxu0 0.0
      %1050 = vmatpush1.msra.mxu0 0.0
      %1051 = vmatprep.subr.mxu0 0.0
      %1052 = vmatpush1.msra.mxu0 0.0
      %1053 = vmatprep.mubr.f32.mxu0 0.0
      %1054 = vmatmul.mubr.f32.gmra.mrb[0].mxu0 %v987
      %v1055 = vpop.f32.mrb[0].mxu0
      %v1056 = vadd.f32 0.0, %v1055
      %v1057 = vpop.f32.mrb[0].mxu0
      %v1058 = vadd.f32 0.0, %v1057
      %1059 = vdwg.mxu0
      %v1061 = vsel %vm214, %v977, 0
      %1063 = vmatprep.subr.mxu0 %v971
      %1064 = vmatpush1.msra.mxu0 %v970
      %1065 = vmatprep.subr.mxu0 0.0
      %1066 = vmatpush1.msra.mxu0 0.0
      %1067 = vmatprep.subr.mxu0 0.0
      %1068 = vmatpush1.msra.mxu0 0.0
      %1069 = vmatprep.subr.mxu0 0.0
      %1070 = vmatpush1.msra.mxu0 0.0
      %1071 = vmatprep.subr.mxu0 0.0
      %1072 = vmatpush1.msra.mxu0 0.0
      %1073 = vmatprep.subr.mxu0 0.0
      %1074 = vmatpush1.msra.mxu0 0.0
      %1075 = vmatprep.subr.mxu0 0.0
      %1076 = vmatpush1.msra.mxu0 0.0
      %1077 = vmatprep.subr.mxu0 0.0
      %1078 = vmatpush1.msra.mxu0 0.0
      %1079 = vmatprep.subr.mxu0 0.0
      %1080 = vmatpush1.msra.mxu0 0.0
      %1081 = vmatprep.subr.mxu0 0.0
      %1082 = vmatpush1.msra.mxu0 0.0
      %1083 = vmatprep.subr.mxu0 0.0
      %1084 = vmatpush1.msra.mxu0 0.0
      %1085 = vmatprep.subr.mxu0 0.0
      %1086 = vmatpush1.msra.mxu0 0.0
      %1087 = vmatprep.subr.mxu0 0.0
      %1088 = vmatpush1.msra.mxu0 0.0
      %1089 = vmatprep.subr.mxu0 0.0
      %1090 = vmatpush1.msra.mxu0 0.0
      %1091 = vmatprep.subr.mxu0 0.0
      %1092 = vmatpush1.msra.mxu0 0.0
      %1093 = vmatprep.subr.mxu0 0.0
      %1094 = vmatpush1.msra.mxu0 0.0
      %1095 = vmatprep.subr.mxu0 0.0
      %1096 = vmatpush1.msra.mxu0 0.0
      %1097 = vmatprep.subr.mxu0 0.0
      %1098 = vmatpush1.msra.mxu0 0.0
      %1099 = vmatprep.subr.mxu0 0.0
      %1100 = vmatpush1.msra.mxu0 0.0
      %1101 = vmatprep.subr.mxu0 0.0
      %1102 = vmatpush1.msra.mxu0 0.0
      %1103 = vmatprep.subr.mxu0 0.0
      %1104 = vmatpush1.msra.mxu0 0.0
      %1105 = vmatprep.subr.mxu0 0.0
      %1106 = vmatpush1.msra.mxu0 0.0
      %1107 = vmatprep.subr.mxu0 0.0
      %1108 = vmatpush1.msra.mxu0 0.0
      %1109 = vmatprep.subr.mxu0 0.0
      %1110 = vmatpush1.msra.mxu0 0.0
      %1111 = vmatprep.subr.mxu0 0.0
      %1112 = vmatpush1.msra.mxu0 0.0
      %1113 = vmatprep.subr.mxu0 0.0
      %1114 = vmatpush1.msra.mxu0 0.0
      %1115 = vmatprep.subr.mxu0 0.0
      %1116 = vmatpush1.msra.mxu0 0.0
      %1117 = vmatprep.subr.mxu0 0.0
      %1118 = vmatpush1.msra.mxu0 0.0
      %1119 = vmatprep.subr.mxu0 0.0
      %1120 = vmatpush1.msra.mxu0 0.0
      %1121 = vmatprep.subr.mxu0 0.0
      %1122 = vmatpush1.msra.mxu0 0.0
      %1123 = vmatprep.subr.mxu0 0.0
      %1124 = vmatpush1.msra.mxu0 0.0
      %1125 = vmatprep.subr.mxu0 0.0
      %1126 = vmatpush1.msra.mxu0 0.0
      %1127 = vmatprep.mubr.f32.mxu0 0.0
      %1128 = vmatmul.mubr.f32.gmra.mrb[0].mxu0 %v1061
      %v1129 = vpop.f32.mrb[0].mxu0
      %v1130 = vadd.f32 %v1056, %v1129
      %v1131 = vpop.f32.mrb[0].mxu0
      %v1132 = vadd.f32 %v1058, %v1131
      %1133 = vdwg.mxu0
      %1134 = vrot.lane.b32.xlu0 %v970, 126
      %v1135 = vpop.permute.xlu0 %1134
      %1136 = vrot.lane.b32.xlu0 %v971, 126
      %v1137 = vpop.permute.xlu0 %1136
      %v1138 = vsel %vm367, %v1135, %v1137
      %v1139 = vsel %vm367, %v1137, %v1135
      %s1140 = scalar_lea.vmem %s1, 88
      %v1141 = vld [vmem:[%s1140] sm:$0xff]
      %v1143 = vsel %vm214, %v1141, 0
      %1145 = vmatprep.subr.mxu0 %v1139
      %1146 = vmatpush1.msra.mxu0 %v1138
      %1147 = vmatprep.subr.mxu0 0.0
      %1148 = vmatpush1.msra.mxu0 0.0
      %1149 = vmatprep.subr.mxu0 0.0
      %1150 = vmatpush1.msra.mxu0 0.0
      %1151 = vmatprep.subr.mxu0 0.0
      %1152 = vmatpush1.msra.mxu0 0.0
      %1153 = vmatprep.subr.mxu0 0.0
      %1154 = vmatpush1.msra.mxu0 0.0
      %1155 = vmatprep.subr.mxu0 0.0
      %1156 = vmatpush1.msra.mxu0 0.0
      %1157 = vmatprep.subr.mxu0 0.0
      %1158 = vmatpush1.msra.mxu0 0.0
      %1159 = vmatprep.subr.mxu0 0.0
      %1160 = vmatpush1.msra.mxu0 0.0
      %1161 = vmatprep.subr.mxu0 0.0
      %1162 = vmatpush1.msra.mxu0 0.0
      %1163 = vmatprep.subr.mxu0 0.0
      %1164 = vmatpush1.msra.mxu0 0.0
      %1165 = vmatprep.subr.mxu0 0.0
      %1166 = vmatpush1.msra.mxu0 0.0
      %1167 = vmatprep.subr.mxu0 0.0
      %1168 = vmatpush1.msra.mxu0 0.0
      %1169 = vmatprep.subr.mxu0 0.0
      %1170 = vmatpush1.msra.mxu0 0.0
      %1171 = vmatprep.subr.mxu0 0.0
      %1172 = vmatpush1.msra.mxu0 0.0
      %1173 = vmatprep.subr.mxu0 0.0
      %1174 = vmatpush1.msra.mxu0 0.0
      %1175 = vmatprep.subr.mxu0 0.0
      %1176 = vmatpush1.msra.mxu0 0.0
      %1177 = vmatprep.subr.mxu0 0.0
      %1178 = vmatpush1.msra.mxu0 0.0
      %1179 = vmatprep.subr.mxu0 0.0
      %1180 = vmatpush1.msra.mxu0 0.0
      %1181 = vmatprep.subr.mxu0 0.0
      %1182 = vmatpush1.msra.mxu0 0.0
      %1183 = vmatprep.subr.mxu0 0.0
      %1184 = vmatpush1.msra.mxu0 0.0
      %1185 = vmatprep.subr.mxu0 0.0
      %1186 = vmatpush1.msra.mxu0 0.0
      %1187 = vmatprep.subr.mxu0 0.0
      %1188 = vmatpush1.msra.mxu0 0.0
      %1189 = vmatprep.subr.mxu0 0.0
      %1190 = vmatpush1.msra.mxu0 0.0
      %1191 = vmatprep.subr.mxu0 0.0
      %1192 = vmatpush1.msra.mxu0 0.0
      %1193 = vmatprep.subr.mxu0 0.0
      %1194 = vmatpush1.msra.mxu0 0.0
      %1195 = vmatprep.subr.mxu0 0.0
      %1196 = vmatpush1.msra.mxu0 0.0
      %1197 = vmatprep.subr.mxu0 0.0
      %1198 = vmatpush1.msra.mxu0 0.0
      %1199 = vmatprep.subr.mxu0 0.0
      %1200 = vmatpush1.msra.mxu0 0.0
      %1201 = vmatprep.subr.mxu0 0.0
      %1202 = vmatpush1.msra.mxu0 0.0
      %1203 = vmatprep.subr.mxu0 0.0
      %1204 = vmatpush1.msra.mxu0 0.0
      %1205 = vmatprep.subr.mxu0 0.0
      %1206 = vmatpush1.msra.mxu0 0.0
      %1207 = vmatprep.subr.mxu0 0.0
      %1208 = vmatpush1.msra.mxu0 0.0
      %1209 = vmatprep.mubr.f32.mxu0 0.0
      %1210 = vmatmul.mubr.f32.gmra.mrb[0].mxu0 %v1143
      %v1211 = vpop.f32.mrb[0].mxu0
      %v1212 = vadd.f32 0.0, %v1211
      %v1213 = vpop.f32.mrb[0].mxu0
      %v1214 = vadd.f32 0.0, %v1213
      %1215 = vdwg.mxu0
      %v1216 = vadd.f32 %v1130, %v1212
      %v1217 = vadd.f32 %v1132, %v1214
      %1218 = vrot.lane.b32.xlu0 %v970, 112
      %v1219 = vpop.permute.xlu0 %1218
      %1220 = vrot.lane.b32.xlu0 %v971, 112
      %v1221 = vpop.permute.xlu0 %1220
      %v1222 = vsel %vm452, %v1219, %v1221
      %v1223 = vsel %vm452, %v1221, %v1219
      %s1224 = scalar_lea.vmem %s1, 96
      %v1225 = vld [vmem:[%s1224] sm:$0xff]
      %v1227 = vsel %vm214, %v1225, 0
      %1229 = vmatprep.subr.mxu0 %v1223
      %1230 = vmatpush1.msra.mxu0 %v1222
      %1231 = vmatprep.subr.mxu0 0.0
      %1232 = vmatpush1.msra.mxu0 0.0
      %1233 = vmatprep.subr.mxu0 0.0
      %1234 = vmatpush1.msra.mxu0 0.0
      %1235 = vmatprep.subr.mxu0 0.0
      %1236 = vmatpush1.msra.mxu0 0.0
      %1237 = vmatprep.subr.mxu0 0.0
      %1238 = vmatpush1.msra.mxu0 0.0
      %1239 = vmatprep.subr.mxu0 0.0
      %1240 = vmatpush1.msra.mxu0 0.0
      %1241 = vmatprep.subr.mxu0 0.0
      %1242 = vmatpush1.msra.mxu0 0.0
      %1243 = vmatprep.subr.mxu0 0.0
      %1244 = vmatpush1.msra.mxu0 0.0
      %1245 = vmatprep.subr.mxu0 0.0
      %1246 = vmatpush1.msra.mxu0 0.0
      %1247 = vmatprep.subr.mxu0 0.0
      %1248 = vmatpush1.msra.mxu0 0.0
      %1249 = vmatprep.subr.mxu0 0.0
      %1250 = vmatpush1.msra.mxu0 0.0
      %1251 = vmatprep.subr.mxu0 0.0
      %1252 = vmatpush1.msra.mxu0 0.0
      %1253 = vmatprep.subr.mxu0 0.0
      %1254 = vmatpush1.msra.mxu0 0.0
      %1255 = vmatprep.subr.mxu0 0.0
      %1256 = vmatpush1.msra.mxu0 0.0
      %1257 = vmatprep.subr.mxu0 0.0
      %1258 = vmatpush1.msra.mxu0 0.0
      %1259 = vmatprep.subr.mxu0 0.0
      %1260 = vmatpush1.msra.mxu0 0.0
      %1261 = vmatprep.subr.mxu0 0.0
      %1262 = vmatpush1.msra.mxu0 0.0
      %1263 = vmatprep.subr.mxu0 0.0
      %1264 = vmatpush1.msra.mxu0 0.0
      %1265 = vmatprep.subr.mxu0 0.0
      %1266 = vmatpush1.msra.mxu0 0.0
      %1267 = vmatprep.subr.mxu0 0.0
      %1268 = vmatpush1.msra.mxu0 0.0
      %1269 = vmatprep.subr.mxu0 0.0
      %1270 = vmatpush1.msra.mxu0 0.0
      %1271 = vmatprep.subr.mxu0 0.0
      %1272 = vmatpush1.msra.mxu0 0.0
      %1273 = vmatprep.subr.mxu0 0.0
      %1274 = vmatpush1.msra.mxu0 0.0
      %1275 = vmatprep.subr.mxu0 0.0
      %1276 = vmatpush1.msra.mxu0 0.0
      %1277 = vmatprep.subr.mxu0 0.0
      %1278 = vmatpush1.msra.mxu0 0.0
      %1279 = vmatprep.subr.mxu0 0.0
      %1280 = vmatpush1.msra.mxu0 0.0
      %1281 = vmatprep.subr.mxu0 0.0
      %1282 = vmatpush1.msra.mxu0 0.0
      %1283 = vmatprep.subr.mxu0 0.0
      %1284 = vmatpush1.msra.mxu0 0.0
      %1285 = vmatprep.subr.mxu0 0.0
      %1286 = vmatpush1.msra.mxu0 0.0
      %1287 = vmatprep.subr.mxu0 0.0
      %1288 = vmatpush1.msra.mxu0 0.0
      %1289 = vmatprep.subr.mxu0 0.0
      %1290 = vmatpush1.msra.mxu0 0.0
      %1291 = vmatprep.subr.mxu0 0.0
      %1292 = vmatpush1.msra.mxu0 0.0
      %1293 = vmatprep.mubr.f32.mxu0 0.0
      %1294 = vmatmul.mubr.f32.gmra.mrb[0].mxu0 %v1227
      %v1295 = vpop.f32.mrb[0].mxu0
      %v1296 = vadd.f32 0.0, %v1295
      %v1297 = vpop.f32.mrb[0].mxu0
      %v1298 = vadd.f32 0.0, %v1297
      %1299 = vdwg.mxu0
      %v1300 = vadd.f32 %v1216, %v1296
      %v1301 = vadd.f32 %v1217, %v1298
      %1302 = vrot.lane.b32.xlu0 %v970, 111
      %v1303 = vpop.permute.xlu0 %1302
      %1304 = vrot.lane.b32.xlu0 %v971, 111
      %v1305 = vpop.permute.xlu0 %1304
      %v1306 = vsel %vm537, %v1303, %v1305
      %v1307 = vsel %vm537, %v1305, %v1303
      %s1308 = scalar_lea.vmem %s1, 104
      %v1309 = vld [vmem:[%s1308] sm:$0xff]
      %v1311 = vsel %vm214, %v1309, 0
      %1313 = vmatprep.subr.mxu0 %v1307
      %1314 = vmatpush1.msra.mxu0 %v1306
      %1315 = vmatprep.subr.mxu0 0.0
      %1316 = vmatpush1.msra.mxu0 0.0
      %1317 = vmatprep.subr.mxu0 0.0
      %1318 = vmatpush1.msra.mxu0 0.0
      %1319 = vmatprep.subr.mxu0 0.0
      %1320 = vmatpush1.msra.mxu0 0.0
      %1321 = vmatprep.subr.mxu0 0.0
      %1322 = vmatpush1.msra.mxu0 0.0
      %1323 = vmatprep.subr.mxu0 0.0
      %1324 = vmatpush1.msra.mxu0 0.0
      %1325 = vmatprep.subr.mxu0 0.0
      %1326 = vmatpush1.msra.mxu0 0.0
      %1327 = vmatprep.subr.mxu0 0.0
      %1328 = vmatpush1.msra.mxu0 0.0
      %1329 = vmatprep.subr.mxu0 0.0
      %1330 = vmatpush1.msra.mxu0 0.0
      %1331 = vmatprep.subr.mxu0 0.0
      %1332 = vmatpush1.msra.mxu0 0.0
      %1333 = vmatprep.subr.mxu0 0.0
      %1334 = vmatpush1.msra.mxu0 0.0
      %1335 = vmatprep.subr.mxu0 0.0
      %1336 = vmatpush1.msra.mxu0 0.0
      %1337 = vmatprep.subr.mxu0 0.0
      %1338 = vmatpush1.msra.mxu0 0.0
      %1339 = vmatprep.subr.mxu0 0.0
      %1340 = vmatpush1.msra.mxu0 0.0
      %1341 = vmatprep.subr.mxu0 0.0
      %1342 = vmatpush1.msra.mxu0 0.0
      %1343 = vmatprep.subr.mxu0 0.0
      %1344 = vmatpush1.msra.mxu0 0.0
      %1345 = vmatprep.subr.mxu0 0.0
      %1346 = vmatpush1.msra.mxu0 0.0
      %1347 = vmatprep.subr.mxu0 0.0
      %1348 = vmatpush1.msra.mxu0 0.0
      %1349 = vmatprep.subr.mxu0 0.0
      %1350 = vmatpush1.msra.mxu0 0.0
      %1351 = vmatprep.subr.mxu0 0.0
      %1352 = vmatpush1.msra.mxu0 0.0
      %1353 = vmatprep.subr.mxu0 0.0
      %1354 = vmatpush1.msra.mxu0 0.0
      %1355 = vmatprep.subr.mxu0 0.0
      %1356 = vmatpush1.msra.mxu0 0.0
      %1357 = vmatprep.subr.mxu0 0.0
      %1358 = vmatpush1.msra.mxu0 0.0
      %1359 = vmatprep.subr.mxu0 0.0
      %1360 = vmatpush1.msra.mxu0 0.0
      %1361 = vmatprep.subr.mxu0 0.0
      %1362 = vmatpush1.msra.mxu0 0.0
      %1363 = vmatprep.subr.mxu0 0.0
      %1364 = vmatpush1.msra.mxu0 0.0
      %1365 = vmatprep.subr.mxu0 0.0
      %1366 = vmatpush1.msra.mxu0 0.0
      %1367 = vmatprep.subr.mxu0 0.0
      %1368 = vmatpush1.msra.mxu0 0.0
      %1369 = vmatprep.subr.mxu0 0.0
      %1370 = vmatpush1.msra.mxu0 0.0
      %1371 = vmatprep.subr.mxu0 0.0
      %1372 = vmatpush1.msra.mxu0 0.0
      %1373 = vmatprep.subr.mxu0 0.0
      %1374 = vmatpush1.msra.mxu0 0.0
      %1375 = vmatprep.subr.mxu0 0.0
      %1376 = vmatpush1.msra.mxu0 0.0
      %1377 = vmatprep.mubr.f32.mxu0 0.0
      %1378 = vmatmul.mubr.f32.gmra.mrb[0].mxu0 %v1311
      %v1379 = vpop.f32.mrb[0].mxu0
      %v1380 = vadd.f32 0.0, %v1379
      %v1381 = vpop.f32.mrb[0].mxu0
      %v1382 = vadd.f32 0.0, %v1381
      %1383 = vdwg.mxu0
      %v1384 = vadd.f32 %v1300, %v1380
      %v1385 = vadd.f32 %v1301, %v1382
      %1386 = vrot.lane.b32.xlu0 %v970, 110
      %v1387 = vpop.permute.xlu0 %1386
      %1388 = vrot.lane.b32.xlu0 %v971, 110
      %v1389 = vpop.permute.xlu0 %1388
      %v1390 = vsel %vm622, %v1387, %v1389
      %v1391 = vsel %vm622, %v1389, %v1387
      %s1392 = scalar_lea.vmem %s1, 112
      %v1393 = vld [vmem:[%s1392] sm:$0xff]
      %v1395 = vsel %vm214, %v1393, 0
      %1397 = vmatprep.subr.mxu0 %v1391
      %1398 = vmatpush1.msra.mxu0 %v1390
      %1399 = vmatprep.subr.mxu0 0.0
      %1400 = vmatpush1.msra.mxu0 0.0
      %1401 = vmatprep.subr.mxu0 0.0
      %1402 = vmatpush1.msra.mxu0 0.0
      %1403 = vmatprep.subr.mxu0 0.0
      %1404 = vmatpush1.msra.mxu0 0.0
      %1405 = vmatprep.subr.mxu0 0.0
      %1406 = vmatpush1.msra.mxu0 0.0
      %1407 = vmatprep.subr.mxu0 0.0
      %1408 = vmatpush1.msra.mxu0 0.0
      %1409 = vmatprep.subr.mxu0 0.0
      %1410 = vmatpush1.msra.mxu0 0.0
      %1411 = vmatprep.subr.mxu0 0.0
      %1412 = vmatpush1.msra.mxu0 0.0
      %1413 = vmatprep.subr.mxu0 0.0
      %1414 = vmatpush1.msra.mxu0 0.0
      %1415 = vmatprep.subr.mxu0 0.0
      %1416 = vmatpush1.msra.mxu0 0.0
      %1417 = vmatprep.subr.mxu0 0.0
      %1418 = vmatpush1.msra.mxu0 0.0
      %1419 = vmatprep.subr.mxu0 0.0
      %1420 = vmatpush1.msra.mxu0 0.0
      %1421 = vmatprep.subr.mxu0 0.0
      %1422 = vmatpush1.msra.mxu0 0.0
      %1423 = vmatprep.subr.mxu0 0.0
      %1424 = vmatpush1.msra.mxu0 0.0
      %1425 = vmatprep.subr.mxu0 0.0
      %1426 = vmatpush1.msra.mxu0 0.0
      %1427 = vmatprep.subr.mxu0 0.0
      %1428 = vmatpush1.msra.mxu0 0.0
      %1429 = vmatprep.subr.mxu0 0.0
      %1430 = vmatpush1.msra.mxu0 0.0
      %1431 = vmatprep.subr.mxu0 0.0
      %1432 = vmatpush1.msra.mxu0 0.0
      %1433 = vmatprep.subr.mxu0 0.0
      %1434 = vmatpush1.msra.mxu0 0.0
      %1435 = vmatprep.subr.mxu0 0.0
      %1436 = vmatpush1.msra.mxu0 0.0
      %1437 = vmatprep.subr.mxu0 0.0
      %1438 = vmatpush1.msra.mxu0 0.0
      %1439 = vmatprep.subr.mxu0 0.0
      %1440 = vmatpush1.msra.mxu0 0.0
      %1441 = vmatprep.subr.mxu0 0.0
      %1442 = vmatpush1.msra.mxu0 0.0
      %1443 = vmatprep.subr.mxu0 0.0
      %1444 = vmatpush1.msra.mxu0 0.0
      %1445 = vmatprep.subr.mxu0 0.0
      %1446 = vmatpush1.msra.mxu0 0.0
      %1447 = vmatprep.subr.mxu0 0.0
      %1448 = vmatpush1.msra.mxu0 0.0
      %1449 = vmatprep.subr.mxu0 0.0
      %1450 = vmatpush1.msra.mxu0 0.0
      %1451 = vmatprep.subr.mxu0 0.0
      %1452 = vmatpush1.msra.mxu0 0.0
      %1453 = vmatprep.subr.mxu0 0.0
      %1454 = vmatpush1.msra.mxu0 0.0
      %1455 = vmatprep.subr.mxu0 0.0
      %1456 = vmatpush1.msra.mxu0 0.0
      %1457 = vmatprep.subr.mxu0 0.0
      %1458 = vmatpush1.msra.mxu0 0.0
      %1459 = vmatprep.subr.mxu0 0.0
      %1460 = vmatpush1.msra.mxu0 0.0
      %1461 = vmatprep.mubr.f32.mxu0 0.0
      %1462 = vmatmul.mubr.f32.gmra.mrb[0].mxu0 %v1395
      %v1463 = vpop.f32.mrb[0].mxu0
      %v1464 = vadd.f32 0.0, %v1463
      %v1465 = vpop.f32.mrb[0].mxu0
      %v1466 = vadd.f32 0.0, %v1465
      %1467 = vdwg.mxu0
      %v1468 = vadd.f32 %v1384, %v1464
      %v1469 = vadd.f32 %v1385, %v1466
      %1470 = vrot.lane.b32.xlu0 %v970, 96
      %v1471 = vpop.permute.xlu0 %1470
      %1472 = vrot.lane.b32.xlu0 %v971, 96
      %v1473 = vpop.permute.xlu0 %1472
      %v1474 = vsel %vm707, %v1471, %v1473
      %v1475 = vsel %vm707, %v1473, %v1471
      %s1476 = scalar_lea.vmem %s1, 120
      %v1477 = vld [vmem:[%s1476] sm:$0xff]
      %v1479 = vsel %vm214, %v1477, 0
      %1481 = vmatprep.subr.mxu0 %v1475
      %1482 = vmatpush1.msra.mxu0 %v1474
      %1483 = vmatprep.subr.mxu0 0.0
      %1484 = vmatpush1.msra.mxu0 0.0
      %1485 = vmatprep.subr.mxu0 0.0
      %1486 = vmatpush1.msra.mxu0 0.0
      %1487 = vmatprep.subr.mxu0 0.0
      %1488 = vmatpush1.msra.mxu0 0.0
      %1489 = vmatprep.subr.mxu0 0.0
      %1490 = vmatpush1.msra.mxu0 0.0
      %1491 = vmatprep.subr.mxu0 0.0
      %1492 = vmatpush1.msra.mxu0 0.0
      %1493 = vmatprep.subr.mxu0 0.0
      %1494 = vmatpush1.msra.mxu0 0.0
      %1495 = vmatprep.subr.mxu0 0.0
      %1496 = vmatpush1.msra.mxu0 0.0
      %1497 = vmatprep.subr.mxu0 0.0
      %1498 = vmatpush1.msra.mxu0 0.0
      %1499 = vmatprep.subr.mxu0 0.0
      %1500 = vmatpush1.msra.mxu0 0.0
      %1501 = vmatprep.subr.mxu0 0.0
      %1502 = vmatpush1.msra.mxu0 0.0
      %1503 = vmatprep.subr.mxu0 0.0
      %1504 = vmatpush1.msra.mxu0 0.0
      %1505 = vmatprep.subr.mxu0 0.0
      %1506 = vmatpush1.msra.mxu0 0.0
      %1507 = vmatprep.subr.mxu0 0.0
      %1508 = vmatpush1.msra.mxu0 0.0
      %1509 = vmatprep.subr.mxu0 0.0
      %1510 = vmatpush1.msra.mxu0 0.0
      %1511 = vmatprep.subr.mxu0 0.0
      %1512 = vmatpush1.msra.mxu0 0.0
      %1513 = vmatprep.subr.mxu0 0.0
      %1514 = vmatpush1.msra.mxu0 0.0
      %1515 = vmatprep.subr.mxu0 0.0
      %1516 = vmatpush1.msra.mxu0 0.0
      %1517 = vmatprep.subr.mxu0 0.0
      %1518 = vmatpush1.msra.mxu0 0.0
      %1519 = vmatprep.subr.mxu0 0.0
      %1520 = vmatpush1.msra.mxu0 0.0
      %1521 = vmatprep.subr.mxu0 0.0
      %1522 = vmatpush1.msra.mxu0 0.0
      %1523 = vmatprep.subr.mxu0 0.0
      %1524 = vmatpush1.msra.mxu0 0.0
      %1525 = vmatprep.subr.mxu0 0.0
      %1526 = vmatpush1.msra.mxu0 0.0
      %1527 = vmatprep.subr.mxu0 0.0
      %1528 = vmatpush1.msra.mxu0 0.0
      %1529 = vmatprep.subr.mxu0 0.0
      %1530 = vmatpush1.msra.mxu0 0.0
      %1531 = vmatprep.subr.mxu0 0.0
      %1532 = vmatpush1.msra.mxu0 0.0
      %1533 = vmatprep.subr.mxu0 0.0
      %1534 = vmatpush1.msra.mxu0 0.0
      %1535 = vmatprep.subr.mxu0 0.0
      %1536 = vmatpush1.msra.mxu0 0.0
      %1537 = vmatprep.subr.mxu0 0.0
      %1538 = vmatpush1.msra.mxu0 0.0
      %1539 = vmatprep.subr.mxu0 0.0
      %1540 = vmatpush1.msra.mxu0 0.0
      %1541 = vmatprep.subr.mxu0 0.0
      %1542 = vmatpush1.msra.mxu0 0.0
      %1543 = vmatprep.subr.mxu0 0.0
      %1544 = vmatpush1.msra.mxu0 0.0
      %1545 = vmatprep.mubr.f32.mxu0 0.0
      %1546 = vmatmul.mubr.f32.gmra.mrb[0].mxu0 %v1479
      %v1547 = vpop.f32.mrb[0].mxu0
      %v1548 = vadd.f32 0.0, %v1547
      %v1549 = vpop.f32.mrb[0].mxu0
      %v1550 = vadd.f32 0.0, %v1549
      %1551 = vdwg.mxu0
      %v1552 = vadd.f32 %v1468, %v1548
      %v1553 = vadd.f32 %v1469, %v1550
      %1554 = vrot.lane.b32.xlu0 %v970, 95
      %v1555 = vpop.permute.xlu0 %1554
      %1556 = vrot.lane.b32.xlu0 %v971, 95
      %v1557 = vpop.permute.xlu0 %1556
      %v1558 = vsel %vm792, %v1555, %v1557
      %v1559 = vsel %vm792, %v1557, %v1555
      %s1560 = scalar_lea.vmem %s1, 128
      %v1561 = vld [vmem:[%s1560] sm:$0xff]
      %v1563 = vsel %vm214, %v1561, 0
      %1565 = vmatprep.subr.mxu0 %v1559
      %1566 = vmatpush1.msra.mxu0 %v1558
      %1567 = vmatprep.subr.mxu0 0.0
      %1568 = vmatpush1.msra.mxu0 0.0
      %1569 = vmatprep.subr.mxu0 0.0
      %1570 = vmatpush1.msra.mxu0 0.0
      %1571 = vmatprep.subr.mxu0 0.0
      %1572 = vmatpush1.msra.mxu0 0.0
      %1573 = vmatprep.subr.mxu0 0.0
      %1574 = vmatpush1.msra.mxu0 0.0
      %1575 = vmatprep.subr.mxu0 0.0
      %1576 = vmatpush1.msra.mxu0 0.0
      %1577 = vmatprep.subr.mxu0 0.0
      %1578 = vmatpush1.msra.mxu0 0.0
      %1579 = vmatprep.subr.mxu0 0.0
      %1580 = vmatpush1.msra.mxu0 0.0
      %1581 = vmatprep.subr.mxu0 0.0
      %1582 = vmatpush1.msra.mxu0 0.0
      %1583 = vmatprep.subr.mxu0 0.0
      %1584 = vmatpush1.msra.mxu0 0.0
      %1585 = vmatprep.subr.mxu0 0.0
      %1586 = vmatpush1.msra.mxu0 0.0
      %1587 = vmatprep.subr.mxu0 0.0
      %1588 = vmatpush1.msra.mxu0 0.0
      %1589 = vmatprep.subr.mxu0 0.0
      %1590 = vmatpush1.msra.mxu0 0.0
      %1591 = vmatprep.subr.mxu0 0.0
      %1592 = vmatpush1.msra.mxu0 0.0
      %1593 = vmatprep.subr.mxu0 0.0
      %1594 = vmatpush1.msra.mxu0 0.0
      %1595 = vmatprep.subr.mxu0 0.0
      %1596 = vmatpush1.msra.mxu0 0.0
      %1597 = vmatprep.subr.mxu0 0.0
      %1598 = vmatpush1.msra.mxu0 0.0
      %1599 = vmatprep.subr.mxu0 0.0
      %1600 = vmatpush1.msra.mxu0 0.0
      %1601 = vmatprep.subr.mxu0 0.0
      %1602 = vmatpush1.msra.mxu0 0.0
      %1603 = vmatprep.subr.mxu0 0.0
      %1604 = vmatpush1.msra.mxu0 0.0
      %1605 = vmatprep.subr.mxu0 0.0
      %1606 = vmatpush1.msra.mxu0 0.0
      %1607 = vmatprep.subr.mxu0 0.0
      %1608 = vmatpush1.msra.mxu0 0.0
      %1609 = vmatprep.subr.mxu0 0.0
      %1610 = vmatpush1.msra.mxu0 0.0
      %1611 = vmatprep.subr.mxu0 0.0
      %1612 = vmatpush1.msra.mxu0 0.0
      %1613 = vmatprep.subr.mxu0 0.0
      %1614 = vmatpush1.msra.mxu0 0.0
      %1615 = vmatprep.subr.mxu0 0.0
      %1616 = vmatpush1.msra.mxu0 0.0
      %1617 = vmatprep.subr.mxu0 0.0
      %1618 = vmatpush1.msra.mxu0 0.0
      %1619 = vmatprep.subr.mxu0 0.0
      %1620 = vmatpush1.msra.mxu0 0.0
      %1621 = vmatprep.subr.mxu0 0.0
      %1622 = vmatpush1.msra.mxu0 0.0
      %1623 = vmatprep.subr.mxu0 0.0
      %1624 = vmatpush1.msra.mxu0 0.0
      %1625 = vmatprep.subr.mxu0 0.0
      %1626 = vmatpush1.msra.mxu0 0.0
      %1627 = vmatprep.subr.mxu0 0.0
      %1628 = vmatpush1.msra.mxu0 0.0
      %1629 = vmatprep.mubr.f32.mxu0 0.0
      %1630 = vmatmul.mubr.f32.gmra.mrb[0].mxu0 %v1563
      %v1631 = vpop.f32.mrb[0].mxu0
      %v1632 = vadd.f32 0.0, %v1631
      %v1633 = vpop.f32.mrb[0].mxu0
      %v1634 = vadd.f32 0.0, %v1633
      %1635 = vdwg.mxu0
      %v1636 = vadd.f32 %v1552, %v1632
      %v1637 = vadd.f32 %v1553, %v1634
      %1638 = vrot.lane.b32.xlu0 %v970, 94
      %v1639 = vpop.permute.xlu0 %1638
      %1640 = vrot.lane.b32.xlu0 %v971, 94
      %v1641 = vpop.permute.xlu0 %1640
      %v1642 = vsel %vm877, %v1639, %v1641
      %v1643 = vsel %vm877, %v1641, %v1639
      %s1644 = scalar_lea.vmem %s1, 136
      %v1645 = vld [vmem:[%s1644] sm:$0xff]
      %v1647 = vsel %vm214, %v1645, 0
      %1649 = vmatprep.subr.mxu0 %v1643
      %1650 = vmatpush1.msra.mxu0 %v1642
      %1651 = vmatprep.subr.mxu0 0.0
      %1652 = vmatpush1.msra.mxu0 0.0
      %1653 = vmatprep.subr.mxu0 0.0
      %1654 = vmatpush1.msra.mxu0 0.0
      %1655 = vmatprep.subr.mxu0 0.0
      %1656 = vmatpush1.msra.mxu0 0.0
      %1657 = vmatprep.subr.mxu0 0.0
      %1658 = vmatpush1.msra.mxu0 0.0
      %1659 = vmatprep.subr.mxu0 0.0
      %1660 = vmatpush1.msra.mxu0 0.0
      %1661 = vmatprep.subr.mxu0 0.0
      %1662 = vmatpush1.msra.mxu0 0.0
      %1663 = vmatprep.subr.mxu0 0.0
      %1664 = vmatpush1.msra.mxu0 0.0
      %1665 = vmatprep.subr.mxu0 0.0
      %1666 = vmatpush1.msra.mxu0 0.0
      %1667 = vmatprep.subr.mxu0 0.0
      %1668 = vmatpush1.msra.mxu0 0.0
      %1669 = vmatprep.subr.mxu0 0.0
      %1670 = vmatpush1.msra.mxu0 0.0
      %1671 = vmatprep.subr.mxu0 0.0
      %1672 = vmatpush1.msra.mxu0 0.0
      %1673 = vmatprep.subr.mxu0 0.0
      %1674 = vmatpush1.msra.mxu0 0.0
      %1675 = vmatprep.subr.mxu0 0.0
      %1676 = vmatpush1.msra.mxu0 0.0
      %1677 = vmatprep.subr.mxu0 0.0
      %1678 = vmatpush1.msra.mxu0 0.0
      %1679 = vmatprep.subr.mxu0 0.0
      %1680 = vmatpush1.msra.mxu0 0.0
      %1681 = vmatprep.subr.mxu0 0.0
      %1682 = vmatpush1.msra.mxu0 0.0
      %1683 = vmatprep.subr.mxu0 0.0
      %1684 = vmatpush1.msra.mxu0 0.0
      %1685 = vmatprep.subr.mxu0 0.0
      %1686 = vmatpush1.msra.mxu0 0.0
      %1687 = vmatprep.subr.mxu0 0.0
      %1688 = vmatpush1.msra.mxu0 0.0
      %1689 = vmatprep.subr.mxu0 0.0
      %1690 = vmatpush1.msra.mxu0 0.0
      %1691 = vmatprep.subr.mxu0 0.0
      %1692 = vmatpush1.msra.mxu0 0.0
      %1693 = vmatprep.subr.mxu0 0.0
      %1694 = vmatpush1.msra.mxu0 0.0
      %1695 = vmatprep.subr.mxu0 0.0
      %1696 = vmatpush1.msra.mxu0 0.0
      %1697 = vmatprep.subr.mxu0 0.0
      %1698 = vmatpush1.msra.mxu0 0.0
      %1699 = vmatprep.subr.mxu0 0.0
      %1700 = vmatpush1.msra.mxu0 0.0
      %1701 = vmatprep.subr.mxu0 0.0
      %1702 = vmatpush1.msra.mxu0 0.0
      %1703 = vmatprep.subr.mxu0 0.0
      %1704 = vmatpush1.msra.mxu0 0.0
      %1705 = vmatprep.subr.mxu0 0.0
      %1706 = vmatpush1.msra.mxu0 0.0
      %1707 = vmatprep.subr.mxu0 0.0
      %1708 = vmatpush1.msra.mxu0 0.0
      %1709 = vmatprep.subr.mxu0 0.0
      %1710 = vmatpush1.msra.mxu0 0.0
      %1711 = vmatprep.subr.mxu0 0.0
      %1712 = vmatpush1.msra.mxu0 0.0
      %1713 = vmatprep.mubr.f32.mxu0 0.0
      %1714 = vmatmul.mubr.f32.gmra.mrb[0].mxu0 %v1647
      %v1715 = vpop.f32.mrb[0].mxu0
      %v1716 = vadd.f32 0.0, %v1715
      %v1717 = vpop.f32.mrb[0].mxu0
      %v1718 = vadd.f32 0.0, %v1717
      %1719 = vdwg.mxu0
      %v1720 = vadd.f32 %v1636, %v1716
      %v1721 = vadd.f32 %v1637, %v1718
      %1723 = vset.pattern.permute.xlu0 0
      %1724 = vperm.xlu0 %1723, %v973
      %v1725 = vpop.permute.xlu0 %1724
      %v1727 = vmul.f32 %v1720, %v1725
      %v1728 = vmul.f32 %v1721, %v1725
      %1730 = vset.pattern.permute.xlu0 0
      %1731 = vperm.xlu0 %1730, %v975
      %v1732 = vpop.permute.xlu0 %1731
      %v1734 = vadd.f32 %v1727, %v1732
      %v1735 = vadd.f32 %v1728, %v1732
      %s1736 = scalar_lea.vmem %s2, 16
      %v1737 = vld [vmem:[%s1736] sm:$0xff]
      %s1738 = scalar_lea.vmem %s3, 16
      %v1739 = vld [vmem:[%s1738] sm:$0xff]
      %s1740 = scalar_lea.vmem %s1, 144
      %v1741 = vld [vmem:[%s1740] sm:$0xff]
      %1742 = vrot.lane.b32.xlu0 %v1734, 127
      %v1743 = vpop.permute.xlu0 %1742
      %1744 = vrot.lane.b32.xlu0 %v1735, 127
      %v1745 = vpop.permute.xlu0 %1744
      %v1746 = vsel %vm209, %v1743, %v1745
      %v1747 = vsel %vm209, %v1745, %v1743
      %s1748 = scalar_lea.vmem %s1, 152
      %v1749 = vld [vmem:[%s1748] sm:$0xff]
      %v1751 = vsel %vm214, %v1749, 0
      %1753 = vmatprep.subr.mxu0 %v1747
      %1754 = vmatpush1.msra.mxu0 %v1746
      %1755 = vmatprep.subr.mxu0 0.0
      %1756 = vmatpush1.msra.mxu0 0.0
      %1757 = vmatprep.subr.mxu0 0.0
      %1758 = vmatpush1.msra.mxu0 0.0
      %1759 = vmatprep.subr.mxu0 0.0
      %1760 = vmatpush1.msra.mxu0 0.0
      %1761 = vmatprep.subr.mxu0 0.0
      %1762 = vmatpush1.msra.mxu0 0.0
      %1763 = vmatprep.subr.mxu0 0.0
      %1764 = vmatpush1.msra.mxu0 0.0
      %1765 = vmatprep.subr.mxu0 0.0
      %1766 = vmatpush1.msra.mxu0 0.0
      %1767 = vmatprep.subr.mxu0 0.0
      %1768 = vmatpush1.msra.mxu0 0.0
      %1769 = vmatprep.subr.mxu0 0.0
      %1770 = vmatpush1.msra.mxu0 0.0
      %1771 = vmatprep.subr.mxu0 0.0
      %1772 = vmatpush1.msra.mxu0 0.0
      %1773 = vmatprep.subr.mxu0 0.0
      %1774 = vmatpush1.msra.mxu0 0.0
      %1775 = vmatprep.subr.mxu0 0.0
      %1776 = vmatpush1.msra.mxu0 0.0
      %1777 = vmatprep.subr.mxu0 0.0
      %1778 = vmatpush1.msra.mxu0 0.0
      %1779 = vmatprep.subr.mxu0 0.0
      %1780 = vmatpush1.msra.mxu0 0.0
      %1781 = vmatprep.subr.mxu0 0.0
      %1782 = vmatpush1.msra.mxu0 0.0
      %1783 = vmatprep.subr.mxu0 0.0
      %1784 = vmatpush1.msra.mxu0 0.0
      %1785 = vmatprep.subr.mxu0 0.0
      %1786 = vmatpush1.msra.mxu0 0.0
      %1787 = vmatprep.subr.mxu0 0.0
      %1788 = vmatpush1.msra.mxu0 0.0
      %1789 = vmatprep.subr.mxu0 0.0
      %1790 = vmatpush1.msra.mxu0 0.0
      %1791 = vmatprep.subr.mxu0 0.0
      %1792 = vmatpush1.msra.mxu0 0.0
      %1793 = vmatprep.subr.mxu0 0.0
      %1794 = vmatpush1.msra.mxu0 0.0
      %1795 = vmatprep.subr.mxu0 0.0
      %1796 = vmatpush1.msra.mxu0 0.0
      %1797 = vmatprep.subr.mxu0 0.0
      %1798 = vmatpush1.msra.mxu0 0.0
      %1799 = vmatprep.subr.mxu0 0.0
      %1800 = vmatpush1.msra.mxu0 0.0
      %1801 = vmatprep.subr.mxu0 0.0
      %1802 = vmatpush1.msra.mxu0 0.0
      %1803 = vmatprep.subr.mxu0 0.0
      %1804 = vmatpush1.msra.mxu0 0.0
      %1805 = vmatprep.subr.mxu0 0.0
      %1806 = vmatpush1.msra.mxu0 0.0
      %1807 = vmatprep.subr.mxu0 0.0
      %1808 = vmatpush1.msra.mxu0 0.0
      %1809 = vmatprep.subr.mxu0 0.0
      %1810 = vmatpush1.msra.mxu0 0.0
      %1811 = vmatprep.subr.mxu0 0.0
      %1812 = vmatpush1.msra.mxu0 0.0
      %1813 = vmatprep.subr.mxu0 0.0
      %1814 = vmatpush1.msra.mxu0 0.0
      %1815 = vmatprep.subr.mxu0 0.0
      %1816 = vmatpush1.msra.mxu0 0.0
      %1817 = vmatprep.mubr.f32.mxu0 0.0
      %1818 = vmatmul.mubr.f32.gmra.mrb[0].mxu0 %v1751
      %v1819 = vpop.f32.mrb[0].mxu0
      %v1820 = vadd.f32 0.0, %v1819
      %v1821 = vpop.f32.mrb[0].mxu0
      %v1822 = vadd.f32 0.0, %v1821
      %1823 = vdwg.mxu0
      %v1825 = vsel %vm214, %v1741, 0
      %1827 = vmatprep.subr.mxu0 %v1735
      %1828 = vmatpush1.msra.mxu0 %v1734
      %1829 = vmatprep.subr.mxu0 0.0
      %1830 = vmatpush1.msra.mxu0 0.0
      %1831 = vmatprep.subr.mxu0 0.0
      %1832 = vmatpush1.msra.mxu0 0.0
      %1833 = vmatprep.subr.mxu0 0.0
      %1834 = vmatpush1.msra.mxu0 0.0
      %1835 = vmatprep.subr.mxu0 0.0
      %1836 = vmatpush1.msra.mxu0 0.0
      %1837 = vmatprep.subr.mxu0 0.0
      %1838 = vmatpush1.msra.mxu0 0.0
      %1839 = vmatprep.subr.mxu0 0.0
      %1840 = vmatpush1.msra.mxu0 0.0
      %1841 = vmatprep.subr.mxu0 0.0
      %1842 = vmatpush1.msra.mxu0 0.0
      %1843 = vmatprep.subr.mxu0 0.0
      %1844 = vmatpush1.msra.mxu0 0.0
      %1845 = vmatprep.subr.mxu0 0.0
      %1846 = vmatpush1.msra.mxu0 0.0
      %1847 = vmatprep.subr.mxu0 0.0
      %1848 = vmatpush1.msra.mxu0 0.0
      %1849 = vmatprep.subr.mxu0 0.0
      %1850 = vmatpush1.msra.mxu0 0.0
      %1851 = vmatprep.subr.mxu0 0.0
      %1852 = vmatpush1.msra.mxu0 0.0
      %1853 = vmatprep.subr.mxu0 0.0
      %1854 = vmatpush1.msra.mxu0 0.0
      %1855 = vmatprep.subr.mxu0 0.0
      %1856 = vmatpush1.msra.mxu0 0.0
      %1857 = vmatprep.subr.mxu0 0.0
      %1858 = vmatpush1.msra.mxu0 0.0
      %1859 = vmatprep.subr.mxu0 0.0
      %1860 = vmatpush1.msra.mxu0 0.0
      %1861 = vmatprep.subr.mxu0 0.0
      %1862 = vmatpush1.msra.mxu0 0.0
      %1863 = vmatprep.subr.mxu0 0.0
      %1864 = vmatpush1.msra.mxu0 0.0
      %1865 = vmatprep.subr.mxu0 0.0
      %1866 = vmatpush1.msra.mxu0 0.0
      %1867 = vmatprep.subr.mxu0 0.0
      %1868 = vmatpush1.msra.mxu0 0.0
      %1869 = vmatprep.subr.mxu0 0.0
      %1870 = vmatpush1.msra.mxu0 0.0
      %1871 = vmatprep.subr.mxu0 0.0
      %1872 = vmatpush1.msra.mxu0 0.0
      %1873 = vmatprep.subr.mxu0 0.0
      %1874 = vmatpush1.msra.mxu0 0.0
      %1875 = vmatprep.subr.mxu0 0.0
      %1876 = vmatpush1.msra.mxu0 0.0
      %1877 = vmatprep.subr.mxu0 0.0
      %1878 = vmatpush1.msra.mxu0 0.0
      %1879 = vmatprep.subr.mxu0 0.0
      %1880 = vmatpush1.msra.mxu0 0.0
      %1881 = vmatprep.subr.mxu0 0.0
      %1882 = vmatpush1.msra.mxu0 0.0
      %1883 = vmatprep.subr.mxu0 0.0
      %1884 = vmatpush1.msra.mxu0 0.0
      %1885 = vmatprep.subr.mxu0 0.0
      %1886 = vmatpush1.msra.mxu0 0.0
      %1887 = vmatprep.subr.mxu0 0.0
      %1888 = vmatpush1.msra.mxu0 0.0
      %1889 = vmatprep.subr.mxu0 0.0
      %1890 = vmatpush1.msra.mxu0 0.0
      %1891 = vmatprep.mubr.f32.mxu0 0.0
      %1892 = vmatmul.mubr.f32.gmra.mrb[0].mxu0 %v1825
      %v1893 = vpop.f32.mrb[0].mxu0
      %v1894 = vadd.f32 %v1820, %v1893
      %v1895 = vpop.f32.mrb[0].mxu0
      %v1896 = vadd.f32 %v1822, %v1895
      %1897 = vdwg.mxu0
      %1898 = vrot.lane.b32.xlu0 %v1734, 126
      %v1899 = vpop.permute.xlu0 %1898
      %1900 = vrot.lane.b32.xlu0 %v1735, 126
      %v1901 = vpop.permute.xlu0 %1900
      %v1902 = vsel %vm367, %v1899, %v1901
      %v1903 = vsel %vm367, %v1901, %v1899
      %s1904 = scalar_lea.vmem %s1, 160
      %v1905 = vld [vmem:[%s1904] sm:$0xff]
      %v1907 = vsel %vm214, %v1905, 0
      %1909 = vmatprep.subr.mxu0 %v1903
      %1910 = vmatpush1.msra.mxu0 %v1902
      %1911 = vmatprep.subr.mxu0 0.0
      %1912 = vmatpush1.msra.mxu0 0.0
      %1913 = vmatprep.subr.mxu0 0.0
      %1914 = vmatpush1.msra.mxu0 0.0
      %1915 = vmatprep.subr.mxu0 0.0
      %1916 = vmatpush1.msra.mxu0 0.0
      %1917 = vmatprep.subr.mxu0 0.0
      %1918 = vmatpush1.msra.mxu0 0.0
      %1919 = vmatprep.subr.mxu0 0.0
      %1920 = vmatpush1.msra.mxu0 0.0
      %1921 = vmatprep.subr.mxu0 0.0
      %1922 = vmatpush1.msra.mxu0 0.0
      %1923 = vmatprep.subr.mxu0 0.0
      %1924 = vmatpush1.msra.mxu0 0.0
      %1925 = vmatprep.subr.mxu0 0.0
      %1926 = vmatpush1.msra.mxu0 0.0
      %1927 = vmatprep.subr.mxu0 0.0
      %1928 = vmatpush1.msra.mxu0 0.0
      %1929 = vmatprep.subr.mxu0 0.0
      %1930 = vmatpush1.msra.mxu0 0.0
      %1931 = vmatprep.subr.mxu0 0.0
      %1932 = vmatpush1.msra.mxu0 0.0
      %1933 = vmatprep.subr.mxu0 0.0
      %1934 = vmatpush1.msra.mxu0 0.0
      %1935 = vmatprep.subr.mxu0 0.0
      %1936 = vmatpush1.msra.mxu0 0.0
      %1937 = vmatprep.subr.mxu0 0.0
      %1938 = vmatpush1.msra.mxu0 0.0
      %1939 = vmatprep.subr.mxu0 0.0
      %1940 = vmatpush1.msra.mxu0 0.0
      %1941 = vmatprep.subr.mxu0 0.0
      %1942 = vmatpush1.msra.mxu0 0.0
      %1943 = vmatprep.subr.mxu0 0.0
      %1944 = vmatpush1.msra.mxu0 0.0
      %1945 = vmatprep.subr.mxu0 0.0
      %1946 = vmatpush1.msra.mxu0 0.0
      %1947 = vmatprep.subr.mxu0 0.0
      %1948 = vmatpush1.msra.mxu0 0.0
      %1949 = vmatprep.subr.mxu0 0.0
      %1950 = vmatpush1.msra.mxu0 0.0
      %1951 = vmatprep.subr.mxu0 0.0
      %1952 = vmatpush1.msra.mxu0 0.0
      %1953 = vmatprep.subr.mxu0 0.0
      %1954 = vmatpush1.msra.mxu0 0.0
      %1955 = vmatprep.subr.mxu0 0.0
      %1956 = vmatpush1.msra.mxu0 0.0
      %1957 = vmatprep.subr.mxu0 0.0
      %1958 = vmatpush1.msra.mxu0 0.0
      %1959 = vmatprep.subr.mxu0 0.0
      %1960 = vmatpush1.msra.mxu0 0.0
      %1961 = vmatprep.subr.mxu0 0.0
      %1962 = vmatpush1.msra.mxu0 0.0
      %1963 = vmatprep.subr.mxu0 0.0
      %1964 = vmatpush1.msra.mxu0 0.0
      %1965 = vmatprep.subr.mxu0 0.0
      %1966 = vmatpush1.msra.mxu0 0.0
      %1967 = vmatprep.subr.mxu0 0.0
      %1968 = vmatpush1.msra.mxu0 0.0
      %1969 = vmatprep.subr.mxu0 0.0
      %1970 = vmatpush1.msra.mxu0 0.0
      %1971 = vmatprep.subr.mxu0 0.0
      %1972 = vmatpush1.msra.mxu0 0.0
      %1973 = vmatprep.mubr.f32.mxu0 0.0
      %1974 = vmatmul.mubr.f32.gmra.mrb[0].mxu0 %v1907
      %v1975 = vpop.f32.mrb[0].mxu0
      %v1976 = vadd.f32 0.0, %v1975
      %v1977 = vpop.f32.mrb[0].mxu0
      %v1978 = vadd.f32 0.0, %v1977
      %1979 = vdwg.mxu0
      %v1980 = vadd.f32 %v1894, %v1976
      %v1981 = vadd.f32 %v1896, %v1978
      %1982 = vrot.lane.b32.xlu0 %v1734, 112
      %v1983 = vpop.permute.xlu0 %1982
      %1984 = vrot.lane.b32.xlu0 %v1735, 112
      %v1985 = vpop.permute.xlu0 %1984
      %v1986 = vsel %vm452, %v1983, %v1985
      %v1987 = vsel %vm452, %v1985, %v1983
      %s1988 = scalar_lea.vmem %s1, 168
      %v1989 = vld [vmem:[%s1988] sm:$0xff]
      %v1991 = vsel %vm214, %v1989, 0
      %1993 = vmatprep.subr.mxu0 %v1987
      %1994 = vmatpush1.msra.mxu0 %v1986
      %1995 = vmatprep.subr.mxu0 0.0
      %1996 = vmatpush1.msra.mxu0 0.0
      %1997 = vmatprep.subr.mxu0 0.0
      %1998 = vmatpush1.msra.mxu0 0.0
      %1999 = vmatprep.subr.mxu0 0.0
      %2000 = vmatpush1.msra.mxu0 0.0
      %2001 = vmatprep.subr.mxu0 0.0
      %2002 = vmatpush1.msra.mxu0 0.0
      %2003 = vmatprep.subr.mxu0 0.0
      %2004 = vmatpush1.msra.mxu0 0.0
      %2005 = vmatprep.subr.mxu0 0.0
      %2006 = vmatpush1.msra.mxu0 0.0
      %2007 = vmatprep.subr.mxu0 0.0
      %2008 = vmatpush1.msra.mxu0 0.0
      %2009 = vmatprep.subr.mxu0 0.0
      %2010 = vmatpush1.msra.mxu0 0.0
      %2011 = vmatprep.subr.mxu0 0.0
      %2012 = vmatpush1.msra.mxu0 0.0
      %2013 = vmatprep.subr.mxu0 0.0
      %2014 = vmatpush1.msra.mxu0 0.0
      %2015 = vmatprep.subr.mxu0 0.0
      %2016 = vmatpush1.msra.mxu0 0.0
      %2017 = vmatprep.subr.mxu0 0.0
      %2018 = vmatpush1.msra.mxu0 0.0
      %2019 = vmatprep.subr.mxu0 0.0
      %2020 = vmatpush1.msra.mxu0 0.0
      %2021 = vmatprep.subr.mxu0 0.0
      %2022 = vmatpush1.msra.mxu0 0.0
      %2023 = vmatprep.subr.mxu0 0.0
      %2024 = vmatpush1.msra.mxu0 0.0
      %2025 = vmatprep.subr.mxu0 0.0
      %2026 = vmatpush1.msra.mxu0 0.0
      %2027 = vmatprep.subr.mxu0 0.0
      %2028 = vmatpush1.msra.mxu0 0.0
      %2029 = vmatprep.subr.mxu0 0.0
      %2030 = vmatpush1.msra.mxu0 0.0
      %2031 = vmatprep.subr.mxu0 0.0
      %2032 = vmatpush1.msra.mxu0 0.0
      %2033 = vmatprep.subr.mxu0 0.0
      %2034 = vmatpush1.msra.mxu0 0.0
      %2035 = vmatprep.subr.mxu0 0.0
      %2036 = vmatpush1.msra.mxu0 0.0
      %2037 = vmatprep.subr.mxu0 0.0
      %2038 = vmatpush1.msra.mxu0 0.0
      %2039 = vmatprep.subr.mxu0 0.0
      %2040 = vmatpush1.msra.mxu0 0.0
      %2041 = vmatprep.subr.mxu0 0.0
      %2042 = vmatpush1.msra.mxu0 0.0
      %2043 = vmatprep.subr.mxu0 0.0
      %2044 = vmatpush1.msra.mxu0 0.0
      %2045 = vmatprep.subr.mxu0 0.0
      %2046 = vmatpush1.msra.mxu0 0.0
      %2047 = vmatprep.subr.mxu0 0.0
      %2048 = vmatpush1.msra.mxu0 0.0
      %2049 = vmatprep.subr.mxu0 0.0
      %2050 = vmatpush1.msra.mxu0 0.0
      %2051 = vmatprep.subr.mxu0 0.0
      %2052 = vmatpush1.msra.mxu0 0.0
      %2053 = vmatprep.subr.mxu0 0.0
      %2054 = vmatpush1.msra.mxu0 0.0
      %2055 = vmatprep.subr.mxu0 0.0
      %2056 = vmatpush1.msra.mxu0 0.0
      %2057 = vmatprep.mubr.f32.mxu0 0.0
      %2058 = vmatmul.mubr.f32.gmra.mrb[0].mxu0 %v1991
      %v2059 = vpop.f32.mrb[0].mxu0
      %v2060 = vadd.f32 0.0, %v2059
      %v2061 = vpop.f32.mrb[0].mxu0
      %v2062 = vadd.f32 0.0, %v2061
      %2063 = vdwg.mxu0
      %v2064 = vadd.f32 %v1980, %v2060
      %v2065 = vadd.f32 %v1981, %v2062
      %2066 = vrot.lane.b32.xlu0 %v1734, 111
      %v2067 = vpop.permute.xlu0 %2066
      %2068 = vrot.lane.b32.xlu0 %v1735, 111
      %v2069 = vpop.permute.xlu0 %2068
      %v2070 = vsel %vm537, %v2067, %v2069
      %v2071 = vsel %vm537, %v2069, %v2067
      %s2072 = scalar_lea.vmem %s1, 176
      %v2073 = vld [vmem:[%s2072] sm:$0xff]
      %v2075 = vsel %vm214, %v2073, 0
      %2077 = vmatprep.subr.mxu0 %v2071
      %2078 = vmatpush1.msra.mxu0 %v2070
      %2079 = vmatprep.subr.mxu0 0.0
      %2080 = vmatpush1.msra.mxu0 0.0
      %2081 = vmatprep.subr.mxu0 0.0
      %2082 = vmatpush1.msra.mxu0 0.0
      %2083 = vmatprep.subr.mxu0 0.0
      %2084 = vmatpush1.msra.mxu0 0.0
      %2085 = vmatprep.subr.mxu0 0.0
      %2086 = vmatpush1.msra.mxu0 0.0
      %2087 = vmatprep.subr.mxu0 0.0
      %2088 = vmatpush1.msra.mxu0 0.0
      %2089 = vmatprep.subr.mxu0 0.0
      %2090 = vmatpush1.msra.mxu0 0.0
      %2091 = vmatprep.subr.mxu0 0.0
      %2092 = vmatpush1.msra.mxu0 0.0
      %2093 = vmatprep.subr.mxu0 0.0
      %2094 = vmatpush1.msra.mxu0 0.0
      %2095 = vmatprep.subr.mxu0 0.0
      %2096 = vmatpush1.msra.mxu0 0.0
      %2097 = vmatprep.subr.mxu0 0.0
      %2098 = vmatpush1.msra.mxu0 0.0
      %2099 = vmatprep.subr.mxu0 0.0
      %2100 = vmatpush1.msra.mxu0 0.0
      %2101 = vmatprep.subr.mxu0 0.0
      %2102 = vmatpush1.msra.mxu0 0.0
      %2103 = vmatprep.subr.mxu0 0.0
      %2104 = vmatpush1.msra.mxu0 0.0
      %2105 = vmatprep.subr.mxu0 0.0
      %2106 = vmatpush1.msra.mxu0 0.0
      %2107 = vmatprep.subr.mxu0 0.0
      %2108 = vmatpush1.msra.mxu0 0.0
      %2109 = vmatprep.subr.mxu0 0.0
      %2110 = vmatpush1.msra.mxu0 0.0
      %2111 = vmatprep.subr.mxu0 0.0
      %2112 = vmatpush1.msra.mxu0 0.0
      %2113 = vmatprep.subr.mxu0 0.0
      %2114 = vmatpush1.msra.mxu0 0.0
      %2115 = vmatprep.subr.mxu0 0.0
      %2116 = vmatpush1.msra.mxu0 0.0
      %2117 = vmatprep.subr.mxu0 0.0
      %2118 = vmatpush1.msra.mxu0 0.0
      %2119 = vmatprep.subr.mxu0 0.0
      %2120 = vmatpush1.msra.mxu0 0.0
      %2121 = vmatprep.subr.mxu0 0.0
      %2122 = vmatpush1.msra.mxu0 0.0
      %2123 = vmatprep.subr.mxu0 0.0
      %2124 = vmatpush1.msra.mxu0 0.0
      %2125 = vmatprep.subr.mxu0 0.0
      %2126 = vmatpush1.msra.mxu0 0.0
      %2127 = vmatprep.subr.mxu0 0.0
      %2128 = vmatpush1.msra.mxu0 0.0
      %2129 = vmatprep.subr.mxu0 0.0
      %2130 = vmatpush1.msra.mxu0 0.0
      %2131 = vmatprep.subr.mxu0 0.0
      %2132 = vmatpush1.msra.mxu0 0.0
      %2133 = vmatprep.subr.mxu0 0.0
      %2134 = vmatpush1.msra.mxu0 0.0
      %2135 = vmatprep.subr.mxu0 0.0
      %2136 = vmatpush1.msra.mxu0 0.0
      %2137 = vmatprep.subr.mxu0 0.0
      %2138 = vmatpush1.msra.mxu0 0.0
      %2139 = vmatprep.subr.mxu0 0.0
      %2140 = vmatpush1.msra.mxu0 0.0
      %2141 = vmatprep.mubr.f32.mxu0 0.0
      %2142 = vmatmul.mubr.f32.gmra.mrb[0].mxu0 %v2075
      %v2143 = vpop.f32.mrb[0].mxu0
      %v2144 = vadd.f32 0.0, %v2143
      %v2145 = vpop.f32.mrb[0].mxu0
      %v2146 = vadd.f32 0.0, %v2145
      %2147 = vdwg.mxu0
      %v2148 = vadd.f32 %v2064, %v2144
      %v2149 = vadd.f32 %v2065, %v2146
      %2150 = vrot.lane.b32.xlu0 %v1734, 110
      %v2151 = vpop.permute.xlu0 %2150
      %2152 = vrot.lane.b32.xlu0 %v1735, 110
      %v2153 = vpop.permute.xlu0 %2152
      %v2154 = vsel %vm622, %v2151, %v2153
      %v2155 = vsel %vm622, %v2153, %v2151
      %s2156 = scalar_lea.vmem %s1, 184
      %v2157 = vld [vmem:[%s2156] sm:$0xff]
      %v2159 = vsel %vm214, %v2157, 0
      %2161 = vmatprep.subr.mxu0 %v2155
      %2162 = vmatpush1.msra.mxu0 %v2154
      %2163 = vmatprep.subr.mxu0 0.0
      %2164 = vmatpush1.msra.mxu0 0.0
      %2165 = vmatprep.subr.mxu0 0.0
      %2166 = vmatpush1.msra.mxu0 0.0
      %2167 = vmatprep.subr.mxu0 0.0
      %2168 = vmatpush1.msra.mxu0 0.0
      %2169 = vmatprep.subr.mxu0 0.0
      %2170 = vmatpush1.msra.mxu0 0.0
      %2171 = vmatprep.subr.mxu0 0.0
      %2172 = vmatpush1.msra.mxu0 0.0
      %2173 = vmatprep.subr.mxu0 0.0
      %2174 = vmatpush1.msra.mxu0 0.0
      %2175 = vmatprep.subr.mxu0 0.0
      %2176 = vmatpush1.msra.mxu0 0.0
      %2177 = vmatprep.subr.mxu0 0.0
      %2178 = vmatpush1.msra.mxu0 0.0
      %2179 = vmatprep.subr.mxu0 0.0
      %2180 = vmatpush1.msra.mxu0 0.0
      %2181 = vmatprep.subr.mxu0 0.0
      %2182 = vmatpush1.msra.mxu0 0.0
      %2183 = vmatprep.subr.mxu0 0.0
      %2184 = vmatpush1.msra.mxu0 0.0
      %2185 = vmatprep.subr.mxu0 0.0
      %2186 = vmatpush1.msra.mxu0 0.0
      %2187 = vmatprep.subr.mxu0 0.0
      %2188 = vmatpush1.msra.mxu0 0.0
      %2189 = vmatprep.subr.mxu0 0.0
      %2190 = vmatpush1.msra.mxu0 0.0
      %2191 = vmatprep.subr.mxu0 0.0
      %2192 = vmatpush1.msra.mxu0 0.0
      %2193 = vmatprep.subr.mxu0 0.0
      %2194 = vmatpush1.msra.mxu0 0.0
      %2195 = vmatprep.subr.mxu0 0.0
      %2196 = vmatpush1.msra.mxu0 0.0
      %2197 = vmatprep.subr.mxu0 0.0
      %2198 = vmatpush1.msra.mxu0 0.0
      %2199 = vmatprep.subr.mxu0 0.0
      %2200 = vmatpush1.msra.mxu0 0.0
      %2201 = vmatprep.subr.mxu0 0.0
      %2202 = vmatpush1.msra.mxu0 0.0
      %2203 = vmatprep.subr.mxu0 0.0
      %2204 = vmatpush1.msra.mxu0 0.0
      %2205 = vmatprep.subr.mxu0 0.0
      %2206 = vmatpush1.msra.mxu0 0.0
      %2207 = vmatprep.subr.mxu0 0.0
      %2208 = vmatpush1.msra.mxu0 0.0
      %2209 = vmatprep.subr.mxu0 0.0
      %2210 = vmatpush1.msra.mxu0 0.0
      %2211 = vmatprep.subr.mxu0 0.0
      %2212 = vmatpush1.msra.mxu0 0.0
      %2213 = vmatprep.subr.mxu0 0.0
      %2214 = vmatpush1.msra.mxu0 0.0
      %2215 = vmatprep.subr.mxu0 0.0
      %2216 = vmatpush1.msra.mxu0 0.0
      %2217 = vmatprep.subr.mxu0 0.0
      %2218 = vmatpush1.msra.mxu0 0.0
      %2219 = vmatprep.subr.mxu0 0.0
      %2220 = vmatpush1.msra.mxu0 0.0
      %2221 = vmatprep.subr.mxu0 0.0
      %2222 = vmatpush1.msra.mxu0 0.0
      %2223 = vmatprep.subr.mxu0 0.0
      %2224 = vmatpush1.msra.mxu0 0.0
      %2225 = vmatprep.mubr.f32.mxu0 0.0
      %2226 = vmatmul.mubr.f32.gmra.mrb[0].mxu0 %v2159
      %v2227 = vpop.f32.mrb[0].mxu0
      %v2228 = vadd.f32 0.0, %v2227
      %v2229 = vpop.f32.mrb[0].mxu0
      %v2230 = vadd.f32 0.0, %v2229
      %2231 = vdwg.mxu0
      %v2232 = vadd.f32 %v2148, %v2228
      %v2233 = vadd.f32 %v2149, %v2230
      %2234 = vrot.lane.b32.xlu0 %v1734, 96
      %v2235 = vpop.permute.xlu0 %2234
      %2236 = vrot.lane.b32.xlu0 %v1735, 96
      %v2237 = vpop.permute.xlu0 %2236
      %v2238 = vsel %vm707, %v2235, %v2237
      %v2239 = vsel %vm707, %v2237, %v2235
      %s2240 = scalar_lea.vmem %s1, 192
      %v2241 = vld [vmem:[%s2240] sm:$0xff]
      %v2243 = vsel %vm214, %v2241, 0
      %2245 = vmatprep.subr.mxu0 %v2239
      %2246 = vmatpush1.msra.mxu0 %v2238
      %2247 = vmatprep.subr.mxu0 0.0
      %2248 = vmatpush1.msra.mxu0 0.0
      %2249 = vmatprep.subr.mxu0 0.0
      %2250 = vmatpush1.msra.mxu0 0.0
      %2251 = vmatprep.subr.mxu0 0.0
      %2252 = vmatpush1.msra.mxu0 0.0
      %2253 = vmatprep.subr.mxu0 0.0
      %2254 = vmatpush1.msra.mxu0 0.0
      %2255 = vmatprep.subr.mxu0 0.0
      %2256 = vmatpush1.msra.mxu0 0.0
      %2257 = vmatprep.subr.mxu0 0.0
      %2258 = vmatpush1.msra.mxu0 0.0
      %2259 = vmatprep.subr.mxu0 0.0
      %2260 = vmatpush1.msra.mxu0 0.0
      %2261 = vmatprep.subr.mxu0 0.0
      %2262 = vmatpush1.msra.mxu0 0.0
      %2263 = vmatprep.subr.mxu0 0.0
      %2264 = vmatpush1.msra.mxu0 0.0
      %2265 = vmatprep.subr.mxu0 0.0
      %2266 = vmatpush1.msra.mxu0 0.0
      %2267 = vmatprep.subr.mxu0 0.0
      %2268 = vmatpush1.msra.mxu0 0.0
      %2269 = vmatprep.subr.mxu0 0.0
      %2270 = vmatpush1.msra.mxu0 0.0
      %2271 = vmatprep.subr.mxu0 0.0
      %2272 = vmatpush1.msra.mxu0 0.0
      %2273 = vmatprep.subr.mxu0 0.0
      %2274 = vmatpush1.msra.mxu0 0.0
      %2275 = vmatprep.subr.mxu0 0.0
      %2276 = vmatpush1.msra.mxu0 0.0
      %2277 = vmatprep.subr.mxu0 0.0
      %2278 = vmatpush1.msra.mxu0 0.0
      %2279 = vmatprep.subr.mxu0 0.0
      %2280 = vmatpush1.msra.mxu0 0.0
      %2281 = vmatprep.subr.mxu0 0.0
      %2282 = vmatpush1.msra.mxu0 0.0
      %2283 = vmatprep.subr.mxu0 0.0
      %2284 = vmatpush1.msra.mxu0 0.0
      %2285 = vmatprep.subr.mxu0 0.0
      %2286 = vmatpush1.msra.mxu0 0.0
      %2287 = vmatprep.subr.mxu0 0.0
      %2288 = vmatpush1.msra.mxu0 0.0
      %2289 = vmatprep.subr.mxu0 0.0
      %2290 = vmatpush1.msra.mxu0 0.0
      %2291 = vmatprep.subr.mxu0 0.0
      %2292 = vmatpush1.msra.mxu0 0.0
      %2293 = vmatprep.subr.mxu0 0.0
      %2294 = vmatpush1.msra.mxu0 0.0
      %2295 = vmatprep.subr.mxu0 0.0
      %2296 = vmatpush1.msra.mxu0 0.0
      %2297 = vmatprep.subr.mxu0 0.0
      %2298 = vmatpush1.msra.mxu0 0.0
      %2299 = vmatprep.subr.mxu0 0.0
      %2300 = vmatpush1.msra.mxu0 0.0
      %2301 = vmatprep.subr.mxu0 0.0
      %2302 = vmatpush1.msra.mxu0 0.0
      %2303 = vmatprep.subr.mxu0 0.0
      %2304 = vmatpush1.msra.mxu0 0.0
      %2305 = vmatprep.subr.mxu0 0.0
      %2306 = vmatpush1.msra.mxu0 0.0
      %2307 = vmatprep.subr.mxu0 0.0
      %2308 = vmatpush1.msra.mxu0 0.0
      %2309 = vmatprep.mubr.f32.mxu0 0.0
      %2310 = vmatmul.mubr.f32.gmra.mrb[0].mxu0 %v2243
      %v2311 = vpop.f32.mrb[0].mxu0
      %v2312 = vadd.f32 0.0, %v2311
      %v2313 = vpop.f32.mrb[0].mxu0
      %v2314 = vadd.f32 0.0, %v2313
      %2315 = vdwg.mxu0
      %v2316 = vadd.f32 %v2232, %v2312
      %v2317 = vadd.f32 %v2233, %v2314
      %2318 = vrot.lane.b32.xlu0 %v1734, 95
      %v2319 = vpop.permute.xlu0 %2318
      %2320 = vrot.lane.b32.xlu0 %v1735, 95
      %v2321 = vpop.permute.xlu0 %2320
      %v2322 = vsel %vm792, %v2319, %v2321
      %v2323 = vsel %vm792, %v2321, %v2319
      %s2324 = scalar_lea.vmem %s1, 200
      %v2325 = vld [vmem:[%s2324] sm:$0xff]
      %v2327 = vsel %vm214, %v2325, 0
      %2329 = vmatprep.subr.mxu0 %v2323
      %2330 = vmatpush1.msra.mxu0 %v2322
      %2331 = vmatprep.subr.mxu0 0.0
      %2332 = vmatpush1.msra.mxu0 0.0
      %2333 = vmatprep.subr.mxu0 0.0
      %2334 = vmatpush1.msra.mxu0 0.0
      %2335 = vmatprep.subr.mxu0 0.0
      %2336 = vmatpush1.msra.mxu0 0.0
      %2337 = vmatprep.subr.mxu0 0.0
      %2338 = vmatpush1.msra.mxu0 0.0
      %2339 = vmatprep.subr.mxu0 0.0
      %2340 = vmatpush1.msra.mxu0 0.0
      %2341 = vmatprep.subr.mxu0 0.0
      %2342 = vmatpush1.msra.mxu0 0.0
      %2343 = vmatprep.subr.mxu0 0.0
      %2344 = vmatpush1.msra.mxu0 0.0
      %2345 = vmatprep.subr.mxu0 0.0
      %2346 = vmatpush1.msra.mxu0 0.0
      %2347 = vmatprep.subr.mxu0 0.0
      %2348 = vmatpush1.msra.mxu0 0.0
      %2349 = vmatprep.subr.mxu0 0.0
      %2350 = vmatpush1.msra.mxu0 0.0
      %2351 = vmatprep.subr.mxu0 0.0
      %2352 = vmatpush1.msra.mxu0 0.0
      %2353 = vmatprep.subr.mxu0 0.0
      %2354 = vmatpush1.msra.mxu0 0.0
      %2355 = vmatprep.subr.mxu0 0.0
      %2356 = vmatpush1.msra.mxu0 0.0
      %2357 = vmatprep.subr.mxu0 0.0
      %2358 = vmatpush1.msra.mxu0 0.0
      %2359 = vmatprep.subr.mxu0 0.0
      %2360 = vmatpush1.msra.mxu0 0.0
      %2361 = vmatprep.subr.mxu0 0.0
      %2362 = vmatpush1.msra.mxu0 0.0
      %2363 = vmatprep.subr.mxu0 0.0
      %2364 = vmatpush1.msra.mxu0 0.0
      %2365 = vmatprep.subr.mxu0 0.0
      %2366 = vmatpush1.msra.mxu0 0.0
      %2367 = vmatprep.subr.mxu0 0.0
      %2368 = vmatpush1.msra.mxu0 0.0
      %2369 = vmatprep.subr.mxu0 0.0
      %2370 = vmatpush1.msra.mxu0 0.0
      %2371 = vmatprep.subr.mxu0 0.0
      %2372 = vmatpush1.msra.mxu0 0.0
      %2373 = vmatprep.subr.mxu0 0.0
      %2374 = vmatpush1.msra.mxu0 0.0
      %2375 = vmatprep.subr.mxu0 0.0
      %2376 = vmatpush1.msra.mxu0 0.0
      %2377 = vmatprep.subr.mxu0 0.0
      %2378 = vmatpush1.msra.mxu0 0.0
      %2379 = vmatprep.subr.mxu0 0.0
      %2380 = vmatpush1.msra.mxu0 0.0
      %2381 = vmatprep.subr.mxu0 0.0
      %2382 = vmatpush1.msra.mxu0 0.0
      %2383 = vmatprep.subr.mxu0 0.0
      %2384 = vmatpush1.msra.mxu0 0.0
      %2385 = vmatprep.subr.mxu0 0.0
      %2386 = vmatpush1.msra.mxu0 0.0
      %2387 = vmatprep.subr.mxu0 0.0
      %2388 = vmatpush1.msra.mxu0 0.0
      %2389 = vmatprep.subr.mxu0 0.0
      %2390 = vmatpush1.msra.mxu0 0.0
      %2391 = vmatprep.subr.mxu0 0.0
      %2392 = vmatpush1.msra.mxu0 0.0
      %2393 = vmatprep.mubr.f32.mxu0 0.0
      %2394 = vmatmul.mubr.f32.gmra.mrb[0].mxu0 %v2327
      %v2395 = vpop.f32.mrb[0].mxu0
      %v2396 = vadd.f32 0.0, %v2395
      %v2397 = vpop.f32.mrb[0].mxu0
      %v2398 = vadd.f32 0.0, %v2397
      %2399 = vdwg.mxu0
      %v2400 = vadd.f32 %v2316, %v2396
      %v2401 = vadd.f32 %v2317, %v2398
      %2402 = vrot.lane.b32.xlu0 %v1734, 94
      %v2403 = vpop.permute.xlu0 %2402
      %2404 = vrot.lane.b32.xlu0 %v1735, 94
      %v2405 = vpop.permute.xlu0 %2404
      %v2406 = vsel %vm877, %v2403, %v2405
      %v2407 = vsel %vm877, %v2405, %v2403
      %s2408 = scalar_lea.vmem %s1, 208
      %v2409 = vld [vmem:[%s2408] sm:$0xff]
      %v2411 = vsel %vm214, %v2409, 0
      %2413 = vmatprep.subr.mxu0 %v2407
      %2414 = vmatpush1.msra.mxu0 %v2406
      %2415 = vmatprep.subr.mxu0 0.0
      %2416 = vmatpush1.msra.mxu0 0.0
      %2417 = vmatprep.subr.mxu0 0.0
      %2418 = vmatpush1.msra.mxu0 0.0
      %2419 = vmatprep.subr.mxu0 0.0
      %2420 = vmatpush1.msra.mxu0 0.0
      %2421 = vmatprep.subr.mxu0 0.0
      %2422 = vmatpush1.msra.mxu0 0.0
      %2423 = vmatprep.subr.mxu0 0.0
      %2424 = vmatpush1.msra.mxu0 0.0
      %2425 = vmatprep.subr.mxu0 0.0
      %2426 = vmatpush1.msra.mxu0 0.0
      %2427 = vmatprep.subr.mxu0 0.0
      %2428 = vmatpush1.msra.mxu0 0.0
      %2429 = vmatprep.subr.mxu0 0.0
      %2430 = vmatpush1.msra.mxu0 0.0
      %2431 = vmatprep.subr.mxu0 0.0
      %2432 = vmatpush1.msra.mxu0 0.0
      %2433 = vmatprep.subr.mxu0 0.0
      %2434 = vmatpush1.msra.mxu0 0.0
      %2435 = vmatprep.subr.mxu0 0.0
      %2436 = vmatpush1.msra.mxu0 0.0
      %2437 = vmatprep.subr.mxu0 0.0
      %2438 = vmatpush1.msra.mxu0 0.0
      %2439 = vmatprep.subr.mxu0 0.0
      %2440 = vmatpush1.msra.mxu0 0.0
      %2441 = vmatprep.subr.mxu0 0.0
      %2442 = vmatpush1.msra.mxu0 0.0
      %2443 = vmatprep.subr.mxu0 0.0
      %2444 = vmatpush1.msra.mxu0 0.0
      %2445 = vmatprep.subr.mxu0 0.0
      %2446 = vmatpush1.msra.mxu0 0.0
      %2447 = vmatprep.subr.mxu0 0.0
      %2448 = vmatpush1.msra.mxu0 0.0
      %2449 = vmatprep.subr.mxu0 0.0
      %2450 = vmatpush1.msra.mxu0 0.0
      %2451 = vmatprep.subr.mxu0 0.0
      %2452 = vmatpush1.msra.mxu0 0.0
      %2453 = vmatprep.subr.mxu0 0.0
      %2454 = vmatpush1.msra.mxu0 0.0
      %2455 = vmatprep.subr.mxu0 0.0
      %2456 = vmatpush1.msra.mxu0 0.0
      %2457 = vmatprep.subr.mxu0 0.0
      %2458 = vmatpush1.msra.mxu0 0.0
      %2459 = vmatprep.subr.mxu0 0.0
      %2460 = vmatpush1.msra.mxu0 0.0
      %2461 = vmatprep.subr.mxu0 0.0
      %2462 = vmatpush1.msra.mxu0 0.0
      %2463 = vmatprep.subr.mxu0 0.0
      %2464 = vmatpush1.msra.mxu0 0.0
      %2465 = vmatprep.subr.mxu0 0.0
      %2466 = vmatpush1.msra.mxu0 0.0
      %2467 = vmatprep.subr.mxu0 0.0
      %2468 = vmatpush1.msra.mxu0 0.0
      %2469 = vmatprep.subr.mxu0 0.0
      %2470 = vmatpush1.msra.mxu0 0.0
      %2471 = vmatprep.subr.mxu0 0.0
      %2472 = vmatpush1.msra.mxu0 0.0
      %2473 = vmatprep.subr.mxu0 0.0
      %2474 = vmatpush1.msra.mxu0 0.0
      %2475 = vmatprep.subr.mxu0 0.0
      %2476 = vmatpush1.msra.mxu0 0.0
      %2477 = vmatprep.mubr.f32.mxu0 0.0
      %2478 = vmatmul.mubr.f32.gmra.mrb[0].mxu0 %v2411
      %v2479 = vpop.f32.mrb[0].mxu0
      %v2480 = vadd.f32 0.0, %v2479
      %v2481 = vpop.f32.mrb[0].mxu0
      %v2482 = vadd.f32 0.0, %v2481
      %2483 = vdwg.mxu0
      %v2484 = vadd.f32 %v2400, %v2480
      %v2485 = vadd.f32 %v2401, %v2482
      %2487 = vset.pattern.permute.xlu0 0
      %2488 = vperm.xlu0 %2487, %v1737
      %v2489 = vpop.permute.xlu0 %2488
      %v2491 = vmul.f32 %v2484, %v2489
      %v2492 = vmul.f32 %v2485, %v2489
      %2494 = vset.pattern.permute.xlu0 0
      %2495 = vperm.xlu0 %2494, %v1739
      %v2496 = vpop.permute.xlu0 %2495
      %v2498 = vadd.f32 %v2491, %v2496
      %v2499 = vadd.f32 %v2492, %v2496
      %s2500 = scalar_lea.vmem %s2, 24
      %v2501 = vld [vmem:[%s2500] sm:$0xff]
      %s2502 = scalar_lea.vmem %s3, 24
      %v2503 = vld [vmem:[%s2502] sm:$0xff]
      %s2504 = scalar_lea.vmem %s1, 216
      %v2505 = vld [vmem:[%s2504] sm:$0xff]
      %2506 = vrot.lane.b32.xlu0 %v2498, 127
      %v2507 = vpop.permute.xlu0 %2506
      %2508 = vrot.lane.b32.xlu0 %v2499, 127
      %v2509 = vpop.permute.xlu0 %2508
      %v2510 = vsel %vm209, %v2507, %v2509
      %v2511 = vsel %vm209, %v2509, %v2507
      %s2512 = scalar_lea.vmem %s1, 224
      %v2513 = vld [vmem:[%s2512] sm:$0xff]
      %v2515 = vsel %vm214, %v2513, 0
      %2517 = vmatprep.subr.mxu0 %v2511
      %2518 = vmatpush1.msra.mxu0 %v2510
      %2519 = vmatprep.subr.mxu0 0.0
      %2520 = vmatpush1.msra.mxu0 0.0
      %2521 = vmatprep.subr.mxu0 0.0
      %2522 = vmatpush1.msra.mxu0 0.0
      %2523 = vmatprep.subr.mxu0 0.0
      %2524 = vmatpush1.msra.mxu0 0.0
      %2525 = vmatprep.subr.mxu0 0.0
      %2526 = vmatpush1.msra.mxu0 0.0
      %2527 = vmatprep.subr.mxu0 0.0
      %2528 = vmatpush1.msra.mxu0 0.0
      %2529 = vmatprep.subr.mxu0 0.0
      %2530 = vmatpush1.msra.mxu0 0.0
      %2531 = vmatprep.subr.mxu0 0.0
      %2532 = vmatpush1.msra.mxu0 0.0
      %2533 = vmatprep.subr.mxu0 0.0
      %2534 = vmatpush1.msra.mxu0 0.0
      %2535 = vmatprep.subr.mxu0 0.0
      %2536 = vmatpush1.msra.mxu0 0.0
      %2537 = vmatprep.subr.mxu0 0.0
      %2538 = vmatpush1.msra.mxu0 0.0
      %2539 = vmatprep.subr.mxu0 0.0
      %2540 = vmatpush1.msra.mxu0 0.0
      %2541 = vmatprep.subr.mxu0 0.0
      %2542 = vmatpush1.msra.mxu0 0.0
      %2543 = vmatprep.subr.mxu0 0.0
      %2544 = vmatpush1.msra.mxu0 0.0
      %2545 = vmatprep.subr.mxu0 0.0
      %2546 = vmatpush1.msra.mxu0 0.0
      %2547 = vmatprep.subr.mxu0 0.0
      %2548 = vmatpush1.msra.mxu0 0.0
      %2549 = vmatprep.subr.mxu0 0.0
      %2550 = vmatpush1.msra.mxu0 0.0
      %2551 = vmatprep.subr.mxu0 0.0
      %2552 = vmatpush1.msra.mxu0 0.0
      %2553 = vmatprep.subr.mxu0 0.0
      %2554 = vmatpush1.msra.mxu0 0.0
      %2555 = vmatprep.subr.mxu0 0.0
      %2556 = vmatpush1.msra.mxu0 0.0
      %2557 = vmatprep.subr.mxu0 0.0
      %2558 = vmatpush1.msra.mxu0 0.0
      %2559 = vmatprep.subr.mxu0 0.0
      %2560 = vmatpush1.msra.mxu0 0.0
      %2561 = vmatprep.subr.mxu0 0.0
      %2562 = vmatpush1.msra.mxu0 0.0
      %2563 = vmatprep.subr.mxu0 0.0
      %2564 = vmatpush1.msra.mxu0 0.0
      %2565 = vmatprep.subr.mxu0 0.0
      %2566 = vmatpush1.msra.mxu0 0.0
      %2567 = vmatprep.subr.mxu0 0.0
      %2568 = vmatpush1.msra.mxu0 0.0
      %2569 = vmatprep.subr.mxu0 0.0
      %2570 = vmatpush1.msra.mxu0 0.0
      %2571 = vmatprep.subr.mxu0 0.0
      %2572 = vmatpush1.msra.mxu0 0.0
      %2573 = vmatprep.subr.mxu0 0.0
      %2574 = vmatpush1.msra.mxu0 0.0
      %2575 = vmatprep.subr.mxu0 0.0
      %2576 = vmatpush1.msra.mxu0 0.0
      %2577 = vmatprep.subr.mxu0 0.0
      %2578 = vmatpush1.msra.mxu0 0.0
      %2579 = vmatprep.subr.mxu0 0.0
      %2580 = vmatpush1.msra.mxu0 0.0
      %2581 = vmatprep.mubr.f32.mxu0 0.0
      %2582 = vmatmul.mubr.f32.gmra.mrb[0].mxu0 %v2515
      %v2583 = vpop.f32.mrb[0].mxu0
      %v2584 = vadd.f32 0.0, %v2583
      %v2585 = vpop.f32.mrb[0].mxu0
      %v2586 = vadd.f32 0.0, %v2585
      %2587 = vdwg.mxu0
      %v2589 = vsel %vm214, %v2505, 0
      %2591 = vmatprep.subr.mxu0 %v2499
      %2592 = vmatpush1.msra.mxu0 %v2498
      %2593 = vmatprep.subr.mxu0 0.0
      %2594 = vmatpush1.msra.mxu0 0.0
      %2595 = vmatprep.subr.mxu0 0.0
      %2596 = vmatpush1.msra.mxu0 0.0
      %2597 = vmatprep.subr.mxu0 0.0
      %2598 = vmatpush1.msra.mxu0 0.0
      %2599 = vmatprep.subr.mxu0 0.0
      %2600 = vmatpush1.msra.mxu0 0.0
      %2601 = vmatprep.subr.mxu0 0.0
      %2602 = vmatpush1.msra.mxu0 0.0
      %2603 = vmatprep.subr.mxu0 0.0
      %2604 = vmatpush1.msra.mxu0 0.0
      %2605 = vmatprep.subr.mxu0 0.0
      %2606 = vmatpush1.msra.mxu0 0.0
      %2607 = vmatprep.subr.mxu0 0.0
      %2608 = vmatpush1.msra.mxu0 0.0
      %2609 = vmatprep.subr.mxu0 0.0
      %2610 = vmatpush1.msra.mxu0 0.0
      %2611 = vmatprep.subr.mxu0 0.0
      %2612 = vmatpush1.msra.mxu0 0.0
      %2613 = vmatprep.subr.mxu0 0.0
      %2614 = vmatpush1.msra.mxu0 0.0
      %2615 = vmatprep.subr.mxu0 0.0
      %2616 = vmatpush1.msra.mxu0 0.0
      %2617 = vmatprep.subr.mxu0 0.0
      %2618 = vmatpush1.msra.mxu0 0.0
      %2619 = vmatprep.subr.mxu0 0.0
      %2620 = vmatpush1.msra.mxu0 0.0
      %2621 = vmatprep.subr.mxu0 0.0
      %2622 = vmatpush1.msra.mxu0 0.0
      %2623 = vmatprep.subr.mxu0 0.0
      %2624 = vmatpush1.msra.mxu0 0.0
      %2625 = vmatprep.subr.mxu0 0.0
      %2626 = vmatpush1.msra.mxu0 0.0
      %2627 = vmatprep.subr.mxu0 0.0
      %2628 = vmatpush1.msra.mxu0 0.0
      %2629 = vmatprep.subr.mxu0 0.0
      %2630 = vmatpush1.msra.mxu0 0.0
      %2631 = vmatprep.subr.mxu0 0.0
      %2632 = vmatpush1.msra.mxu0 0.0
      %2633 = vmatprep.subr.mxu0 0.0
      %2634 = vmatpush1.msra.mxu0 0.0
      %2635 = vmatprep.subr.mxu0 0.0
      %2636 = vmatpush1.msra.mxu0 0.0
      %2637 = vmatprep.subr.mxu0 0.0
      %2638 = vmatpush1.msra.mxu0 0.0
      %2639 = vmatprep.subr.mxu0 0.0
      %2640 = vmatpush1.msra.mxu0 0.0
      %2641 = vmatprep.subr.mxu0 0.0
      %2642 = vmatpush1.msra.mxu0 0.0
      %2643 = vmatprep.subr.mxu0 0.0
      %2644 = vmatpush1.msra.mxu0 0.0
      %2645 = vmatprep.subr.mxu0 0.0
      %2646 = vmatpush1.msra.mxu0 0.0
      %2647 = vmatprep.subr.mxu0 0.0
      %2648 = vmatpush1.msra.mxu0 0.0
      %2649 = vmatprep.subr.mxu0 0.0
      %2650 = vmatpush1.msra.mxu0 0.0
      %2651 = vmatprep.subr.mxu0 0.0
      %2652 = vmatpush1.msra.mxu0 0.0
      %2653 = vmatprep.subr.mxu0 0.0
      %2654 = vmatpush1.msra.mxu0 0.0
      %2655 = vmatprep.mubr.f32.mxu0 0.0
      %2656 = vmatmul.mubr.f32.gmra.mrb[0].mxu0 %v2589
      %v2657 = vpop.f32.mrb[0].mxu0
      %v2658 = vadd.f32 %v2584, %v2657
      %v2659 = vpop.f32.mrb[0].mxu0
      %v2660 = vadd.f32 %v2586, %v2659
      %2661 = vdwg.mxu0
      %2662 = vrot.lane.b32.xlu0 %v2498, 126
      %v2663 = vpop.permute.xlu0 %2662
      %2664 = vrot.lane.b32.xlu0 %v2499, 126
      %v2665 = vpop.permute.xlu0 %2664
      %v2666 = vsel %vm367, %v2663, %v2665
      %v2667 = vsel %vm367, %v2665, %v2663
      %s2668 = scalar_lea.vmem %s1, 232
      %v2669 = vld [vmem:[%s2668] sm:$0xff]
      %v2671 = vsel %vm214, %v2669, 0
      %2673 = vmatprep.subr.mxu0 %v2667
      %2674 = vmatpush1.msra.mxu0 %v2666
      %2675 = vmatprep.subr.mxu0 0.0
      %2676 = vmatpush1.msra.mxu0 0.0
      %2677 = vmatprep.subr.mxu0 0.0
      %2678 = vmatpush1.msra.mxu0 0.0
      %2679 = vmatprep.subr.mxu0 0.0
      %2680 = vmatpush1.msra.mxu0 0.0
      %2681 = vmatprep.subr.mxu0 0.0
      %2682 = vmatpush1.msra.mxu0 0.0
      %2683 = vmatprep.subr.mxu0 0.0
      %2684 = vmatpush1.msra.mxu0 0.0
      %2685 = vmatprep.subr.mxu0 0.0
      %2686 = vmatpush1.msra.mxu0 0.0
      %2687 = vmatprep.subr.mxu0 0.0
      %2688 = vmatpush1.msra.mxu0 0.0
      %2689 = vmatprep.subr.mxu0 0.0
      %2690 = vmatpush1.msra.mxu0 0.0
      %2691 = vmatprep.subr.mxu0 0.0
      %2692 = vmatpush1.msra.mxu0 0.0
      %2693 = vmatprep.subr.mxu0 0.0
      %2694 = vmatpush1.msra.mxu0 0.0
      %2695 = vmatprep.subr.mxu0 0.0
      %2696 = vmatpush1.msra.mxu0 0.0
      %2697 = vmatprep.subr.mxu0 0.0
      %2698 = vmatpush1.msra.mxu0 0.0
      %2699 = vmatprep.subr.mxu0 0.0
      %2700 = vmatpush1.msra.mxu0 0.0
      %2701 = vmatprep.subr.mxu0 0.0
      %2702 = vmatpush1.msra.mxu0 0.0
      %2703 = vmatprep.subr.mxu0 0.0
      %2704 = vmatpush1.msra.mxu0 0.0
      %2705 = vmatprep.subr.mxu0 0.0
      %2706 = vmatpush1.msra.mxu0 0.0
      %2707 = vmatprep.subr.mxu0 0.0
      %2708 = vmatpush1.msra.mxu0 0.0
      %2709 = vmatprep.subr.mxu0 0.0
      %2710 = vmatpush1.msra.mxu0 0.0
      %2711 = vmatprep.subr.mxu0 0.0
      %2712 = vmatpush1.msra.mxu0 0.0
      %2713 = vmatprep.subr.mxu0 0.0
      %2714 = vmatpush1.msra.mxu0 0.0
      %2715 = vmatprep.subr.mxu0 0.0
      %2716 = vmatpush1.msra.mxu0 0.0
      %2717 = vmatprep.subr.mxu0 0.0
      %2718 = vmatpush1.msra.mxu0 0.0
      %2719 = vmatprep.subr.mxu0 0.0
      %2720 = vmatpush1.msra.mxu0 0.0
      %2721 = vmatprep.subr.mxu0 0.0
      %2722 = vmatpush1.msra.mxu0 0.0
      %2723 = vmatprep.subr.mxu0 0.0
      %2724 = vmatpush1.msra.mxu0 0.0
      %2725 = vmatprep.subr.mxu0 0.0
      %2726 = vmatpush1.msra.mxu0 0.0
      %2727 = vmatprep.subr.mxu0 0.0
      %2728 = vmatpush1.msra.mxu0 0.0
      %2729 = vmatprep.subr.mxu0 0.0
      %2730 = vmatpush1.msra.mxu0 0.0
      %2731 = vmatprep.subr.mxu0 0.0
      %2732 = vmatpush1.msra.mxu0 0.0
      %2733 = vmatprep.subr.mxu0 0.0
      %2734 = vmatpush1.msra.mxu0 0.0
      %2735 = vmatprep.subr.mxu0 0.0
      %2736 = vmatpush1.msra.mxu0 0.0
      %2737 = vmatprep.mubr.f32.mxu0 0.0
      %2738 = vmatmul.mubr.f32.gmra.mrb[0].mxu0 %v2671
      %v2739 = vpop.f32.mrb[0].mxu0
      %v2740 = vadd.f32 0.0, %v2739
      %v2741 = vpop.f32.mrb[0].mxu0
      %v2742 = vadd.f32 0.0, %v2741
      %2743 = vdwg.mxu0
      %v2744 = vadd.f32 %v2658, %v2740
      %v2745 = vadd.f32 %v2660, %v2742
      %2746 = vrot.lane.b32.xlu0 %v2498, 112
      %v2747 = vpop.permute.xlu0 %2746
      %2748 = vrot.lane.b32.xlu0 %v2499, 112
      %v2749 = vpop.permute.xlu0 %2748
      %v2750 = vsel %vm452, %v2747, %v2749
      %v2751 = vsel %vm452, %v2749, %v2747
      %s2752 = scalar_lea.vmem %s1, 240
      %v2753 = vld [vmem:[%s2752] sm:$0xff]
      %v2755 = vsel %vm214, %v2753, 0
      %2757 = vmatprep.subr.mxu0 %v2751
      %2758 = vmatpush1.msra.mxu0 %v2750
      %2759 = vmatprep.subr.mxu0 0.0
      %2760 = vmatpush1.msra.mxu0 0.0
      %2761 = vmatprep.subr.mxu0 0.0
      %2762 = vmatpush1.msra.mxu0 0.0
      %2763 = vmatprep.subr.mxu0 0.0
      %2764 = vmatpush1.msra.mxu0 0.0
      %2765 = vmatprep.subr.mxu0 0.0
      %2766 = vmatpush1.msra.mxu0 0.0
      %2767 = vmatprep.subr.mxu0 0.0
      %2768 = vmatpush1.msra.mxu0 0.0
      %2769 = vmatprep.subr.mxu0 0.0
      %2770 = vmatpush1.msra.mxu0 0.0
      %2771 = vmatprep.subr.mxu0 0.0
      %2772 = vmatpush1.msra.mxu0 0.0
      %2773 = vmatprep.subr.mxu0 0.0
      %2774 = vmatpush1.msra.mxu0 0.0
      %2775 = vmatprep.subr.mxu0 0.0
      %2776 = vmatpush1.msra.mxu0 0.0
      %2777 = vmatprep.subr.mxu0 0.0
      %2778 = vmatpush1.msra.mxu0 0.0
      %2779 = vmatprep.subr.mxu0 0.0
      %2780 = vmatpush1.msra.mxu0 0.0
      %2781 = vmatprep.subr.mxu0 0.0
      %2782 = vmatpush1.msra.mxu0 0.0
      %2783 = vmatprep.subr.mxu0 0.0
      %2784 = vmatpush1.msra.mxu0 0.0
      %2785 = vmatprep.subr.mxu0 0.0
      %2786 = vmatpush1.msra.mxu0 0.0
      %2787 = vmatprep.subr.mxu0 0.0
      %2788 = vmatpush1.msra.mxu0 0.0
      %2789 = vmatprep.subr.mxu0 0.0
      %2790 = vmatpush1.msra.mxu0 0.0
      %2791 = vmatprep.subr.mxu0 0.0
      %2792 = vmatpush1.msra.mxu0 0.0
      %2793 = vmatprep.subr.mxu0 0.0
      %2794 = vmatpush1.msra.mxu0 0.0
      %2795 = vmatprep.subr.mxu0 0.0
      %2796 = vmatpush1.msra.mxu0 0.0
      %2797 = vmatprep.subr.mxu0 0.0
      %2798 = vmatpush1.msra.mxu0 0.0
      %2799 = vmatprep.subr.mxu0 0.0
      %2800 = vmatpush1.msra.mxu0 0.0
      %2801 = vmatprep.subr.mxu0 0.0
      %2802 = vmatpush1.msra.mxu0 0.0
      %2803 = vmatprep.subr.mxu0 0.0
      %2804 = vmatpush1.msra.mxu0 0.0
      %2805 = vmatprep.subr.mxu0 0.0
      %2806 = vmatpush1.msra.mxu0 0.0
      %2807 = vmatprep.subr.mxu0 0.0
      %2808 = vmatpush1.msra.mxu0 0.0
      %2809 = vmatprep.subr.mxu0 0.0
      %2810 = vmatpush1.msra.mxu0 0.0
      %2811 = vmatprep.subr.mxu0 0.0
      %2812 = vmatpush1.msra.mxu0 0.0
      %2813 = vmatprep.subr.mxu0 0.0
      %2814 = vmatpush1.msra.mxu0 0.0
      %2815 = vmatprep.subr.mxu0 0.0
      %2816 = vmatpush1.msra.mxu0 0.0
      %2817 = vmatprep.subr.mxu0 0.0
      %2818 = vmatpush1.msra.mxu0 0.0
      %2819 = vmatprep.subr.mxu0 0.0
      %2820 = vmatpush1.msra.mxu0 0.0
      %2821 = vmatprep.mubr.f32.mxu0 0.0
      %2822 = vmatmul.mubr.f32.gmra.mrb[0].mxu0 %v2755
      %v2823 = vpop.f32.mrb[0].mxu0
      %v2824 = vadd.f32 0.0, %v2823
      %v2825 = vpop.f32.mrb[0].mxu0
      %v2826 = vadd.f32 0.0, %v2825
      %2827 = vdwg.mxu0
      %v2828 = vadd.f32 %v2744, %v2824
      %v2829 = vadd.f32 %v2745, %v2826
      %2830 = vrot.lane.b32.xlu0 %v2498, 111
      %v2831 = vpop.permute.xlu0 %2830
      %2832 = vrot.lane.b32.xlu0 %v2499, 111
      %v2833 = vpop.permute.xlu0 %2832
      %v2834 = vsel %vm537, %v2831, %v2833
      %v2835 = vsel %vm537, %v2833, %v2831
      %s2836 = scalar_lea.vmem %s1, 248
      %v2837 = vld [vmem:[%s2836] sm:$0xff]
      %v2839 = vsel %vm214, %v2837, 0
      %2841 = vmatprep.subr.mxu0 %v2835
      %2842 = vmatpush1.msra.mxu0 %v2834
      %2843 = vmatprep.subr.mxu0 0.0
      %2844 = vmatpush1.msra.mxu0 0.0
      %2845 = vmatprep.subr.mxu0 0.0
      %2846 = vmatpush1.msra.mxu0 0.0
      %2847 = vmatprep.subr.mxu0 0.0
      %2848 = vmatpush1.msra.mxu0 0.0
      %2849 = vmatprep.subr.mxu0 0.0
      %2850 = vmatpush1.msra.mxu0 0.0
      %2851 = vmatprep.subr.mxu0 0.0
      %2852 = vmatpush1.msra.mxu0 0.0
      %2853 = vmatprep.subr.mxu0 0.0
      %2854 = vmatpush1.msra.mxu0 0.0
      %2855 = vmatprep.subr.mxu0 0.0
      %2856 = vmatpush1.msra.mxu0 0.0
      %2857 = vmatprep.subr.mxu0 0.0
      %2858 = vmatpush1.msra.mxu0 0.0
      %2859 = vmatprep.subr.mxu0 0.0
      %2860 = vmatpush1.msra.mxu0 0.0
      %2861 = vmatprep.subr.mxu0 0.0
      %2862 = vmatpush1.msra.mxu0 0.0
      %2863 = vmatprep.subr.mxu0 0.0
      %2864 = vmatpush1.msra.mxu0 0.0
      %2865 = vmatprep.subr.mxu0 0.0
      %2866 = vmatpush1.msra.mxu0 0.0
      %2867 = vmatprep.subr.mxu0 0.0
      %2868 = vmatpush1.msra.mxu0 0.0
      %2869 = vmatprep.subr.mxu0 0.0
      %2870 = vmatpush1.msra.mxu0 0.0
      %2871 = vmatprep.subr.mxu0 0.0
      %2872 = vmatpush1.msra.mxu0 0.0
      %2873 = vmatprep.subr.mxu0 0.0
      %2874 = vmatpush1.msra.mxu0 0.0
      %2875 = vmatprep.subr.mxu0 0.0
      %2876 = vmatpush1.msra.mxu0 0.0
      %2877 = vmatprep.subr.mxu0 0.0
      %2878 = vmatpush1.msra.mxu0 0.0
      %2879 = vmatprep.subr.mxu0 0.0
      %2880 = vmatpush1.msra.mxu0 0.0
      %2881 = vmatprep.subr.mxu0 0.0
      %2882 = vmatpush1.msra.mxu0 0.0
      %2883 = vmatprep.subr.mxu0 0.0
      %2884 = vmatpush1.msra.mxu0 0.0
      %2885 = vmatprep.subr.mxu0 0.0
      %2886 = vmatpush1.msra.mxu0 0.0
      %2887 = vmatprep.subr.mxu0 0.0
      %2888 = vmatpush1.msra.mxu0 0.0
      %2889 = vmatprep.subr.mxu0 0.0
      %2890 = vmatpush1.msra.mxu0 0.0
      %2891 = vmatprep.subr.mxu0 0.0
      %2892 = vmatpush1.msra.mxu0 0.0
      %2893 = vmatprep.subr.mxu0 0.0
      %2894 = vmatpush1.msra.mxu0 0.0
      %2895 = vmatprep.subr.mxu0 0.0
      %2896 = vmatpush1.msra.mxu0 0.0
      %2897 = vmatprep.subr.mxu0 0.0
      %2898 = vmatpush1.msra.mxu0 0.0
      %2899 = vmatprep.subr.mxu0 0.0
      %2900 = vmatpush1.msra.mxu0 0.0
      %2901 = vmatprep.subr.mxu0 0.0
      %2902 = vmatpush1.msra.mxu0 0.0
      %2903 = vmatprep.subr.mxu0 0.0
      %2904 = vmatpush1.msra.mxu0 0.0
      %2905 = vmatprep.mubr.f32.mxu0 0.0
      %2906 = vmatmul.mubr.f32.gmra.mrb[0].mxu0 %v2839
      %v2907 = vpop.f32.mrb[0].mxu0
      %v2908 = vadd.f32 0.0, %v2907
      %v2909 = vpop.f32.mrb[0].mxu0
      %v2910 = vadd.f32 0.0, %v2909
      %2911 = vdwg.mxu0
      %v2912 = vadd.f32 %v2828, %v2908
      %v2913 = vadd.f32 %v2829, %v2910
      %2914 = vrot.lane.b32.xlu0 %v2498, 110
      %v2915 = vpop.permute.xlu0 %2914
      %2916 = vrot.lane.b32.xlu0 %v2499, 110
      %v2917 = vpop.permute.xlu0 %2916
      %v2918 = vsel %vm622, %v2915, %v2917
      %v2919 = vsel %vm622, %v2917, %v2915
      %s2920 = scalar_lea.vmem %s1, 256
      %v2921 = vld [vmem:[%s2920] sm:$0xff]
      %v2923 = vsel %vm214, %v2921, 0
      %2925 = vmatprep.subr.mxu0 %v2919
      %2926 = vmatpush1.msra.mxu0 %v2918
      %2927 = vmatprep.subr.mxu0 0.0
      %2928 = vmatpush1.msra.mxu0 0.0
      %2929 = vmatprep.subr.mxu0 0.0
      %2930 = vmatpush1.msra.mxu0 0.0
      %2931 = vmatprep.subr.mxu0 0.0
      %2932 = vmatpush1.msra.mxu0 0.0
      %2933 = vmatprep.subr.mxu0 0.0
      %2934 = vmatpush1.msra.mxu0 0.0
      %2935 = vmatprep.subr.mxu0 0.0
      %2936 = vmatpush1.msra.mxu0 0.0
      %2937 = vmatprep.subr.mxu0 0.0
      %2938 = vmatpush1.msra.mxu0 0.0
      %2939 = vmatprep.subr.mxu0 0.0
      %2940 = vmatpush1.msra.mxu0 0.0
      %2941 = vmatprep.subr.mxu0 0.0
      %2942 = vmatpush1.msra.mxu0 0.0
      %2943 = vmatprep.subr.mxu0 0.0
      %2944 = vmatpush1.msra.mxu0 0.0
      %2945 = vmatprep.subr.mxu0 0.0
      %2946 = vmatpush1.msra.mxu0 0.0
      %2947 = vmatprep.subr.mxu0 0.0
      %2948 = vmatpush1.msra.mxu0 0.0
      %2949 = vmatprep.subr.mxu0 0.0
      %2950 = vmatpush1.msra.mxu0 0.0
      %2951 = vmatprep.subr.mxu0 0.0
      %2952 = vmatpush1.msra.mxu0 0.0
      %2953 = vmatprep.subr.mxu0 0.0
      %2954 = vmatpush1.msra.mxu0 0.0
      %2955 = vmatprep.subr.mxu0 0.0
      %2956 = vmatpush1.msra.mxu0 0.0
      %2957 = vmatprep.subr.mxu0 0.0
      %2958 = vmatpush1.msra.mxu0 0.0
      %2959 = vmatprep.subr.mxu0 0.0
      %2960 = vmatpush1.msra.mxu0 0.0
      %2961 = vmatprep.subr.mxu0 0.0
      %2962 = vmatpush1.msra.mxu0 0.0
      %2963 = vmatprep.subr.mxu0 0.0
      %2964 = vmatpush1.msra.mxu0 0.0
      %2965 = vmatprep.subr.mxu0 0.0
      %2966 = vmatpush1.msra.mxu0 0.0
      %2967 = vmatprep.subr.mxu0 0.0
      %2968 = vmatpush1.msra.mxu0 0.0
      %2969 = vmatprep.subr.mxu0 0.0
      %2970 = vmatpush1.msra.mxu0 0.0
      %2971 = vmatprep.subr.mxu0 0.0
      %2972 = vmatpush1.msra.mxu0 0.0
      %2973 = vmatprep.subr.mxu0 0.0
      %2974 = vmatpush1.msra.mxu0 0.0
      %2975 = vmatprep.subr.mxu0 0.0
      %2976 = vmatpush1.msra.mxu0 0.0
      %2977 = vmatprep.subr.mxu0 0.0
      %2978 = vmatpush1.msra.mxu0 0.0
      %2979 = vmatprep.subr.mxu0 0.0
      %2980 = vmatpush1.msra.mxu0 0.0
      %2981 = vmatprep.subr.mxu0 0.0
      %2982 = vmatpush1.msra.mxu0 0.0
      %2983 = vmatprep.subr.mxu0 0.0
      %2984 = vmatpush1.msra.mxu0 0.0
      %2985 = vmatprep.subr.mxu0 0.0
      %2986 = vmatpush1.msra.mxu0 0.0
      %2987 = vmatprep.subr.mxu0 0.0
      %2988 = vmatpush1.msra.mxu0 0.0
      %2989 = vmatprep.mubr.f32.mxu0 0.0
      %2990 = vmatmul.mubr.f32.gmra.mrb[0].mxu0 %v2923
      %v2991 = vpop.f32.mrb[0].mxu0
      %v2992 = vadd.f32 0.0, %v2991
      %v2993 = vpop.f32.mrb[0].mxu0
      %v2994 = vadd.f32 0.0, %v2993
      %2995 = vdwg.mxu0
      %v2996 = vadd.f32 %v2912, %v2992
      %v2997 = vadd.f32 %v2913, %v2994
      %2998 = vrot.lane.b32.xlu0 %v2498, 96
      %v2999 = vpop.permute.xlu0 %2998
      %3000 = vrot.lane.b32.xlu0 %v2499, 96
      %v3001 = vpop.permute.xlu0 %3000
      %v3002 = vsel %vm707, %v2999, %v3001
      %v3003 = vsel %vm707, %v3001, %v2999
      %s3004 = scalar_lea.vmem %s1, 264
      %v3005 = vld [vmem:[%s3004] sm:$0xff]
      %v3007 = vsel %vm214, %v3005, 0
      %3009 = vmatprep.subr.mxu0 %v3003
      %3010 = vmatpush1.msra.mxu0 %v3002
      %3011 = vmatprep.subr.mxu0 0.0
      %3012 = vmatpush1.msra.mxu0 0.0
      %3013 = vmatprep.subr.mxu0 0.0
      %3014 = vmatpush1.msra.mxu0 0.0
      %3015 = vmatprep.subr.mxu0 0.0
      %3016 = vmatpush1.msra.mxu0 0.0
      %3017 = vmatprep.subr.mxu0 0.0
      %3018 = vmatpush1.msra.mxu0 0.0
      %3019 = vmatprep.subr.mxu0 0.0
      %3020 = vmatpush1.msra.mxu0 0.0
      %3021 = vmatprep.subr.mxu0 0.0
      %3022 = vmatpush1.msra.mxu0 0.0
      %3023 = vmatprep.subr.mxu0 0.0
      %3024 = vmatpush1.msra.mxu0 0.0
      %3025 = vmatprep.subr.mxu0 0.0
      %3026 = vmatpush1.msra.mxu0 0.0
      %3027 = vmatprep.subr.mxu0 0.0
      %3028 = vmatpush1.msra.mxu0 0.0
      %3029 = vmatprep.subr.mxu0 0.0
      %3030 = vmatpush1.msra.mxu0 0.0
      %3031 = vmatprep.subr.mxu0 0.0
      %3032 = vmatpush1.msra.mxu0 0.0
      %3033 = vmatprep.subr.mxu0 0.0
      %3034 = vmatpush1.msra.mxu0 0.0
      %3035 = vmatprep.subr.mxu0 0.0
      %3036 = vmatpush1.msra.mxu0 0.0
      %3037 = vmatprep.subr.mxu0 0.0
      %3038 = vmatpush1.msra.mxu0 0.0
      %3039 = vmatprep.subr.mxu0 0.0
      %3040 = vmatpush1.msra.mxu0 0.0
      %3041 = vmatprep.subr.mxu0 0.0
      %3042 = vmatpush1.msra.mxu0 0.0
      %3043 = vmatprep.subr.mxu0 0.0
      %3044 = vmatpush1.msra.mxu0 0.0
      %3045 = vmatprep.subr.mxu0 0.0
      %3046 = vmatpush1.msra.mxu0 0.0
      %3047 = vmatprep.subr.mxu0 0.0
      %3048 = vmatpush1.msra.mxu0 0.0
      %3049 = vmatprep.subr.mxu0 0.0
      %3050 = vmatpush1.msra.mxu0 0.0
      %3051 = vmatprep.subr.mxu0 0.0
      %3052 = vmatpush1.msra.mxu0 0.0
      %3053 = vmatprep.subr.mxu0 0.0
      %3054 = vmatpush1.msra.mxu0 0.0
      %3055 = vmatprep.subr.mxu0 0.0
      %3056 = vmatpush1.msra.mxu0 0.0
      %3057 = vmatprep.subr.mxu0 0.0
      %3058 = vmatpush1.msra.mxu0 0.0
      %3059 = vmatprep.subr.mxu0 0.0
      %3060 = vmatpush1.msra.mxu0 0.0
      %3061 = vmatprep.subr.mxu0 0.0
      %3062 = vmatpush1.msra.mxu0 0.0
      %3063 = vmatprep.subr.mxu0 0.0
      %3064 = vmatpush1.msra.mxu0 0.0
      %3065 = vmatprep.subr.mxu0 0.0
      %3066 = vmatpush1.msra.mxu0 0.0
      %3067 = vmatprep.subr.mxu0 0.0
      %3068 = vmatpush1.msra.mxu0 0.0
      %3069 = vmatprep.subr.mxu0 0.0
      %3070 = vmatpush1.msra.mxu0 0.0
      %3071 = vmatprep.subr.mxu0 0.0
      %3072 = vmatpush1.msra.mxu0 0.0
      %3073 = vmatprep.mubr.f32.mxu0 0.0
      %3074 = vmatmul.mubr.f32.gmra.mrb[0].mxu0 %v3007
      %v3075 = vpop.f32.mrb[0].mxu0
      %v3076 = vadd.f32 0.0, %v3075
      %v3077 = vpop.f32.mrb[0].mxu0
      %v3078 = vadd.f32 0.0, %v3077
      %3079 = vdwg.mxu0
      %v3080 = vadd.f32 %v2996, %v3076
      %v3081 = vadd.f32 %v2997, %v3078
      %3082 = vrot.lane.b32.xlu0 %v2498, 95
      %v3083 = vpop.permute.xlu0 %3082
      %3084 = vrot.lane.b32.xlu0 %v2499, 95
      %v3085 = vpop.permute.xlu0 %3084
      %v3086 = vsel %vm792, %v3083, %v3085
      %v3087 = vsel %vm792, %v3085, %v3083
      %s3088 = scalar_lea.vmem %s1, 272
      %v3089 = vld [vmem:[%s3088] sm:$0xff]
      %v3091 = vsel %vm214, %v3089, 0
      %3093 = vmatprep.subr.mxu0 %v3087
      %3094 = vmatpush1.msra.mxu0 %v3086
      %3095 = vmatprep.subr.mxu0 0.0
      %3096 = vmatpush1.msra.mxu0 0.0
      %3097 = vmatprep.subr.mxu0 0.0
      %3098 = vmatpush1.msra.mxu0 0.0
      %3099 = vmatprep.subr.mxu0 0.0
      %3100 = vmatpush1.msra.mxu0 0.0
      %3101 = vmatprep.subr.mxu0 0.0
      %3102 = vmatpush1.msra.mxu0 0.0
      %3103 = vmatprep.subr.mxu0 0.0
      %3104 = vmatpush1.msra.mxu0 0.0
      %3105 = vmatprep.subr.mxu0 0.0
      %3106 = vmatpush1.msra.mxu0 0.0
      %3107 = vmatprep.subr.mxu0 0.0
      %3108 = vmatpush1.msra.mxu0 0.0
      %3109 = vmatprep.subr.mxu0 0.0
      %3110 = vmatpush1.msra.mxu0 0.0
      %3111 = vmatprep.subr.mxu0 0.0
      %3112 = vmatpush1.msra.mxu0 0.0
      %3113 = vmatprep.subr.mxu0 0.0
      %3114 = vmatpush1.msra.mxu0 0.0
      %3115 = vmatprep.subr.mxu0 0.0
      %3116 = vmatpush1.msra.mxu0 0.0
      %3117 = vmatprep.subr.mxu0 0.0
      %3118 = vmatpush1.msra.mxu0 0.0
      %3119 = vmatprep.subr.mxu0 0.0
      %3120 = vmatpush1.msra.mxu0 0.0
      %3121 = vmatprep.subr.mxu0 0.0
      %3122 = vmatpush1.msra.mxu0 0.0
      %3123 = vmatprep.subr.mxu0 0.0
      %3124 = vmatpush1.msra.mxu0 0.0
      %3125 = vmatprep.subr.mxu0 0.0
      %3126 = vmatpush1.msra.mxu0 0.0
      %3127 = vmatprep.subr.mxu0 0.0
      %3128 = vmatpush1.msra.mxu0 0.0
      %3129 = vmatprep.subr.mxu0 0.0
      %3130 = vmatpush1.msra.mxu0 0.0
      %3131 = vmatprep.subr.mxu0 0.0
      %3132 = vmatpush1.msra.mxu0 0.0
      %3133 = vmatprep.subr.mxu0 0.0
      %3134 = vmatpush1.msra.mxu0 0.0
      %3135 = vmatprep.subr.mxu0 0.0
      %3136 = vmatpush1.msra.mxu0 0.0
      %3137 = vmatprep.subr.mxu0 0.0
      %3138 = vmatpush1.msra.mxu0 0.0
      %3139 = vmatprep.subr.mxu0 0.0
      %3140 = vmatpush1.msra.mxu0 0.0
      %3141 = vmatprep.subr.mxu0 0.0
      %3142 = vmatpush1.msra.mxu0 0.0
      %3143 = vmatprep.subr.mxu0 0.0
      %3144 = vmatpush1.msra.mxu0 0.0
      %3145 = vmatprep.subr.mxu0 0.0
      %3146 = vmatpush1.msra.mxu0 0.0
      %3147 = vmatprep.subr.mxu0 0.0
      %3148 = vmatpush1.msra.mxu0 0.0
      %3149 = vmatprep.subr.mxu0 0.0
      %3150 = vmatpush1.msra.mxu0 0.0
      %3151 = vmatprep.subr.mxu0 0.0
      %3152 = vmatpush1.msra.mxu0 0.0
      %3153 = vmatprep.subr.mxu0 0.0
      %3154 = vmatpush1.msra.mxu0 0.0
      %3155 = vmatprep.subr.mxu0 0.0
      %3156 = vmatpush1.msra.mxu0 0.0
      %3157 = vmatprep.mubr.f32.mxu0 0.0
      %3158 = vmatmul.mubr.f32.gmra.mrb[0].mxu0 %v3091
      %v3159 = vpop.f32.mrb[0].mxu0
      %v3160 = vadd.f32 0.0, %v3159
      %v3161 = vpop.f32.mrb[0].mxu0
      %v3162 = vadd.f32 0.0, %v3161
      %3163 = vdwg.mxu0
      %v3164 = vadd.f32 %v3080, %v3160
      %v3165 = vadd.f32 %v3081, %v3162
      %3166 = vrot.lane.b32.xlu0 %v2498, 94
      %v3167 = vpop.permute.xlu0 %3166
      %3168 = vrot.lane.b32.xlu0 %v2499, 94
      %v3169 = vpop.permute.xlu0 %3168
      %v3170 = vsel %vm877, %v3167, %v3169
      %v3171 = vsel %vm877, %v3169, %v3167
      %s3172 = scalar_lea.vmem %s1, 280
      %v3173 = vld [vmem:[%s3172] sm:$0xff]
      %v3175 = vsel %vm214, %v3173, 0
      %3177 = vmatprep.subr.mxu0 %v3171
      %3178 = vmatpush1.msra.mxu0 %v3170
      %3179 = vmatprep.subr.mxu0 0.0
      %3180 = vmatpush1.msra.mxu0 0.0
      %3181 = vmatprep.subr.mxu0 0.0
      %3182 = vmatpush1.msra.mxu0 0.0
      %3183 = vmatprep.subr.mxu0 0.0
      %3184 = vmatpush1.msra.mxu0 0.0
      %3185 = vmatprep.subr.mxu0 0.0
      %3186 = vmatpush1.msra.mxu0 0.0
      %3187 = vmatprep.subr.mxu0 0.0
      %3188 = vmatpush1.msra.mxu0 0.0
      %3189 = vmatprep.subr.mxu0 0.0
      %3190 = vmatpush1.msra.mxu0 0.0
      %3191 = vmatprep.subr.mxu0 0.0
      %3192 = vmatpush1.msra.mxu0 0.0
      %3193 = vmatprep.subr.mxu0 0.0
      %3194 = vmatpush1.msra.mxu0 0.0
      %3195 = vmatprep.subr.mxu0 0.0
      %3196 = vmatpush1.msra.mxu0 0.0
      %3197 = vmatprep.subr.mxu0 0.0
      %3198 = vmatpush1.msra.mxu0 0.0
      %3199 = vmatprep.subr.mxu0 0.0
      %3200 = vmatpush1.msra.mxu0 0.0
      %3201 = vmatprep.subr.mxu0 0.0
      %3202 = vmatpush1.msra.mxu0 0.0
      %3203 = vmatprep.subr.mxu0 0.0
      %3204 = vmatpush1.msra.mxu0 0.0
      %3205 = vmatprep.subr.mxu0 0.0
      %3206 = vmatpush1.msra.mxu0 0.0
      %3207 = vmatprep.subr.mxu0 0.0
      %3208 = vmatpush1.msra.mxu0 0.0
      %3209 = vmatprep.subr.mxu0 0.0
      %3210 = vmatpush1.msra.mxu0 0.0
      %3211 = vmatprep.subr.mxu0 0.0
      %3212 = vmatpush1.msra.mxu0 0.0
      %3213 = vmatprep.subr.mxu0 0.0
      %3214 = vmatpush1.msra.mxu0 0.0
      %3215 = vmatprep.subr.mxu0 0.0
      %3216 = vmatpush1.msra.mxu0 0.0
      %3217 = vmatprep.subr.mxu0 0.0
      %3218 = vmatpush1.msra.mxu0 0.0
      %3219 = vmatprep.subr.mxu0 0.0
      %3220 = vmatpush1.msra.mxu0 0.0
      %3221 = vmatprep.subr.mxu0 0.0
      %3222 = vmatpush1.msra.mxu0 0.0
      %3223 = vmatprep.subr.mxu0 0.0
      %3224 = vmatpush1.msra.mxu0 0.0
      %3225 = vmatprep.subr.mxu0 0.0
      %3226 = vmatpush1.msra.mxu0 0.0
      %3227 = vmatprep.subr.mxu0 0.0
      %3228 = vmatpush1.msra.mxu0 0.0
      %3229 = vmatprep.subr.mxu0 0.0
      %3230 = vmatpush1.msra.mxu0 0.0
      %3231 = vmatprep.subr.mxu0 0.0
      %3232 = vmatpush1.msra.mxu0 0.0
      %3233 = vmatprep.subr.mxu0 0.0
      %3234 = vmatpush1.msra.mxu0 0.0
      %3235 = vmatprep.subr.mxu0 0.0
      %3236 = vmatpush1.msra.mxu0 0.0
      %3237 = vmatprep.subr.mxu0 0.0
      %3238 = vmatpush1.msra.mxu0 0.0
      %3239 = vmatprep.subr.mxu0 0.0
      %3240 = vmatpush1.msra.mxu0 0.0
      %3241 = vmatprep.mubr.f32.mxu0 0.0
      %3242 = vmatmul.mubr.f32.gmra.mrb[0].mxu0 %v3175
      %v3243 = vpop.f32.mrb[0].mxu0
      %v3244 = vadd.f32 0.0, %v3243
      %v3245 = vpop.f32.mrb[0].mxu0
      %v3246 = vadd.f32 0.0, %v3245
      %3247 = vdwg.mxu0
      %v3248 = vadd.f32 %v3164, %v3244
      %v3249 = vadd.f32 %v3165, %v3246
      %3251 = vset.pattern.permute.xlu0 0
      %3252 = vperm.xlu0 %3251, %v2501
      %v3253 = vpop.permute.xlu0 %3252
      %v3255 = vmul.f32 %v3248, %v3253
      %v3256 = vmul.f32 %v3249, %v3253
      %3258 = vset.pattern.permute.xlu0 0
      %3259 = vperm.xlu0 %3258, %v2503
      %v3260 = vpop.permute.xlu0 %3259
      %v3262 = vadd.f32 %v3255, %v3260
      %v3263 = vadd.f32 %v3256, %v3260
      %s3264 = scalar_lea.vmem %s192, 16
      %v3265 = vld [vmem:[%s3264] sm:$0xff]
      %v3266 = vld [vmem:[%s3264 + $0x8] sm:$0xff]
      %3267 = vrot.lane.b32.xlu0 %v3265, 127
      %v3268 = vpop.permute.xlu0 %3267
      %3269 = vrot.lane.b32.xlu0 %v3266, 127
      %v3270 = vpop.permute.xlu0 %3269
      %v3271 = vsel %vm209, %v3268, %v3270
      %v3272 = vsel %vm209, %v3270, %v3268
      %3273 = vmatprep.subr.mxu0 %v3272
      %3274 = vmatpush1.msra.mxu0 %v3271
      %3275 = vmatprep.subr.mxu0 0.0
      %3276 = vmatpush1.msra.mxu0 0.0
      %3277 = vmatprep.subr.mxu0 0.0
      %3278 = vmatpush1.msra.mxu0 0.0
      %3279 = vmatprep.subr.mxu0 0.0
      %3280 = vmatpush1.msra.mxu0 0.0
      %3281 = vmatprep.subr.mxu0 0.0
      %3282 = vmatpush1.msra.mxu0 0.0
      %3283 = vmatprep.subr.mxu0 0.0
      %3284 = vmatpush1.msra.mxu0 0.0
      %3285 = vmatprep.subr.mxu0 0.0
      %3286 = vmatpush1.msra.mxu0 0.0
      %3287 = vmatprep.subr.mxu0 0.0
      %3288 = vmatpush1.msra.mxu0 0.0
      %3289 = vmatprep.subr.mxu0 0.0
      %3290 = vmatpush1.msra.mxu0 0.0
      %3291 = vmatprep.subr.mxu0 0.0
      %3292 = vmatpush1.msra.mxu0 0.0
      %3293 = vmatprep.subr.mxu0 0.0
      %3294 = vmatpush1.msra.mxu0 0.0
      %3295 = vmatprep.subr.mxu0 0.0
      %3296 = vmatpush1.msra.mxu0 0.0
      %3297 = vmatprep.subr.mxu0 0.0
      %3298 = vmatpush1.msra.mxu0 0.0
      %3299 = vmatprep.subr.mxu0 0.0
      %3300 = vmatpush1.msra.mxu0 0.0
      %3301 = vmatprep.subr.mxu0 0.0
      %3302 = vmatpush1.msra.mxu0 0.0
      %3303 = vmatprep.subr.mxu0 0.0
      %3304 = vmatpush1.msra.mxu0 0.0
      %3305 = vmatprep.subr.mxu0 0.0
      %3306 = vmatpush1.msra.mxu0 0.0
      %3307 = vmatprep.subr.mxu0 0.0
      %3308 = vmatpush1.msra.mxu0 0.0
      %3309 = vmatprep.subr.mxu0 0.0
      %3310 = vmatpush1.msra.mxu0 0.0
      %3311 = vmatprep.subr.mxu0 0.0
      %3312 = vmatpush1.msra.mxu0 0.0
      %3313 = vmatprep.subr.mxu0 0.0
      %3314 = vmatpush1.msra.mxu0 0.0
      %3315 = vmatprep.subr.mxu0 0.0
      %3316 = vmatpush1.msra.mxu0 0.0
      %3317 = vmatprep.subr.mxu0 0.0
      %3318 = vmatpush1.msra.mxu0 0.0
      %3319 = vmatprep.subr.mxu0 0.0
      %3320 = vmatpush1.msra.mxu0 0.0
      %3321 = vmatprep.subr.mxu0 0.0
      %3322 = vmatpush1.msra.mxu0 0.0
      %3323 = vmatprep.subr.mxu0 0.0
      %3324 = vmatpush1.msra.mxu0 0.0
      %3325 = vmatprep.subr.mxu0 0.0
      %3326 = vmatpush1.msra.mxu0 0.0
      %3327 = vmatprep.subr.mxu0 0.0
      %3328 = vmatpush1.msra.mxu0 0.0
      %3329 = vmatprep.subr.mxu0 0.0
      %3330 = vmatpush1.msra.mxu0 0.0
      %3331 = vmatprep.subr.mxu0 0.0
      %3332 = vmatpush1.msra.mxu0 0.0
      %3333 = vmatprep.subr.mxu0 0.0
      %3334 = vmatpush1.msra.mxu0 0.0
      %3335 = vmatprep.subr.mxu0 0.0
      %3336 = vmatpush1.msra.mxu0 0.0
      %3337 = vmatprep.mubr.f32.mxu0 0.0
      %3338 = vmatmul.mubr.f32.gmra.mrb[0].mxu0 %v216
      %v3339 = vpop.f32.mrb[0].mxu0
      %v3340 = vadd.f32 0.0, %v3339
      %v3341 = vpop.f32.mrb[0].mxu0
      %v3342 = vadd.f32 0.0, %v3341
      %3343 = vdwg.mxu0
      %3344 = vmatprep.subr.mxu0 %v3266
      %3345 = vmatpush1.msra.mxu0 %v3265
      %3346 = vmatprep.subr.mxu0 0.0
      %3347 = vmatpush1.msra.mxu0 0.0
      %3348 = vmatprep.subr.mxu0 0.0
      %3349 = vmatpush1.msra.mxu0 0.0
      %3350 = vmatprep.subr.mxu0 0.0
      %3351 = vmatpush1.msra.mxu0 0.0
      %3352 = vmatprep.subr.mxu0 0.0
      %3353 = vmatpush1.msra.mxu0 0.0
      %3354 = vmatprep.subr.mxu0 0.0
      %3355 = vmatpush1.msra.mxu0 0.0
      %3356 = vmatprep.subr.mxu0 0.0
      %3357 = vmatpush1.msra.mxu0 0.0
      %3358 = vmatprep.subr.mxu0 0.0
      %3359 = vmatpush1.msra.mxu0 0.0
      %3360 = vmatprep.subr.mxu0 0.0
      %3361 = vmatpush1.msra.mxu0 0.0
      %3362 = vmatprep.subr.mxu0 0.0
      %3363 = vmatpush1.msra.mxu0 0.0
      %3364 = vmatprep.subr.mxu0 0.0
      %3365 = vmatpush1.msra.mxu0 0.0
      %3366 = vmatprep.subr.mxu0 0.0
      %3367 = vmatpush1.msra.mxu0 0.0
      %3368 = vmatprep.subr.mxu0 0.0
      %3369 = vmatpush1.msra.mxu0 0.0
      %3370 = vmatprep.subr.mxu0 0.0
      %3371 = vmatpush1.msra.mxu0 0.0
      %3372 = vmatprep.subr.mxu0 0.0
      %3373 = vmatpush1.msra.mxu0 0.0
      %3374 = vmatprep.subr.mxu0 0.0
      %3375 = vmatpush1.msra.mxu0 0.0
      %3376 = vmatprep.subr.mxu0 0.0
      %3377 = vmatpush1.msra.mxu0 0.0
      %3378 = vmatprep.subr.mxu0 0.0
      %3379 = vmatpush1.msra.mxu0 0.0
      %3380 = vmatprep.subr.mxu0 0.0
      %3381 = vmatpush1.msra.mxu0 0.0
      %3382 = vmatprep.subr.mxu0 0.0
      %3383 = vmatpush1.msra.mxu0 0.0
      %3384 = vmatprep.subr.mxu0 0.0
      %3385 = vmatpush1.msra.mxu0 0.0
      %3386 = vmatprep.subr.mxu0 0.0
      %3387 = vmatpush1.msra.mxu0 0.0
      %3388 = vmatprep.subr.mxu0 0.0
      %3389 = vmatpush1.msra.mxu0 0.0
      %3390 = vmatprep.subr.mxu0 0.0
      %3391 = vmatpush1.msra.mxu0 0.0
      %3392 = vmatprep.subr.mxu0 0.0
      %3393 = vmatpush1.msra.mxu0 0.0
      %3394 = vmatprep.subr.mxu0 0.0
      %3395 = vmatpush1.msra.mxu0 0.0
      %3396 = vmatprep.subr.mxu0 0.0
      %3397 = vmatpush1.msra.mxu0 0.0
      %3398 = vmatprep.subr.mxu0 0.0
      %3399 = vmatpush1.msra.mxu0 0.0
      %3400 = vmatprep.subr.mxu0 0.0
      %3401 = vmatpush1.msra.mxu0 0.0
      %3402 = vmatprep.subr.mxu0 0.0
      %3403 = vmatpush1.msra.mxu0 0.0
      %3404 = vmatprep.subr.mxu0 0.0
      %3405 = vmatpush1.msra.mxu0 0.0
      %3406 = vmatprep.subr.mxu0 0.0
      %3407 = vmatpush1.msra.mxu0 0.0
      %3408 = vmatprep.mubr.f32.mxu0 0.0
      %3409 = vmatmul.mubr.f32.gmra.mrb[0].mxu0 %v290
      %v3410 = vpop.f32.mrb[0].mxu0
      %v3411 = vadd.f32 %v3340, %v3410
      %v3412 = vpop.f32.mrb[0].mxu0
      %v3413 = vadd.f32 %v3342, %v3412
      %3414 = vdwg.mxu0
      %3415 = vrot.lane.b32.xlu0 %v3265, 126
      %v3416 = vpop.permute.xlu0 %3415
      %3417 = vrot.lane.b32.xlu0 %v3266, 126
      %v3418 = vpop.permute.xlu0 %3417
      %v3419 = vsel %vm367, %v3416, %v3418
      %v3420 = vsel %vm367, %v3418, %v3416
      %3421 = vmatprep.subr.mxu0 %v3420
      %3422 = vmatpush1.msra.mxu0 %v3419
      %3423 = vmatprep.subr.mxu0 0.0
      %3424 = vmatpush1.msra.mxu0 0.0
      %3425 = vmatprep.subr.mxu0 0.0
      %3426 = vmatpush1.msra.mxu0 0.0
      %3427 = vmatprep.subr.mxu0 0.0
      %3428 = vmatpush1.msra.mxu0 0.0
      %3429 = vmatprep.subr.mxu0 0.0
      %3430 = vmatpush1.msra.mxu0 0.0
      %3431 = vmatprep.subr.mxu0 0.0
      %3432 = vmatpush1.msra.mxu0 0.0
      %3433 = vmatprep.subr.mxu0 0.0
      %3434 = vmatpush1.msra.mxu0 0.0
      %3435 = vmatprep.subr.mxu0 0.0
      %3436 = vmatpush1.msra.mxu0 0.0
      %3437 = vmatprep.subr.mxu0 0.0
      %3438 = vmatpush1.msra.mxu0 0.0
      %3439 = vmatprep.subr.mxu0 0.0
      %3440 = vmatpush1.msra.mxu0 0.0
      %3441 = vmatprep.subr.mxu0 0.0
      %3442 = vmatpush1.msra.mxu0 0.0
      %3443 = vmatprep.subr.mxu0 0.0
      %3444 = vmatpush1.msra.mxu0 0.0
      %3445 = vmatprep.subr.mxu0 0.0
      %3446 = vmatpush1.msra.mxu0 0.0
      %3447 = vmatprep.subr.mxu0 0.0
      %3448 = vmatpush1.msra.mxu0 0.0
      %3449 = vmatprep.subr.mxu0 0.0
      %3450 = vmatpush1.msra.mxu0 0.0
      %3451 = vmatprep.subr.mxu0 0.0
      %3452 = vmatpush1.msra.mxu0 0.0
      %3453 = vmatprep.subr.mxu0 0.0
      %3454 = vmatpush1.msra.mxu0 0.0
      %3455 = vmatprep.subr.mxu0 0.0
      %3456 = vmatpush1.msra.mxu0 0.0
      %3457 = vmatprep.subr.mxu0 0.0
      %3458 = vmatpush1.msra.mxu0 0.0
      %3459 = vmatprep.subr.mxu0 0.0
      %3460 = vmatpush1.msra.mxu0 0.0
      %3461 = vmatprep.subr.mxu0 0.0
      %3462 = vmatpush1.msra.mxu0 0.0
      %3463 = vmatprep.subr.mxu0 0.0
      %3464 = vmatpush1.msra.mxu0 0.0
      %3465 = vmatprep.subr.mxu0 0.0
      %3466 = vmatpush1.msra.mxu0 0.0
      %3467 = vmatprep.subr.mxu0 0.0
      %3468 = vmatpush1.msra.mxu0 0.0
      %3469 = vmatprep.subr.mxu0 0.0
      %3470 = vmatpush1.msra.mxu0 0.0
      %3471 = vmatprep.subr.mxu0 0.0
      %3472 = vmatpush1.msra.mxu0 0.0
      %3473 = vmatprep.subr.mxu0 0.0
      %3474 = vmatpush1.msra.mxu0 0.0
      %3475 = vmatprep.subr.mxu0 0.0
      %3476 = vmatpush1.msra.mxu0 0.0
      %3477 = vmatprep.subr.mxu0 0.0
      %3478 = vmatpush1.msra.mxu0 0.0
      %3479 = vmatprep.subr.mxu0 0.0
      %3480 = vmatpush1.msra.mxu0 0.0
      %3481 = vmatprep.subr.mxu0 0.0
      %3482 = vmatpush1.msra.mxu0 0.0
      %3483 = vmatprep.subr.mxu0 0.0
      %3484 = vmatpush1.msra.mxu0 0.0
      %3485 = vmatprep.mubr.f32.mxu0 0.0
      %3486 = vmatmul.mubr.f32.gmra.mrb[0].mxu0 %v373
      %v3487 = vpop.f32.mrb[0].mxu0
      %v3488 = vadd.f32 0.0, %v3487
      %v3489 = vpop.f32.mrb[0].mxu0
      %v3490 = vadd.f32 0.0, %v3489
      %3491 = vdwg.mxu0
      %v3492 = vadd.f32 %v3411, %v3488
      %v3493 = vadd.f32 %v3413, %v3490
      %3494 = vrot.lane.b32.xlu0 %v3265, 112
      %v3495 = vpop.permute.xlu0 %3494
      %3496 = vrot.lane.b32.xlu0 %v3266, 112
      %v3497 = vpop.permute.xlu0 %3496
      %v3498 = vsel %vm452, %v3495, %v3497
      %v3499 = vsel %vm452, %v3497, %v3495
      %3500 = vmatprep.subr.mxu0 %v3499
      %3501 = vmatpush1.msra.mxu0 %v3498
      %3502 = vmatprep.subr.mxu0 0.0
      %3503 = vmatpush1.msra.mxu0 0.0
      %3504 = vmatprep.subr.mxu0 0.0
      %3505 = vmatpush1.msra.mxu0 0.0
      %3506 = vmatprep.subr.mxu0 0.0
      %3507 = vmatpush1.msra.mxu0 0.0
      %3508 = vmatprep.subr.mxu0 0.0
      %3509 = vmatpush1.msra.mxu0 0.0
      %3510 = vmatprep.subr.mxu0 0.0
      %3511 = vmatpush1.msra.mxu0 0.0
      %3512 = vmatprep.subr.mxu0 0.0
      %3513 = vmatpush1.msra.mxu0 0.0
      %3514 = vmatprep.subr.mxu0 0.0
      %3515 = vmatpush1.msra.mxu0 0.0
      %3516 = vmatprep.subr.mxu0 0.0
      %3517 = vmatpush1.msra.mxu0 0.0
      %3518 = vmatprep.subr.mxu0 0.0
      %3519 = vmatpush1.msra.mxu0 0.0
      %3520 = vmatprep.subr.mxu0 0.0
      %3521 = vmatpush1.msra.mxu0 0.0
      %3522 = vmatprep.subr.mxu0 0.0
      %3523 = vmatpush1.msra.mxu0 0.0
      %3524 = vmatprep.subr.mxu0 0.0
      %3525 = vmatpush1.msra.mxu0 0.0
      %3526 = vmatprep.subr.mxu0 0.0
      %3527 = vmatpush1.msra.mxu0 0.0
      %3528 = vmatprep.subr.mxu0 0.0
      %3529 = vmatpush1.msra.mxu0 0.0
      %3530 = vmatprep.subr.mxu0 0.0
      %3531 = vmatpush1.msra.mxu0 0.0
      %3532 = vmatprep.subr.mxu0 0.0
      %3533 = vmatpush1.msra.mxu0 0.0
      %3534 = vmatprep.subr.mxu0 0.0
      %3535 = vmatpush1.msra.mxu0 0.0
      %3536 = vmatprep.subr.mxu0 0.0
      %3537 = vmatpush1.msra.mxu0 0.0
      %3538 = vmatprep.subr.mxu0 0.0
      %3539 = vmatpush1.msra.mxu0 0.0
      %3540 = vmatprep.subr.mxu0 0.0
      %3541 = vmatpush1.msra.mxu0 0.0
      %3542 = vmatprep.subr.mxu0 0.0
      %3543 = vmatpush1.msra.mxu0 0.0
      %3544 = vmatprep.subr.mxu0 0.0
      %3545 = vmatpush1.msra.mxu0 0.0
      %3546 = vmatprep.subr.mxu0 0.0
      %3547 = vmatpush1.msra.mxu0 0.0
      %3548 = vmatprep.subr.mxu0 0.0
      %3549 = vmatpush1.msra.mxu0 0.0
      %3550 = vmatprep.subr.mxu0 0.0
      %3551 = vmatpush1.msra.mxu0 0.0
      %3552 = vmatprep.subr.mxu0 0.0
      %3553 = vmatpush1.msra.mxu0 0.0
      %3554 = vmatprep.subr.mxu0 0.0
      %3555 = vmatpush1.msra.mxu0 0.0
      %3556 = vmatprep.subr.mxu0 0.0
      %3557 = vmatpush1.msra.mxu0 0.0
      %3558 = vmatprep.subr.mxu0 0.0
      %3559 = vmatpush1.msra.mxu0 0.0
      %3560 = vmatprep.subr.mxu0 0.0
      %3561 = vmatpush1.msra.mxu0 0.0
      %3562 = vmatprep.subr.mxu0 0.0
      %3563 = vmatpush1.msra.mxu0 0.0
      %3564 = vmatprep.mubr.f32.mxu0 0.0
      %3565 = vmatmul.mubr.f32.gmra.mrb[0].mxu0 %v458
      %v3566 = vpop.f32.mrb[0].mxu0
      %v3567 = vadd.f32 0.0, %v3566
      %v3568 = vpop.f32.mrb[0].mxu0
      %v3569 = vadd.f32 0.0, %v3568
      %3570 = vdwg.mxu0
      %v3571 = vadd.f32 %v3492, %v3567
      %v3572 = vadd.f32 %v3493, %v3569
      %3573 = vrot.lane.b32.xlu0 %v3265, 111
      %v3574 = vpop.permute.xlu0 %3573
      %3575 = vrot.lane.b32.xlu0 %v3266, 111
      %v3576 = vpop.permute.xlu0 %3575
      %v3577 = vsel %vm537, %v3574, %v3576
      %v3578 = vsel %vm537, %v3576, %v3574
      %3579 = vmatprep.subr.mxu0 %v3578
      %3580 = vmatpush1.msra.mxu0 %v3577
      %3581 = vmatprep.subr.mxu0 0.0
      %3582 = vmatpush1.msra.mxu0 0.0
      %3583 = vmatprep.subr.mxu0 0.0
      %3584 = vmatpush1.msra.mxu0 0.0
      %3585 = vmatprep.subr.mxu0 0.0
      %3586 = vmatpush1.msra.mxu0 0.0
      %3587 = vmatprep.subr.mxu0 0.0
      %3588 = vmatpush1.msra.mxu0 0.0
      %3589 = vmatprep.subr.mxu0 0.0
      %3590 = vmatpush1.msra.mxu0 0.0
      %3591 = vmatprep.subr.mxu0 0.0
      %3592 = vmatpush1.msra.mxu0 0.0
      %3593 = vmatprep.subr.mxu0 0.0
      %3594 = vmatpush1.msra.mxu0 0.0
      %3595 = vmatprep.subr.mxu0 0.0
      %3596 = vmatpush1.msra.mxu0 0.0
      %3597 = vmatprep.subr.mxu0 0.0
      %3598 = vmatpush1.msra.mxu0 0.0
      %3599 = vmatprep.subr.mxu0 0.0
      %3600 = vmatpush1.msra.mxu0 0.0
      %3601 = vmatprep.subr.mxu0 0.0
      %3602 = vmatpush1.msra.mxu0 0.0
      %3603 = vmatprep.subr.mxu0 0.0
      %3604 = vmatpush1.msra.mxu0 0.0
      %3605 = vmatprep.subr.mxu0 0.0
      %3606 = vmatpush1.msra.mxu0 0.0
      %3607 = vmatprep.subr.mxu0 0.0
      %3608 = vmatpush1.msra.mxu0 0.0
      %3609 = vmatprep.subr.mxu0 0.0
      %3610 = vmatpush1.msra.mxu0 0.0
      %3611 = vmatprep.subr.mxu0 0.0
      %3612 = vmatpush1.msra.mxu0 0.0
      %3613 = vmatprep.subr.mxu0 0.0
      %3614 = vmatpush1.msra.mxu0 0.0
      %3615 = vmatprep.subr.mxu0 0.0
      %3616 = vmatpush1.msra.mxu0 0.0
      %3617 = vmatprep.subr.mxu0 0.0
      %3618 = vmatpush1.msra.mxu0 0.0
      %3619 = vmatprep.subr.mxu0 0.0
      %3620 = vmatpush1.msra.mxu0 0.0
      %3621 = vmatprep.subr.mxu0 0.0
      %3622 = vmatpush1.msra.mxu0 0.0
      %3623 = vmatprep.subr.mxu0 0.0
      %3624 = vmatpush1.msra.mxu0 0.0
      %3625 = vmatprep.subr.mxu0 0.0
      %3626 = vmatpush1.msra.mxu0 0.0
      %3627 = vmatprep.subr.mxu0 0.0
      %3628 = vmatpush1.msra.mxu0 0.0
      %3629 = vmatprep.subr.mxu0 0.0
      %3630 = vmatpush1.msra.mxu0 0.0
      %3631 = vmatprep.subr.mxu0 0.0
      %3632 = vmatpush1.msra.mxu0 0.0
      %3633 = vmatprep.subr.mxu0 0.0
      %3634 = vmatpush1.msra.mxu0 0.0
      %3635 = vmatprep.subr.mxu0 0.0
      %3636 = vmatpush1.msra.mxu0 0.0
      %3637 = vmatprep.subr.mxu0 0.0
      %3638 = vmatpush1.msra.mxu0 0.0
      %3639 = vmatprep.subr.mxu0 0.0
      %3640 = vmatpush1.msra.mxu0 0.0
      %3641 = vmatprep.subr.mxu0 0.0
      %3642 = vmatpush1.msra.mxu0 0.0
      %3643 = vmatprep.mubr.f32.mxu0 0.0
      %3644 = vmatmul.mubr.f32.gmra.mrb[0].mxu0 %v543
      %v3645 = vpop.f32.mrb[0].mxu0
      %v3646 = vadd.f32 0.0, %v3645
      %v3647 = vpop.f32.mrb[0].mxu0
      %v3648 = vadd.f32 0.0, %v3647
      %3649 = vdwg.mxu0
      %v3650 = vadd.f32 %v3571, %v3646
      %v3651 = vadd.f32 %v3572, %v3648
      %3652 = vrot.lane.b32.xlu0 %v3265, 110
      %v3653 = vpop.permute.xlu0 %3652
      %3654 = vrot.lane.b32.xlu0 %v3266, 110
      %v3655 = vpop.permute.xlu0 %3654
      %v3656 = vsel %vm622, %v3653, %v3655
      %v3657 = vsel %vm622, %v3655, %v3653
      %3658 = vmatprep.subr.mxu0 %v3657
      %3659 = vmatpush1.msra.mxu0 %v3656
      %3660 = vmatprep.subr.mxu0 0.0
      %3661 = vmatpush1.msra.mxu0 0.0
      %3662 = vmatprep.subr.mxu0 0.0
      %3663 = vmatpush1.msra.mxu0 0.0
      %3664 = vmatprep.subr.mxu0 0.0
      %3665 = vmatpush1.msra.mxu0 0.0
      %3666 = vmatprep.subr.mxu0 0.0
      %3667 = vmatpush1.msra.mxu0 0.0
      %3668 = vmatprep.subr.mxu0 0.0
      %3669 = vmatpush1.msra.mxu0 0.0
      %3670 = vmatprep.subr.mxu0 0.0
      %3671 = vmatpush1.msra.mxu0 0.0
      %3672 = vmatprep.subr.mxu0 0.0
      %3673 = vmatpush1.msra.mxu0 0.0
      %3674 = vmatprep.subr.mxu0 0.0
      %3675 = vmatpush1.msra.mxu0 0.0
      %3676 = vmatprep.subr.mxu0 0.0
      %3677 = vmatpush1.msra.mxu0 0.0
      %3678 = vmatprep.subr.mxu0 0.0
      %3679 = vmatpush1.msra.mxu0 0.0
      %3680 = vmatprep.subr.mxu0 0.0
      %3681 = vmatpush1.msra.mxu0 0.0
      %3682 = vmatprep.subr.mxu0 0.0
      %3683 = vmatpush1.msra.mxu0 0.0
      %3684 = vmatprep.subr.mxu0 0.0
      %3685 = vmatpush1.msra.mxu0 0.0
      %3686 = vmatprep.subr.mxu0 0.0
      %3687 = vmatpush1.msra.mxu0 0.0
      %3688 = vmatprep.subr.mxu0 0.0
      %3689 = vmatpush1.msra.mxu0 0.0
      %3690 = vmatprep.subr.mxu0 0.0
      %3691 = vmatpush1.msra.mxu0 0.0
      %3692 = vmatprep.subr.mxu0 0.0
      %3693 = vmatpush1.msra.mxu0 0.0
      %3694 = vmatprep.subr.mxu0 0.0
      %3695 = vmatpush1.msra.mxu0 0.0
      %3696 = vmatprep.subr.mxu0 0.0
      %3697 = vmatpush1.msra.mxu0 0.0
      %3698 = vmatprep.subr.mxu0 0.0
      %3699 = vmatpush1.msra.mxu0 0.0
      %3700 = vmatprep.subr.mxu0 0.0
      %3701 = vmatpush1.msra.mxu0 0.0
      %3702 = vmatprep.subr.mxu0 0.0
      %3703 = vmatpush1.msra.mxu0 0.0
      %3704 = vmatprep.subr.mxu0 0.0
      %3705 = vmatpush1.msra.mxu0 0.0
      %3706 = vmatprep.subr.mxu0 0.0
      %3707 = vmatpush1.msra.mxu0 0.0
      %3708 = vmatprep.subr.mxu0 0.0
      %3709 = vmatpush1.msra.mxu0 0.0
      %3710 = vmatprep.subr.mxu0 0.0
      %3711 = vmatpush1.msra.mxu0 0.0
      %3712 = vmatprep.subr.mxu0 0.0
      %3713 = vmatpush1.msra.mxu0 0.0
      %3714 = vmatprep.subr.mxu0 0.0
      %3715 = vmatpush1.msra.mxu0 0.0
      %3716 = vmatprep.subr.mxu0 0.0
      %3717 = vmatpush1.msra.mxu0 0.0
      %3718 = vmatprep.subr.mxu0 0.0
      %3719 = vmatpush1.msra.mxu0 0.0
      %3720 = vmatprep.subr.mxu0 0.0
      %3721 = vmatpush1.msra.mxu0 0.0
      %3722 = vmatprep.mubr.f32.mxu0 0.0
      %3723 = vmatmul.mubr.f32.gmra.mrb[0].mxu0 %v628
      %v3724 = vpop.f32.mrb[0].mxu0
      %v3725 = vadd.f32 0.0, %v3724
      %v3726 = vpop.f32.mrb[0].mxu0
      %v3727 = vadd.f32 0.0, %v3726
      %3728 = vdwg.mxu0
      %v3729 = vadd.f32 %v3650, %v3725
      %v3730 = vadd.f32 %v3651, %v3727
      %3731 = vrot.lane.b32.xlu0 %v3265, 96
      %v3732 = vpop.permute.xlu0 %3731
      %3733 = vrot.lane.b32.xlu0 %v3266, 96
      %v3734 = vpop.permute.xlu0 %3733
      %v3735 = vsel %vm707, %v3732, %v3734
      %v3736 = vsel %vm707, %v3734, %v3732
      %3737 = vmatprep.subr.mxu0 %v3736
      %3738 = vmatpush1.msra.mxu0 %v3735
      %3739 = vmatprep.subr.mxu0 0.0
      %3740 = vmatpush1.msra.mxu0 0.0
      %3741 = vmatprep.subr.mxu0 0.0
      %3742 = vmatpush1.msra.mxu0 0.0
      %3743 = vmatprep.subr.mxu0 0.0
      %3744 = vmatpush1.msra.mxu0 0.0
      %3745 = vmatprep.subr.mxu0 0.0
      %3746 = vmatpush1.msra.mxu0 0.0
      %3747 = vmatprep.subr.mxu0 0.0
      %3748 = vmatpush1.msra.mxu0 0.0
      %3749 = vmatprep.subr.mxu0 0.0
      %3750 = vmatpush1.msra.mxu0 0.0
      %3751 = vmatprep.subr.mxu0 0.0
      %3752 = vmatpush1.msra.mxu0 0.0
      %3753 = vmatprep.subr.mxu0 0.0
      %3754 = vmatpush1.msra.mxu0 0.0
      %3755 = vmatprep.subr.mxu0 0.0
      %3756 = vmatpush1.msra.mxu0 0.0
      %3757 = vmatprep.subr.mxu0 0.0
      %3758 = vmatpush1.msra.mxu0 0.0
      %3759 = vmatprep.subr.mxu0 0.0
      %3760 = vmatpush1.msra.mxu0 0.0
      %3761 = vmatprep.subr.mxu0 0.0
      %3762 = vmatpush1.msra.mxu0 0.0
      %3763 = vmatprep.subr.mxu0 0.0
      %3764 = vmatpush1.msra.mxu0 0.0
      %3765 = vmatprep.subr.mxu0 0.0
      %3766 = vmatpush1.msra.mxu0 0.0
      %3767 = vmatprep.subr.mxu0 0.0
      %3768 = vmatpush1.msra.mxu0 0.0
      %3769 = vmatprep.subr.mxu0 0.0
      %3770 = vmatpush1.msra.mxu0 0.0
      %3771 = vmatprep.subr.mxu0 0.0
      %3772 = vmatpush1.msra.mxu0 0.0
      %3773 = vmatprep.subr.mxu0 0.0
      %3774 = vmatpush1.msra.mxu0 0.0
      %3775 = vmatprep.subr.mxu0 0.0
      %3776 = vmatpush1.msra.mxu0 0.0
      %3777 = vmatprep.subr.mxu0 0.0
      %3778 = vmatpush1.msra.mxu0 0.0
      %3779 = vmatprep.subr.mxu0 0.0
      %3780 = vmatpush1.msra.mxu0 0.0
      %3781 = vmatprep.subr.mxu0 0.0
      %3782 = vmatpush1.msra.mxu0 0.0
      %3783 = vmatprep.subr.mxu0 0.0
      %3784 = vmatpush1.msra.mxu0 0.0
      %3785 = vmatprep.subr.mxu0 0.0
      %3786 = vmatpush1.msra.mxu0 0.0
      %3787 = vmatprep.subr.mxu0 0.0
      %3788 = vmatpush1.msra.mxu0 0.0
      %3789 = vmatprep.subr.mxu0 0.0
      %3790 = vmatpush1.msra.mxu0 0.0
      %3791 = vmatprep.subr.mxu0 0.0
      %3792 = vmatpush1.msra.mxu0 0.0
      %3793 = vmatprep.subr.mxu0 0.0
      %3794 = vmatpush1.msra.mxu0 0.0
      %3795 = vmatprep.subr.mxu0 0.0
      %3796 = vmatpush1.msra.mxu0 0.0
      %3797 = vmatprep.subr.mxu0 0.0
      %3798 = vmatpush1.msra.mxu0 0.0
      %3799 = vmatprep.subr.mxu0 0.0
      %3800 = vmatpush1.msra.mxu0 0.0
      %3801 = vmatprep.mubr.f32.mxu0 0.0
      %3802 = vmatmul.mubr.f32.gmra.mrb[0].mxu0 %v713
      %v3803 = vpop.f32.mrb[0].mxu0
      %v3804 = vadd.f32 0.0, %v3803
      %v3805 = vpop.f32.mrb[0].mxu0
      %v3806 = vadd.f32 0.0, %v3805
      %3807 = vdwg.mxu0
      %v3808 = vadd.f32 %v3729, %v3804
      %v3809 = vadd.f32 %v3730, %v3806
      %3810 = vrot.lane.b32.xlu0 %v3265, 95
      %v3811 = vpop.permute.xlu0 %3810
      %3812 = vrot.lane.b32.xlu0 %v3266, 95
      %v3813 = vpop.permute.xlu0 %3812
      %v3814 = vsel %vm792, %v3811, %v3813
      %v3815 = vsel %vm792, %v3813, %v3811
      %3816 = vmatprep.subr.mxu0 %v3815
      %3817 = vmatpush1.msra.mxu0 %v3814
      %3818 = vmatprep.subr.mxu0 0.0
      %3819 = vmatpush1.msra.mxu0 0.0
      %3820 = vmatprep.subr.mxu0 0.0
      %3821 = vmatpush1.msra.mxu0 0.0
      %3822 = vmatprep.subr.mxu0 0.0
      %3823 = vmatpush1.msra.mxu0 0.0
      %3824 = vmatprep.subr.mxu0 0.0
      %3825 = vmatpush1.msra.mxu0 0.0
      %3826 = vmatprep.subr.mxu0 0.0
      %3827 = vmatpush1.msra.mxu0 0.0
      %3828 = vmatprep.subr.mxu0 0.0
      %3829 = vmatpush1.msra.mxu0 0.0
      %3830 = vmatprep.subr.mxu0 0.0
      %3831 = vmatpush1.msra.mxu0 0.0
      %3832 = vmatprep.subr.mxu0 0.0
      %3833 = vmatpush1.msra.mxu0 0.0
      %3834 = vmatprep.subr.mxu0 0.0
      %3835 = vmatpush1.msra.mxu0 0.0
      %3836 = vmatprep.subr.mxu0 0.0
      %3837 = vmatpush1.msra.mxu0 0.0
      %3838 = vmatprep.subr.mxu0 0.0
      %3839 = vmatpush1.msra.mxu0 0.0
      %3840 = vmatprep.subr.mxu0 0.0
      %3841 = vmatpush1.msra.mxu0 0.0
      %3842 = vmatprep.subr.mxu0 0.0
      %3843 = vmatpush1.msra.mxu0 0.0
      %3844 = vmatprep.subr.mxu0 0.0
      %3845 = vmatpush1.msra.mxu0 0.0
      %3846 = vmatprep.subr.mxu0 0.0
      %3847 = vmatpush1.msra.mxu0 0.0
      %3848 = vmatprep.subr.mxu0 0.0
      %3849 = vmatpush1.msra.mxu0 0.0
      %3850 = vmatprep.subr.mxu0 0.0
      %3851 = vmatpush1.msra.mxu0 0.0
      %3852 = vmatprep.subr.mxu0 0.0
      %3853 = vmatpush1.msra.mxu0 0.0
      %3854 = vmatprep.subr.mxu0 0.0
      %3855 = vmatpush1.msra.mxu0 0.0
      %3856 = vmatprep.subr.mxu0 0.0
      %3857 = vmatpush1.msra.mxu0 0.0
      %3858 = vmatprep.subr.mxu0 0.0
      %3859 = vmatpush1.msra.mxu0 0.0
      %3860 = vmatprep.subr.mxu0 0.0
      %3861 = vmatpush1.msra.mxu0 0.0
      %3862 = vmatprep.subr.mxu0 0.0
      %3863 = vmatpush1.msra.mxu0 0.0
      %3864 = vmatprep.subr.mxu0 0.0
      %3865 = vmatpush1.msra.mxu0 0.0
      %3866 = vmatprep.subr.mxu0 0.0
      %3867 = vmatpush1.msra.mxu0 0.0
      %3868 = vmatprep.subr.mxu0 0.0
      %3869 = vmatpush1.msra.mxu0 0.0
      %3870 = vmatprep.subr.mxu0 0.0
      %3871 = vmatpush1.msra.mxu0 0.0
      %3872 = vmatprep.subr.mxu0 0.0
      %3873 = vmatpush1.msra.mxu0 0.0
      %3874 = vmatprep.subr.mxu0 0.0
      %3875 = vmatpush1.msra.mxu0 0.0
      %3876 = vmatprep.subr.mxu0 0.0
      %3877 = vmatpush1.msra.mxu0 0.0
      %3878 = vmatprep.subr.mxu0 0.0
      %3879 = vmatpush1.msra.mxu0 0.0
      %3880 = vmatprep.mubr.f32.mxu0 0.0
      %3881 = vmatmul.mubr.f32.gmra.mrb[0].mxu0 %v798
      %v3882 = vpop.f32.mrb[0].mxu0
      %v3883 = vadd.f32 0.0, %v3882
      %v3884 = vpop.f32.mrb[0].mxu0
      %v3885 = vadd.f32 0.0, %v3884
      %3886 = vdwg.mxu0
      %v3887 = vadd.f32 %v3808, %v3883
      %v3888 = vadd.f32 %v3809, %v3885
      %3889 = vrot.lane.b32.xlu0 %v3265, 94
      %v3890 = vpop.permute.xlu0 %3889
      %3891 = vrot.lane.b32.xlu0 %v3266, 94
      %v3892 = vpop.permute.xlu0 %3891
      %v3893 = vsel %vm877, %v3890, %v3892
      %v3894 = vsel %vm877, %v3892, %v3890
      %3895 = vmatprep.subr.mxu0 %v3894
      %3896 = vmatpush1.msra.mxu0 %v3893
      %3897 = vmatprep.subr.mxu0 0.0
      %3898 = vmatpush1.msra.mxu0 0.0
      %3899 = vmatprep.subr.mxu0 0.0
      %3900 = vmatpush1.msra.mxu0 0.0
      %3901 = vmatprep.subr.mxu0 0.0
      %3902 = vmatpush1.msra.mxu0 0.0
      %3903 = vmatprep.subr.mxu0 0.0
      %3904 = vmatpush1.msra.mxu0 0.0
      %3905 = vmatprep.subr.mxu0 0.0
      %3906 = vmatpush1.msra.mxu0 0.0
      %3907 = vmatprep.subr.mxu0 0.0
      %3908 = vmatpush1.msra.mxu0 0.0
      %3909 = vmatprep.subr.mxu0 0.0
      %3910 = vmatpush1.msra.mxu0 0.0
      %3911 = vmatprep.subr.mxu0 0.0
      %3912 = vmatpush1.msra.mxu0 0.0
      %3913 = vmatprep.subr.mxu0 0.0
      %3914 = vmatpush1.msra.mxu0 0.0
      %3915 = vmatprep.subr.mxu0 0.0
      %3916 = vmatpush1.msra.mxu0 0.0
      %3917 = vmatprep.subr.mxu0 0.0
      %3918 = vmatpush1.msra.mxu0 0.0
      %3919 = vmatprep.subr.mxu0 0.0
      %3920 = vmatpush1.msra.mxu0 0.0
      %3921 = vmatprep.subr.mxu0 0.0
      %3922 = vmatpush1.msra.mxu0 0.0
      %3923 = vmatprep.subr.mxu0 0.0
      %3924 = vmatpush1.msra.mxu0 0.0
      %3925 = vmatprep.subr.mxu0 0.0
      %3926 = vmatpush1.msra.mxu0 0.0
      %3927 = vmatprep.subr.mxu0 0.0
      %3928 = vmatpush1.msra.mxu0 0.0
      %3929 = vmatprep.subr.mxu0 0.0
      %3930 = vmatpush1.msra.mxu0 0.0
      %3931 = vmatprep.subr.mxu0 0.0
      %3932 = vmatpush1.msra.mxu0 0.0
      %3933 = vmatprep.subr.mxu0 0.0
      %3934 = vmatpush1.msra.mxu0 0.0
      %3935 = vmatprep.subr.mxu0 0.0
      %3936 = vmatpush1.msra.mxu0 0.0
      %3937 = vmatprep.subr.mxu0 0.0
      %3938 = vmatpush1.msra.mxu0 0.0
      %3939 = vmatprep.subr.mxu0 0.0
      %3940 = vmatpush1.msra.mxu0 0.0
      %3941 = vmatprep.subr.mxu0 0.0
      %3942 = vmatpush1.msra.mxu0 0.0
      %3943 = vmatprep.subr.mxu0 0.0
      %3944 = vmatpush1.msra.mxu0 0.0
      %3945 = vmatprep.subr.mxu0 0.0
      %3946 = vmatpush1.msra.mxu0 0.0
      %3947 = vmatprep.subr.mxu0 0.0
      %3948 = vmatpush1.msra.mxu0 0.0
      %3949 = vmatprep.subr.mxu0 0.0
      %3950 = vmatpush1.msra.mxu0 0.0
      %3951 = vmatprep.subr.mxu0 0.0
      %3952 = vmatpush1.msra.mxu0 0.0
      %3953 = vmatprep.subr.mxu0 0.0
      %3954 = vmatpush1.msra.mxu0 0.0
      %3955 = vmatprep.subr.mxu0 0.0
      %3956 = vmatpush1.msra.mxu0 0.0
      %3957 = vmatprep.subr.mxu0 0.0
      %3958 = vmatpush1.msra.mxu0 0.0
      %3959 = vmatprep.mubr.f32.mxu0 0.0
      %3960 = vmatmul.mubr.f32.gmra.mrb[0].mxu0 %v883
      %v3961 = vpop.f32.mrb[0].mxu0
      %v3962 = vadd.f32 0.0, %v3961
      %v3963 = vpop.f32.mrb[0].mxu0
      %v3964 = vadd.f32 0.0, %v3963
      %3965 = vdwg.mxu0
      %v3966 = vadd.f32 %v3887, %v3962
      %v3967 = vadd.f32 %v3888, %v3964
      %v3968 = vmul.f32 %v3966, %v961
      %v3969 = vmul.f32 %v3967, %v961
      %v3970 = vadd.f32 %v3968, %v968
      %v3971 = vadd.f32 %v3969, %v968
      %3972 = vrot.lane.b32.xlu0 %v3970, 127
      %v3973 = vpop.permute.xlu0 %3972
      %3974 = vrot.lane.b32.xlu0 %v3971, 127
      %v3975 = vpop.permute.xlu0 %3974
      %v3976 = vsel %vm209, %v3973, %v3975
      %v3977 = vsel %vm209, %v3975, %v3973
      %3978 = vmatprep.subr.mxu0 %v3977
      %3979 = vmatpush1.msra.mxu0 %v3976
      %3980 = vmatprep.subr.mxu0 0.0
      %3981 = vmatpush1.msra.mxu0 0.0
      %3982 = vmatprep.subr.mxu0 0.0
      %3983 = vmatpush1.msra.mxu0 0.0
      %3984 = vmatprep.subr.mxu0 0.0
      %3985 = vmatpush1.msra.mxu0 0.0
      %3986 = vmatprep.subr.mxu0 0.0
      %3987 = vmatpush1.msra.mxu0 0.0
      %3988 = vmatprep.subr.mxu0 0.0
      %3989 = vmatpush1.msra.mxu0 0.0
      %3990 = vmatprep.subr.mxu0 0.0
      %3991 = vmatpush1.msra.mxu0 0.0
      %3992 = vmatprep.subr.mxu0 0.0
      %3993 = vmatpush1.msra.mxu0 0.0
      %3994 = vmatprep.subr.mxu0 0.0
      %3995 = vmatpush1.msra.mxu0 0.0
      %3996 = vmatprep.subr.mxu0 0.0
      %3997 = vmatpush1.msra.mxu0 0.0
      %3998 = vmatprep.subr.mxu0 0.0
      %3999 = vmatpush1.msra.mxu0 0.0
      %4000 = vmatprep.subr.mxu0 0.0
      %4001 = vmatpush1.msra.mxu0 0.0
      %4002 = vmatprep.subr.mxu0 0.0
      %4003 = vmatpush1.msra.mxu0 0.0
      %4004 = vmatprep.subr.mxu0 0.0
      %4005 = vmatpush1.msra.mxu0 0.0
      %4006 = vmatprep.subr.mxu0 0.0
      %4007 = vmatpush1.msra.mxu0 0.0
      %4008 = vmatprep.subr.mxu0 0.0
      %4009 = vmatpush1.msra.mxu0 0.0
      %4010 = vmatprep.subr.mxu0 0.0
      %4011 = vmatpush1.msra.mxu0 0.0
      %4012 = vmatprep.subr.mxu0 0.0
      %4013 = vmatpush1.msra.mxu0 0.0
      %4014 = vmatprep.subr.mxu0 0.0
      %4015 = vmatpush1.msra.mxu0 0.0
      %4016 = vmatprep.subr.mxu0 0.0
      %4017 = vmatpush1.msra.mxu0 0.0
      %4018 = vmatprep.subr.mxu0 0.0
      %4019 = vmatpush1.msra.mxu0 0.0
      %4020 = vmatprep.subr.mxu0 0.0
      %4021 = vmatpush1.msra.mxu0 0.0
      %4022 = vmatprep.subr.mxu0 0.0
      %4023 = vmatpush1.msra.mxu0 0.0
      %4024 = vmatprep.subr.mxu0 0.0
      %4025 = vmatpush1.msra.mxu0 0.0
      %4026 = vmatprep.subr.mxu0 0.0
      %4027 = vmatpush1.msra.mxu0 0.0
      %4028 = vmatprep.subr.mxu0 0.0
      %4029 = vmatpush1.msra.mxu0 0.0
      %4030 = vmatprep.subr.mxu0 0.0
      %4031 = vmatpush1.msra.mxu0 0.0
      %4032 = vmatprep.subr.mxu0 0.0
      %4033 = vmatpush1.msra.mxu0 0.0
      %4034 = vmatprep.subr.mxu0 0.0
      %4035 = vmatpush1.msra.mxu0 0.0
      %4036 = vmatprep.subr.mxu0 0.0
      %4037 = vmatpush1.msra.mxu0 0.0
      %4038 = vmatprep.subr.mxu0 0.0
      %4039 = vmatpush1.msra.mxu0 0.0
      %4040 = vmatprep.subr.mxu0 0.0
      %4041 = vmatpush1.msra.mxu0 0.0
      %4042 = vmatprep.mubr.f32.mxu0 0.0
      %4043 = vmatmul.mubr.f32.gmra.mrb[0].mxu0 %v987
      %v4044 = vpop.f32.mrb[0].mxu0
      %v4045 = vadd.f32 0.0, %v4044
      %v4046 = vpop.f32.mrb[0].mxu0
      %v4047 = vadd.f32 0.0, %v4046
      %4048 = vdwg.mxu0
      %4049 = vmatprep.subr.mxu0 %v3971
      %4050 = vmatpush1.msra.mxu0 %v3970
      %4051 = vmatprep.subr.mxu0 0.0
      %4052 = vmatpush1.msra.mxu0 0.0
      %4053 = vmatprep.subr.mxu0 0.0
      %4054 = vmatpush1.msra.mxu0 0.0
      %4055 = vmatprep.subr.mxu0 0.0
      %4056 = vmatpush1.msra.mxu0 0.0
      %4057 = vmatprep.subr.mxu0 0.0
      %4058 = vmatpush1.msra.mxu0 0.0
      %4059 = vmatprep.subr.mxu0 0.0
      %4060 = vmatpush1.msra.mxu0 0.0
      %4061 = vmatprep.subr.mxu0 0.0
      %4062 = vmatpush1.msra.mxu0 0.0
      %4063 = vmatprep.subr.mxu0 0.0
      %4064 = vmatpush1.msra.mxu0 0.0
      %4065 = vmatprep.subr.mxu0 0.0
      %4066 = vmatpush1.msra.mxu0 0.0
      %4067 = vmatprep.subr.mxu0 0.0
      %4068 = vmatpush1.msra.mxu0 0.0
      %4069 = vmatprep.subr.mxu0 0.0
      %4070 = vmatpush1.msra.mxu0 0.0
      %4071 = vmatprep.subr.mxu0 0.0
      %4072 = vmatpush1.msra.mxu0 0.0
      %4073 = vmatprep.subr.mxu0 0.0
      %4074 = vmatpush1.msra.mxu0 0.0
      %4075 = vmatprep.subr.mxu0 0.0
      %4076 = vmatpush1.msra.mxu0 0.0
      %4077 = vmatprep.subr.mxu0 0.0
      %4078 = vmatpush1.msra.mxu0 0.0
      %4079 = vmatprep.subr.mxu0 0.0
      %4080 = vmatpush1.msra.mxu0 0.0
      %4081 = vmatprep.subr.mxu0 0.0
      %4082 = vmatpush1.msra.mxu0 0.0
      %4083 = vmatprep.subr.mxu0 0.0
      %4084 = vmatpush1.msra.mxu0 0.0
      %4085 = vmatprep.subr.mxu0 0.0
      %4086 = vmatpush1.msra.mxu0 0.0
      %4087 = vmatprep.subr.mxu0 0.0
      %4088 = vmatpush1.msra.mxu0 0.0
      %4089 = vmatprep.subr.mxu0 0.0
      %4090 = vmatpush1.msra.mxu0 0.0
      %4091 = vmatprep.subr.mxu0 0.0
      %4092 = vmatpush1.msra.mxu0 0.0
      %4093 = vmatprep.subr.mxu0 0.0
      %4094 = vmatpush1.msra.mxu0 0.0
      %4095 = vmatprep.subr.mxu0 0.0
      %4096 = vmatpush1.msra.mxu0 0.0
      %4097 = vmatprep.subr.mxu0 0.0
      %4098 = vmatpush1.msra.mxu0 0.0
      %4099 = vmatprep.subr.mxu0 0.0
      %4100 = vmatpush1.msra.mxu0 0.0
      %4101 = vmatprep.subr.mxu0 0.0
      %4102 = vmatpush1.msra.mxu0 0.0
      %4103 = vmatprep.subr.mxu0 0.0
      %4104 = vmatpush1.msra.mxu0 0.0
      %4105 = vmatprep.subr.mxu0 0.0
      %4106 = vmatpush1.msra.mxu0 0.0
      %4107 = vmatprep.subr.mxu0 0.0
      %4108 = vmatpush1.msra.mxu0 0.0
      %4109 = vmatprep.subr.mxu0 0.0
      %4110 = vmatpush1.msra.mxu0 0.0
      %4111 = vmatprep.subr.mxu0 0.0
      %4112 = vmatpush1.msra.mxu0 0.0
      %4113 = vmatprep.mubr.f32.mxu0 0.0
      %4114 = vmatmul.mubr.f32.gmra.mrb[0].mxu0 %v1061
      %v4115 = vpop.f32.mrb[0].mxu0
      %v4116 = vadd.f32 %v4045, %v4115
      %v4117 = vpop.f32.mrb[0].mxu0
      %v4118 = vadd.f32 %v4047, %v4117
      %4119 = vdwg.mxu0
      %4120 = vrot.lane.b32.xlu0 %v3970, 126
      %v4121 = vpop.permute.xlu0 %4120
      %4122 = vrot.lane.b32.xlu0 %v3971, 126
      %v4123 = vpop.permute.xlu0 %4122
      %v4124 = vsel %vm367, %v4121, %v4123
      %v4125 = vsel %vm367, %v4123, %v4121
      %4126 = vmatprep.subr.mxu0 %v4125
      %4127 = vmatpush1.msra.mxu0 %v4124
      %4128 = vmatprep.subr.mxu0 0.0
      %4129 = vmatpush1.msra.mxu0 0.0
      %4130 = vmatprep.subr.mxu0 0.0
      %4131 = vmatpush1.msra.mxu0 0.0
      %4132 = vmatprep.subr.mxu0 0.0
      %4133 = vmatpush1.msra.mxu0 0.0
      %4134 = vmatprep.subr.mxu0 0.0
      %4135 = vmatpush1.msra.mxu0 0.0
      %4136 = vmatprep.subr.mxu0 0.0
      %4137 = vmatpush1.msra.mxu0 0.0
      %4138 = vmatprep.subr.mxu0 0.0
      %4139 = vmatpush1.msra.mxu0 0.0
      %4140 = vmatprep.subr.mxu0 0.0
      %4141 = vmatpush1.msra.mxu0 0.0
      %4142 = vmatprep.subr.mxu0 0.0
      %4143 = vmatpush1.msra.mxu0 0.0
      %4144 = vmatprep.subr.mxu0 0.0
      %4145 = vmatpush1.msra.mxu0 0.0
      %4146 = vmatprep.subr.mxu0 0.0
      %4147 = vmatpush1.msra.mxu0 0.0
      %4148 = vmatprep.subr.mxu0 0.0
      %4149 = vmatpush1.msra.mxu0 0.0
      %4150 = vmatprep.subr.mxu0 0.0
      %4151 = vmatpush1.msra.mxu0 0.0
      %4152 = vmatprep.subr.mxu0 0.0
      %4153 = vmatpush1.msra.mxu0 0.0
      %4154 = vmatprep.subr.mxu0 0.0
      %4155 = vmatpush1.msra.mxu0 0.0
      %4156 = vmatprep.subr.mxu0 0.0
      %4157 = vmatpush1.msra.mxu0 0.0
      %4158 = vmatprep.subr.mxu0 0.0
      %4159 = vmatpush1.msra.mxu0 0.0
      %4160 = vmatprep.subr.mxu0 0.0
      %4161 = vmatpush1.msra.mxu0 0.0
      %4162 = vmatprep.subr.mxu0 0.0
      %4163 = vmatpush1.msra.mxu0 0.0
      %4164 = vmatprep.subr.mxu0 0.0
      %4165 = vmatpush1.msra.mxu0 0.0
      %4166 = vmatprep.subr.mxu0 0.0
      %4167 = vmatpush1.msra.mxu0 0.0
      %4168 = vmatprep.subr.mxu0 0.0
      %4169 = vmatpush1.msra.mxu0 0.0
      %4170 = vmatprep.subr.mxu0 0.0
      %4171 = vmatpush1.msra.mxu0 0.0
      %4172 = vmatprep.subr.mxu0 0.0
      %4173 = vmatpush1.msra.mxu0 0.0
      %4174 = vmatprep.subr.mxu0 0.0
      %4175 = vmatpush1.msra.mxu0 0.0
      %4176 = vmatprep.subr.mxu0 0.0
      %4177 = vmatpush1.msra.mxu0 0.0
      %4178 = vmatprep.subr.mxu0 0.0
      %4179 = vmatpush1.msra.mxu0 0.0
      %4180 = vmatprep.subr.mxu0 0.0
      %4181 = vmatpush1.msra.mxu0 0.0
      %4182 = vmatprep.subr.mxu0 0.0
      %4183 = vmatpush1.msra.mxu0 0.0
      %4184 = vmatprep.subr.mxu0 0.0
      %4185 = vmatpush1.msra.mxu0 0.0
      %4186 = vmatprep.subr.mxu0 0.0
      %4187 = vmatpush1.msra.mxu0 0.0
      %4188 = vmatprep.subr.mxu0 0.0
      %4189 = vmatpush1.msra.mxu0 0.0
      %4190 = vmatprep.mubr.f32.mxu0 0.0
      %4191 = vmatmul.mubr.f32.gmra.mrb[0].mxu0 %v1143
      %v4192 = vpop.f32.mrb[0].mxu0
      %v4193 = vadd.f32 0.0, %v4192
      %v4194 = vpop.f32.mrb[0].mxu0
      %v4195 = vadd.f32 0.0, %v4194
      %4196 = vdwg.mxu0
      %v4197 = vadd.f32 %v4116, %v4193
      %v4198 = vadd.f32 %v4118, %v4195
      %4199 = vrot.lane.b32.xlu0 %v3970, 112
      %v4200 = vpop.permute.xlu0 %4199
      %4201 = vrot.lane.b32.xlu0 %v3971, 112
      %v4202 = vpop.permute.xlu0 %4201
      %v4203 = vsel %vm452, %v4200, %v4202
      %v4204 = vsel %vm452, %v4202, %v4200
      %4205 = vmatprep.subr.mxu0 %v4204
      %4206 = vmatpush1.msra.mxu0 %v4203
      %4207 = vmatprep.subr.mxu0 0.0
      %4208 = vmatpush1.msra.mxu0 0.0
      %4209 = vmatprep.subr.mxu0 0.0
      %4210 = vmatpush1.msra.mxu0 0.0
      %4211 = vmatprep.subr.mxu0 0.0
      %4212 = vmatpush1.msra.mxu0 0.0
      %4213 = vmatprep.subr.mxu0 0.0
      %4214 = vmatpush1.msra.mxu0 0.0
      %4215 = vmatprep.subr.mxu0 0.0
      %4216 = vmatpush1.msra.mxu0 0.0
      %4217 = vmatprep.subr.mxu0 0.0
      %4218 = vmatpush1.msra.mxu0 0.0
      %4219 = vmatprep.subr.mxu0 0.0
      %4220 = vmatpush1.msra.mxu0 0.0
      %4221 = vmatprep.subr.mxu0 0.0
      %4222 = vmatpush1.msra.mxu0 0.0
      %4223 = vmatprep.subr.mxu0 0.0
      %4224 = vmatpush1.msra.mxu0 0.0
      %4225 = vmatprep.subr.mxu0 0.0
      %4226 = vmatpush1.msra.mxu0 0.0
      %4227 = vmatprep.subr.mxu0 0.0
      %4228 = vmatpush1.msra.mxu0 0.0
      %4229 = vmatprep.subr.mxu0 0.0
      %4230 = vmatpush1.msra.mxu0 0.0
      %4231 = vmatprep.subr.mxu0 0.0
      %4232 = vmatpush1.msra.mxu0 0.0
      %4233 = vmatprep.subr.mxu0 0.0
      %4234 = vmatpush1.msra.mxu0 0.0
      %4235 = vmatprep.subr.mxu0 0.0
      %4236 = vmatpush1.msra.mxu0 0.0
      %4237 = vmatprep.subr.mxu0 0.0
      %4238 = vmatpush1.msra.mxu0 0.0
      %4239 = vmatprep.subr.mxu0 0.0
      %4240 = vmatpush1.msra.mxu0 0.0
      %4241 = vmatprep.subr.mxu0 0.0
      %4242 = vmatpush1.msra.mxu0 0.0
      %4243 = vmatprep.subr.mxu0 0.0
      %4244 = vmatpush1.msra.mxu0 0.0
      %4245 = vmatprep.subr.mxu0 0.0
      %4246 = vmatpush1.msra.mxu0 0.0
      %4247 = vmatprep.subr.mxu0 0.0
      %4248 = vmatpush1.msra.mxu0 0.0
      %4249 = vmatprep.subr.mxu0 0.0
      %4250 = vmatpush1.msra.mxu0 0.0
      %4251 = vmatprep.subr.mxu0 0.0
      %4252 = vmatpush1.msra.mxu0 0.0
      %4253 = vmatprep.subr.mxu0 0.0
      %4254 = vmatpush1.msra.mxu0 0.0
      %4255 = vmatprep.subr.mxu0 0.0
      %4256 = vmatpush1.msra.mxu0 0.0
      %4257 = vmatprep.subr.mxu0 0.0
      %4258 = vmatpush1.msra.mxu0 0.0
      %4259 = vmatprep.subr.mxu0 0.0
      %4260 = vmatpush1.msra.mxu0 0.0
      %4261 = vmatprep.subr.mxu0 0.0
      %4262 = vmatpush1.msra.mxu0 0.0
      %4263 = vmatprep.subr.mxu0 0.0
      %4264 = vmatpush1.msra.mxu0 0.0
      %4265 = vmatprep.subr.mxu0 0.0
      %4266 = vmatpush1.msra.mxu0 0.0
      %4267 = vmatprep.subr.mxu0 0.0
      %4268 = vmatpush1.msra.mxu0 0.0
      %4269 = vmatprep.mubr.f32.mxu0 0.0
      %4270 = vmatmul.mubr.f32.gmra.mrb[0].mxu0 %v1227
      %v4271 = vpop.f32.mrb[0].mxu0
      %v4272 = vadd.f32 0.0, %v4271
      %v4273 = vpop.f32.mrb[0].mxu0
      %v4274 = vadd.f32 0.0, %v4273
      %4275 = vdwg.mxu0
      %v4276 = vadd.f32 %v4197, %v4272
      %v4277 = vadd.f32 %v4198, %v4274
      %4278 = vrot.lane.b32.xlu0 %v3970, 111
      %v4279 = vpop.permute.xlu0 %4278
      %4280 = vrot.lane.b32.xlu0 %v3971, 111
      %v4281 = vpop.permute.xlu0 %4280
      %v4282 = vsel %vm537, %v4279, %v4281
      %v4283 = vsel %vm537, %v4281, %v4279
      %4284 = vmatprep.subr.mxu0 %v4283
      %4285 = vmatpush1.msra.mxu0 %v4282
      %4286 = vmatprep.subr.mxu0 0.0
      %4287 = vmatpush1.msra.mxu0 0.0
      %4288 = vmatprep.subr.mxu0 0.0
      %4289 = vmatpush1.msra.mxu0 0.0
      %4290 = vmatprep.subr.mxu0 0.0
      %4291 = vmatpush1.msra.mxu0 0.0
      %4292 = vmatprep.subr.mxu0 0.0
      %4293 = vmatpush1.msra.mxu0 0.0
      %4294 = vmatprep.subr.mxu0 0.0
      %4295 = vmatpush1.msra.mxu0 0.0
      %4296 = vmatprep.subr.mxu0 0.0
      %4297 = vmatpush1.msra.mxu0 0.0
      %4298 = vmatprep.subr.mxu0 0.0
      %4299 = vmatpush1.msra.mxu0 0.0
      %4300 = vmatprep.subr.mxu0 0.0
      %4301 = vmatpush1.msra.mxu0 0.0
      %4302 = vmatprep.subr.mxu0 0.0
      %4303 = vmatpush1.msra.mxu0 0.0
      %4304 = vmatprep.subr.mxu0 0.0
      %4305 = vmatpush1.msra.mxu0 0.0
      %4306 = vmatprep.subr.mxu0 0.0
      %4307 = vmatpush1.msra.mxu0 0.0
      %4308 = vmatprep.subr.mxu0 0.0
      %4309 = vmatpush1.msra.mxu0 0.0
      %4310 = vmatprep.subr.mxu0 0.0
      %4311 = vmatpush1.msra.mxu0 0.0
      %4312 = vmatprep.subr.mxu0 0.0
      %4313 = vmatpush1.msra.mxu0 0.0
      %4314 = vmatprep.subr.mxu0 0.0
      %4315 = vmatpush1.msra.mxu0 0.0
      %4316 = vmatprep.subr.mxu0 0.0
      %4317 = vmatpush1.msra.mxu0 0.0
      %4318 = vmatprep.subr.mxu0 0.0
      %4319 = vmatpush1.msra.mxu0 0.0
      %4320 = vmatprep.subr.mxu0 0.0
      %4321 = vmatpush1.msra.mxu0 0.0
      %4322 = vmatprep.subr.mxu0 0.0
      %4323 = vmatpush1.msra.mxu0 0.0
      %4324 = vmatprep.subr.mxu0 0.0
      %4325 = vmatpush1.msra.mxu0 0.0
      %4326 = vmatprep.subr.mxu0 0.0
      %4327 = vmatpush1.msra.mxu0 0.0
      %4328 = vmatprep.subr.mxu0 0.0
      %4329 = vmatpush1.msra.mxu0 0.0
      %4330 = vmatprep.subr.mxu0 0.0
      %4331 = vmatpush1.msra.mxu0 0.0
      %4332 = vmatprep.subr.mxu0 0.0
      %4333 = vmatpush1.msra.mxu0 0.0
      %4334 = vmatprep.subr.mxu0 0.0
      %4335 = vmatpush1.msra.mxu0 0.0
      %4336 = vmatprep.subr.mxu0 0.0
      %4337 = vmatpush1.msra.mxu0 0.0
      %4338 = vmatprep.subr.mxu0 0.0
      %4339 = vmatpush1.msra.mxu0 0.0
      %4340 = vmatprep.subr.mxu0 0.0
      %4341 = vmatpush1.msra.mxu0 0.0
      %4342 = vmatprep.subr.mxu0 0.0
      %4343 = vmatpush1.msra.mxu0 0.0
      %4344 = vmatprep.subr.mxu0 0.0
      %4345 = vmatpush1.msra.mxu0 0.0
      %4346 = vmatprep.subr.mxu0 0.0
      %4347 = vmatpush1.msra.mxu0 0.0
      %4348 = vmatprep.mubr.f32.mxu0 0.0
      %4349 = vmatmul.mubr.f32.gmra.mrb[0].mxu0 %v1311
      %v4350 = vpop.f32.mrb[0].mxu0
      %v4351 = vadd.f32 0.0, %v4350
      %v4352 = vpop.f32.mrb[0].mxu0
      %v4353 = vadd.f32 0.0, %v4352
      %4354 = vdwg.mxu0
      %v4355 = vadd.f32 %v4276, %v4351
      %v4356 = vadd.f32 %v4277, %v4353
      %4357 = vrot.lane.b32.xlu0 %v3970, 110
      %v4358 = vpop.permute.xlu0 %4357
      %4359 = vrot.lane.b32.xlu0 %v3971, 110
      %v4360 = vpop.permute.xlu0 %4359
      %v4361 = vsel %vm622, %v4358, %v4360
      %v4362 = vsel %vm622, %v4360, %v4358
      %4363 = vmatprep.subr.mxu0 %v4362
      %4364 = vmatpush1.msra.mxu0 %v4361
      %4365 = vmatprep.subr.mxu0 0.0
      %4366 = vmatpush1.msra.mxu0 0.0
      %4367 = vmatprep.subr.mxu0 0.0
      %4368 = vmatpush1.msra.mxu0 0.0
      %4369 = vmatprep.subr.mxu0 0.0
      %4370 = vmatpush1.msra.mxu0 0.0
      %4371 = vmatprep.subr.mxu0 0.0
      %4372 = vmatpush1.msra.mxu0 0.0
      %4373 = vmatprep.subr.mxu0 0.0
      %4374 = vmatpush1.msra.mxu0 0.0
      %4375 = vmatprep.subr.mxu0 0.0
      %4376 = vmatpush1.msra.mxu0 0.0
      %4377 = vmatprep.subr.mxu0 0.0
      %4378 = vmatpush1.msra.mxu0 0.0
      %4379 = vmatprep.subr.mxu0 0.0
      %4380 = vmatpush1.msra.mxu0 0.0
      %4381 = vmatprep.subr.mxu0 0.0
      %4382 = vmatpush1.msra.mxu0 0.0
      %4383 = vmatprep.subr.mxu0 0.0
      %4384 = vmatpush1.msra.mxu0 0.0
      %4385 = vmatprep.subr.mxu0 0.0
      %4386 = vmatpush1.msra.mxu0 0.0
      %4387 = vmatprep.subr.mxu0 0.0
      %4388 = vmatpush1.msra.mxu0 0.0
      %4389 = vmatprep.subr.mxu0 0.0
      %4390 = vmatpush1.msra.mxu0 0.0
      %4391 = vmatprep.subr.mxu0 0.0
      %4392 = vmatpush1.msra.mxu0 0.0
      %4393 = vmatprep.subr.mxu0 0.0
      %4394 = vmatpush1.msra.mxu0 0.0
      %4395 = vmatprep.subr.mxu0 0.0
      %4396 = vmatpush1.msra.mxu0 0.0
      %4397 = vmatprep.subr.mxu0 0.0
      %4398 = vmatpush1.msra.mxu0 0.0
      %4399 = vmatprep.subr.mxu0 0.0
      %4400 = vmatpush1.msra.mxu0 0.0
      %4401 = vmatprep.subr.mxu0 0.0
      %4402 = vmatpush1.msra.mxu0 0.0
      %4403 = vmatprep.subr.mxu0 0.0
      %4404 = vmatpush1.msra.mxu0 0.0
      %4405 = vmatprep.subr.mxu0 0.0
      %4406 = vmatpush1.msra.mxu0 0.0
      %4407 = vmatprep.subr.mxu0 0.0
      %4408 = vmatpush1.msra.mxu0 0.0
      %4409 = vmatprep.subr.mxu0 0.0
      %4410 = vmatpush1.msra.mxu0 0.0
      %4411 = vmatprep.subr.mxu0 0.0
      %4412 = vmatpush1.msra.mxu0 0.0
      %4413 = vmatprep.subr.mxu0 0.0
      %4414 = vmatpush1.msra.mxu0 0.0
      %4415 = vmatprep.subr.mxu0 0.0
      %4416 = vmatpush1.msra.mxu0 0.0
      %4417 = vmatprep.subr.mxu0 0.0
      %4418 = vmatpush1.msra.mxu0 0.0
      %4419 = vmatprep.subr.mxu0 0.0
      %4420 = vmatpush1.msra.mxu0 0.0
      %4421 = vmatprep.subr.mxu0 0.0
      %4422 = vmatpush1.msra.mxu0 0.0
      %4423 = vmatprep.subr.mxu0 0.0
      %4424 = vmatpush1.msra.mxu0 0.0
      %4425 = vmatprep.subr.mxu0 0.0
      %4426 = vmatpush1.msra.mxu0 0.0
      %4427 = vmatprep.mubr.f32.mxu0 0.0
      %4428 = vmatmul.mubr.f32.gmra.mrb[0].mxu0 %v1395
      %v4429 = vpop.f32.mrb[0].mxu0
      %v4430 = vadd.f32 0.0, %v4429
      %v4431 = vpop.f32.mrb[0].mxu0
      %v4432 = vadd.f32 0.0, %v4431
      %4433 = vdwg.mxu0
      %v4434 = vadd.f32 %v4355, %v4430
      %v4435 = vadd.f32 %v4356, %v4432
      %4436 = vrot.lane.b32.xlu0 %v3970, 96
      %v4437 = vpop.permute.xlu0 %4436
      %4438 = vrot.lane.b32.xlu0 %v3971, 96
      %v4439 = vpop.permute.xlu0 %4438
      %v4440 = vsel %vm707, %v4437, %v4439
      %v4441 = vsel %vm707, %v4439, %v4437
      %4442 = vmatprep.subr.mxu0 %v4441
      %4443 = vmatpush1.msra.mxu0 %v4440
      %4444 = vmatprep.subr.mxu0 0.0
      %4445 = vmatpush1.msra.mxu0 0.0
      %4446 = vmatprep.subr.mxu0 0.0
      %4447 = vmatpush1.msra.mxu0 0.0
      %4448 = vmatprep.subr.mxu0 0.0
      %4449 = vmatpush1.msra.mxu0 0.0
      %4450 = vmatprep.subr.mxu0 0.0
      %4451 = vmatpush1.msra.mxu0 0.0
      %4452 = vmatprep.subr.mxu0 0.0
      %4453 = vmatpush1.msra.mxu0 0.0
      %4454 = vmatprep.subr.mxu0 0.0
      %4455 = vmatpush1.msra.mxu0 0.0
      %4456 = vmatprep.subr.mxu0 0.0
      %4457 = vmatpush1.msra.mxu0 0.0
      %4458 = vmatprep.subr.mxu0 0.0
      %4459 = vmatpush1.msra.mxu0 0.0
      %4460 = vmatprep.subr.mxu0 0.0
      %4461 = vmatpush1.msra.mxu0 0.0
      %4462 = vmatprep.subr.mxu0 0.0
      %4463 = vmatpush1.msra.mxu0 0.0
      %4464 = vmatprep.subr.mxu0 0.0
      %4465 = vmatpush1.msra.mxu0 0.0
      %4466 = vmatprep.subr.mxu0 0.0
      %4467 = vmatpush1.msra.mxu0 0.0
      %4468 = vmatprep.subr.mxu0 0.0
      %4469 = vmatpush1.msra.mxu0 0.0
      %4470 = vmatprep.subr.mxu0 0.0
      %4471 = vmatpush1.msra.mxu0 0.0
      %4472 = vmatprep.subr.mxu0 0.0
      %4473 = vmatpush1.msra.mxu0 0.0
      %4474 = vmatprep.subr.mxu0 0.0
      %4475 = vmatpush1.msra.mxu0 0.0
      %4476 = vmatprep.subr.mxu0 0.0
      %4477 = vmatpush1.msra.mxu0 0.0
      %4478 = vmatprep.subr.mxu0 0.0
      %4479 = vmatpush1.msra.mxu0 0.0
      %4480 = vmatprep.subr.mxu0 0.0
      %4481 = vmatpush1.msra.mxu0 0.0
      %4482 = vmatprep.subr.mxu0 0.0
      %4483 = vmatpush1.msra.mxu0 0.0
      %4484 = vmatprep.subr.mxu0 0.0
      %4485 = vmatpush1.msra.mxu0 0.0
      %4486 = vmatprep.subr.mxu0 0.0
      %4487 = vmatpush1.msra.mxu0 0.0
      %4488 = vmatprep.subr.mxu0 0.0
      %4489 = vmatpush1.msra.mxu0 0.0
      %4490 = vmatprep.subr.mxu0 0.0
      %4491 = vmatpush1.msra.mxu0 0.0
      %4492 = vmatprep.subr.mxu0 0.0
      %4493 = vmatpush1.msra.mxu0 0.0
      %4494 = vmatprep.subr.mxu0 0.0
      %4495 = vmatpush1.msra.mxu0 0.0
      %4496 = vmatprep.subr.mxu0 0.0
      %4497 = vmatpush1.msra.mxu0 0.0
      %4498 = vmatprep.subr.mxu0 0.0
      %4499 = vmatpush1.msra.mxu0 0.0
      %4500 = vmatprep.subr.mxu0 0.0
      %4501 = vmatpush1.msra.mxu0 0.0
      %4502 = vmatprep.subr.mxu0 0.0
      %4503 = vmatpush1.msra.mxu0 0.0
      %4504 = vmatprep.subr.mxu0 0.0
      %4505 = vmatpush1.msra.mxu0 0.0
      %4506 = vmatprep.mubr.f32.mxu0 0.0
      %4507 = vmatmul.mubr.f32.gmra.mrb[0].mxu0 %v1479
      %v4508 = vpop.f32.mrb[0].mxu0
      %v4509 = vadd.f32 0.0, %v4508
      %v4510 = vpop.f32.mrb[0].mxu0
      %v4511 = vadd.f32 0.0, %v4510
      %4512 = vdwg.mxu0
      %v4513 = vadd.f32 %v4434, %v4509
      %v4514 = vadd.f32 %v4435, %v4511
      %4515 = vrot.lane.b32.xlu0 %v3970, 95
      %v4516 = vpop.permute.xlu0 %4515
      %4517 = vrot.lane.b32.xlu0 %v3971, 95
      %v4518 = vpop.permute.xlu0 %4517
      %v4519 = vsel %vm792, %v4516, %v4518
      %v4520 = vsel %vm792, %v4518, %v4516
      %4521 = vmatprep.subr.mxu0 %v4520
      %4522 = vmatpush1.msra.mxu0 %v4519
      %4523 = vmatprep.subr.mxu0 0.0
      %4524 = vmatpush1.msra.mxu0 0.0
      %4525 = vmatprep.subr.mxu0 0.0
      %4526 = vmatpush1.msra.mxu0 0.0
      %4527 = vmatprep.subr.mxu0 0.0
      %4528 = vmatpush1.msra.mxu0 0.0
      %4529 = vmatprep.subr.mxu0 0.0
      %4530 = vmatpush1.msra.mxu0 0.0
      %4531 = vmatprep.subr.mxu0 0.0
      %4532 = vmatpush1.msra.mxu0 0.0
      %4533 = vmatprep.subr.mxu0 0.0
      %4534 = vmatpush1.msra.mxu0 0.0
      %4535 = vmatprep.subr.mxu0 0.0
      %4536 = vmatpush1.msra.mxu0 0.0
      %4537 = vmatprep.subr.mxu0 0.0
      %4538 = vmatpush1.msra.mxu0 0.0
      %4539 = vmatprep.subr.mxu0 0.0
      %4540 = vmatpush1.msra.mxu0 0.0
      %4541 = vmatprep.subr.mxu0 0.0
      %4542 = vmatpush1.msra.mxu0 0.0
      %4543 = vmatprep.subr.mxu0 0.0
      %4544 = vmatpush1.msra.mxu0 0.0
      %4545 = vmatprep.subr.mxu0 0.0
      %4546 = vmatpush1.msra.mxu0 0.0
      %4547 = vmatprep.subr.mxu0 0.0
      %4548 = vmatpush1.msra.mxu0 0.0
      %4549 = vmatprep.subr.mxu0 0.0
      %4550 = vmatpush1.msra.mxu0 0.0
      %4551 = vmatprep.subr.mxu0 0.0
      %4552 = vmatpush1.msra.mxu0 0.0
      %4553 = vmatprep.subr.mxu0 0.0
      %4554 = vmatpush1.msra.mxu0 0.0
      %4555 = vmatprep.subr.mxu0 0.0
      %4556 = vmatpush1.msra.mxu0 0.0
      %4557 = vmatprep.subr.mxu0 0.0
      %4558 = vmatpush1.msra.mxu0 0.0
      %4559 = vmatprep.subr.mxu0 0.0
      %4560 = vmatpush1.msra.mxu0 0.0
      %4561 = vmatprep.subr.mxu0 0.0
      %4562 = vmatpush1.msra.mxu0 0.0
      %4563 = vmatprep.subr.mxu0 0.0
      %4564 = vmatpush1.msra.mxu0 0.0
      %4565 = vmatprep.subr.mxu0 0.0
      %4566 = vmatpush1.msra.mxu0 0.0
      %4567 = vmatprep.subr.mxu0 0.0
      %4568 = vmatpush1.msra.mxu0 0.0
      %4569 = vmatprep.subr.mxu0 0.0
      %4570 = vmatpush1.msra.mxu0 0.0
      %4571 = vmatprep.subr.mxu0 0.0
      %4572 = vmatpush1.msra.mxu0 0.0
      %4573 = vmatprep.subr.mxu0 0.0
      %4574 = vmatpush1.msra.mxu0 0.0
      %4575 = vmatprep.subr.mxu0 0.0
      %4576 = vmatpush1.msra.mxu0 0.0
      %4577 = vmatprep.subr.mxu0 0.0
      %4578 = vmatpush1.msra.mxu0 0.0
      %4579 = vmatprep.subr.mxu0 0.0
      %4580 = vmatpush1.msra.mxu0 0.0
      %4581 = vmatprep.subr.mxu0 0.0
      %4582 = vmatpush1.msra.mxu0 0.0
      %4583 = vmatprep.subr.mxu0 0.0
      %4584 = vmatpush1.msra.mxu0 0.0
      %4585 = vmatprep.mubr.f32.mxu0 0.0
      %4586 = vmatmul.mubr.f32.gmra.mrb[0].mxu0 %v1563
      %v4587 = vpop.f32.mrb[0].mxu0
      %v4588 = vadd.f32 0.0, %v4587
      %v4589 = vpop.f32.mrb[0].mxu0
      %v4590 = vadd.f32 0.0, %v4589
      %4591 = vdwg.mxu0
      %v4592 = vadd.f32 %v4513, %v4588
      %v4593 = vadd.f32 %v4514, %v4590
      %4594 = vrot.lane.b32.xlu0 %v3970, 94
      %v4595 = vpop.permute.xlu0 %4594
      %4596 = vrot.lane.b32.xlu0 %v3971, 94
      %v4597 = vpop.permute.xlu0 %4596
      %v4598 = vsel %vm877, %v4595, %v4597
      %v4599 = vsel %vm877, %v4597, %v4595
      %4600 = vmatprep.subr.mxu0 %v4599
      %4601 = vmatpush1.msra.mxu0 %v4598
      %4602 = vmatprep.subr.mxu0 0.0
      %4603 = vmatpush1.msra.mxu0 0.0
      %4604 = vmatprep.subr.mxu0 0.0
      %4605 = vmatpush1.msra.mxu0 0.0
      %4606 = vmatprep.subr.mxu0 0.0
      %4607 = vmatpush1.msra.mxu0 0.0
      %4608 = vmatprep.subr.mxu0 0.0
      %4609 = vmatpush1.msra.mxu0 0.0
      %4610 = vmatprep.subr.mxu0 0.0
      %4611 = vmatpush1.msra.mxu0 0.0
      %4612 = vmatprep.subr.mxu0 0.0
      %4613 = vmatpush1.msra.mxu0 0.0
      %4614 = vmatprep.subr.mxu0 0.0
      %4615 = vmatpush1.msra.mxu0 0.0
      %4616 = vmatprep.subr.mxu0 0.0
      %4617 = vmatpush1.msra.mxu0 0.0
      %4618 = vmatprep.subr.mxu0 0.0
      %4619 = vmatpush1.msra.mxu0 0.0
      %4620 = vmatprep.subr.mxu0 0.0
      %4621 = vmatpush1.msra.mxu0 0.0
      %4622 = vmatprep.subr.mxu0 0.0
      %4623 = vmatpush1.msra.mxu0 0.0
      %4624 = vmatprep.subr.mxu0 0.0
      %4625 = vmatpush1.msra.mxu0 0.0
      %4626 = vmatprep.subr.mxu0 0.0
      %4627 = vmatpush1.msra.mxu0 0.0
      %4628 = vmatprep.subr.mxu0 0.0
      %4629 = vmatpush1.msra.mxu0 0.0
      %4630 = vmatprep.subr.mxu0 0.0
      %4631 = vmatpush1.msra.mxu0 0.0
      %4632 = vmatprep.subr.mxu0 0.0
      %4633 = vmatpush1.msra.mxu0 0.0
      %4634 = vmatprep.subr.mxu0 0.0
      %4635 = vmatpush1.msra.mxu0 0.0
      %4636 = vmatprep.subr.mxu0 0.0
      %4637 = vmatpush1.msra.mxu0 0.0
      %4638 = vmatprep.subr.mxu0 0.0
      %4639 = vmatpush1.msra.mxu0 0.0
      %4640 = vmatprep.subr.mxu0 0.0
      %4641 = vmatpush1.msra.mxu0 0.0
      %4642 = vmatprep.subr.mxu0 0.0
      %4643 = vmatpush1.msra.mxu0 0.0
      %4644 = vmatprep.subr.mxu0 0.0
      %4645 = vmatpush1.msra.mxu0 0.0
      %4646 = vmatprep.subr.mxu0 0.0
      %4647 = vmatpush1.msra.mxu0 0.0
      %4648 = vmatprep.subr.mxu0 0.0
      %4649 = vmatpush1.msra.mxu0 0.0
      %4650 = vmatprep.subr.mxu0 0.0
      %4651 = vmatpush1.msra.mxu0 0.0
      %4652 = vmatprep.subr.mxu0 0.0
      %4653 = vmatpush1.msra.mxu0 0.0
      %4654 = vmatprep.subr.mxu0 0.0
      %4655 = vmatpush1.msra.mxu0 0.0
      %4656 = vmatprep.subr.mxu0 0.0
      %4657 = vmatpush1.msra.mxu0 0.0
      %4658 = vmatprep.subr.mxu0 0.0
      %4659 = vmatpush1.msra.mxu0 0.0
      %4660 = vmatprep.subr.mxu0 0.0
      %4661 = vmatpush1.msra.mxu0 0.0
      %4662 = vmatprep.subr.mxu0 0.0
      %4663 = vmatpush1.msra.mxu0 0.0
      %4664 = vmatprep.mubr.f32.mxu0 0.0
      %4665 = vmatmul.mubr.f32.gmra.mrb[0].mxu0 %v1647
      %v4666 = vpop.f32.mrb[0].mxu0
      %v4667 = vadd.f32 0.0, %v4666
      %v4668 = vpop.f32.mrb[0].mxu0
      %v4669 = vadd.f32 0.0, %v4668
      %4670 = vdwg.mxu0
      %v4671 = vadd.f32 %v4592, %v4667
      %v4672 = vadd.f32 %v4593, %v4669
      %v4673 = vmul.f32 %v4671, %v1725
      %v4674 = vmul.f32 %v4672, %v1725
      %v4675 = vadd.f32 %v4673, %v1732
      %v4676 = vadd.f32 %v4674, %v1732
      %4677 = vrot.lane.b32.xlu0 %v4675, 127
      %v4678 = vpop.permute.xlu0 %4677
      %4679 = vrot.lane.b32.xlu0 %v4676, 127
      %v4680 = vpop.permute.xlu0 %4679
      %v4681 = vsel %vm209, %v4678, %v4680
      %v4682 = vsel %vm209, %v4680, %v4678
      %4683 = vmatprep.subr.mxu0 %v4682
      %4684 = vmatpush1.msra.mxu0 %v4681
      %4685 = vmatprep.subr.mxu0 0.0
      %4686 = vmatpush1.msra.mxu0 0.0
      %4687 = vmatprep.subr.mxu0 0.0
      %4688 = vmatpush1.msra.mxu0 0.0
      %4689 = vmatprep.subr.mxu0 0.0
      %4690 = vmatpush1.msra.mxu0 0.0
      %4691 = vmatprep.subr.mxu0 0.0
      %4692 = vmatpush1.msra.mxu0 0.0
      %4693 = vmatprep.subr.mxu0 0.0
      %4694 = vmatpush1.msra.mxu0 0.0
      %4695 = vmatprep.subr.mxu0 0.0
      %4696 = vmatpush1.msra.mxu0 0.0
      %4697 = vmatprep.subr.mxu0 0.0
      %4698 = vmatpush1.msra.mxu0 0.0
      %4699 = vmatprep.subr.mxu0 0.0
      %4700 = vmatpush1.msra.mxu0 0.0
      %4701 = vmatprep.subr.mxu0 0.0
      %4702 = vmatpush1.msra.mxu0 0.0
      %4703 = vmatprep.subr.mxu0 0.0
      %4704 = vmatpush1.msra.mxu0 0.0
      %4705 = vmatprep.subr.mxu0 0.0
      %4706 = vmatpush1.msra.mxu0 0.0
      %4707 = vmatprep.subr.mxu0 0.0
      %4708 = vmatpush1.msra.mxu0 0.0
      %4709 = vmatprep.subr.mxu0 0.0
      %4710 = vmatpush1.msra.mxu0 0.0
      %4711 = vmatprep.subr.mxu0 0.0
      %4712 = vmatpush1.msra.mxu0 0.0
      %4713 = vmatprep.subr.mxu0 0.0
      %4714 = vmatpush1.msra.mxu0 0.0
      %4715 = vmatprep.subr.mxu0 0.0
      %4716 = vmatpush1.msra.mxu0 0.0
      %4717 = vmatprep.subr.mxu0 0.0
      %4718 = vmatpush1.msra.mxu0 0.0
      %4719 = vmatprep.subr.mxu0 0.0
      %4720 = vmatpush1.msra.mxu0 0.0
      %4721 = vmatprep.subr.mxu0 0.0
      %4722 = vmatpush1.msra.mxu0 0.0
      %4723 = vmatprep.subr.mxu0 0.0
      %4724 = vmatpush1.msra.mxu0 0.0
      %4725 = vmatprep.subr.mxu0 0.0
      %4726 = vmatpush1.msra.mxu0 0.0
      %4727 = vmatprep.subr.mxu0 0.0
      %4728 = vmatpush1.msra.mxu0 0.0
      %4729 = vmatprep.subr.mxu0 0.0
      %4730 = vmatpush1.msra.mxu0 0.0
      %4731 = vmatprep.subr.mxu0 0.0
      %4732 = vmatpush1.msra.mxu0 0.0
      %4733 = vmatprep.subr.mxu0 0.0
      %4734 = vmatpush1.msra.mxu0 0.0
      %4735 = vmatprep.subr.mxu0 0.0
      %4736 = vmatpush1.msra.mxu0 0.0
      %4737 = vmatprep.subr.mxu0 0.0
      %4738 = vmatpush1.msra.mxu0 0.0
      %4739 = vmatprep.subr.mxu0 0.0
      %4740 = vmatpush1.msra.mxu0 0.0
      %4741 = vmatprep.subr.mxu0 0.0
      %4742 = vmatpush1.msra.mxu0 0.0
      %4743 = vmatprep.subr.mxu0 0.0
      %4744 = vmatpush1.msra.mxu0 0.0
      %4745 = vmatprep.subr.mxu0 0.0
      %4746 = vmatpush1.msra.mxu0 0.0
      %4747 = vmatprep.mubr.f32.mxu0 0.0
      %4748 = vmatmul.mubr.f32.gmra.mrb[0].mxu0 %v1751
      %v4749 = vpop.f32.mrb[0].mxu0
      %v4750 = vadd.f32 0.0, %v4749
      %v4751 = vpop.f32.mrb[0].mxu0
      %v4752 = vadd.f32 0.0, %v4751
      %4753 = vdwg.mxu0
      %4754 = vmatprep.subr.mxu0 %v4676
      %4755 = vmatpush1.msra.mxu0 %v4675
      %4756 = vmatprep.subr.mxu0 0.0
      %4757 = vmatpush1.msra.mxu0 0.0
      %4758 = vmatprep.subr.mxu0 0.0
      %4759 = vmatpush1.msra.mxu0 0.0
      %4760 = vmatprep.subr.mxu0 0.0
      %4761 = vmatpush1.msra.mxu0 0.0
      %4762 = vmatprep.subr.mxu0 0.0
      %4763 = vmatpush1.msra.mxu0 0.0
      %4764 = vmatprep.subr.mxu0 0.0
      %4765 = vmatpush1.msra.mxu0 0.0
      %4766 = vmatprep.subr.mxu0 0.0
      %4767 = vmatpush1.msra.mxu0 0.0
      %4768 = vmatprep.subr.mxu0 0.0
      %4769 = vmatpush1.msra.mxu0 0.0
      %4770 = vmatprep.subr.mxu0 0.0
      %4771 = vmatpush1.msra.mxu0 0.0
      %4772 = vmatprep.subr.mxu0 0.0
      %4773 = vmatpush1.msra.mxu0 0.0
      %4774 = vmatprep.subr.mxu0 0.0
      %4775 = vmatpush1.msra.mxu0 0.0
      %4776 = vmatprep.subr.mxu0 0.0
      %4777 = vmatpush1.msra.mxu0 0.0
      %4778 = vmatprep.subr.mxu0 0.0
      %4779 = vmatpush1.msra.mxu0 0.0
      %4780 = vmatprep.subr.mxu0 0.0
      %4781 = vmatpush1.msra.mxu0 0.0
      %4782 = vmatprep.subr.mxu0 0.0
      %4783 = vmatpush1.msra.mxu0 0.0
      %4784 = vmatprep.subr.mxu0 0.0
      %4785 = vmatpush1.msra.mxu0 0.0
      %4786 = vmatprep.subr.mxu0 0.0
      %4787 = vmatpush1.msra.mxu0 0.0
      %4788 = vmatprep.subr.mxu0 0.0
      %4789 = vmatpush1.msra.mxu0 0.0
      %4790 = vmatprep.subr.mxu0 0.0
      %4791 = vmatpush1.msra.mxu0 0.0
      %4792 = vmatprep.subr.mxu0 0.0
      %4793 = vmatpush1.msra.mxu0 0.0
      %4794 = vmatprep.subr.mxu0 0.0
      %4795 = vmatpush1.msra.mxu0 0.0
      %4796 = vmatprep.subr.mxu0 0.0
      %4797 = vmatpush1.msra.mxu0 0.0
      %4798 = vmatprep.subr.mxu0 0.0
      %4799 = vmatpush1.msra.mxu0 0.0
      %4800 = vmatprep.subr.mxu0 0.0
      %4801 = vmatpush1.msra.mxu0 0.0
      %4802 = vmatprep.subr.mxu0 0.0
      %4803 = vmatpush1.msra.mxu0 0.0
      %4804 = vmatprep.subr.mxu0 0.0
      %4805 = vmatpush1.msra.mxu0 0.0
      %4806 = vmatprep.subr.mxu0 0.0
      %4807 = vmatpush1.msra.mxu0 0.0
      %4808 = vmatprep.subr.mxu0 0.0
      %4809 = vmatpush1.msra.mxu0 0.0
      %4810 = vmatprep.subr.mxu0 0.0
      %4811 = vmatpush1.msra.mxu0 0.0
      %4812 = vmatprep.subr.mxu0 0.0
      %4813 = vmatpush1.msra.mxu0 0.0
      %4814 = vmatprep.subr.mxu0 0.0
      %4815 = vmatpush1.msra.mxu0 0.0
      %4816 = vmatprep.subr.mxu0 0.0
      %4817 = vmatpush1.msra.mxu0 0.0
      %4818 = vmatprep.mubr.f32.mxu0 0.0
      %4819 = vmatmul.mubr.f32.gmra.mrb[0].mxu0 %v1825
      %v4820 = vpop.f32.mrb[0].mxu0
      %v4821 = vadd.f32 %v4750, %v4820
      %v4822 = vpop.f32.mrb[0].mxu0
      %v4823 = vadd.f32 %v4752, %v4822
      %4824 = vdwg.mxu0
      %4825 = vrot.lane.b32.xlu0 %v4675, 126
      %v4826 = vpop.permute.xlu0 %4825
      %4827 = vrot.lane.b32.xlu0 %v4676, 126
      %v4828 = vpop.permute.xlu0 %4827
      %v4829 = vsel %vm367, %v4826, %v4828
      %v4830 = vsel %vm367, %v4828, %v4826
      %4831 = vmatprep.subr.mxu0 %v4830
      %4832 = vmatpush1.msra.mxu0 %v4829
      %4833 = vmatprep.subr.mxu0 0.0
      %4834 = vmatpush1.msra.mxu0 0.0
      %4835 = vmatprep.subr.mxu0 0.0
      %4836 = vmatpush1.msra.mxu0 0.0
      %4837 = vmatprep.subr.mxu0 0.0
      %4838 = vmatpush1.msra.mxu0 0.0
      %4839 = vmatprep.subr.mxu0 0.0
      %4840 = vmatpush1.msra.mxu0 0.0
      %4841 = vmatprep.subr.mxu0 0.0
      %4842 = vmatpush1.msra.mxu0 0.0
      %4843 = vmatprep.subr.mxu0 0.0
      %4844 = vmatpush1.msra.mxu0 0.0
      %4845 = vmatprep.subr.mxu0 0.0
      %4846 = vmatpush1.msra.mxu0 0.0
      %4847 = vmatprep.subr.mxu0 0.0
      %4848 = vmatpush1.msra.mxu0 0.0
      %4849 = vmatprep.subr.mxu0 0.0
      %4850 = vmatpush1.msra.mxu0 0.0
      %4851 = vmatprep.subr.mxu0 0.0
      %4852 = vmatpush1.msra.mxu0 0.0
      %4853 = vmatprep.subr.mxu0 0.0
      %4854 = vmatpush1.msra.mxu0 0.0
      %4855 = vmatprep.subr.mxu0 0.0
      %4856 = vmatpush1.msra.mxu0 0.0
      %4857 = vmatprep.subr.mxu0 0.0
      %4858 = vmatpush1.msra.mxu0 0.0
      %4859 = vmatprep.subr.mxu0 0.0
      %4860 = vmatpush1.msra.mxu0 0.0
      %4861 = vmatprep.subr.mxu0 0.0
      %4862 = vmatpush1.msra.mxu0 0.0
      %4863 = vmatprep.subr.mxu0 0.0
      %4864 = vmatpush1.msra.mxu0 0.0
      %4865 = vmatprep.subr.mxu0 0.0
      %4866 = vmatpush1.msra.mxu0 0.0
      %4867 = vmatprep.subr.mxu0 0.0
      %4868 = vmatpush1.msra.mxu0 0.0
      %4869 = vmatprep.subr.mxu0 0.0
      %4870 = vmatpush1.msra.mxu0 0.0
      %4871 = vmatprep.subr.mxu0 0.0
      %4872 = vmatpush1.msra.mxu0 0.0
      %4873 = vmatprep.subr.mxu0 0.0
      %4874 = vmatpush1.msra.mxu0 0.0
      %4875 = vmatprep.subr.mxu0 0.0
      %4876 = vmatpush1.msra.mxu0 0.0
      %4877 = vmatprep.subr.mxu0 0.0
      %4878 = vmatpush1.msra.mxu0 0.0
      %4879 = vmatprep.subr.mxu0 0.0
      %4880 = vmatpush1.msra.mxu0 0.0
      %4881 = vmatprep.subr.mxu0 0.0
      %4882 = vmatpush1.msra.mxu0 0.0
      %4883 = vmatprep.subr.mxu0 0.0
      %4884 = vmatpush1.msra.mxu0 0.0
      %4885 = vmatprep.subr.mxu0 0.0
      %4886 = vmatpush1.msra.mxu0 0.0
      %4887 = vmatprep.subr.mxu0 0.0
      %4888 = vmatpush1.msra.mxu0 0.0
      %4889 = vmatprep.subr.mxu0 0.0
      %4890 = vmatpush1.msra.mxu0 0.0
      %4891 = vmatprep.subr.mxu0 0.0
      %4892 = vmatpush1.msra.mxu0 0.0
      %4893 = vmatprep.subr.mxu0 0.0
      %4894 = vmatpush1.msra.mxu0 0.0
      %4895 = vmatprep.mubr.f32.mxu0 0.0
      %4896 = vmatmul.mubr.f32.gmra.mrb[0].mxu0 %v1907
      %v4897 = vpop.f32.mrb[0].mxu0
      %v4898 = vadd.f32 0.0, %v4897
      %v4899 = vpop.f32.mrb[0].mxu0
      %v4900 = vadd.f32 0.0, %v4899
      %4901 = vdwg.mxu0
      %v4902 = vadd.f32 %v4821, %v4898
      %v4903 = vadd.f32 %v4823, %v4900
      %4904 = vrot.lane.b32.xlu0 %v4675, 112
      %v4905 = vpop.permute.xlu0 %4904
      %4906 = vrot.lane.b32.xlu0 %v4676, 112
      %v4907 = vpop.permute.xlu0 %4906
      %v4908 = vsel %vm452, %v4905, %v4907
      %v4909 = vsel %vm452, %v4907, %v4905
      %4910 = vmatprep.subr.mxu0 %v4909
      %4911 = vmatpush1.msra.mxu0 %v4908
      %4912 = vmatprep.subr.mxu0 0.0
      %4913 = vmatpush1.msra.mxu0 0.0
      %4914 = vmatprep.subr.mxu0 0.0
      %4915 = vmatpush1.msra.mxu0 0.0
      %4916 = vmatprep.subr.mxu0 0.0
      %4917 = vmatpush1.msra.mxu0 0.0
      %4918 = vmatprep.subr.mxu0 0.0
      %4919 = vmatpush1.msra.mxu0 0.0
      %4920 = vmatprep.subr.mxu0 0.0
      %4921 = vmatpush1.msra.mxu0 0.0
      %4922 = vmatprep.subr.mxu0 0.0
      %4923 = vmatpush1.msra.mxu0 0.0
      %4924 = vmatprep.subr.mxu0 0.0
      %4925 = vmatpush1.msra.mxu0 0.0
      %4926 = vmatprep.subr.mxu0 0.0
      %4927 = vmatpush1.msra.mxu0 0.0
      %4928 = vmatprep.subr.mxu0 0.0
      %4929 = vmatpush1.msra.mxu0 0.0
      %4930 = vmatprep.subr.mxu0 0.0
      %4931 = vmatpush1.msra.mxu0 0.0
      %4932 = vmatprep.subr.mxu0 0.0
      %4933 = vmatpush1.msra.mxu0 0.0
      %4934 = vmatprep.subr.mxu0 0.0
      %4935 = vmatpush1.msra.mxu0 0.0
      %4936 = vmatprep.subr.mxu0 0.0
      %4937 = vmatpush1.msra.mxu0 0.0
      %4938 = vmatprep.subr.mxu0 0.0
      %4939 = vmatpush1.msra.mxu0 0.0
      %4940 = vmatprep.subr.mxu0 0.0
      %4941 = vmatpush1.msra.mxu0 0.0
      %4942 = vmatprep.subr.mxu0 0.0
      %4943 = vmatpush1.msra.mxu0 0.0
      %4944 = vmatprep.subr.mxu0 0.0
      %4945 = vmatpush1.msra.mxu0 0.0
      %4946 = vmatprep.subr.mxu0 0.0
      %4947 = vmatpush1.msra.mxu0 0.0
      %4948 = vmatprep.subr.mxu0 0.0
      %4949 = vmatpush1.msra.mxu0 0.0
      %4950 = vmatprep.subr.mxu0 0.0
      %4951 = vmatpush1.msra.mxu0 0.0
      %4952 = vmatprep.subr.mxu0 0.0
      %4953 = vmatpush1.msra.mxu0 0.0
      %4954 = vmatprep.subr.mxu0 0.0
      %4955 = vmatpush1.msra.mxu0 0.0
      %4956 = vmatprep.subr.mxu0 0.0
      %4957 = vmatpush1.msra.mxu0 0.0
      %4958 = vmatprep.subr.mxu0 0.0
      %4959 = vmatpush1.msra.mxu0 0.0
      %4960 = vmatprep.subr.mxu0 0.0
      %4961 = vmatpush1.msra.mxu0 0.0
      %4962 = vmatprep.subr.mxu0 0.0
      %4963 = vmatpush1.msra.mxu0 0.0
      %4964 = vmatprep.subr.mxu0 0.0
      %4965 = vmatpush1.msra.mxu0 0.0
      %4966 = vmatprep.subr.mxu0 0.0
      %4967 = vmatpush1.msra.mxu0 0.0
      %4968 = vmatprep.subr.mxu0 0.0
      %4969 = vmatpush1.msra.mxu0 0.0
      %4970 = vmatprep.subr.mxu0 0.0
      %4971 = vmatpush1.msra.mxu0 0.0
      %4972 = vmatprep.subr.mxu0 0.0
      %4973 = vmatpush1.msra.mxu0 0.0
      %4974 = vmatprep.mubr.f32.mxu0 0.0
      %4975 = vmatmul.mubr.f32.gmra.mrb[0].mxu0 %v1991
      %v4976 = vpop.f32.mrb[0].mxu0
      %v4977 = vadd.f32 0.0, %v4976
      %v4978 = vpop.f32.mrb[0].mxu0
      %v4979 = vadd.f32 0.0, %v4978
      %4980 = vdwg.mxu0
      %v4981 = vadd.f32 %v4902, %v4977
      %v4982 = vadd.f32 %v4903, %v4979
      %4983 = vrot.lane.b32.xlu0 %v4675, 111
      %v4984 = vpop.permute.xlu0 %4983
      %4985 = vrot.lane.b32.xlu0 %v4676, 111
      %v4986 = vpop.permute.xlu0 %4985
      %v4987 = vsel %vm537, %v4984, %v4986
      %v4988 = vsel %vm537, %v4986, %v4984
      %4989 = vmatprep.subr.mxu0 %v4988
      %4990 = vmatpush1.msra.mxu0 %v4987
      %4991 = vmatprep.subr.mxu0 0.0
      %4992 = vmatpush1.msra.mxu0 0.0
      %4993 = vmatprep.subr.mxu0 0.0
      %4994 = vmatpush1.msra.mxu0 0.0
      %4995 = vmatprep.subr.mxu0 0.0
      %4996 = vmatpush1.msra.mxu0 0.0
      %4997 = vmatprep.subr.mxu0 0.0
      %4998 = vmatpush1.msra.mxu0 0.0
      %4999 = vmatprep.subr.mxu0 0.0
      %5000 = vmatpush1.msra.mxu0 0.0
      %5001 = vmatprep.subr.mxu0 0.0
      %5002 = vmatpush1.msra.mxu0 0.0
      %5003 = vmatprep.subr.mxu0 0.0
      %5004 = vmatpush1.msra.mxu0 0.0
      %5005 = vmatprep.subr.mxu0 0.0
      %5006 = vmatpush1.msra.mxu0 0.0
      %5007 = vmatprep.subr.mxu0 0.0
      %5008 = vmatpush1.msra.mxu0 0.0
      %5009 = vmatprep.subr.mxu0 0.0
      %5010 = vmatpush1.msra.mxu0 0.0
      %5011 = vmatprep.subr.mxu0 0.0
      %5012 = vmatpush1.msra.mxu0 0.0
      %5013 = vmatprep.subr.mxu0 0.0
      %5014 = vmatpush1.msra.mxu0 0.0
      %5015 = vmatprep.subr.mxu0 0.0
      %5016 = vmatpush1.msra.mxu0 0.0
      %5017 = vmatprep.subr.mxu0 0.0
      %5018 = vmatpush1.msra.mxu0 0.0
      %5019 = vmatprep.subr.mxu0 0.0
      %5020 = vmatpush1.msra.mxu0 0.0
      %5021 = vmatprep.subr.mxu0 0.0
      %5022 = vmatpush1.msra.mxu0 0.0
      %5023 = vmatprep.subr.mxu0 0.0
      %5024 = vmatpush1.msra.mxu0 0.0
      %5025 = vmatprep.subr.mxu0 0.0
      %5026 = vmatpush1.msra.mxu0 0.0
      %5027 = vmatprep.subr.mxu0 0.0
      %5028 = vmatpush1.msra.mxu0 0.0
      %5029 = vmatprep.subr.mxu0 0.0
      %5030 = vmatpush1.msra.mxu0 0.0
      %5031 = vmatprep.subr.mxu0 0.0
      %5032 = vmatpush1.msra.mxu0 0.0
      %5033 = vmatprep.subr.mxu0 0.0
      %5034 = vmatpush1.msra.mxu0 0.0
      %5035 = vmatprep.subr.mxu0 0.0
      %5036 = vmatpush1.msra.mxu0 0.0
      %5037 = vmatprep.subr.mxu0 0.0
      %5038 = vmatpush1.msra.mxu0 0.0
      %5039 = vmatprep.subr.mxu0 0.0
      %5040 = vmatpush1.msra.mxu0 0.0
      %5041 = vmatprep.subr.mxu0 0.0
      %5042 = vmatpush1.msra.mxu0 0.0
      %5043 = vmatprep.subr.mxu0 0.0
      %5044 = vmatpush1.msra.mxu0 0.0
      %5045 = vmatprep.subr.mxu0 0.0
      %5046 = vmatpush1.msra.mxu0 0.0
      %5047 = vmatprep.subr.mxu0 0.0
      %5048 = vmatpush1.msra.mxu0 0.0
      %5049 = vmatprep.subr.mxu0 0.0
      %5050 = vmatpush1.msra.mxu0 0.0
      %5051 = vmatprep.subr.mxu0 0.0
      %5052 = vmatpush1.msra.mxu0 0.0
      %5053 = vmatprep.mubr.f32.mxu0 0.0
      %5054 = vmatmul.mubr.f32.gmra.mrb[0].mxu0 %v2075
      %v5055 = vpop.f32.mrb[0].mxu0
      %v5056 = vadd.f32 0.0, %v5055
      %v5057 = vpop.f32.mrb[0].mxu0
      %v5058 = vadd.f32 0.0, %v5057
      %5059 = vdwg.mxu0
      %v5060 = vadd.f32 %v4981, %v5056
      %v5061 = vadd.f32 %v4982, %v5058
      %5062 = vrot.lane.b32.xlu0 %v4675, 110
      %v5063 = vpop.permute.xlu0 %5062
      %5064 = vrot.lane.b32.xlu0 %v4676, 110
      %v5065 = vpop.permute.xlu0 %5064
      %v5066 = vsel %vm622, %v5063, %v5065
      %v5067 = vsel %vm622, %v5065, %v5063
      %5068 = vmatprep.subr.mxu0 %v5067
      %5069 = vmatpush1.msra.mxu0 %v5066
      %5070 = vmatprep.subr.mxu0 0.0
      %5071 = vmatpush1.msra.mxu0 0.0
      %5072 = vmatprep.subr.mxu0 0.0
      %5073 = vmatpush1.msra.mxu0 0.0
      %5074 = vmatprep.subr.mxu0 0.0
      %5075 = vmatpush1.msra.mxu0 0.0
      %5076 = vmatprep.subr.mxu0 0.0
      %5077 = vmatpush1.msra.mxu0 0.0
      %5078 = vmatprep.subr.mxu0 0.0
      %5079 = vmatpush1.msra.mxu0 0.0
      %5080 = vmatprep.subr.mxu0 0.0
      %5081 = vmatpush1.msra.mxu0 0.0
      %5082 = vmatprep.subr.mxu0 0.0
      %5083 = vmatpush1.msra.mxu0 0.0
      %5084 = vmatprep.subr.mxu0 0.0
      %5085 = vmatpush1.msra.mxu0 0.0
      %5086 = vmatprep.subr.mxu0 0.0
      %5087 = vmatpush1.msra.mxu0 0.0
      %5088 = vmatprep.subr.mxu0 0.0
      %5089 = vmatpush1.msra.mxu0 0.0
      %5090 = vmatprep.subr.mxu0 0.0
      %5091 = vmatpush1.msra.mxu0 0.0
      %5092 = vmatprep.subr.mxu0 0.0
      %5093 = vmatpush1.msra.mxu0 0.0
      %5094 = vmatprep.subr.mxu0 0.0
      %5095 = vmatpush1.msra.mxu0 0.0
      %5096 = vmatprep.subr.mxu0 0.0
      %5097 = vmatpush1.msra.mxu0 0.0
      %5098 = vmatprep.subr.mxu0 0.0
      %5099 = vmatpush1.msra.mxu0 0.0
      %5100 = vmatprep.subr.mxu0 0.0
      %5101 = vmatpush1.msra.mxu0 0.0
      %5102 = vmatprep.subr.mxu0 0.0
      %5103 = vmatpush1.msra.mxu0 0.0
      %5104 = vmatprep.subr.mxu0 0.0
      %5105 = vmatpush1.msra.mxu0 0.0
      %5106 = vmatprep.subr.mxu0 0.0
      %5107 = vmatpush1.msra.mxu0 0.0
      %5108 = vmatprep.subr.mxu0 0.0
      %5109 = vmatpush1.msra.mxu0 0.0
      %5110 = vmatprep.subr.mxu0 0.0
      %5111 = vmatpush1.msra.mxu0 0.0
      %5112 = vmatprep.subr.mxu0 0.0
      %5113 = vmatpush1.msra.mxu0 0.0
      %5114 = vmatprep.subr.mxu0 0.0
      %5115 = vmatpush1.msra.mxu0 0.0
      %5116 = vmatprep.subr.mxu0 0.0
      %5117 = vmatpush1.msra.mxu0 0.0
      %5118 = vmatprep.subr.mxu0 0.0
      %5119 = vmatpush1.msra.mxu0 0.0
      %5120 = vmatprep.subr.mxu0 0.0
      %5121 = vmatpush1.msra.mxu0 0.0
      %5122 = vmatprep.subr.mxu0 0.0
      %5123 = vmatpush1.msra.mxu0 0.0
      %5124 = vmatprep.subr.mxu0 0.0
      %5125 = vmatpush1.msra.mxu0 0.0
      %5126 = vmatprep.subr.mxu0 0.0
      %5127 = vmatpush1.msra.mxu0 0.0
      %5128 = vmatprep.subr.mxu0 0.0
      %5129 = vmatpush1.msra.mxu0 0.0
      %5130 = vmatprep.subr.mxu0 0.0
      %5131 = vmatpush1.msra.mxu0 0.0
      %5132 = vmatprep.mubr.f32.mxu0 0.0
      %5133 = vmatmul.mubr.f32.gmra.mrb[0].mxu0 %v2159
      %v5134 = vpop.f32.mrb[0].mxu0
      %v5135 = vadd.f32 0.0, %v5134
      %v5136 = vpop.f32.mrb[0].mxu0
      %v5137 = vadd.f32 0.0, %v5136
      %5138 = vdwg.mxu0
      %v5139 = vadd.f32 %v5060, %v5135
      %v5140 = vadd.f32 %v5061, %v5137
      %5141 = vrot.lane.b32.xlu0 %v4675, 96
      %v5142 = vpop.permute.xlu0 %5141
      %5143 = vrot.lane.b32.xlu0 %v4676, 96
      %v5144 = vpop.permute.xlu0 %5143
      %v5145 = vsel %vm707, %v5142, %v5144
      %v5146 = vsel %vm707, %v5144, %v5142
      %5147 = vmatprep.subr.mxu0 %v5146
      %5148 = vmatpush1.msra.mxu0 %v5145
      %5149 = vmatprep.subr.mxu0 0.0
      %5150 = vmatpush1.msra.mxu0 0.0
      %5151 = vmatprep.subr.mxu0 0.0
      %5152 = vmatpush1.msra.mxu0 0.0
      %5153 = vmatprep.subr.mxu0 0.0
      %5154 = vmatpush1.msra.mxu0 0.0
      %5155 = vmatprep.subr.mxu0 0.0
      %5156 = vmatpush1.msra.mxu0 0.0
      %5157 = vmatprep.subr.mxu0 0.0
      %5158 = vmatpush1.msra.mxu0 0.0
      %5159 = vmatprep.subr.mxu0 0.0
      %5160 = vmatpush1.msra.mxu0 0.0
      %5161 = vmatprep.subr.mxu0 0.0
      %5162 = vmatpush1.msra.mxu0 0.0
      %5163 = vmatprep.subr.mxu0 0.0
      %5164 = vmatpush1.msra.mxu0 0.0
      %5165 = vmatprep.subr.mxu0 0.0
      %5166 = vmatpush1.msra.mxu0 0.0
      %5167 = vmatprep.subr.mxu0 0.0
      %5168 = vmatpush1.msra.mxu0 0.0
      %5169 = vmatprep.subr.mxu0 0.0
      %5170 = vmatpush1.msra.mxu0 0.0
      %5171 = vmatprep.subr.mxu0 0.0
      %5172 = vmatpush1.msra.mxu0 0.0
      %5173 = vmatprep.subr.mxu0 0.0
      %5174 = vmatpush1.msra.mxu0 0.0
      %5175 = vmatprep.subr.mxu0 0.0
      %5176 = vmatpush1.msra.mxu0 0.0
      %5177 = vmatprep.subr.mxu0 0.0
      %5178 = vmatpush1.msra.mxu0 0.0
      %5179 = vmatprep.subr.mxu0 0.0
      %5180 = vmatpush1.msra.mxu0 0.0
      %5181 = vmatprep.subr.mxu0 0.0
      %5182 = vmatpush1.msra.mxu0 0.0
      %5183 = vmatprep.subr.mxu0 0.0
      %5184 = vmatpush1.msra.mxu0 0.0
      %5185 = vmatprep.subr.mxu0 0.0
      %5186 = vmatpush1.msra.mxu0 0.0
      %5187 = vmatprep.subr.mxu0 0.0
      %5188 = vmatpush1.msra.mxu0 0.0
      %5189 = vmatprep.subr.mxu0 0.0
      %5190 = vmatpush1.msra.mxu0 0.0
      %5191 = vmatprep.subr.mxu0 0.0
      %5192 = vmatpush1.msra.mxu0 0.0
      %5193 = vmatprep.subr.mxu0 0.0
      %5194 = vmatpush1.msra.mxu0 0.0
      %5195 = vmatprep.subr.mxu0 0.0
      %5196 = vmatpush1.msra.mxu0 0.0
      %5197 = vmatprep.subr.mxu0 0.0
      %5198 = vmatpush1.msra.mxu0 0.0
      %5199 = vmatprep.subr.mxu0 0.0
      %5200 = vmatpush1.msra.mxu0 0.0
      %5201 = vmatprep.subr.mxu0 0.0
      %5202 = vmatpush1.msra.mxu0 0.0
      %5203 = vmatprep.subr.mxu0 0.0
      %5204 = vmatpush1.msra.mxu0 0.0
      %5205 = vmatprep.subr.mxu0 0.0
      %5206 = vmatpush1.msra.mxu0 0.0
      %5207 = vmatprep.subr.mxu0 0.0
      %5208 = vmatpush1.msra.mxu0 0.0
      %5209 = vmatprep.subr.mxu0 0.0
      %5210 = vmatpush1.msra.mxu0 0.0
      %5211 = vmatprep.mubr.f32.mxu0 0.0
      %5212 = vmatmul.mubr.f32.gmra.mrb[0].mxu0 %v2243
      %v5213 = vpop.f32.mrb[0].mxu0
      %v5214 = vadd.f32 0.0, %v5213
      %v5215 = vpop.f32.mrb[0].mxu0
      %v5216 = vadd.f32 0.0, %v5215
      %5217 = vdwg.mxu0
      %v5218 = vadd.f32 %v5139, %v5214
      %v5219 = vadd.f32 %v5140, %v5216
      %5220 = vrot.lane.b32.xlu0 %v4675, 95
      %v5221 = vpop.permute.xlu0 %5220
      %5222 = vrot.lane.b32.xlu0 %v4676, 95
      %v5223 = vpop.permute.xlu0 %5222
      %v5224 = vsel %vm792, %v5221, %v5223
      %v5225 = vsel %vm792, %v5223, %v5221
      %5226 = vmatprep.subr.mxu0 %v5225
      %5227 = vmatpush1.msra.mxu0 %v5224
      %5228 = vmatprep.subr.mxu0 0.0
      %5229 = vmatpush1.msra.mxu0 0.0
      %5230 = vmatprep.subr.mxu0 0.0
      %5231 = vmatpush1.msra.mxu0 0.0
      %5232 = vmatprep.subr.mxu0 0.0
      %5233 = vmatpush1.msra.mxu0 0.0
      %5234 = vmatprep.subr.mxu0 0.0
      %5235 = vmatpush1.msra.mxu0 0.0
      %5236 = vmatprep.subr.mxu0 0.0
      %5237 = vmatpush1.msra.mxu0 0.0
      %5238 = vmatprep.subr.mxu0 0.0
      %5239 = vmatpush1.msra.mxu0 0.0
      %5240 = vmatprep.subr.mxu0 0.0
      %5241 = vmatpush1.msra.mxu0 0.0
      %5242 = vmatprep.subr.mxu0 0.0
      %5243 = vmatpush1.msra.mxu0 0.0
      %5244 = vmatprep.subr.mxu0 0.0
      %5245 = vmatpush1.msra.mxu0 0.0
      %5246 = vmatprep.subr.mxu0 0.0
      %5247 = vmatpush1.msra.mxu0 0.0
      %5248 = vmatprep.subr.mxu0 0.0
      %5249 = vmatpush1.msra.mxu0 0.0
      %5250 = vmatprep.subr.mxu0 0.0
      %5251 = vmatpush1.msra.mxu0 0.0
      %5252 = vmatprep.subr.mxu0 0.0
      %5253 = vmatpush1.msra.mxu0 0.0
      %5254 = vmatprep.subr.mxu0 0.0
      %5255 = vmatpush1.msra.mxu0 0.0
      %5256 = vmatprep.subr.mxu0 0.0
      %5257 = vmatpush1.msra.mxu0 0.0
      %5258 = vmatprep.subr.mxu0 0.0
      %5259 = vmatpush1.msra.mxu0 0.0
      %5260 = vmatprep.subr.mxu0 0.0
      %5261 = vmatpush1.msra.mxu0 0.0
      %5262 = vmatprep.subr.mxu0 0.0
      %5263 = vmatpush1.msra.mxu0 0.0
      %5264 = vmatprep.subr.mxu0 0.0
      %5265 = vmatpush1.msra.mxu0 0.0
      %5266 = vmatprep.subr.mxu0 0.0
      %5267 = vmatpush1.msra.mxu0 0.0
      %5268 = vmatprep.subr.mxu0 0.0
      %5269 = vmatpush1.msra.mxu0 0.0
      %5270 = vmatprep.subr.mxu0 0.0
      %5271 = vmatpush1.msra.mxu0 0.0
      %5272 = vmatprep.subr.mxu0 0.0
      %5273 = vmatpush1.msra.mxu0 0.0
      %5274 = vmatprep.subr.mxu0 0.0
      %5275 = vmatpush1.msra.mxu0 0.0
      %5276 = vmatprep.subr.mxu0 0.0
      %5277 = vmatpush1.msra.mxu0 0.0
      %5278 = vmatprep.subr.mxu0 0.0
      %5279 = vmatpush1.msra.mxu0 0.0
      %5280 = vmatprep.subr.mxu0 0.0
      %5281 = vmatpush1.msra.mxu0 0.0
      %5282 = vmatprep.subr.mxu0 0.0
      %5283 = vmatpush1.msra.mxu0 0.0
      %5284 = vmatprep.subr.mxu0 0.0
      %5285 = vmatpush1.msra.mxu0 0.0
      %5286 = vmatprep.subr.mxu0 0.0
      %5287 = vmatpush1.msra.mxu0 0.0
      %5288 = vmatprep.subr.mxu0 0.0
      %5289 = vmatpush1.msra.mxu0 0.0
      %5290 = vmatprep.mubr.f32.mxu0 0.0
      %5291 = vmatmul.mubr.f32.gmra.mrb[0].mxu0 %v2327
      %v5292 = vpop.f32.mrb[0].mxu0
      %v5293 = vadd.f32 0.0, %v5292
      %v5294 = vpop.f32.mrb[0].mxu0
      %v5295 = vadd.f32 0.0, %v5294
      %5296 = vdwg.mxu0
      %v5297 = vadd.f32 %v5218, %v5293
      %v5298 = vadd.f32 %v5219, %v5295
      %5299 = vrot.lane.b32.xlu0 %v4675, 94
      %v5300 = vpop.permute.xlu0 %5299
      %5301 = vrot.lane.b32.xlu0 %v4676, 94
      %v5302 = vpop.permute.xlu0 %5301
      %v5303 = vsel %vm877, %v5300, %v5302
      %v5304 = vsel %vm877, %v5302, %v5300
      %5305 = vmatprep.subr.mxu0 %v5304
      %5306 = vmatpush1.msra.mxu0 %v5303
      %5307 = vmatprep.subr.mxu0 0.0
      %5308 = vmatpush1.msra.mxu0 0.0
      %5309 = vmatprep.subr.mxu0 0.0
      %5310 = vmatpush1.msra.mxu0 0.0
      %5311 = vmatprep.subr.mxu0 0.0
      %5312 = vmatpush1.msra.mxu0 0.0
      %5313 = vmatprep.subr.mxu0 0.0
      %5314 = vmatpush1.msra.mxu0 0.0
      %5315 = vmatprep.subr.mxu0 0.0
      %5316 = vmatpush1.msra.mxu0 0.0
      %5317 = vmatprep.subr.mxu0 0.0
      %5318 = vmatpush1.msra.mxu0 0.0
      %5319 = vmatprep.subr.mxu0 0.0
      %5320 = vmatpush1.msra.mxu0 0.0
      %5321 = vmatprep.subr.mxu0 0.0
      %5322 = vmatpush1.msra.mxu0 0.0
      %5323 = vmatprep.subr.mxu0 0.0
      %5324 = vmatpush1.msra.mxu0 0.0
      %5325 = vmatprep.subr.mxu0 0.0
      %5326 = vmatpush1.msra.mxu0 0.0
      %5327 = vmatprep.subr.mxu0 0.0
      %5328 = vmatpush1.msra.mxu0 0.0
      %5329 = vmatprep.subr.mxu0 0.0
      %5330 = vmatpush1.msra.mxu0 0.0
      %5331 = vmatprep.subr.mxu0 0.0
      %5332 = vmatpush1.msra.mxu0 0.0
      %5333 = vmatprep.subr.mxu0 0.0
      %5334 = vmatpush1.msra.mxu0 0.0
      %5335 = vmatprep.subr.mxu0 0.0
      %5336 = vmatpush1.msra.mxu0 0.0
      %5337 = vmatprep.subr.mxu0 0.0
      %5338 = vmatpush1.msra.mxu0 0.0
      %5339 = vmatprep.subr.mxu0 0.0
      %5340 = vmatpush1.msra.mxu0 0.0
      %5341 = vmatprep.subr.mxu0 0.0
      %5342 = vmatpush1.msra.mxu0 0.0
      %5343 = vmatprep.subr.mxu0 0.0
      %5344 = vmatpush1.msra.mxu0 0.0
      %5345 = vmatprep.subr.mxu0 0.0
      %5346 = vmatpush1.msra.mxu0 0.0
      %5347 = vmatprep.subr.mxu0 0.0
      %5348 = vmatpush1.msra.mxu0 0.0
      %5349 = vmatprep.subr.mxu0 0.0
      %5350 = vmatpush1.msra.mxu0 0.0
      %5351 = vmatprep.subr.mxu0 0.0
      %5352 = vmatpush1.msra.mxu0 0.0
      %5353 = vmatprep.subr.mxu0 0.0
      %5354 = vmatpush1.msra.mxu0 0.0
      %5355 = vmatprep.subr.mxu0 0.0
      %5356 = vmatpush1.msra.mxu0 0.0
      %5357 = vmatprep.subr.mxu0 0.0
      %5358 = vmatpush1.msra.mxu0 0.0
      %5359 = vmatprep.subr.mxu0 0.0
      %5360 = vmatpush1.msra.mxu0 0.0
      %5361 = vmatprep.subr.mxu0 0.0
      %5362 = vmatpush1.msra.mxu0 0.0
      %5363 = vmatprep.subr.mxu0 0.0
      %5364 = vmatpush1.msra.mxu0 0.0
      %5365 = vmatprep.subr.mxu0 0.0
      %5366 = vmatpush1.msra.mxu0 0.0
      %5367 = vmatprep.subr.mxu0 0.0
      %5368 = vmatpush1.msra.mxu0 0.0
      %5369 = vmatprep.mubr.f32.mxu0 0.0
      %5370 = vmatmul.mubr.f32.gmra.mrb[0].mxu0 %v2411
      %v5371 = vpop.f32.mrb[0].mxu0
      %v5372 = vadd.f32 0.0, %v5371
      %v5373 = vpop.f32.mrb[0].mxu0
      %v5374 = vadd.f32 0.0, %v5373
      %5375 = vdwg.mxu0
      %v5376 = vadd.f32 %v5297, %v5372
      %v5377 = vadd.f32 %v5298, %v5374
      %v5378 = vmul.f32 %v5376, %v2489
      %v5379 = vmul.f32 %v5377, %v2489
      %v5380 = vadd.f32 %v5378, %v2496
      %v5381 = vadd.f32 %v5379, %v2496
      %5382 = vrot.lane.b32.xlu0 %v5380, 127
      %v5383 = vpop.permute.xlu0 %5382
      %5384 = vrot.lane.b32.xlu0 %v5381, 127
      %v5385 = vpop.permute.xlu0 %5384
      %v5386 = vsel %vm209, %v5383, %v5385
      %v5387 = vsel %vm209, %v5385, %v5383
      %5388 = vmatprep.subr.mxu0 %v5387
      %5389 = vmatpush1.msra.mxu0 %v5386
      %5390 = vmatprep.subr.mxu0 0.0
      %5391 = vmatpush1.msra.mxu0 0.0
      %5392 = vmatprep.subr.mxu0 0.0
      %5393 = vmatpush1.msra.mxu0 0.0
      %5394 = vmatprep.subr.mxu0 0.0
      %5395 = vmatpush1.msra.mxu0 0.0
      %5396 = vmatprep.subr.mxu0 0.0
      %5397 = vmatpush1.msra.mxu0 0.0
      %5398 = vmatprep.subr.mxu0 0.0
      %5399 = vmatpush1.msra.mxu0 0.0
      %5400 = vmatprep.subr.mxu0 0.0
      %5401 = vmatpush1.msra.mxu0 0.0
      %5402 = vmatprep.subr.mxu0 0.0
      %5403 = vmatpush1.msra.mxu0 0.0
      %5404 = vmatprep.subr.mxu0 0.0
      %5405 = vmatpush1.msra.mxu0 0.0
      %5406 = vmatprep.subr.mxu0 0.0
      %5407 = vmatpush1.msra.mxu0 0.0
      %5408 = vmatprep.subr.mxu0 0.0
      %5409 = vmatpush1.msra.mxu0 0.0
      %5410 = vmatprep.subr.mxu0 0.0
      %5411 = vmatpush1.msra.mxu0 0.0
      %5412 = vmatprep.subr.mxu0 0.0
      %5413 = vmatpush1.msra.mxu0 0.0
      %5414 = vmatprep.subr.mxu0 0.0
      %5415 = vmatpush1.msra.mxu0 0.0
      %5416 = vmatprep.subr.mxu0 0.0
      %5417 = vmatpush1.msra.mxu0 0.0
      %5418 = vmatprep.subr.mxu0 0.0
      %5419 = vmatpush1.msra.mxu0 0.0
      %5420 = vmatprep.subr.mxu0 0.0
      %5421 = vmatpush1.msra.mxu0 0.0
      %5422 = vmatprep.subr.mxu0 0.0
      %5423 = vmatpush1.msra.mxu0 0.0
      %5424 = vmatprep.subr.mxu0 0.0
      %5425 = vmatpush1.msra.mxu0 0.0
      %5426 = vmatprep.subr.mxu0 0.0
      %5427 = vmatpush1.msra.mxu0 0.0
      %5428 = vmatprep.subr.mxu0 0.0
      %5429 = vmatpush1.msra.mxu0 0.0
      %5430 = vmatprep.subr.mxu0 0.0
      %5431 = vmatpush1.msra.mxu0 0.0
      %5432 = vmatprep.subr.mxu0 0.0
      %5433 = vmatpush1.msra.mxu0 0.0
      %5434 = vmatprep.subr.mxu0 0.0
      %5435 = vmatpush1.msra.mxu0 0.0
      %5436 = vmatprep.subr.mxu0 0.0
      %5437 = vmatpush1.msra.mxu0 0.0
      %5438 = vmatprep.subr.mxu0 0.0
      %5439 = vmatpush1.msra.mxu0 0.0
      %5440 = vmatprep.subr.mxu0 0.0
      %5441 = vmatpush1.msra.mxu0 0.0
      %5442 = vmatprep.subr.mxu0 0.0
      %5443 = vmatpush1.msra.mxu0 0.0
      %5444 = vmatprep.subr.mxu0 0.0
      %5445 = vmatpush1.msra.mxu0 0.0
      %5446 = vmatprep.subr.mxu0 0.0
      %5447 = vmatpush1.msra.mxu0 0.0
      %5448 = vmatprep.subr.mxu0 0.0
      %5449 = vmatpush1.msra.mxu0 0.0
      %5450 = vmatprep.subr.mxu0 0.0
      %5451 = vmatpush1.msra.mxu0 0.0
      %5452 = vmatprep.mubr.f32.mxu0 0.0
      %5453 = vmatmul.mubr.f32.gmra.mrb[0].mxu0 %v2515
      %v5454 = vpop.f32.mrb[0].mxu0
      %v5455 = vadd.f32 0.0, %v5454
      %v5456 = vpop.f32.mrb[0].mxu0
      %v5457 = vadd.f32 0.0, %v5456
      %5458 = vdwg.mxu0
      %5459 = vmatprep.subr.mxu0 %v5381
      %5460 = vmatpush1.msra.mxu0 %v5380
      %5461 = vmatprep.subr.mxu0 0.0
      %5462 = vmatpush1.msra.mxu0 0.0
      %5463 = vmatprep.subr.mxu0 0.0
      %5464 = vmatpush1.msra.mxu0 0.0
      %5465 = vmatprep.subr.mxu0 0.0
      %5466 = vmatpush1.msra.mxu0 0.0
      %5467 = vmatprep.subr.mxu0 0.0
      %5468 = vmatpush1.msra.mxu0 0.0
      %5469 = vmatprep.subr.mxu0 0.0
      %5470 = vmatpush1.msra.mxu0 0.0
      %5471 = vmatprep.subr.mxu0 0.0
      %5472 = vmatpush1.msra.mxu0 0.0
      %5473 = vmatprep.subr.mxu0 0.0
      %5474 = vmatpush1.msra.mxu0 0.0
      %5475 = vmatprep.subr.mxu0 0.0
      %5476 = vmatpush1.msra.mxu0 0.0
      %5477 = vmatprep.subr.mxu0 0.0
      %5478 = vmatpush1.msra.mxu0 0.0
      %5479 = vmatprep.subr.mxu0 0.0
      %5480 = vmatpush1.msra.mxu0 0.0
      %5481 = vmatprep.subr.mxu0 0.0
      %5482 = vmatpush1.msra.mxu0 0.0
      %5483 = vmatprep.subr.mxu0 0.0
      %5484 = vmatpush1.msra.mxu0 0.0
      %5485 = vmatprep.subr.mxu0 0.0
      %5486 = vmatpush1.msra.mxu0 0.0
      %5487 = vmatprep.subr.mxu0 0.0
      %5488 = vmatpush1.msra.mxu0 0.0
      %5489 = vmatprep.subr.mxu0 0.0
      %5490 = vmatpush1.msra.mxu0 0.0
      %5491 = vmatprep.subr.mxu0 0.0
      %5492 = vmatpush1.msra.mxu0 0.0
      %5493 = vmatprep.subr.mxu0 0.0
      %5494 = vmatpush1.msra.mxu0 0.0
      %5495 = vmatprep.subr.mxu0 0.0
      %5496 = vmatpush1.msra.mxu0 0.0
      %5497 = vmatprep.subr.mxu0 0.0
      %5498 = vmatpush1.msra.mxu0 0.0
      %5499 = vmatprep.subr.mxu0 0.0
      %5500 = vmatpush1.msra.mxu0 0.0
      %5501 = vmatprep.subr.mxu0 0.0
      %5502 = vmatpush1.msra.mxu0 0.0
      %5503 = vmatprep.subr.mxu0 0.0
      %5504 = vmatpush1.msra.mxu0 0.0
      %5505 = vmatprep.subr.mxu0 0.0
      %5506 = vmatpush1.msra.mxu0 0.0
      %5507 = vmatprep.subr.mxu0 0.0
      %5508 = vmatpush1.msra.mxu0 0.0
      %5509 = vmatprep.subr.mxu0 0.0
      %5510 = vmatpush1.msra.mxu0 0.0
      %5511 = vmatprep.subr.mxu0 0.0
      %5512 = vmatpush1.msra.mxu0 0.0
      %5513 = vmatprep.subr.mxu0 0.0
      %5514 = vmatpush1.msra.mxu0 0.0
      %5515 = vmatprep.subr.mxu0 0.0
      %5516 = vmatpush1.msra.mxu0 0.0
      %5517 = vmatprep.subr.mxu0 0.0
      %5518 = vmatpush1.msra.mxu0 0.0
      %5519 = vmatprep.subr.mxu0 0.0
      %5520 = vmatpush1.msra.mxu0 0.0
      %5521 = vmatprep.subr.mxu0 0.0
      %5522 = vmatpush1.msra.mxu0 0.0
      %5523 = vmatprep.mubr.f32.mxu0 0.0
      %5524 = vmatmul.mubr.f32.gmra.mrb[0].mxu0 %v2589
      %v5525 = vpop.f32.mrb[0].mxu0
      %v5526 = vadd.f32 %v5455, %v5525
      %v5527 = vpop.f32.mrb[0].mxu0
      %v5528 = vadd.f32 %v5457, %v5527
      %5529 = vdwg.mxu0
      %5530 = vrot.lane.b32.xlu0 %v5380, 126
      %v5531 = vpop.permute.xlu0 %5530
      %5532 = vrot.lane.b32.xlu0 %v5381, 126
      %v5533 = vpop.permute.xlu0 %5532
      %v5534 = vsel %vm367, %v5531, %v5533
      %v5535 = vsel %vm367, %v5533, %v5531
      %5536 = vmatprep.subr.mxu0 %v5535
      %5537 = vmatpush1.msra.mxu0 %v5534
      %5538 = vmatprep.subr.mxu0 0.0
      %5539 = vmatpush1.msra.mxu0 0.0
      %5540 = vmatprep.subr.mxu0 0.0
      %5541 = vmatpush1.msra.mxu0 0.0
      %5542 = vmatprep.subr.mxu0 0.0
      %5543 = vmatpush1.msra.mxu0 0.0
      %5544 = vmatprep.subr.mxu0 0.0
      %5545 = vmatpush1.msra.mxu0 0.0
      %5546 = vmatprep.subr.mxu0 0.0
      %5547 = vmatpush1.msra.mxu0 0.0
      %5548 = vmatprep.subr.mxu0 0.0
      %5549 = vmatpush1.msra.mxu0 0.0
      %5550 = vmatprep.subr.mxu0 0.0
      %5551 = vmatpush1.msra.mxu0 0.0
      %5552 = vmatprep.subr.mxu0 0.0
      %5553 = vmatpush1.msra.mxu0 0.0
      %5554 = vmatprep.subr.mxu0 0.0
      %5555 = vmatpush1.msra.mxu0 0.0
      %5556 = vmatprep.subr.mxu0 0.0
      %5557 = vmatpush1.msra.mxu0 0.0
      %5558 = vmatprep.subr.mxu0 0.0
      %5559 = vmatpush1.msra.mxu0 0.0
      %5560 = vmatprep.subr.mxu0 0.0
      %5561 = vmatpush1.msra.mxu0 0.0
      %5562 = vmatprep.subr.mxu0 0.0
      %5563 = vmatpush1.msra.mxu0 0.0
      %5564 = vmatprep.subr.mxu0 0.0
      %5565 = vmatpush1.msra.mxu0 0.0
      %5566 = vmatprep.subr.mxu0 0.0
      %5567 = vmatpush1.msra.mxu0 0.0
      %5568 = vmatprep.subr.mxu0 0.0
      %5569 = vmatpush1.msra.mxu0 0.0
      %5570 = vmatprep.subr.mxu0 0.0
      %5571 = vmatpush1.msra.mxu0 0.0
      %5572 = vmatprep.subr.mxu0 0.0
      %5573 = vmatpush1.msra.mxu0 0.0
      %5574 = vmatprep.subr.mxu0 0.0
      %5575 = vmatpush1.msra.mxu0 0.0
      %5576 = vmatprep.subr.mxu0 0.0
      %5577 = vmatpush1.msra.mxu0 0.0
      %5578 = vmatprep.subr.mxu0 0.0
      %5579 = vmatpush1.msra.mxu0 0.0
      %5580 = vmatprep.subr.mxu0 0.0
      %5581 = vmatpush1.msra.mxu0 0.0
      %5582 = vmatprep.subr.mxu0 0.0
      %5583 = vmatpush1.msra.mxu0 0.0
      %5584 = vmatprep.subr.mxu0 0.0
      %5585 = vmatpush1.msra.mxu0 0.0
      %5586 = vmatprep.subr.mxu0 0.0
      %5587 = vmatpush1.msra.mxu0 0.0
      %5588 = vmatprep.subr.mxu0 0.0
      %5589 = vmatpush1.msra.mxu0 0.0
      %5590 = vmatprep.subr.mxu0 0.0
      %5591 = vmatpush1.msra.mxu0 0.0
      %5592 = vmatprep.subr.mxu0 0.0
      %5593 = vmatpush1.msra.mxu0 0.0
      %5594 = vmatprep.subr.mxu0 0.0
      %5595 = vmatpush1.msra.mxu0 0.0
      %5596 = vmatprep.subr.mxu0 0.0
      %5597 = vmatpush1.msra.mxu0 0.0
      %5598 = vmatprep.subr.mxu0 0.0
      %5599 = vmatpush1.msra.mxu0 0.0
      %5600 = vmatprep.mubr.f32.mxu0 0.0
      %5601 = vmatmul.mubr.f32.gmra.mrb[0].mxu0 %v2671
      %v5602 = vpop.f32.mrb[0].mxu0
      %v5603 = vadd.f32 0.0, %v5602
      %v5604 = vpop.f32.mrb[0].mxu0
      %v5605 = vadd.f32 0.0, %v5604
      %5606 = vdwg.mxu0
      %v5607 = vadd.f32 %v5526, %v5603
      %v5608 = vadd.f32 %v5528, %v5605
      %5609 = vrot.lane.b32.xlu0 %v5380, 112
      %v5610 = vpop.permute.xlu0 %5609
      %5611 = vrot.lane.b32.xlu0 %v5381, 112
      %v5612 = vpop.permute.xlu0 %5611
      %v5613 = vsel %vm452, %v5610, %v5612
      %v5614 = vsel %vm452, %v5612, %v5610
      %5615 = vmatprep.subr.mxu0 %v5614
      %5616 = vmatpush1.msra.mxu0 %v5613
      %5617 = vmatprep.subr.mxu0 0.0
      %5618 = vmatpush1.msra.mxu0 0.0
      %5619 = vmatprep.subr.mxu0 0.0
      %5620 = vmatpush1.msra.mxu0 0.0
      %5621 = vmatprep.subr.mxu0 0.0
      %5622 = vmatpush1.msra.mxu0 0.0
      %5623 = vmatprep.subr.mxu0 0.0
      %5624 = vmatpush1.msra.mxu0 0.0
      %5625 = vmatprep.subr.mxu0 0.0
      %5626 = vmatpush1.msra.mxu0 0.0
      %5627 = vmatprep.subr.mxu0 0.0
      %5628 = vmatpush1.msra.mxu0 0.0
      %5629 = vmatprep.subr.mxu0 0.0
      %5630 = vmatpush1.msra.mxu0 0.0
      %5631 = vmatprep.subr.mxu0 0.0
      %5632 = vmatpush1.msra.mxu0 0.0
      %5633 = vmatprep.subr.mxu0 0.0
      %5634 = vmatpush1.msra.mxu0 0.0
      %5635 = vmatprep.subr.mxu0 0.0
      %5636 = vmatpush1.msra.mxu0 0.0
      %5637 = vmatprep.subr.mxu0 0.0
      %5638 = vmatpush1.msra.mxu0 0.0
      %5639 = vmatprep.subr.mxu0 0.0
      %5640 = vmatpush1.msra.mxu0 0.0
      %5641 = vmatprep.subr.mxu0 0.0
      %5642 = vmatpush1.msra.mxu0 0.0
      %5643 = vmatprep.subr.mxu0 0.0
      %5644 = vmatpush1.msra.mxu0 0.0
      %5645 = vmatprep.subr.mxu0 0.0
      %5646 = vmatpush1.msra.mxu0 0.0
      %5647 = vmatprep.subr.mxu0 0.0
      %5648 = vmatpush1.msra.mxu0 0.0
      %5649 = vmatprep.subr.mxu0 0.0
      %5650 = vmatpush1.msra.mxu0 0.0
      %5651 = vmatprep.subr.mxu0 0.0
      %5652 = vmatpush1.msra.mxu0 0.0
      %5653 = vmatprep.subr.mxu0 0.0
      %5654 = vmatpush1.msra.mxu0 0.0
      %5655 = vmatprep.subr.mxu0 0.0
      %5656 = vmatpush1.msra.mxu0 0.0
      %5657 = vmatprep.subr.mxu0 0.0
      %5658 = vmatpush1.msra.mxu0 0.0
      %5659 = vmatprep.subr.mxu0 0.0
      %5660 = vmatpush1.msra.mxu0 0.0
      %5661 = vmatprep.subr.mxu0 0.0
      %5662 = vmatpush1.msra.mxu0 0.0
      %5663 = vmatprep.subr.mxu0 0.0
      %5664 = vmatpush1.msra.mxu0 0.0
      %5665 = vmatprep.subr.mxu0 0.0
      %5666 = vmatpush1.msra.mxu0 0.0
      %5667 = vmatprep.subr.mxu0 0.0
      %5668 = vmatpush1.msra.mxu0 0.0
      %5669 = vmatprep.subr.mxu0 0.0
      %5670 = vmatpush1.msra.mxu0 0.0
      %5671 = vmatprep.subr.mxu0 0.0
      %5672 = vmatpush1.msra.mxu0 0.0
      %5673 = vmatprep.subr.mxu0 0.0
      %5674 = vmatpush1.msra.mxu0 0.0
      %5675 = vmatprep.subr.mxu0 0.0
      %5676 = vmatpush1.msra.mxu0 0.0
      %5677 = vmatprep.subr.mxu0 0.0
      %5678 = vmatpush1.msra.mxu0 0.0
      %5679 = vmatprep.mubr.f32.mxu0 0.0
      %5680 = vmatmul.mubr.f32.gmra.mrb[0].mxu0 %v2755
      %v5681 = vpop.f32.mrb[0].mxu0
      %v5682 = vadd.f32 0.0, %v5681
      %v5683 = vpop.f32.mrb[0].mxu0
      %v5684 = vadd.f32 0.0, %v5683
      %5685 = vdwg.mxu0
      %v5686 = vadd.f32 %v5607, %v5682
      %v5687 = vadd.f32 %v5608, %v5684
      %5688 = vrot.lane.b32.xlu0 %v5380, 111
      %v5689 = vpop.permute.xlu0 %5688
      %5690 = vrot.lane.b32.xlu0 %v5381, 111
      %v5691 = vpop.permute.xlu0 %5690
      %v5692 = vsel %vm537, %v5689, %v5691
      %v5693 = vsel %vm537, %v5691, %v5689
      %5694 = vmatprep.subr.mxu0 %v5693
      %5695 = vmatpush1.msra.mxu0 %v5692
      %5696 = vmatprep.subr.mxu0 0.0
      %5697 = vmatpush1.msra.mxu0 0.0
      %5698 = vmatprep.subr.mxu0 0.0
      %5699 = vmatpush1.msra.mxu0 0.0
      %5700 = vmatprep.subr.mxu0 0.0
      %5701 = vmatpush1.msra.mxu0 0.0
      %5702 = vmatprep.subr.mxu0 0.0
      %5703 = vmatpush1.msra.mxu0 0.0
      %5704 = vmatprep.subr.mxu0 0.0
      %5705 = vmatpush1.msra.mxu0 0.0
      %5706 = vmatprep.subr.mxu0 0.0
      %5707 = vmatpush1.msra.mxu0 0.0
      %5708 = vmatprep.subr.mxu0 0.0
      %5709 = vmatpush1.msra.mxu0 0.0
      %5710 = vmatprep.subr.mxu0 0.0
      %5711 = vmatpush1.msra.mxu0 0.0
      %5712 = vmatprep.subr.mxu0 0.0
      %5713 = vmatpush1.msra.mxu0 0.0
      %5714 = vmatprep.subr.mxu0 0.0
      %5715 = vmatpush1.msra.mxu0 0.0
      %5716 = vmatprep.subr.mxu0 0.0
      %5717 = vmatpush1.msra.mxu0 0.0
      %5718 = vmatprep.subr.mxu0 0.0
      %5719 = vmatpush1.msra.mxu0 0.0
      %5720 = vmatprep.subr.mxu0 0.0
      %5721 = vmatpush1.msra.mxu0 0.0
      %5722 = vmatprep.subr.mxu0 0.0
      %5723 = vmatpush1.msra.mxu0 0.0
      %5724 = vmatprep.subr.mxu0 0.0
      %5725 = vmatpush1.msra.mxu0 0.0
      %5726 = vmatprep.subr.mxu0 0.0
      %5727 = vmatpush1.msra.mxu0 0.0
      %5728 = vmatprep.subr.mxu0 0.0
      %5729 = vmatpush1.msra.mxu0 0.0
      %5730 = vmatprep.subr.mxu0 0.0
      %5731 = vmatpush1.msra.mxu0 0.0
      %5732 = vmatprep.subr.mxu0 0.0
      %5733 = vmatpush1.msra.mxu0 0.0
      %5734 = vmatprep.subr.mxu0 0.0
      %5735 = vmatpush1.msra.mxu0 0.0
      %5736 = vmatprep.subr.mxu0 0.0
      %5737 = vmatpush1.msra.mxu0 0.0
      %5738 = vmatprep.subr.mxu0 0.0
      %5739 = vmatpush1.msra.mxu0 0.0
      %5740 = vmatprep.subr.mxu0 0.0
      %5741 = vmatpush1.msra.mxu0 0.0
      %5742 = vmatprep.subr.mxu0 0.0
      %5743 = vmatpush1.msra.mxu0 0.0
      %5744 = vmatprep.subr.mxu0 0.0
      %5745 = vmatpush1.msra.mxu0 0.0
      %5746 = vmatprep.subr.mxu0 0.0
      %5747 = vmatpush1.msra.mxu0 0.0
      %5748 = vmatprep.subr.mxu0 0.0
      %5749 = vmatpush1.msra.mxu0 0.0
      %5750 = vmatprep.subr.mxu0 0.0
      %5751 = vmatpush1.msra.mxu0 0.0
      %5752 = vmatprep.subr.mxu0 0.0
      %5753 = vmatpush1.msra.mxu0 0.0
      %5754 = vmatprep.subr.mxu0 0.0
      %5755 = vmatpush1.msra.mxu0 0.0
      %5756 = vmatprep.subr.mxu0 0.0
      %5757 = vmatpush1.msra.mxu0 0.0
      %5758 = vmatprep.mubr.f32.mxu0 0.0
      %5759 = vmatmul.mubr.f32.gmra.mrb[0].mxu0 %v2839
      %v5760 = vpop.f32.mrb[0].mxu0
      %v5761 = vadd.f32 0.0, %v5760
      %v5762 = vpop.f32.mrb[0].mxu0
      %v5763 = vadd.f32 0.0, %v5762
      %5764 = vdwg.mxu0
      %v5765 = vadd.f32 %v5686, %v5761
      %v5766 = vadd.f32 %v5687, %v5763
      %5767 = vrot.lane.b32.xlu0 %v5380, 110
      %v5768 = vpop.permute.xlu0 %5767
      %5769 = vrot.lane.b32.xlu0 %v5381, 110
      %v5770 = vpop.permute.xlu0 %5769
      %v5771 = vsel %vm622, %v5768, %v5770
      %v5772 = vsel %vm622, %v5770, %v5768
      %5773 = vmatprep.subr.mxu0 %v5772
      %5774 = vmatpush1.msra.mxu0 %v5771
      %5775 = vmatprep.subr.mxu0 0.0
      %5776 = vmatpush1.msra.mxu0 0.0
      %5777 = vmatprep.subr.mxu0 0.0
      %5778 = vmatpush1.msra.mxu0 0.0
      %5779 = vmatprep.subr.mxu0 0.0
      %5780 = vmatpush1.msra.mxu0 0.0
      %5781 = vmatprep.subr.mxu0 0.0
      %5782 = vmatpush1.msra.mxu0 0.0
      %5783 = vmatprep.subr.mxu0 0.0
      %5784 = vmatpush1.msra.mxu0 0.0
      %5785 = vmatprep.subr.mxu0 0.0
      %5786 = vmatpush1.msra.mxu0 0.0
      %5787 = vmatprep.subr.mxu0 0.0
      %5788 = vmatpush1.msra.mxu0 0.0
      %5789 = vmatprep.subr.mxu0 0.0
      %5790 = vmatpush1.msra.mxu0 0.0
      %5791 = vmatprep.subr.mxu0 0.0
      %5792 = vmatpush1.msra.mxu0 0.0
      %5793 = vmatprep.subr.mxu0 0.0
      %5794 = vmatpush1.msra.mxu0 0.0
      %5795 = vmatprep.subr.mxu0 0.0
      %5796 = vmatpush1.msra.mxu0 0.0
      %5797 = vmatprep.subr.mxu0 0.0
      %5798 = vmatpush1.msra.mxu0 0.0
      %5799 = vmatprep.subr.mxu0 0.0
      %5800 = vmatpush1.msra.mxu0 0.0
      %5801 = vmatprep.subr.mxu0 0.0
      %5802 = vmatpush1.msra.mxu0 0.0
      %5803 = vmatprep.subr.mxu0 0.0
      %5804 = vmatpush1.msra.mxu0 0.0
      %5805 = vmatprep.subr.mxu0 0.0
      %5806 = vmatpush1.msra.mxu0 0.0
      %5807 = vmatprep.subr.mxu0 0.0
      %5808 = vmatpush1.msra.mxu0 0.0
      %5809 = vmatprep.subr.mxu0 0.0
      %5810 = vmatpush1.msra.mxu0 0.0
      %5811 = vmatprep.subr.mxu0 0.0
      %5812 = vmatpush1.msra.mxu0 0.0
      %5813 = vmatprep.subr.mxu0 0.0
      %5814 = vmatpush1.msra.mxu0 0.0
      %5815 = vmatprep.subr.mxu0 0.0
      %5816 = vmatpush1.msra.mxu0 0.0
      %5817 = vmatprep.subr.mxu0 0.0
      %5818 = vmatpush1.msra.mxu0 0.0
      %5819 = vmatprep.subr.mxu0 0.0
      %5820 = vmatpush1.msra.mxu0 0.0
      %5821 = vmatprep.subr.mxu0 0.0
      %5822 = vmatpush1.msra.mxu0 0.0
      %5823 = vmatprep.subr.mxu0 0.0
      %5824 = vmatpush1.msra.mxu0 0.0
      %5825 = vmatprep.subr.mxu0 0.0
      %5826 = vmatpush1.msra.mxu0 0.0
      %5827 = vmatprep.subr.mxu0 0.0
      %5828 = vmatpush1.msra.mxu0 0.0
      %5829 = vmatprep.subr.mxu0 0.0
      %5830 = vmatpush1.msra.mxu0 0.0
      %5831 = vmatprep.subr.mxu0 0.0
      %5832 = vmatpush1.msra.mxu0 0.0
      %5833 = vmatprep.subr.mxu0 0.0
      %5834 = vmatpush1.msra.mxu0 0.0
      %5835 = vmatprep.subr.mxu0 0.0
      %5836 = vmatpush1.msra.mxu0 0.0
      %5837 = vmatprep.mubr.f32.mxu0 0.0
      %5838 = vmatmul.mubr.f32.gmra.mrb[0].mxu0 %v2923
      %v5839 = vpop.f32.mrb[0].mxu0
      %v5840 = vadd.f32 0.0, %v5839
      %v5841 = vpop.f32.mrb[0].mxu0
      %v5842 = vadd.f32 0.0, %v5841
      %5843 = vdwg.mxu0
      %v5844 = vadd.f32 %v5765, %v5840
      %v5845 = vadd.f32 %v5766, %v5842
      %5846 = vrot.lane.b32.xlu0 %v5380, 96
      %v5847 = vpop.permute.xlu0 %5846
      %5848 = vrot.lane.b32.xlu0 %v5381, 96
      %v5849 = vpop.permute.xlu0 %5848
      %v5850 = vsel %vm707, %v5847, %v5849
      %v5851 = vsel %vm707, %v5849, %v5847
      %5852 = vmatprep.subr.mxu0 %v5851
      %5853 = vmatpush1.msra.mxu0 %v5850
      %5854 = vmatprep.subr.mxu0 0.0
      %5855 = vmatpush1.msra.mxu0 0.0
      %5856 = vmatprep.subr.mxu0 0.0
      %5857 = vmatpush1.msra.mxu0 0.0
      %5858 = vmatprep.subr.mxu0 0.0
      %5859 = vmatpush1.msra.mxu0 0.0
      %5860 = vmatprep.subr.mxu0 0.0
      %5861 = vmatpush1.msra.mxu0 0.0
      %5862 = vmatprep.subr.mxu0 0.0
      %5863 = vmatpush1.msra.mxu0 0.0
      %5864 = vmatprep.subr.mxu0 0.0
      %5865 = vmatpush1.msra.mxu0 0.0
      %5866 = vmatprep.subr.mxu0 0.0
      %5867 = vmatpush1.msra.mxu0 0.0
      %5868 = vmatprep.subr.mxu0 0.0
      %5869 = vmatpush1.msra.mxu0 0.0
      %5870 = vmatprep.subr.mxu0 0.0
      %5871 = vmatpush1.msra.mxu0 0.0
      %5872 = vmatprep.subr.mxu0 0.0
      %5873 = vmatpush1.msra.mxu0 0.0
      %5874 = vmatprep.subr.mxu0 0.0
      %5875 = vmatpush1.msra.mxu0 0.0
      %5876 = vmatprep.subr.mxu0 0.0
      %5877 = vmatpush1.msra.mxu0 0.0
      %5878 = vmatprep.subr.mxu0 0.0
      %5879 = vmatpush1.msra.mxu0 0.0
      %5880 = vmatprep.subr.mxu0 0.0
      %5881 = vmatpush1.msra.mxu0 0.0
      %5882 = vmatprep.subr.mxu0 0.0
      %5883 = vmatpush1.msra.mxu0 0.0
      %5884 = vmatprep.subr.mxu0 0.0
      %5885 = vmatpush1.msra.mxu0 0.0
      %5886 = vmatprep.subr.mxu0 0.0
      %5887 = vmatpush1.msra.mxu0 0.0
      %5888 = vmatprep.subr.mxu0 0.0
      %5889 = vmatpush1.msra.mxu0 0.0
      %5890 = vmatprep.subr.mxu0 0.0
      %5891 = vmatpush1.msra.mxu0 0.0
      %5892 = vmatprep.subr.mxu0 0.0
      %5893 = vmatpush1.msra.mxu0 0.0
      %5894 = vmatprep.subr.mxu0 0.0
      %5895 = vmatpush1.msra.mxu0 0.0
      %5896 = vmatprep.subr.mxu0 0.0
      %5897 = vmatpush1.msra.mxu0 0.0
      %5898 = vmatprep.subr.mxu0 0.0
      %5899 = vmatpush1.msra.mxu0 0.0
      %5900 = vmatprep.subr.mxu0 0.0
      %5901 = vmatpush1.msra.mxu0 0.0
      %5902 = vmatprep.subr.mxu0 0.0
      %5903 = vmatpush1.msra.mxu0 0.0
      %5904 = vmatprep.subr.mxu0 0.0
      %5905 = vmatpush1.msra.mxu0 0.0
      %5906 = vmatprep.subr.mxu0 0.0
      %5907 = vmatpush1.msra.mxu0 0.0
      %5908 = vmatprep.subr.mxu0 0.0
      %5909 = vmatpush1.msra.mxu0 0.0
      %5910 = vmatprep.subr.mxu0 0.0
      %5911 = vmatpush1.msra.mxu0 0.0
      %5912 = vmatprep.subr.mxu0 0.0
      %5913 = vmatpush1.msra.mxu0 0.0
      %5914 = vmatprep.subr.mxu0 0.0
      %5915 = vmatpush1.msra.mxu0 0.0
      %5916 = vmatprep.mubr.f32.mxu0 0.0
      %5917 = vmatmul.mubr.f32.gmra.mrb[0].mxu0 %v3007
      %v5918 = vpop.f32.mrb[0].mxu0
      %v5919 = vadd.f32 0.0, %v5918
      %v5920 = vpop.f32.mrb[0].mxu0
      %v5921 = vadd.f32 0.0, %v5920
      %5922 = vdwg.mxu0
      %v5923 = vadd.f32 %v5844, %v5919
      %v5924 = vadd.f32 %v5845, %v5921
      %5925 = vrot.lane.b32.xlu0 %v5380, 95
      %v5926 = vpop.permute.xlu0 %5925
      %5927 = vrot.lane.b32.xlu0 %v5381, 95
      %v5928 = vpop.permute.xlu0 %5927
      %v5929 = vsel %vm792, %v5926, %v5928
      %v5930 = vsel %vm792, %v5928, %v5926
      %5931 = vmatprep.subr.mxu0 %v5930
      %5932 = vmatpush1.msra.mxu0 %v5929
      %5933 = vmatprep.subr.mxu0 0.0
      %5934 = vmatpush1.msra.mxu0 0.0
      %5935 = vmatprep.subr.mxu0 0.0
      %5936 = vmatpush1.msra.mxu0 0.0
      %5937 = vmatprep.subr.mxu0 0.0
      %5938 = vmatpush1.msra.mxu0 0.0
      %5939 = vmatprep.subr.mxu0 0.0
      %5940 = vmatpush1.msra.mxu0 0.0
      %5941 = vmatprep.subr.mxu0 0.0
      %5942 = vmatpush1.msra.mxu0 0.0
      %5943 = vmatprep.subr.mxu0 0.0
      %5944 = vmatpush1.msra.mxu0 0.0
      %5945 = vmatprep.subr.mxu0 0.0
      %5946 = vmatpush1.msra.mxu0 0.0
      %5947 = vmatprep.subr.mxu0 0.0
      %5948 = vmatpush1.msra.mxu0 0.0
      %5949 = vmatprep.subr.mxu0 0.0
      %5950 = vmatpush1.msra.mxu0 0.0
      %5951 = vmatprep.subr.mxu0 0.0
      %5952 = vmatpush1.msra.mxu0 0.0
      %5953 = vmatprep.subr.mxu0 0.0
      %5954 = vmatpush1.msra.mxu0 0.0
      %5955 = vmatprep.subr.mxu0 0.0
      %5956 = vmatpush1.msra.mxu0 0.0
      %5957 = vmatprep.subr.mxu0 0.0
      %5958 = vmatpush1.msra.mxu0 0.0
      %5959 = vmatprep.subr.mxu0 0.0
      %5960 = vmatpush1.msra.mxu0 0.0
      %5961 = vmatprep.subr.mxu0 0.0
      %5962 = vmatpush1.msra.mxu0 0.0
      %5963 = vmatprep.subr.mxu0 0.0
      %5964 = vmatpush1.msra.mxu0 0.0
      %5965 = vmatprep.subr.mxu0 0.0
      %5966 = vmatpush1.msra.mxu0 0.0
      %5967 = vmatprep.subr.mxu0 0.0
      %5968 = vmatpush1.msra.mxu0 0.0
      %5969 = vmatprep.subr.mxu0 0.0
      %5970 = vmatpush1.msra.mxu0 0.0
      %5971 = vmatprep.subr.mxu0 0.0
      %5972 = vmatpush1.msra.mxu0 0.0
      %5973 = vmatprep.subr.mxu0 0.0
      %5974 = vmatpush1.msra.mxu0 0.0
      %5975 = vmatprep.subr.mxu0 0.0
      %5976 = vmatpush1.msra.mxu0 0.0
      %5977 = vmatprep.subr.mxu0 0.0
      %5978 = vmatpush1.msra.mxu0 0.0
      %5979 = vmatprep.subr.mxu0 0.0
      %5980 = vmatpush1.msra.mxu0 0.0
      %5981 = vmatprep.subr.mxu0 0.0
      %5982 = vmatpush1.msra.mxu0 0.0
      %5983 = vmatprep.subr.mxu0 0.0
      %5984 = vmatpush1.msra.mxu0 0.0
      %5985 = vmatprep.subr.mxu0 0.0
      %5986 = vmatpush1.msra.mxu0 0.0
      %5987 = vmatprep.subr.mxu0 0.0
      %5988 = vmatpush1.msra.mxu0 0.0
      %5989 = vmatprep.subr.mxu0 0.0
      %5990 = vmatpush1.msra.mxu0 0.0
      %5991 = vmatprep.subr.mxu0 0.0
      %5992 = vmatpush1.msra.mxu0 0.0
      %5993 = vmatprep.subr.mxu0 0.0
      %5994 = vmatpush1.msra.mxu0 0.0
      %5995 = vmatprep.mubr.f32.mxu0 0.0
      %5996 = vmatmul.mubr.f32.gmra.mrb[0].mxu0 %v3091
      %v5997 = vpop.f32.mrb[0].mxu0
      %v5998 = vadd.f32 0.0, %v5997
      %v5999 = vpop.f32.mrb[0].mxu0
      %v6000 = vadd.f32 0.0, %v5999
      %6001 = vdwg.mxu0
      %v6002 = vadd.f32 %v5923, %v5998
      %v6003 = vadd.f32 %v5924, %v6000
      %6004 = vrot.lane.b32.xlu0 %v5380, 94
      %v6005 = vpop.permute.xlu0 %6004
      %6006 = vrot.lane.b32.xlu0 %v5381, 94
      %v6007 = vpop.permute.xlu0 %6006
      %v6008 = vsel %vm877, %v6005, %v6007
      %v6009 = vsel %vm877, %v6007, %v6005
      %6010 = vmatprep.subr.mxu0 %v6009
      %6011 = vmatpush1.msra.mxu0 %v6008
      %6012 = vmatprep.subr.mxu0 0.0
      %6013 = vmatpush1.msra.mxu0 0.0
      %6014 = vmatprep.subr.mxu0 0.0
      %6015 = vmatpush1.msra.mxu0 0.0
      %6016 = vmatprep.subr.mxu0 0.0
      %6017 = vmatpush1.msra.mxu0 0.0
      %6018 = vmatprep.subr.mxu0 0.0
      %6019 = vmatpush1.msra.mxu0 0.0
      %6020 = vmatprep.subr.mxu0 0.0
      %6021 = vmatpush1.msra.mxu0 0.0
      %6022 = vmatprep.subr.mxu0 0.0
      %6023 = vmatpush1.msra.mxu0 0.0
      %6024 = vmatprep.subr.mxu0 0.0
      %6025 = vmatpush1.msra.mxu0 0.0
      %6026 = vmatprep.subr.mxu0 0.0
      %6027 = vmatpush1.msra.mxu0 0.0
      %6028 = vmatprep.subr.mxu0 0.0
      %6029 = vmatpush1.msra.mxu0 0.0
      %6030 = vmatprep.subr.mxu0 0.0
      %6031 = vmatpush1.msra.mxu0 0.0
      %6032 = vmatprep.subr.mxu0 0.0
      %6033 = vmatpush1.msra.mxu0 0.0
      %6034 = vmatprep.subr.mxu0 0.0
      %6035 = vmatpush1.msra.mxu0 0.0
      %6036 = vmatprep.subr.mxu0 0.0
      %6037 = vmatpush1.msra.mxu0 0.0
      %6038 = vmatprep.subr.mxu0 0.0
      %6039 = vmatpush1.msra.mxu0 0.0
      %6040 = vmatprep.subr.mxu0 0.0
      %6041 = vmatpush1.msra.mxu0 0.0
      %6042 = vmatprep.subr.mxu0 0.0
      %6043 = vmatpush1.msra.mxu0 0.0
      %6044 = vmatprep.subr.mxu0 0.0
      %6045 = vmatpush1.msra.mxu0 0.0
      %6046 = vmatprep.subr.mxu0 0.0
      %6047 = vmatpush1.msra.mxu0 0.0
      %6048 = vmatprep.subr.mxu0 0.0
      %6049 = vmatpush1.msra.mxu0 0.0
      %6050 = vmatprep.subr.mxu0 0.0
      %6051 = vmatpush1.msra.mxu0 0.0
      %6052 = vmatprep.subr.mxu0 0.0
      %6053 = vmatpush1.msra.mxu0 0.0
      %6054 = vmatprep.subr.mxu0 0.0
      %6055 = vmatpush1.msra.mxu0 0.0
      %6056 = vmatprep.subr.mxu0 0.0
      %6057 = vmatpush1.msra.mxu0 0.0
      %6058 = vmatprep.subr.mxu0 0.0
      %6059 = vmatpush1.msra.mxu0 0.0
      %6060 = vmatprep.subr.mxu0 0.0
      %6061 = vmatpush1.msra.mxu0 0.0
      %6062 = vmatprep.subr.mxu0 0.0
      %6063 = vmatpush1.msra.mxu0 0.0
      %6064 = vmatprep.subr.mxu0 0.0
      %6065 = vmatpush1.msra.mxu0 0.0
      %6066 = vmatprep.subr.mxu0 0.0
      %6067 = vmatpush1.msra.mxu0 0.0
      %6068 = vmatprep.subr.mxu0 0.0
      %6069 = vmatpush1.msra.mxu0 0.0
      %6070 = vmatprep.subr.mxu0 0.0
      %6071 = vmatpush1.msra.mxu0 0.0
      %6072 = vmatprep.subr.mxu0 0.0
      %6073 = vmatpush1.msra.mxu0 0.0
      %6074 = vmatprep.mubr.f32.mxu0 0.0
      %6075 = vmatmul.mubr.f32.gmra.mrb[0].mxu0 %v3175
      %v6076 = vpop.f32.mrb[0].mxu0
      %v6077 = vadd.f32 0.0, %v6076
      %v6078 = vpop.f32.mrb[0].mxu0
      %v6079 = vadd.f32 0.0, %v6078
      %6080 = vdwg.mxu0
      %v6081 = vadd.f32 %v6002, %v6077
      %v6082 = vadd.f32 %v6003, %v6079
      %v6083 = vmul.f32 %v6081, %v3253
      %v6084 = vmul.f32 %v6082, %v3253
      %v6085 = vadd.f32 %v6083, %v3260
      %v6086 = vadd.f32 %v6084, %v3260
      %v6087 = vmax.f32 %v3262, %v6085
      %v6088 = vmax.f32 %v3263, %v6086
      %6089 = vst [vmem:[%s197] sm:$0xff] %v6087
      %6090 = vst [vmem:[%s197 + $0x8] sm:$0xff] %v6088
      %p6091 = scmp.lt.s32.totalorder %s15, 1
      %s6092 = scalar_select %p6091, %s15, 1
      %s6093 = smul.addr %s6092, 2
      %s6094 = smul.addr %s6093, 8
      %s6095 = scalar_lea.vmem %s4, %s6094
      // Predicated region
      $region37: #{qc_forward.3} parent=35 // pred_check
        %p6096 = pneg %p122
      $region38: #{qc_forward.3} parent=35 // pred_check_branch
        %6098 = sbr.rel (%p6096) target = $region40
      $region39: #{qc_forward.3} parent=35 // pred_region
        _
      $region40: #{qc_forward.3} parent=35 // pred_fallthru
        _
    $region36: #{qc_forward.3} parent=5 // pred_fallthru
      _
    %p6099 = scmp.le.s32.totalorder 2, %s10
    // Predicated region
    $region41: #{qc_forward.3} parent=5 // pred_check
      %p6100 = pneg %p6099
    $region42: #{qc_forward.3} parent=5 // pred_check_branch
      %6102 = sbr.rel (%p6100) target = $region44
    $region43: #{qc_forward.3} parent=5 // pred_region
      %s6103 = ssub.s32 %s10, 2
      // Predicated region
      $region45: #{qc_forward.3} parent=43 // pred_check
        %p6104 = pneg %p128
      $region46: #{qc_forward.3} parent=43 // pred_check_branch
        %6106 = sbr.rel (%p6104) target = $region48
      $region47: #{qc_forward.3} parent=43 // pred_region
        %p6107 = scmp.lt.s32.totalorder %s16, 1
        %s6108 = scalar_select %p6107, %s16, 1
        %s6109 = smul.addr %s6108, 2
        %s6110 = smul.addr %s6109, 8
        %s6111 = scalar_lea.vmem %s4, %s6110
      $region48: #{qc_forward.3} parent=43 // pred_fallthru
        _
    $region44: #{qc_forward.3} parent=5 // pred_fallthru
      _
  $region6: #{qc_forward.3} parent=0 // loop_footer
    %s14 = sadd.s32 1, %s10
  $region7: #{qc_forward.3} parent=0 // loop_footer_branch
    %9 = sbr.rel target = $region3
  $region8: #{qc_forward.3} parent=0 // loop_exit
    _

</llo_original>
